<compile_context>
chip_gen: v5e
topology: v5e:2x2
jax: 0.10.0
libtpu: 0.0.40
codegen_flags: <defaults>
</compile_context>

<pallas_src>
import functools
import math

import jax
import jax.numpy as jnp
from jax.experimental import pallas as pl
from jax.experimental.pallas import tpu as pltpu


_CONV_SPECS = [(32, 8, 4), (64, 4, 2), (64, 3, 1)]  # (out_channels, ksize, stride)


# ----------------------------- small helpers ------------------------------

def _round_up(x, m):
    return (x + m - 1) // m * m


def _full_spec(shape):
    # Whole-array block for the small no-grid dense kernels.
    return pl.BlockSpec(shape, lambda *_: (0,) * len(shape))


def _ln(x, g, b, eps=1e-5):
    mu = jnp.mean(x, axis=-1, keepdims=True)
    var = jnp.mean(jnp.square(x - mu), axis=-1, keepdims=True)
    return (x - mu) * jax.lax.rsqrt(var + eps) * g + b


# --------------------- grouped (head/neck) linear kernel --------------------

def _grouped_linear_kernel(a_ref, w_ref, b_ref, o_ref, *, relu):
    y = jnp.dot(a_ref[...], w_ref[...], preferred_element_type=jnp.float32)
    y = y + b_ref[...]
    if relu:
        y = jnp.maximum(y, 0.0)
    o_ref[...] = y.astype(o_ref.dtype)


def grouped_linear(a, w, b, *, relu=True, out_dtype=jnp.float32, block_m=512):
    """a: (G, M, K), w: (G, K, N), b: (G, 1, N) -> (G, M, N)."""
    G, M, K = a.shape
    N = w.shape[-1]
    Mp = _round_up(M, 8)
    bm = min(block_m, Mp)
    Mp = _round_up(Mp, bm)
    if Mp != M:
        a = jnp.pad(a, ((0, 0), (0, Mp - M), (0, 0)))
    out = pl.pallas_call(
        functools.partial(_grouped_linear_kernel, relu=relu),
        grid=(G, Mp // bm),
        out_shape=jax.ShapeDtypeStruct((G, Mp, N), out_dtype),
        in_specs=[
            pl.BlockSpec((None, bm, K), lambda g, m: (g, m, 0)),
            pl.BlockSpec((None, K, N), lambda g, m: (g, 0, 0)),
            pl.BlockSpec((None, 1, N), lambda g, m: (g, 0, 0)),
        ],
        out_specs=pl.BlockSpec((None, bm, N), lambda g, m: (g, m, 0)),
        compiler_params=pltpu.CompilerParams(
            dimension_semantics=("parallel", "parallel"),
            vmem_limit_bytes=48 * 1024 * 1024),
    )(a, w, b)
    return out[:, :M]


# ------------------------------ MLP base kernel -----------------------------

def _mlp_chain_kernel(*refs):
    x_ref = refs[0]
    o_ref = refs[-1]
    wbs = refs[1:-1]
    h = x_ref[...]
    for i in range(0, len(wbs), 2):
        h = jnp.dot(h, wbs[i][...], preferred_element_type=jnp.float32)
        h = jnp.maximum(h + wbs[i + 1][...], 0.0)
    o_ref[...] = h


def mlp_base_pallas(x, ws, bs):
    M = x.shape[0]
    n_out = ws[-1].shape[1]
    in_specs = [_full_spec(x.shape)]
    args = [x]
    for w, b in zip(ws, bs):
        in_specs += [_full_spec(w.shape), _full_spec(b.shape)]
        args += [w, b]
    return pl.pallas_call(
        _mlp_chain_kernel,
        out_shape=jax.ShapeDtypeStruct((M, n_out), jnp.float32),
        in_specs=in_specs,
        out_specs=_full_spec((M, n_out)),
    )(*args)


# ----------------- attention + residual + LayerNorm-MLP kernel --------------
# One grid step per branch (head / neck / state); 1-head MultiheadAttention.

def _attn_mlp_kernel(q_ref, kv_ref, w_ref, v_ref, o_ref):
    B, T, E = q_ref.shape
    scale = 1.0 / math.sqrt(E)

    wq = w_ref[0 * E:1 * E, :]
    wk = w_ref[1 * E:2 * E, :]
    wv = w_ref[2 * E:3 * E, :]
    wo = w_ref[3 * E:4 * E, :]
    w1 = w_ref[4 * E:5 * E, :]
    w2 = w_ref[5 * E:6 * E, :]
    bq = v_ref[0:1, :]
    bk = v_ref[1:2, :]
    bv = v_ref[2:3, :]
    bo = v_ref[3:4, :]
    ln_g = v_ref[4:5, :]
    ln_b = v_ref[5:6, :]
    b1 = v_ref[6:7, :]
    b2 = v_ref[7:8, :]

    for b in range(B):
        qb = q_ref[b]                        # (T, E)
        kvb = kv_ref[b]                      # (S, E)
        qp = jnp.dot(qb, wq, preferred_element_type=jnp.float32) + bq
        kp = jnp.dot(kvb, wk, preferred_element_type=jnp.float32) + bk
        vp = jnp.dot(kvb, wv, preferred_element_type=jnp.float32) + bv
        s = jax.lax.dot_general(qp, kp, (((1,), (1,)), ((), ())),
                                preferred_element_type=jnp.float32) * scale
        s = s - jnp.max(s, axis=-1, keepdims=True)
        e = jnp.exp(s)
        p = e / jnp.sum(e, axis=-1, keepdims=True)
        ctx = jnp.dot(p, vp, preferred_element_type=jnp.float32)
        att = jnp.dot(ctx, wo, preferred_element_type=jnp.float32) + bo
        y = att + qb                         # residual
        yln = _ln(y, ln_g, ln_b)
        h = jnp.maximum(jnp.dot(yln, w1, preferred_element_type=jnp.float32) + b1, 0.0)
        o_ref[b] = jnp.dot(h, w2, preferred_element_type=jnp.float32) + b2


def attention_block_pallas(q, kv, w_all, vec_all):
    G, B, T, E = q.shape
    S = kv.shape[2]
    return pl.pallas_call(
        _attn_mlp_kernel,
        grid=(G,),
        out_shape=jax.ShapeDtypeStruct((G, B, T, E), jnp.float32),
        in_specs=[
            pl.BlockSpec((None, B, T, E), lambda g: (g, 0, 0, 0)),
            pl.BlockSpec((None, B, S, E), lambda g: (g, 0, 0, 0)),
            pl.BlockSpec((None, 6 * E, E), lambda g: (g, 0, 0)),
            pl.BlockSpec((None, 8, E), lambda g: (g, 0, 0)),
        ],
        out_specs=pl.BlockSpec((None, B, T, E), lambda g: (g, 0, 0, 0)),
        compiler_params=pltpu.CompilerParams(
            dimension_semantics=("parallel",)),
    )(q, kv, w_all, vec_all)


# ------------- fused branch-multiply + x@Wx + LayerNorm (hoisted) ------------

def _rnn_in_kernel(att_ref, wx_ref, ln_ref, o_ref):
    B = att_ref.shape[1]
    g = ln_ref[0:1, :]
    b = ln_ref[1:2, :]
    a = att_ref[...]                          # (3, B, T, E) small
    w = wx_ref[...]                           # (E, 4H) bf16
    for bb in range(B):
        xb = a[0, bb] * a[1, bb] * a[2, bb]   # (T, E)  head*neck*state
        y = jnp.dot(xb.astype(jnp.bfloat16), w,
                    preferred_element_type=jnp.float32)
        o_ref[bb] = _ln(y, g, b)


def rnn_input_pallas(att, wx, lnx):
    _, B, T, _ = att.shape
    H4 = wx.shape[1]
    return pl.pallas_call(
        _rnn_in_kernel,
        out_shape=jax.ShapeDtypeStruct((B, T, H4), jnp.float32),
        in_specs=[_full_spec(att.shape), _full_spec(wx.shape),
                  _full_spec(lnx.shape)],
        out_specs=_full_spec((B, T, H4)),
    )(att, wx, lnx)


# --------------------------- layer-norm LSTM kernel -------------------------

def _lnlstm_kernel(xz_ref, m_ref, s_ref, wh_ref, ln4_ref, lnc_ref,
                   out_ref, hN_ref, cN_ref, h_sc, c_sc, *, t_block):
    tb = pl.program_id(0)
    H = h_sc.shape[1]

    @pl.when(tb == 0)
    def _():
        h_sc[...] = s_ref[:, :H]
        c_sc[...] = s_ref[:, H:]

    bias = ln4_ref[0:1, :]
    gh = ln4_ref[1:2, :]
    bh = ln4_ref[2:3, :]
    gc = lnc_ref[0:1, :]
    bc = lnc_ref[1:2, :]

    for i in range(t_block):                  # static, unrolled
        m = m_ref[i]                          # (B, 1); 1 = keep, 0 = reset
        h = h_sc[...] * m
        c = c_sc[...] * m
        hz = jnp.dot(h, wh_ref[...], preferred_element_type=jnp.float32)
        hz = _ln(hz, gh, bh)
        z = xz_ref[i] + hz + bias             # xz already LayerNorm(x @ Wx)
        i_g = jax.nn.sigmoid(z[:, 0 * H:1 * H])
        f_g = jax.nn.sigmoid(z[:, 1 * H:2 * H])
        o_g = jax.nn.sigmoid(z[:, 2 * H:3 * H])
        u = jnp.tanh(z[:, 3 * H:4 * H])
        c_new = f_g * c + i_g * u
        h_new = o_g * jnp.tanh(_ln(c_new, gc, bc))
        h_sc[...] = h_new
        c_sc[...] = c_new
        out_ref[i] = h_new

    @pl.when(tb == pl.num_programs(0) - 1)
    def _():
        hN_ref[...] = h_sc[...]
        cN_ref[...] = c_sc[...]


def lnlstm_pallas(xz, mask, states, p):
    T, B, H4 = xz.shape
    H = H4 // 4
    t_block = max(d for d in (8, 4, 2, 1) if T % d == 0)
    n_blk = T // t_block
    out, h_n, c_n = pl.pallas_call(
        functools.partial(_lnlstm_kernel, t_block=t_block),
        grid=(n_blk,),
        out_shape=(jax.ShapeDtypeStruct((T, B, H), jnp.float32),
                   jax.ShapeDtypeStruct((B, H), jnp.float32),
                   jax.ShapeDtypeStruct((B, H), jnp.float32)),
        in_specs=[
            pl.BlockSpec((t_block, B, H4), lambda t: (t, 0, 0)),
            pl.BlockSpec((t_block, B, 1), lambda t: (t, 0, 0)),
            pl.BlockSpec((B, 2 * H), lambda t: (0, 0)),
            pl.BlockSpec((H, 4 * H), lambda t: (0, 0)),
            pl.BlockSpec((3, 4 * H), lambda t: (0, 0)),
            pl.BlockSpec((2, H), lambda t: (0, 0)),
        ],
        out_specs=[
            pl.BlockSpec((t_block, B, H), lambda t: (t, 0, 0)),
            pl.BlockSpec((B, H), lambda t: (0, 0)),
            pl.BlockSpec((B, H), lambda t: (0, 0)),
        ],
        scratch_shapes=[pltpu.VMEM((B, H), jnp.float32),
                        pltpu.VMEM((B, H), jnp.float32)],
        compiler_params=pltpu.CompilerParams(
            dimension_semantics=("arbitrary",)),
    )(xz, mask, states, p["wh"], p["ln4"], p["lnc"])
    return out, h_n, c_n


# ------------------------------ conv glue (NHWC) ----------------------------

def _extract_patches(act, ksize, stride):
    # act: (G, N, H, W, C) NHWC per group -> (G, N*OH*OW, C*k*k), order (C,kh,kw)
    G, N, H, W, C = act.shape
    a = act.reshape(G * N, H, W, C)
    p = jax.lax.conv_general_dilated_patches(
        a, filter_shape=(ksize, ksize), window_strides=(stride, stride),
        padding="VALID", dimension_numbers=("NHWC", "HWIO", "NHWC"))
    OH = (H - ksize) // stride + 1
    OW = (W - ksize) // stride + 1
    return p.reshape(G, N * OH * OW, C * ksize * ksize), OH, OW


# --------------------------------- forward ----------------------------------

def forward(params, cfg, x, states, mask):
    # x: (T, B, state_dim + visual_dim), states: (B, 2H), mask: (T, B, 1)
    T, B, _ = x.shape
    sd, ic, whw = cfg["state_dim"], cfg["in_channels"], cfg["wh"]
    hid = cfg["hidden_dims"][-1]

    state_x = x[..., :sd]
    visual = x[..., sd:].astype(jnp.bfloat16).reshape(T * B, ic, whw, whw)
    visual = jnp.transpose(visual, (0, 2, 3, 1))           # NCHW -> NHWC
    g_act = jnp.stack([visual[..., :ic // 2], visual[..., ic // 2:]], axis=0)

    # conv stack: head/neck grouped, bf16, lane-dense NHWC activations
    for layer, (oc, k, s) in zip(params["conv"], _CONV_SPECS):
        G, N, _, _, _ = g_act.shape
        patches, OH, OW = _extract_patches(g_act, k, s)     # (2, M, K) bf16
        y = grouped_linear(patches, layer["w"], layer["b"],
                           relu=True, out_dtype=jnp.bfloat16)
        g_act = y.reshape(G, N, OH, OW, oc)

    # flatten in torch NCHW order so feature indices match nn.Flatten
    feat = jnp.transpose(g_act, (0, 1, 4, 2, 3)).reshape(2, T * B, -1)

    # both RLProjections in one grouped Pallas call
    proj = grouped_linear(feat, params["proj_w"], params["proj_b"],
                          relu=True, out_dtype=jnp.float32)  # (2, TB, hid)
    head = proj[0].reshape(T, B, hid).transpose(1, 0, 2)     # (B, T, E)
    neck = proj[1].reshape(T, B, hid).transpose(1, 0, 2)

    st = mlp_base_pallas(state_x.reshape(T * B, sd),
                         params["base_ws"], params["base_bs"])
    state = st.reshape(T, B, hid).transpose(1, 0, 2)         # (B, T, E)

    # three attention branches in one pallas_call (grid over branch)
    q = jnp.stack([head, neck, state], axis=0)               # (3, B, T, E)
    kv = jnp.stack([jnp.concatenate([neck, state], axis=1),  # head attends
                    jnp.concatenate([head, state], axis=1),  # neck attends
                    jnp.concatenate([head, neck], axis=1)],  # state attends
                   axis=0)                                    # (3, B, 2T, E)
    att = attention_block_pallas(q, kv, params["att_w"], params["att_v"])

    # hoisted LSTM input path: (head*neck*state) @ Wx -> LayerNorm
    xz = rnn_input_pallas(att, params["rnn"]["wx"], params["rnn"]["lnx"])
    xz = jnp.transpose(xz, (1, 0, 2))                         # (T, B, 4H)

    rnn_out, h_n, c_n = lnlstm_pallas(xz, mask, states, params["rnn"])
    return rnn_out, jnp.concatenate([h_n, c_n], axis=-1)


# ----------------------------- parameter init -------------------------------

def init_params(key, cfg):
    # TODO(synk): RLProjection / MLPBase assumed to be Linear + ReLU.
    ic2 = cfg["in_channels"] // 2
    hid = cfg["hidden_dims"][-1]
    E = hid
    keys = list(jax.random.split(key, 16))
    ki = iter(keys)

    conv = []
    c_in = ic2
    for oc, k, _ in _CONV_SPECS:
        K = c_in * k * k
        w = jax.random.normal(next(ki), (2, K, oc), jnp.float32) / math.sqrt(K)
        conv.append({"w": w.astype(jnp.bfloat16),
                     "b": jnp.zeros((2, 1, oc), jnp.float32)})
        c_in = oc

    feat_dim = 1024                                   # NatureEncoder.output_dim
    proj_w = (jax.random.normal(next(ki), (2, feat_dim, hid), jnp.float32)
              / math.sqrt(feat_dim)).astype(jnp.bfloat16)
    proj_b = jnp.zeros((2, 1, hid), jnp.float32)

    base_ws, base_bs = [], []
    dims = [cfg["state_dim"]] + list(cfg["hidden_dims"])
    for di, do in zip(dims[:-1], dims[1:]):
        base_ws.append(jax.random.normal(next(ki), (di, do), jnp.float32)
                       / math.sqrt(di))
        base_bs.append(jnp.zeros((1, do), jnp.float32))

    # attention + mlp weights, 3 branches (head, neck, state)
    # rows of att_w per branch: [Wq, Wk, Wv, Wo, mlp_W1, mlp_W2] each (E, E)
    att_w = jax.random.normal(next(ki), (3, 6 * E, E), jnp.float32) / math.sqrt(E)
    # rows of att_v per branch: [bq, bk, bv, bo, ln_g, ln_b, mlp_b1, mlp_b2]
    att_v = jnp.zeros((3, 8, E), jnp.float32).at[:, 4, :].set(1.0)

    H = hid
    wx = (jax.random.normal(next(ki), (E, 4 * H), jnp.float32)
          / math.sqrt(E)).astype(jnp.bfloat16)
    wh = jax.random.normal(next(ki), (H, 4 * H), jnp.float32) / math.sqrt(H)
    lnx = jnp.stack([jnp.ones((4 * H,), jnp.float32),      # gx
                     jnp.zeros((4 * H,), jnp.float32)])    # bx
    ln4 = jnp.stack([jnp.zeros((4 * H,), jnp.float32),     # bias b
                     jnp.ones((4 * H,), jnp.float32),      # gh
                     jnp.zeros((4 * H,), jnp.float32)])    # bh
    lnc = jnp.stack([jnp.ones((H,), jnp.float32),          # gc
                     jnp.zeros((H,), jnp.float32)])        # bc

    return {"conv": conv, "proj_w": proj_w, "proj_b": proj_b,
            "base_ws": base_ws, "base_bs": base_bs,
            "att_w": att_w, "att_v": att_v,
            "rnn": {"wx": wx, "wh": wh, "lnx": lnx, "ln4": ln4, "lnc": lnc}}


# ---------------------------------- driver ----------------------------------

if __name__ == "__main__":
    # 64x64 images are required for NatureEncoder.output_dim == 1024.
    cfg = {
        "in_channels": 4,
        "state_dim": 16,
        "hidden_dims": [64, 64],
        "wh": 64,
        "visual_dim": 4 * 64 * 64,
    }
    T, B = 2, 2
    hid = cfg["hidden_dims"][-1]

    key = jax.random.PRNGKey(0)
    kp, kx, kst = jax.random.split(key, 3)
    params = init_params(kp, cfg)

    x = jax.random.normal(kx, (T, B, cfg["state_dim"] + cfg["visual_dim"]),
                          jnp.float32)
    states = jax.random.normal(kst, (B, 2 * hid), jnp.float32) * 0.1
    mask = jnp.ones((T, B, 1), jnp.float32).at[1, 0, 0].set(0.0)

    fwd = jax.jit(lambda xx, ss, mm: forward(params, cfg, xx, ss, mm))
    rnn_out, new_states = fwd(x, states, mask)
    jax.block_until_ready((rnn_out, new_states))

    assert rnn_out.shape == (T, B, hid)
    assert new_states.shape == (B, 2 * hid)
    assert bool(jnp.all(jnp.isfinite(rnn_out)))
    assert bool(jnp.all(jnp.isfinite(new_states)))
    print("KERNEL_OK")
</pallas_src>

<mosaic_0001>
module attributes {stable_mosaic.version = 11 : i64} {
  func.func @_grouped_linear_kernel(%arg0: i32, %arg1: i32, %arg2: memref<1x512x128xbf16, #tpu.memory_space<vmem>>, %arg3: memref<1x128x32xbf16, #tpu.memory_space<vmem>>, %arg4: memref<1x1x32xf32, #tpu.memory_space<vmem>>, %arg5: memref<1x512x32xbf16, #tpu.memory_space<vmem>>) attributes {dimension_semantics = [#tpu.dimension_semantics<parallel>, #tpu.dimension_semantics<parallel>], iteration_bounds = array<i64: 2, 2>, scalar_prefetch = 0 : i64, scratch_operands = 0 : i64, tpu.core_type = #tpu.core_type<tc>, window_params = [{transform_indices = @transform_0, window_bounds = array<i64: 1, 512, 128>}, {transform_indices = @transform_1, window_bounds = array<i64: 1, 128, 32>}, {transform_indices = @transform_2, window_bounds = array<i64: 1, 1, 32>}, {transform_indices = @transform_3, window_bounds = array<i64: 1, 512, 32>}]} {
    %c0 = arith.constant 0 : index
    %c0_0 = arith.constant 0 : index
    %c0_1 = arith.constant 0 : index
    %0 = vector.load %arg2[%c0, %c0_0, %c0_1] : memref<1x512x128xbf16, #tpu.memory_space<vmem>>, vector<1x512x128xbf16>
    %1 = vector.shape_cast %0 : vector<1x512x128xbf16> to vector<512x128xbf16>
    %c0_2 = arith.constant 0 : index
    %c0_3 = arith.constant 0 : index
    %c0_4 = arith.constant 0 : index
    %2 = vector.load %arg3[%c0_2, %c0_3, %c0_4] : memref<1x128x32xbf16, #tpu.memory_space<vmem>>, vector<1x128x32xbf16>
    %3 = vector.shape_cast %2 : vector<1x128x32xbf16> to vector<128x32xbf16>
    %cst = arith.constant dense<0.000000e+00> : vector<512x32xf32>
    %4 = tpu.matmul %1, %3, %cst {dimension_numbers = #tpu.dot_dimension_numbers<[1], [0], [0], [1], [0, 0, 1, 1], [], []>} : vector<512x128xbf16>, vector<128x32xbf16>, vector<512x32xf32> -> vector<512x32xf32>
    %c0_5 = arith.constant 0 : index
    %c0_6 = arith.constant 0 : index
    %c0_7 = arith.constant 0 : index
    %5 = vector.load %arg4[%c0_5, %c0_6, %c0_7] : memref<1x1x32xf32, #tpu.memory_space<vmem>>, vector<1x1x32xf32>
    %6 = vector.shape_cast %5 : vector<1x1x32xf32> to vector<1x32xf32>
    %7 = vector.broadcast %6 : vector<1x32xf32> to vector<512x32xf32>
    %8 = arith.addf %4, %7 : vector<512x32xf32>
    %cst_8 = arith.constant 0.000000e+00 : f32
    %9 = vector.broadcast %cst_8 : f32 to vector<512x32xf32>
    %10 = arith.maximumf %8, %9 : vector<512x32xf32>
    %11 = arith.truncf %10 : vector<512x32xf32> to vector<512x32xbf16>
    %c0_9 = arith.constant 0 : index
    %c0_10 = arith.constant 0 : index
    %c0_11 = arith.constant 0 : index
    %12 = vector.load %arg5[%c0_9, %c0_10, %c0_11] : memref<1x512x32xbf16, #tpu.memory_space<vmem>>, vector<1x512x32xbf16>
    %13 = vector.shape_cast %12 : vector<1x512x32xbf16> to vector<512x32xbf16>
    %14 = vector.shape_cast %11 : vector<512x32xbf16> to vector<1x512x32xbf16>
    tpu.vector_store %arg5[%c0_9, %c0_10, %c0_11], %14 {strides = array<i32>} : memref<1x512x32xbf16, #tpu.memory_space<vmem>>, vector<1x512x32xbf16>,
    return
  }
  func.func @transform_0(%arg0: i32, %arg1: i32) -> (i32, i32, i32) {
    %c0_i32 = arith.constant 0 : i32
    %c0_i32_0 = arith.constant 0 : i32
    return %arg0, %arg1, %c0_i32 : i32, i32, i32
  }
  func.func @transform_1(%arg0: i32, %arg1: i32) -> (i32, i32, i32) {
    %c0_i32 = arith.constant 0 : i32
    %c0_i32_0 = arith.constant 0 : i32
    %c0_i32_1 = arith.constant 0 : i32
    return %arg0, %c0_i32, %c0_i32_0 : i32, i32, i32
  }
  func.func @transform_2(%arg0: i32, %arg1: i32) -> (i32, i32, i32) {
    %c0_i32 = arith.constant 0 : i32
    %c0_i32_0 = arith.constant 0 : i32
    %c0_i32_1 = arith.constant 0 : i32
    return %arg0, %c0_i32, %c0_i32_0 : i32, i32, i32
  }
  func.func @transform_3(%arg0: i32, %arg1: i32) -> (i32, i32, i32) {
    %c0_i32 = arith.constant 0 : i32
    %c0_i32_0 = arith.constant 0 : i32
    return %arg0, %arg1, %c0_i32 : i32, i32, i32
  }
}

module attributes {stable_mosaic.version = 11 : i64} {
  func.func @_grouped_linear_kernel(%arg0: i32, %arg1: i32, %arg2: memref<1x144x512xbf16, #tpu.memory_space<vmem>>, %arg3: memref<1x512x64xbf16, #tpu.memory_space<vmem>>, %arg4: memref<1x1x64xf32, #tpu.memory_space<vmem>>, %arg5: memref<1x144x64xbf16, #tpu.memory_space<vmem>>) attributes {dimension_semantics = [#tpu.dimension_semantics<parallel>, #tpu.dimension_semantics<parallel>], iteration_bounds = array<i64: 2, 1>, scalar_prefetch = 0 : i64, scratch_operands = 0 : i64, tpu.core_type = #tpu.core_type<tc>, window_params = [{transform_indices = @transform_0, window_bounds = array<i64: 1, 144, 512>}, {transform_indices = @transform_1, window_bounds = array<i64: 1, 512, 64>}, {transform_indices = @transform_2, window_bounds = array<i64: 1, 1, 64>}, {transform_indices = @transform_3, window_bounds = array<i64: 1, 144, 64>}]} {
    %c0 = arith.constant 0 : index
    %c0_0 = arith.constant 0 : index
    %c0_1 = arith.constant 0 : index
    %0 = vector.load %arg2[%c0, %c0_0, %c0_1] : memref<1x144x512xbf16, #tpu.memory_space<vmem>>, vector<1x144x512xbf16>
    %1 = vector.shape_cast %0 : vector<1x144x512xbf16> to vector<144x512xbf16>
    %c0_2 = arith.constant 0 : index
    %c0_3 = arith.constant 0 : index
    %c0_4 = arith.constant 0 : index
    %2 = vector.load %arg3[%c0_2, %c0_3, %c0_4] : memref<1x512x64xbf16, #tpu.memory_space<vmem>>, vector<1x512x64xbf16>
    %3 = vector.shape_cast %2 : vector<1x512x64xbf16> to vector<512x64xbf16>
    %cst = arith.constant dense<0.000000e+00> : vector<144x64xf32>
    %4 = tpu.matmul %1, %3, %cst {dimension_numbers = #tpu.dot_dimension_numbers<[1], [0], [0], [1], [0, 0, 1, 1], [], []>} : vector<144x512xbf16>, vector<512x64xbf16>, vector<144x64xf32> -> vector<144x64xf32>
    %c0_5 = arith.constant 0 : index
    %c0_6 = arith.constant 0 : index
    %c0_7 = arith.constant 0 : index
    %5 = vector.load %arg4[%c0_5, %c0_6, %c0_7] : memref<1x1x64xf32, #tpu.memory_space<vmem>>, vector<1x1x64xf32>
    %6 = vector.shape_cast %5 : vector<1x1x64xf32> to vector<1x64xf32>
    %7 = vector.broadcast %6 : vector<1x64xf32> to vector<144x64xf32>
    %8 = arith.addf %4, %7 : vector<144x64xf32>
    %cst_8 = arith.constant 0.000000e+00 : f32
    %9 = vector.broadcast %cst_8 : f32 to vector<144x64xf32>
    %10 = arith.maximumf %8, %9 : vector<144x64xf32>
    %11 = arith.truncf %10 : vector<144x64xf32> to vector<144x64xbf16>
    %c0_9 = arith.constant 0 : index
    %c0_10 = arith.constant 0 : index
    %c0_11 = arith.constant 0 : index
    %12 = vector.load %arg5[%c0_9, %c0_10, %c0_11] : memref<1x144x64xbf16, #tpu.memory_space<vmem>>, vector<1x144x64xbf16>
    %13 = vector.shape_cast %12 : vector<1x144x64xbf16> to vector<144x64xbf16>
    %14 = vector.shape_cast %11 : vector<144x64xbf16> to vector<1x144x64xbf16>
    tpu.vector_store %arg5[%c0_9, %c0_10, %c0_11], %14 {strides = array<i32>} : memref<1x144x64xbf16, #tpu.memory_space<vmem>>, vector<1x144x64xbf16>,
    return
  }
  func.func @transform_0(%arg0: i32, %arg1: i32) -> (i32, i32, i32) {
    %c0_i32 = arith.constant 0 : i32
    %c0_i32_0 = arith.constant 0 : i32
    return %arg0, %arg1, %c0_i32 : i32, i32, i32
  }
  func.func @transform_1(%arg0: i32, %arg1: i32) -> (i32, i32, i32) {
    %c0_i32 = arith.constant 0 : i32
    %c0_i32_0 = arith.constant 0 : i32
    %c0_i32_1 = arith.constant 0 : i32
    return %arg0, %c0_i32, %c0_i32_0 : i32, i32, i32
  }
  func.func @transform_2(%arg0: i32, %arg1: i32) -> (i32, i32, i32) {
    %c0_i32 = arith.constant 0 : i32
    %c0_i32_0 = arith.constant 0 : i32
    %c0_i32_1 = arith.constant 0 : i32
    return %arg0, %c0_i32, %c0_i32_0 : i32, i32, i32
  }
  func.func @transform_3(%arg0: i32, %arg1: i32) -> (i32, i32, i32) {
    %c0_i32 = arith.constant 0 : i32
    %c0_i32_0 = arith.constant 0 : i32
    return %arg0, %arg1, %c0_i32 : i32, i32, i32
  }
}

module attributes {stable_mosaic.version = 11 : i64} {
  func.func @_grouped_linear_kernel(%arg0: i32, %arg1: i32, %arg2: memref<1x64x576xbf16, #tpu.memory_space<vmem>>, %arg3: memref<1x576x64xbf16, #tpu.memory_space<vmem>>, %arg4: memref<1x1x64xf32, #tpu.memory_space<vmem>>, %arg5: memref<1x64x64xbf16, #tpu.memory_space<vmem>>) attributes {dimension_semantics = [#tpu.dimension_semantics<parallel>, #tpu.dimension_semantics<parallel>], iteration_bounds = array<i64: 2, 1>, scalar_prefetch = 0 : i64, scratch_operands = 0 : i64, tpu.core_type = #tpu.core_type<tc>, window_params = [{transform_indices = @transform_0, window_bounds = array<i64: 1, 64, 576>}, {transform_indices = @transform_1, window_bounds = array<i64: 1, 576, 64>}, {transform_indices = @transform_2, window_bounds = array<i64: 1, 1, 64>}, {transform_indices = @transform_3, window_bounds = array<i64: 1, 64, 64>}]} {
    %c0 = arith.constant 0 : index
    %c0_0 = arith.constant 0 : index
    %c0_1 = arith.constant 0 : index
    %0 = vector.load %arg2[%c0, %c0_0, %c0_1] : memref<1x64x576xbf16, #tpu.memory_space<vmem>>, vector<1x64x576xbf16>
    %1 = vector.shape_cast %0 : vector<1x64x576xbf16> to vector<64x576xbf16>
    %c0_2 = arith.constant 0 : index
    %c0_3 = arith.constant 0 : index
    %c0_4 = arith.constant 0 : index
    %2 = vector.load %arg3[%c0_2, %c0_3, %c0_4] : memref<1x576x64xbf16, #tpu.memory_space<vmem>>, vector<1x576x64xbf16>
    %3 = vector.shape_cast %2 : vector<1x576x64xbf16> to vector<576x64xbf16>
    %cst = arith.constant dense<0.000000e+00> : vector<64x64xf32>
    %4 = tpu.matmul %1, %3, %cst {dimension_numbers = #tpu.dot_dimension_numbers<[1], [0], [0], [1], [0, 0, 1, 1], [], []>} : vector<64x576xbf16>, vector<576x64xbf16>, vector<64x64xf32> -> vector<64x64xf32>
    %c0_5 = arith.constant 0 : index
    %c0_6 = arith.constant 0 : index
    %c0_7 = arith.constant 0 : index
    %5 = vector.load %arg4[%c0_5, %c0_6, %c0_7] : memref<1x1x64xf32, #tpu.memory_space<vmem>>, vector<1x1x64xf32>
    %6 = vector.shape_cast %5 : vector<1x1x64xf32> to vector<1x64xf32>
    %7 = vector.broadcast %6 : vector<1x64xf32> to vector<64x64xf32>
    %8 = arith.addf %4, %7 : vector<64x64xf32>
    %cst_8 = arith.constant 0.000000e+00 : f32
    %9 = vector.broadcast %cst_8 : f32 to vector<64x64xf32>
    %10 = arith.maximumf %8, %9 : vector<64x64xf32>
    %11 = arith.truncf %10 : vector<64x64xf32> to vector<64x64xbf16>
    %c0_9 = arith.constant 0 : index
    %c0_10 = arith.constant 0 : index
    %c0_11 = arith.constant 0 : index
    %12 = vector.load %arg5[%c0_9, %c0_10, %c0_11] : memref<1x64x64xbf16, #tpu.memory_space<vmem>>, vector<1x64x64xbf16>
    %13 = vector.shape_cast %12 : vector<1x64x64xbf16> to vector<64x64xbf16>
    %14 = vector.shape_cast %11 : vector<64x64xbf16> to vector<1x64x64xbf16>
    tpu.vector_store %arg5[%c0_9, %c0_10, %c0_11], %14 {strides = array<i32>} : memref<1x64x64xbf16, #tpu.memory_space<vmem>>, vector<1x64x64xbf16>,
    return
  }
  func.func @transform_0(%arg0: i32, %arg1: i32) -> (i32, i32, i32) {
    %c0_i32 = arith.constant 0 : i32
    %c0_i32_0 = arith.constant 0 : i32
    return %arg0, %arg1, %c0_i32 : i32, i32, i32
  }
  func.func @transform_1(%arg0: i32, %arg1: i32) -> (i32, i32, i32) {
    %c0_i32 = arith.constant 0 : i32
    %c0_i32_0 = arith.constant 0 : i32
    %c0_i32_1 = arith.constant 0 : i32
    return %arg0, %c0_i32, %c0_i32_0 : i32, i32, i32
  }
  func.func @transform_2(%arg0: i32, %arg1: i32) -> (i32, i32, i32) {
    %c0_i32 = arith.constant 0 : i32
    %c0_i32_0 = arith.constant 0 : i32
    %c0_i32_1 = arith.constant 0 : i32
    return %arg0, %c0_i32, %c0_i32_0 : i32, i32, i32
  }
  func.func @transform_3(%arg0: i32, %arg1: i32) -> (i32, i32, i32) {
    %c0_i32 = arith.constant 0 : i32
    %c0_i32_0 = arith.constant 0 : i32
    return %arg0, %arg1, %c0_i32 : i32, i32, i32
  }
}

module attributes {stable_mosaic.version = 11 : i64} {
  func.func @_grouped_linear_kernel(%arg0: i32, %arg1: i32, %arg2: memref<1x8x1024xbf16, #tpu.memory_space<vmem>>, %arg3: memref<1x1024x64xbf16, #tpu.memory_space<vmem>>, %arg4: memref<1x1x64xf32, #tpu.memory_space<vmem>>, %arg5: memref<1x8x64xf32, #tpu.memory_space<vmem>>) attributes {dimension_semantics = [#tpu.dimension_semantics<parallel>, #tpu.dimension_semantics<parallel>], iteration_bounds = array<i64: 2, 1>, scalar_prefetch = 0 : i64, scratch_operands = 0 : i64, tpu.core_type = #tpu.core_type<tc>, window_params = [{transform_indices = @transform_0, window_bounds = array<i64: 1, 8, 1024>}, {transform_indices = @transform_1, window_bounds = array<i64: 1, 1024, 64>}, {transform_indices = @transform_2, window_bounds = array<i64: 1, 1, 64>}, {transform_indices = @transform_3, window_bounds = array<i64: 1, 8, 64>}]} {
    %c0 = arith.constant 0 : index
    %c0_0 = arith.constant 0 : index
    %c0_1 = arith.constant 0 : index
    %0 = vector.load %arg2[%c0, %c0_0, %c0_1] : memref<1x8x1024xbf16, #tpu.memory_space<vmem>>, vector<1x8x1024xbf16>
    %1 = vector.shape_cast %0 : vector<1x8x1024xbf16> to vector<8x1024xbf16>
    %c0_2 = arith.constant 0 : index
    %c0_3 = arith.constant 0 : index
    %c0_4 = arith.constant 0 : index
    %2 = vector.load %arg3[%c0_2, %c0_3, %c0_4] : memref<1x1024x64xbf16, #tpu.memory_space<vmem>>, vector<1x1024x64xbf16>
    %3 = vector.shape_cast %2 : vector<1x1024x64xbf16> to vector<1024x64xbf16>
    %cst = arith.constant dense<0.000000e+00> : vector<8x64xf32>
    %4 = tpu.matmul %1, %3, %cst {dimension_numbers = #tpu.dot_dimension_numbers<[1], [0], [0], [1], [0, 0, 1, 1], [], []>} : vector<8x1024xbf16>, vector<1024x64xbf16>, vector<8x64xf32> -> vector<8x64xf32>
    %c0_5 = arith.constant 0 : index
    %c0_6 = arith.constant 0 : index
    %c0_7 = arith.constant 0 : index
    %5 = vector.load %arg4[%c0_5, %c0_6, %c0_7] : memref<1x1x64xf32, #tpu.memory_space<vmem>>, vector<1x1x64xf32>
    %6 = vector.shape_cast %5 : vector<1x1x64xf32> to vector<1x64xf32>
    %7 = vector.broadcast %6 : vector<1x64xf32> to vector<8x64xf32>
    %8 = arith.addf %4, %7 : vector<8x64xf32>
    %cst_8 = arith.constant 0.000000e+00 : f32
    %9 = vector.broadcast %cst_8 : f32 to vector<8x64xf32>
    %10 = arith.maximumf %8, %9 : vector<8x64xf32>
    %c0_9 = arith.constant 0 : index
    %c0_10 = arith.constant 0 : index
    %c0_11 = arith.constant 0 : index
    %11 = vector.load %arg5[%c0_9, %c0_10, %c0_11] : memref<1x8x64xf32, #tpu.memory_space<vmem>>, vector<1x8x64xf32>
    %12 = vector.shape_cast %11 : vector<1x8x64xf32> to vector<8x64xf32>
    %13 = vector.shape_cast %10 : vector<8x64xf32> to vector<1x8x64xf32>
    tpu.vector_store %arg5[%c0_9, %c0_10, %c0_11], %13 {strides = array<i32>} : memref<1x8x64xf32, #tpu.memory_space<vmem>>, vector<1x8x64xf32>,
    return
  }
  func.func @transform_0(%arg0: i32, %arg1: i32) -> (i32, i32, i32) {
    %c0_i32 = arith.constant 0 : i32
    %c0_i32_0 = arith.constant 0 : i32
    return %arg0, %arg1, %c0_i32 : i32, i32, i32
  }
  func.func @transform_1(%arg0: i32, %arg1: i32) -> (i32, i32, i32) {
    %c0_i32 = arith.constant 0 : i32
    %c0_i32_0 = arith.constant 0 : i32
    %c0_i32_1 = arith.constant 0 : i32
    return %arg0, %c0_i32, %c0_i32_0 : i32, i32, i32
  }
  func.func @transform_2(%arg0: i32, %arg1: i32) -> (i32, i32, i32) {
    %c0_i32 = arith.constant 0 : i32
    %c0_i32_0 = arith.constant 0 : i32
    %c0_i32_1 = arith.constant 0 : i32
    return %arg0, %c0_i32, %c0_i32_0 : i32, i32, i32
  }
  func.func @transform_3(%arg0: i32, %arg1: i32) -> (i32, i32, i32) {
    %c0_i32 = arith.constant 0 : i32
    %c0_i32_0 = arith.constant 0 : i32
    return %arg0, %arg1, %c0_i32 : i32, i32, i32
  }
}

module attributes {stable_mosaic.version = 11 : i64} {
  func.func @_mlp_chain_kernel(%arg0: memref<4x16xf32, #tpu.memory_space<vmem>>, %arg1: memref<16x64xf32, #tpu.memory_space<vmem>>, %arg2: memref<1x64xf32, #tpu.memory_space<vmem>>, %arg3: memref<64x64xf32, #tpu.memory_space<vmem>>, %arg4: memref<1x64xf32, #tpu.memory_space<vmem>>, %arg5: memref<4x64xf32, #tpu.memory_space<vmem>>) attributes {dimension_semantics = [], scalar_prefetch = 0 : i64, scratch_operands = 0 : i64, tpu.core_type = #tpu.core_type<tc>} {
    %c0 = arith.constant 0 : index
    %c0_0 = arith.constant 0 : index
    %0 = vector.load %arg0[%c0, %c0_0] : memref<4x16xf32, #tpu.memory_space<vmem>>, vector<4x16xf32>
    %c0_1 = arith.constant 0 : index
    %c0_2 = arith.constant 0 : index
    %1 = vector.load %arg1[%c0_1, %c0_2] : memref<16x64xf32, #tpu.memory_space<vmem>>, vector<16x64xf32>
    %cst = arith.constant dense<0.000000e+00> : vector<4x64xf32>
    %2 = tpu.matmul %0, %1, %cst {dimension_numbers = #tpu.dot_dimension_numbers<[1], [0], [0], [1], [0, 0, 1, 1], [], []>} : vector<4x16xf32>, vector<16x64xf32>, vector<4x64xf32> -> vector<4x64xf32>
    %c0_3 = arith.constant 0 : index
    %c0_4 = arith.constant 0 : index
    %3 = vector.load %arg2[%c0_3, %c0_4] : memref<1x64xf32, #tpu.memory_space<vmem>>, vector<1x64xf32>
    %4 = vector.broadcast %3 : vector<1x64xf32> to vector<4x64xf32>
    %5 = arith.addf %2, %4 : vector<4x64xf32>
    %cst_5 = arith.constant 0.000000e+00 : f32
    %6 = vector.broadcast %cst_5 : f32 to vector<4x64xf32>
    %7 = arith.maximumf %5, %6 : vector<4x64xf32>
    %c0_6 = arith.constant 0 : index
    %c0_7 = arith.constant 0 : index
    %8 = vector.load %arg3[%c0_6, %c0_7] : memref<64x64xf32, #tpu.memory_space<vmem>>, vector<64x64xf32>
    %cst_8 = arith.constant dense<0.000000e+00> : vector<4x64xf32>
    %9 = tpu.matmul %7, %8, %cst_8 {dimension_numbers = #tpu.dot_dimension_numbers<[1], [0], [0], [1], [0, 0, 1, 1], [], []>} : vector<4x64xf32>, vector<64x64xf32>, vector<4x64xf32> -> vector<4x64xf32>
    %c0_9 = arith.constant 0 : index
    %c0_10 = arith.constant 0 : index
    %10 = vector.load %arg4[%c0_9, %c0_10] : memref<1x64xf32, #tpu.memory_space<vmem>>, vector<1x64xf32>
    %11 = vector.broadcast %10 : vector<1x64xf32> to vector<4x64xf32>
    %12 = arith.addf %9, %11 : vector<4x64xf32>
    %cst_11 = arith.constant 0.000000e+00 : f32
    %13 = vector.broadcast %cst_11 : f32 to vector<4x64xf32>
    %14 = arith.maximumf %12, %13 : vector<4x64xf32>
    %c0_12 = arith.constant 0 : index
    %c0_13 = arith.constant 0 : index
    %15 = vector.load %arg5[%c0_12, %c0_13] : memref<4x64xf32, #tpu.memory_space<vmem>>, vector<4x64xf32>
    tpu.vector_store %arg5[%c0_12, %c0_13], %14 {strides = array<i32>} : memref<4x64xf32, #tpu.memory_space<vmem>>, vector<4x64xf32>,
    return
  }
}

module attributes {stable_mosaic.version = 11 : i64} {
  func.func @_rnn_in_kernel(%arg0: memref<3x2x2x64xf32, #tpu.memory_space<vmem>>, %arg1: memref<64x256xbf16, #tpu.memory_space<vmem>>, %arg2: memref<2x256xf32, #tpu.memory_space<vmem>>, %arg3: memref<2x2x256xf32, #tpu.memory_space<vmem>>) attributes {dimension_semantics = [], scalar_prefetch = 0 : i64, scratch_operands = 0 : i64, tpu.core_type = #tpu.core_type<tc>} {
    %c0 = arith.constant 0 : index
    %c0_0 = arith.constant 0 : index
    %0 = vector.load %arg2[%c0, %c0_0] : memref<2x256xf32, #tpu.memory_space<vmem>>, vector<1x256xf32>
    %c1 = arith.constant 1 : index
    %c0_1 = arith.constant 0 : index
    %1 = vector.load %arg2[%c1, %c0_1] : memref<2x256xf32, #tpu.memory_space<vmem>>, vector<1x256xf32>
    %c0_2 = arith.constant 0 : index
    %c0_3 = arith.constant 0 : index
    %c0_4 = arith.constant 0 : index
    %c0_5 = arith.constant 0 : index
    %2 = vector.load %arg0[%c0_2, %c0_3, %c0_4, %c0_5] : memref<3x2x2x64xf32, #tpu.memory_space<vmem>>, vector<3x2x2x64xf32>
    %c0_6 = arith.constant 0 : index
    %c0_7 = arith.constant 0 : index
    %3 = vector.load %arg1[%c0_6, %c0_7] : memref<64x256xbf16, #tpu.memory_space<vmem>>, vector<64x256xbf16>
    %4 = vector.extract_strided_slice %2 {offsets = [0, 0, 0, 0], sizes = [1, 1, 2, 64], strides = [1, 1, 1, 1]} : vector<3x2x2x64xf32> to vector<1x1x2x64xf32>
    %5 = vector.shape_cast %4 : vector<1x1x2x64xf32> to vector<2x64xf32>
    %6 = vector.extract_strided_slice %2 {offsets = [1, 0, 0, 0], sizes = [1, 1, 2, 64], strides = [1, 1, 1, 1]} : vector<3x2x2x64xf32> to vector<1x1x2x64xf32>
    %7 = vector.shape_cast %6 : vector<1x1x2x64xf32> to vector<2x64xf32>
    %8 = arith.mulf %5, %7 : vector<2x64xf32>
    %9 = vector.extract_strided_slice %2 {offsets = [2, 0, 0, 0], sizes = [1, 1, 2, 64], strides = [1, 1, 1, 1]} : vector<3x2x2x64xf32> to vector<1x1x2x64xf32>
    %10 = vector.shape_cast %9 : vector<1x1x2x64xf32> to vector<2x64xf32>
    %11 = arith.mulf %8, %10 : vector<2x64xf32>
    %12 = arith.truncf %11 : vector<2x64xf32> to vector<2x64xbf16>
    %cst = arith.constant dense<0.000000e+00> : vector<2x256xf32>
    %13 = tpu.matmul %12, %3, %cst {dimension_numbers = #tpu.dot_dimension_numbers<[1], [0], [0], [1], [0, 0, 1, 1], [], []>} : vector<2x64xbf16>, vector<64x256xbf16>, vector<2x256xf32> -> vector<2x256xf32>
    %cst_8 = arith.constant dense<0.000000e+00> : vector<2xf32>
    %14 = vector.multi_reduction <add>, %13, %cst_8 [1] : vector<2x256xf32> to vector<2xf32>
    %15 = vector.shape_cast %14 : vector<2xf32> to vector<2x1xf32>
    %cst_9 = arith.constant 2.560000e+02 : f32
    %16 = vector.broadcast %cst_9 : f32 to vector<2x1xf32>
    %17 = arith.divf %15, %16 : vector<2x1xf32>
    %18 = vector.broadcast %17 : vector<2x1xf32> to vector<2x256xf32>
    %19 = arith.subf %13, %18 : vector<2x256xf32>
    %20 = arith.mulf %19, %19 : vector<2x256xf32>
    %cst_10 = arith.constant dense<0.000000e+00> : vector<2xf32>
    %21 = vector.multi_reduction <add>, %20, %cst_10 [1] : vector<2x256xf32> to vector<2xf32>
    %22 = vector.shape_cast %21 : vector<2xf32> to vector<2x1xf32>
    %cst_11 = arith.constant 2.560000e+02 : f32
    %23 = vector.broadcast %cst_11 : f32 to vector<2x1xf32>
    %24 = arith.divf %22, %23 : vector<2x1xf32>
    %25 = vector.broadcast %17 : vector<2x1xf32> to vector<2x256xf32>
    %26 = arith.subf %13, %25 : vector<2x256xf32>
    %cst_12 = arith.constant 9.99999974E-6 : f32
    %27 = vector.broadcast %cst_12 : f32 to vector<2x1xf32>
    %28 = arith.addf %24, %27 : vector<2x1xf32>
    %29 = math.rsqrt %28 : vector<2x1xf32>
    %30 = vector.broadcast %29 : vector<2x1xf32> to vector<2x256xf32>
    %31 = arith.mulf %26, %30 : vector<2x256xf32>
    %32 = vector.broadcast %0 : vector<1x256xf32> to vector<2x256xf32>
    %33 = arith.mulf %31, %32 : vector<2x256xf32>
    %34 = vector.broadcast %1 : vector<1x256xf32> to vector<2x256xf32>
    %35 = arith.addf %33, %34 : vector<2x256xf32>
    %c0_13 = arith.constant 0 : index
    %c0_14 = arith.constant 0 : index
    %c0_15 = arith.constant 0 : index
    %36 = vector.load %arg3[%c0_13, %c0_14, %c0_15] : memref<2x2x256xf32, #tpu.memory_space<vmem>>, vector<1x2x256xf32>
    %37 = vector.shape_cast %36 : vector<1x2x256xf32> to vector<2x256xf32>
    %38 = vector.shape_cast %35 : vector<2x256xf32> to vector<1x2x256xf32>
    tpu.vector_store %arg3[%c0_13, %c0_14, %c0_15], %38 {strides = array<i32>} : memref<2x2x256xf32, #tpu.memory_space<vmem>>, vector<1x2x256xf32>,
    %39 = vector.extract_strided_slice %2 {offsets = [0, 1, 0, 0], sizes = [1, 1, 2, 64], strides = [1, 1, 1, 1]} : vector<3x2x2x64xf32> to vector<1x1x2x64xf32>
    %40 = vector.shape_cast %39 : vector<1x1x2x64xf32> to vector<2x64xf32>
    %41 = vector.extract_strided_slice %2 {offsets = [1, 1, 0, 0], sizes = [1, 1, 2, 64], strides = [1, 1, 1, 1]} : vector<3x2x2x64xf32> to vector<1x1x2x64xf32>
    %42 = vector.shape_cast %41 : vector<1x1x2x64xf32> to vector<2x64xf32>
    %43 = arith.mulf %40, %42 : vector<2x64xf32>
    %44 = vector.extract_strided_slice %2 {offsets = [2, 1, 0, 0], sizes = [1, 1, 2, 64], strides = [1, 1, 1, 1]} : vector<3x2x2x64xf32> to vector<1x1x2x64xf32>
    %45 = vector.shape_cast %44 : vector<1x1x2x64xf32> to vector<2x64xf32>
    %46 = arith.mulf %43, %45 : vector<2x64xf32>
    %47 = arith.truncf %46 : vector<2x64xf32> to vector<2x64xbf16>
    %cst_16 = arith.constant dense<0.000000e+00> : vector<2x256xf32>
    %48 = tpu.matmul %47, %3, %cst_16 {dimension_numbers = #tpu.dot_dimension_numbers<[1], [0], [0], [1], [0, 0, 1, 1], [], []>} : vector<2x64xbf16>, vector<64x256xbf16>, vector<2x256xf32> -> vector<2x256xf32>
    %cst_17 = arith.constant dense<0.000000e+00> : vector<2xf32>
    %49 = vector.multi_reduction <add>, %48, %cst_17 [1] : vector<2x256xf32> to vector<2xf32>
    %50 = vector.shape_cast %49 : vector<2xf32> to vector<2x1xf32>
    %cst_18 = arith.constant 2.560000e+02 : f32
    %51 = vector.broadcast %cst_18 : f32 to vector<2x1xf32>
    %52 = arith.divf %50, %51 : vector<2x1xf32>
    %53 = vector.broadcast %52 : vector<2x1xf32> to vector<2x256xf32>
    %54 = arith.subf %48, %53 : vector<2x256xf32>
    %55 = arith.mulf %54, %54 : vector<2x256xf32>
    %cst_19 = arith.constant dense<0.000000e+00> : vector<2xf32>
    %56 = vector.multi_reduction <add>, %55, %cst_19 [1] : vector<2x256xf32> to vector<2xf32>
    %57 = vector.shape_cast %56 : vector<2xf32> to vector<2x1xf32>
    %cst_20 = arith.constant 2.560000e+02 : f32
    %58 = vector.broadcast %cst_20 : f32 to vector<2x1xf32>
    %59 = arith.divf %57, %58 : vector<2x1xf32>
    %60 = vector.broadcast %52 : vector<2x1xf32> to vector<2x256xf32>
    %61 = arith.subf %48, %60 : vector<2x256xf32>
    %cst_21 = arith.constant 9.99999974E-6 : f32
    %62 = vector.broadcast %cst_21 : f32 to vector<2x1xf32>
    %63 = arith.addf %59, %62 : vector<2x1xf32>
    %64 = math.rsqrt %63 : vector<2x1xf32>
    %65 = vector.broadcast %64 : vector<2x1xf32> to vector<2x256xf32>
    %66 = arith.mulf %61, %65 : vector<2x256xf32>
    %67 = vector.broadcast %0 : vector<1x256xf32> to vector<2x256xf32>
    %68 = arith.mulf %66, %67 : vector<2x256xf32>
    %69 = vector.broadcast %1 : vector<1x256xf32> to vector<2x256xf32>
    %70 = arith.addf %68, %69 : vector<2x256xf32>
    %c1_22 = arith.constant 1 : index
    %c0_23 = arith.constant 0 : index
    %c0_24 = arith.constant 0 : index
    %71 = vector.load %arg3[%c1_22, %c0_23, %c0_24] : memref<2x2x256xf32, #tpu.memory_space<vmem>>, vector<1x2x256xf32>
    %72 = vector.shape_cast %71 : vector<1x2x256xf32> to vector<2x256xf32>
    %73 = vector.shape_cast %70 : vector<2x256xf32> to vector<1x2x256xf32>
    tpu.vector_store %arg3[%c1_22, %c0_23, %c0_24], %73 {strides = array<i32>} : memref<2x2x256xf32, #tpu.memory_space<vmem>>, vector<1x2x256xf32>,
    return
  }
}

module attributes {stable_mosaic.version = 11 : i64} {
  func.func @_attn_mlp_kernel(%arg0: i32, %arg1: memref<1x2x2x64xf32, #tpu.memory_space<vmem>>, %arg2: memref<1x2x4x64xf32, #tpu.memory_space<vmem>>, %arg3: memref<1x384x64xf32, #tpu.memory_space<vmem>>, %arg4: memref<1x8x64xf32, #tpu.memory_space<vmem>>, %arg5: memref<1x2x2x64xf32, #tpu.memory_space<vmem>>) attributes {dimension_semantics = [#tpu.dimension_semantics<parallel>], iteration_bounds = array<i64: 3>, scalar_prefetch = 0 : i64, scratch_operands = 0 : i64, tpu.core_type = #tpu.core_type<tc>, window_params = [{transform_indices = @transform_0, window_bounds = array<i64: 1, 2, 2, 64>}, {transform_indices = @transform_1, window_bounds = array<i64: 1, 2, 4, 64>}, {transform_indices = @transform_2, window_bounds = array<i64: 1, 384, 64>}, {transform_indices = @transform_3, window_bounds = array<i64: 1, 8, 64>}, {transform_indices = @transform_4, window_bounds = array<i64: 1, 2, 2, 64>}]} {
    %c0 = arith.constant 0 : index
    %c0_0 = arith.constant 0 : index
    %c0_1 = arith.constant 0 : index
    %0 = vector.load %arg3[%c0, %c0_0, %c0_1] : memref<1x384x64xf32, #tpu.memory_space<vmem>>, vector<1x64x64xf32>
    %1 = vector.shape_cast %0 : vector<1x64x64xf32> to vector<64x64xf32>
    %c0_2 = arith.constant 0 : index
    %c64 = arith.constant 64 : index
    %c0_3 = arith.constant 0 : index
    %2 = vector.load %arg3[%c0_2, %c64, %c0_3] : memref<1x384x64xf32, #tpu.memory_space<vmem>>, vector<1x64x64xf32>
    %3 = vector.shape_cast %2 : vector<1x64x64xf32> to vector<64x64xf32>
    %c0_4 = arith.constant 0 : index
    %c128 = arith.constant 128 : index
    %c0_5 = arith.constant 0 : index
    %4 = vector.load %arg3[%c0_4, %c128, %c0_5] : memref<1x384x64xf32, #tpu.memory_space<vmem>>, vector<1x64x64xf32>
    %5 = vector.shape_cast %4 : vector<1x64x64xf32> to vector<64x64xf32>
    %c0_6 = arith.constant 0 : index
    %c192 = arith.constant 192 : index
    %c0_7 = arith.constant 0 : index
    %6 = vector.load %arg3[%c0_6, %c192, %c0_7] : memref<1x384x64xf32, #tpu.memory_space<vmem>>, vector<1x64x64xf32>
    %7 = vector.shape_cast %6 : vector<1x64x64xf32> to vector<64x64xf32>
    %c0_8 = arith.constant 0 : index
    %c256 = arith.constant 256 : index
    %c0_9 = arith.constant 0 : index
    %8 = vector.load %arg3[%c0_8, %c256, %c0_9] : memref<1x384x64xf32, #tpu.memory_space<vmem>>, vector<1x64x64xf32>
    %9 = vector.shape_cast %8 : vector<1x64x64xf32> to vector<64x64xf32>
    %c0_10 = arith.constant 0 : index
    %c320 = arith.constant 320 : index
    %c0_11 = arith.constant 0 : index
    %10 = vector.load %arg3[%c0_10, %c320, %c0_11] : memref<1x384x64xf32, #tpu.memory_space<vmem>>, vector<1x64x64xf32>
    %11 = vector.shape_cast %10 : vector<1x64x64xf32> to vector<64x64xf32>
    %c0_12 = arith.constant 0 : index
    %c0_13 = arith.constant 0 : index
    %c0_14 = arith.constant 0 : index
    %12 = vector.load %arg4[%c0_12, %c0_13, %c0_14] : memref<1x8x64xf32, #tpu.memory_space<vmem>>, vector<1x1x64xf32>
    %13 = vector.shape_cast %12 : vector<1x1x64xf32> to vector<1x64xf32>
    %c0_15 = arith.constant 0 : index
    %c1 = arith.constant 1 : index
    %c0_16 = arith.constant 0 : index
    %14 = vector.load %arg4[%c0_15, %c1, %c0_16] : memref<1x8x64xf32, #tpu.memory_space<vmem>>, vector<1x1x64xf32>
    %15 = vector.shape_cast %14 : vector<1x1x64xf32> to vector<1x64xf32>
    %c0_17 = arith.constant 0 : index
    %c2 = arith.constant 2 : index
    %c0_18 = arith.constant 0 : index
    %16 = vector.load %arg4[%c0_17, %c2, %c0_18] : memref<1x8x64xf32, #tpu.memory_space<vmem>>, vector<1x1x64xf32>
    %17 = vector.shape_cast %16 : vector<1x1x64xf32> to vector<1x64xf32>
    %c0_19 = arith.constant 0 : index
    %c3 = arith.constant 3 : index
    %c0_20 = arith.constant 0 : index
    %18 = vector.load %arg4[%c0_19, %c3, %c0_20] : memref<1x8x64xf32, #tpu.memory_space<vmem>>, vector<1x1x64xf32>
    %19 = vector.shape_cast %18 : vector<1x1x64xf32> to vector<1x64xf32>
    %c0_21 = arith.constant 0 : index
    %c4 = arith.constant 4 : index
    %c0_22 = arith.constant 0 : index
    %20 = vector.load %arg4[%c0_21, %c4, %c0_22] : memref<1x8x64xf32, #tpu.memory_space<vmem>>, vector<1x1x64xf32>
    %21 = vector.shape_cast %20 : vector<1x1x64xf32> to vector<1x64xf32>
    %c0_23 = arith.constant 0 : index
    %c5 = arith.constant 5 : index
    %c0_24 = arith.constant 0 : index
    %22 = vector.load %arg4[%c0_23, %c5, %c0_24] : memref<1x8x64xf32, #tpu.memory_space<vmem>>, vector<1x1x64xf32>
    %23 = vector.shape_cast %22 : vector<1x1x64xf32> to vector<1x64xf32>
    %c0_25 = arith.constant 0 : index
    %c6 = arith.constant 6 : index
    %c0_26 = arith.constant 0 : index
    %24 = vector.load %arg4[%c0_25, %c6, %c0_26] : memref<1x8x64xf32, #tpu.memory_space<vmem>>, vector<1x1x64xf32>
    %25 = vector.shape_cast %24 : vector<1x1x64xf32> to vector<1x64xf32>
    %c0_27 = arith.constant 0 : index
    %c7 = arith.constant 7 : index
    %c0_28 = arith.constant 0 : index
    %26 = vector.load %arg4[%c0_27, %c7, %c0_28] : memref<1x8x64xf32, #tpu.memory_space<vmem>>, vector<1x1x64xf32>
    %27 = vector.shape_cast %26 : vector<1x1x64xf32> to vector<1x64xf32>
    %c0_29 = arith.constant 0 : index
    %c0_30 = arith.constant 0 : index
    %c0_31 = arith.constant 0 : index
    %c0_32 = arith.constant 0 : index
    %28 = vector.load %arg1[%c0_29, %c0_30, %c0_31, %c0_32] : memref<1x2x2x64xf32, #tpu.memory_space<vmem>>, vector<1x1x2x64xf32>
    %29 = vector.shape_cast %28 : vector<1x1x2x64xf32> to vector<2x64xf32>
    %c0_33 = arith.constant 0 : index
    %c0_34 = arith.constant 0 : index
    %c0_35 = arith.constant 0 : index
    %c0_36 = arith.constant 0 : index
    %30 = vector.load %arg2[%c0_33, %c0_34, %c0_35, %c0_36] : memref<1x2x4x64xf32, #tpu.memory_space<vmem>>, vector<1x1x4x64xf32>
    %31 = vector.shape_cast %30 : vector<1x1x4x64xf32> to vector<4x64xf32>
    %cst = arith.constant dense<0.000000e+00> : vector<2x64xf32>
    %32 = tpu.matmul %29, %1, %cst {dimension_numbers = #tpu.dot_dimension_numbers<[1], [0], [0], [1], [0, 0, 1, 1], [], []>} : vector<2x64xf32>, vector<64x64xf32>, vector<2x64xf32> -> vector<2x64xf32>
    %33 = vector.broadcast %13 : vector<1x64xf32> to vector<2x64xf32>
    %34 = arith.addf %32, %33 : vector<2x64xf32>
    %cst_37 = arith.constant dense<0.000000e+00> : vector<4x64xf32>
    %35 = tpu.matmul %31, %3, %cst_37 {dimension_numbers = #tpu.dot_dimension_numbers<[1], [0], [0], [1], [0, 0, 1, 1], [], []>} : vector<4x64xf32>, vector<64x64xf32>, vector<4x64xf32> -> vector<4x64xf32>
    %36 = vector.broadcast %15 : vector<1x64xf32> to vector<4x64xf32>
    %37 = arith.addf %35, %36 : vector<4x64xf32>
    %cst_38 = arith.constant dense<0.000000e+00> : vector<4x64xf32>
    %38 = tpu.matmul %31, %5, %cst_38 {dimension_numbers = #tpu.dot_dimension_numbers<[1], [0], [0], [1], [0, 0, 1, 1], [], []>} : vector<4x64xf32>, vector<64x64xf32>, vector<4x64xf32> -> vector<4x64xf32>
    %39 = vector.broadcast %17 : vector<1x64xf32> to vector<4x64xf32>
    %40 = arith.addf %38, %39 : vector<4x64xf32>
    %cst_39 = arith.constant dense<0.000000e+00> : vector<2x4xf32>
    %41 = tpu.matmul %34, %37, %cst_39 {dimension_numbers = #tpu.dot_dimension_numbers<[1], [1], [0], [0], [0, 0, 1, 0], [], []>} : vector<2x64xf32>, vector<4x64xf32>, vector<2x4xf32> -> vector<2x4xf32>
    %cst_40 = arith.constant 1.250000e-01 : f32
    %42 = vector.broadcast %cst_40 : f32 to vector<2x4xf32>
    %43 = arith.mulf %41, %42 : vector<2x4xf32>
    %cst_41 = arith.constant dense<0xFF800000> : vector<2xf32>
    %44 = vector.multi_reduction <maximumf>, %43, %cst_41 [1] : vector<2x4xf32> to vector<2xf32>
    %45 = vector.shape_cast %44 : vector<2xf32> to vector<2x1xf32>
    %46 = vector.broadcast %45 : vector<2x1xf32> to vector<2x4xf32>
    %47 = arith.subf %43, %46 : vector<2x4xf32>
    %48 = math.exp %47 : vector<2x4xf32>
    %cst_42 = arith.constant dense<0.000000e+00> : vector<2xf32>
    %49 = vector.multi_reduction <add>, %48, %cst_42 [1] : vector<2x4xf32> to vector<2xf32>
    %50 = vector.shape_cast %49 : vector<2xf32> to vector<2x1xf32>
    %51 = vector.broadcast %50 : vector<2x1xf32> to vector<2x4xf32>
    %52 = arith.divf %48, %51 : vector<2x4xf32>
    %cst_43 = arith.constant dense<0.000000e+00> : vector<2x64xf32>
    %53 = tpu.matmul %52, %40, %cst_43 {dimension_numbers = #tpu.dot_dimension_numbers<[1], [0], [0], [1], [0, 0, 1, 1], [], []>} : vector<2x4xf32>, vector<4x64xf32>, vector<2x64xf32> -> vector<2x64xf32>
    %cst_44 = arith.constant dense<0.000000e+00> : vector<2x64xf32>
    %54 = tpu.matmul %53, %7, %cst_44 {dimension_numbers = #tpu.dot_dimension_numbers<[1], [0], [0], [1], [0, 0, 1, 1], [], []>} : vector<2x64xf32>, vector<64x64xf32>, vector<2x64xf32> -> vector<2x64xf32>
    %55 = vector.broadcast %19 : vector<1x64xf32> to vector<2x64xf32>
    %56 = arith.addf %54, %55 : vector<2x64xf32>
    %57 = arith.addf %56, %29 : vector<2x64xf32>
    %cst_45 = arith.constant dense<0.000000e+00> : vector<2xf32>
    %58 = vector.multi_reduction <add>, %57, %cst_45 [1] : vector<2x64xf32> to vector<2xf32>
    %59 = vector.shape_cast %58 : vector<2xf32> to vector<2x1xf32>
    %cst_46 = arith.constant 6.400000e+01 : f32
    %60 = vector.broadcast %cst_46 : f32 to vector<2x1xf32>
    %61 = arith.divf %59, %60 : vector<2x1xf32>
    %62 = vector.broadcast %61 : vector<2x1xf32> to vector<2x64xf32>
    %63 = arith.subf %57, %62 : vector<2x64xf32>
    %64 = arith.mulf %63, %63 : vector<2x64xf32>
    %cst_47 = arith.constant dense<0.000000e+00> : vector<2xf32>
    %65 = vector.multi_reduction <add>, %64, %cst_47 [1] : vector<2x64xf32> to vector<2xf32>
    %66 = vector.shape_cast %65 : vector<2xf32> to vector<2x1xf32>
    %cst_48 = arith.constant 6.400000e+01 : f32
    %67 = vector.broadcast %cst_48 : f32 to vector<2x1xf32>
    %68 = arith.divf %66, %67 : vector<2x1xf32>
    %69 = vector.broadcast %61 : vector<2x1xf32> to vector<2x64xf32>
    %70 = arith.subf %57, %69 : vector<2x64xf32>
    %cst_49 = arith.constant 9.99999974E-6 : f32
    %71 = vector.broadcast %cst_49 : f32 to vector<2x1xf32>
    %72 = arith.addf %68, %71 : vector<2x1xf32>
    %73 = math.rsqrt %72 : vector<2x1xf32>
    %74 = vector.broadcast %73 : vector<2x1xf32> to vector<2x64xf32>
    %75 = arith.mulf %70, %74 : vector<2x64xf32>
    %76 = vector.broadcast %21 : vector<1x64xf32> to vector<2x64xf32>
    %77 = arith.mulf %75, %76 : vector<2x64xf32>
    %78 = vector.broadcast %23 : vector<1x64xf32> to vector<2x64xf32>
    %79 = arith.addf %77, %78 : vector<2x64xf32>
    %cst_50 = arith.constant dense<0.000000e+00> : vector<2x64xf32>
    %80 = tpu.matmul %79, %9, %cst_50 {dimension_numbers = #tpu.dot_dimension_numbers<[1], [0], [0], [1], [0, 0, 1, 1], [], []>} : vector<2x64xf32>, vector<64x64xf32>, vector<2x64xf32> -> vector<2x64xf32>
    %81 = vector.broadcast %25 : vector<1x64xf32> to vector<2x64xf32>
    %82 = arith.addf %80, %81 : vector<2x64xf32>
    %cst_51 = arith.constant 0.000000e+00 : f32
    %83 = vector.broadcast %cst_51 : f32 to vector<2x64xf32>
    %84 = arith.maximumf %82, %83 : vector<2x64xf32>
    %cst_52 = arith.constant dense<0.000000e+00> : vector<2x64xf32>
    %85 = tpu.matmul %84, %11, %cst_52 {dimension_numbers = #tpu.dot_dimension_numbers<[1], [0], [0], [1], [0, 0, 1, 1], [], []>} : vector<2x64xf32>, vector<64x64xf32>, vector<2x64xf32> -> vector<2x64xf32>
    %86 = vector.broadcast %27 : vector<1x64xf32> to vector<2x64xf32>
    %87 = arith.addf %85, %86 : vector<2x64xf32>
    %c0_53 = arith.constant 0 : index
    %c0_54 = arith.constant 0 : index
    %c0_55 = arith.constant 0 : index
    %c0_56 = arith.constant 0 : index
    %88 = vector.load %arg5[%c0_53, %c0_54, %c0_55, %c0_56] : memref<1x2x2x64xf32, #tpu.memory_space<vmem>>, vector<1x1x2x64xf32>
    %89 = vector.shape_cast %88 : vector<1x1x2x64xf32> to vector<2x64xf32>
    %90 = vector.shape_cast %87 : vector<2x64xf32> to vector<1x1x2x64xf32>
    tpu.vector_store %arg5[%c0_53, %c0_54, %c0_55, %c0_56], %90 {strides = array<i32>} : memref<1x2x2x64xf32, #tpu.memory_space<vmem>>, vector<1x1x2x64xf32>,
    %c0_57 = arith.constant 0 : index
    %c1_58 = arith.constant 1 : index
    %c0_59 = arith.constant 0 : index
    %c0_60 = arith.constant 0 : index
    %91 = vector.load %arg1[%c0_57, %c1_58, %c0_59, %c0_60] : memref<1x2x2x64xf32, #tpu.memory_space<vmem>>, vector<1x1x2x64xf32>
    %92 = vector.shape_cast %91 : vector<1x1x2x64xf32> to vector<2x64xf32>
    %c0_61 = arith.constant 0 : index
    %c1_62 = arith.constant 1 : index
    %c0_63 = arith.constant 0 : index
    %c0_64 = arith.constant 0 : index
    %93 = vector.load %arg2[%c0_61, %c1_62, %c0_63, %c0_64] : memref<1x2x4x64xf32, #tpu.memory_space<vmem>>, vector<1x1x4x64xf32>
    %94 = vector.shape_cast %93 : vector<1x1x4x64xf32> to vector<4x64xf32>
    %cst_65 = arith.constant dense<0.000000e+00> : vector<2x64xf32>
    %95 = tpu.matmul %92, %1, %cst_65 {dimension_numbers = #tpu.dot_dimension_numbers<[1], [0], [0], [1], [0, 0, 1, 1], [], []>} : vector<2x64xf32>, vector<64x64xf32>, vector<2x64xf32> -> vector<2x64xf32>
    %96 = vector.broadcast %13 : vector<1x64xf32> to vector<2x64xf32>
    %97 = arith.addf %95, %96 : vector<2x64xf32>
    %cst_66 = arith.constant dense<0.000000e+00> : vector<4x64xf32>
    %98 = tpu.matmul %94, %3, %cst_66 {dimension_numbers = #tpu.dot_dimension_numbers<[1], [0], [0], [1], [0, 0, 1, 1], [], []>} : vector<4x64xf32>, vector<64x64xf32>, vector<4x64xf32> -> vector<4x64xf32>
    %99 = vector.broadcast %15 : vector<1x64xf32> to vector<4x64xf32>
    %100 = arith.addf %98, %99 : vector<4x64xf32>
    %cst_67 = arith.constant dense<0.000000e+00> : vector<4x64xf32>
    %101 = tpu.matmul %94, %5, %cst_67 {dimension_numbers = #tpu.dot_dimension_numbers<[1], [0], [0], [1], [0, 0, 1, 1], [], []>} : vector<4x64xf32>, vector<64x64xf32>, vector<4x64xf32> -> vector<4x64xf32>
    %102 = vector.broadcast %17 : vector<1x64xf32> to vector<4x64xf32>
    %103 = arith.addf %101, %102 : vector<4x64xf32>
    %cst_68 = arith.constant dense<0.000000e+00> : vector<2x4xf32>
    %104 = tpu.matmul %97, %100, %cst_68 {dimension_numbers = #tpu.dot_dimension_numbers<[1], [1], [0], [0], [0, 0, 1, 0], [], []>} : vector<2x64xf32>, vector<4x64xf32>, vector<2x4xf32> -> vector<2x4xf32>
    %cst_69 = arith.constant 1.250000e-01 : f32
    %105 = vector.broadcast %cst_69 : f32 to vector<2x4xf32>
    %106 = arith.mulf %104, %105 : vector<2x4xf32>
    %cst_70 = arith.constant dense<0xFF800000> : vector<2xf32>
    %107 = vector.multi_reduction <maximumf>, %106, %cst_70 [1] : vector<2x4xf32> to vector<2xf32>
    %108 = vector.shape_cast %107 : vector<2xf32> to vector<2x1xf32>
    %109 = vector.broadcast %108 : vector<2x1xf32> to vector<2x4xf32>
    %110 = arith.subf %106, %109 : vector<2x4xf32>
    %111 = math.exp %110 : vector<2x4xf32>
    %cst_71 = arith.constant dense<0.000000e+00> : vector<2xf32>
    %112 = vector.multi_reduction <add>, %111, %cst_71 [1] : vector<2x4xf32> to vector<2xf32>
    %113 = vector.shape_cast %112 : vector<2xf32> to vector<2x1xf32>
    %114 = vector.broadcast %113 : vector<2x1xf32> to vector<2x4xf32>
    %115 = arith.divf %111, %114 : vector<2x4xf32>
    %cst_72 = arith.constant dense<0.000000e+00> : vector<2x64xf32>
    %116 = tpu.matmul %115, %103, %cst_72 {dimension_numbers = #tpu.dot_dimension_numbers<[1], [0], [0], [1], [0, 0, 1, 1], [], []>} : vector<2x4xf32>, vector<4x64xf32>, vector<2x64xf32> -> vector<2x64xf32>
    %cst_73 = arith.constant dense<0.000000e+00> : vector<2x64xf32>
    %117 = tpu.matmul %116, %7, %cst_73 {dimension_numbers = #tpu.dot_dimension_numbers<[1], [0], [0], [1], [0, 0, 1, 1], [], []>} : vector<2x64xf32>, vector<64x64xf32>, vector<2x64xf32> -> vector<2x64xf32>
    %118 = vector.broadcast %19 : vector<1x64xf32> to vector<2x64xf32>
    %119 = arith.addf %117, %118 : vector<2x64xf32>
    %120 = arith.addf %119, %92 : vector<2x64xf32>
    %cst_74 = arith.constant dense<0.000000e+00> : vector<2xf32>
    %121 = vector.multi_reduction <add>, %120, %cst_74 [1] : vector<2x64xf32> to vector<2xf32>
    %122 = vector.shape_cast %121 : vector<2xf32> to vector<2x1xf32>
    %cst_75 = arith.constant 6.400000e+01 : f32
    %123 = vector.broadcast %cst_75 : f32 to vector<2x1xf32>
    %124 = arith.divf %122, %123 : vector<2x1xf32>
    %125 = vector.broadcast %124 : vector<2x1xf32> to vector<2x64xf32>
    %126 = arith.subf %120, %125 : vector<2x64xf32>
    %127 = arith.mulf %126, %126 : vector<2x64xf32>
    %cst_76 = arith.constant dense<0.000000e+00> : vector<2xf32>
    %128 = vector.multi_reduction <add>, %127, %cst_76 [1] : vector<2x64xf32> to vector<2xf32>
    %129 = vector.shape_cast %128 : vector<2xf32> to vector<2x1xf32>
    %cst_77 = arith.constant 6.400000e+01 : f32
    %130 = vector.broadcast %cst_77 : f32 to vector<2x1xf32>
    %131 = arith.divf %129, %130 : vector<2x1xf32>
    %132 = vector.broadcast %124 : vector<2x1xf32> to vector<2x64xf32>
    %133 = arith.subf %120, %132 : vector<2x64xf32>
    %cst_78 = arith.constant 9.99999974E-6 : f32
    %134 = vector.broadcast %cst_78 : f32 to vector<2x1xf32>
    %135 = arith.addf %131, %134 : vector<2x1xf32>
    %136 = math.rsqrt %135 : vector<2x1xf32>
    %137 = vector.broadcast %136 : vector<2x1xf32> to vector<2x64xf32>
    %138 = arith.mulf %133, %137 : vector<2x64xf32>
    %139 = vector.broadcast %21 : vector<1x64xf32> to vector<2x64xf32>
    %140 = arith.mulf %138, %139 : vector<2x64xf32>
    %141 = vector.broadcast %23 : vector<1x64xf32> to vector<2x64xf32>
    %142 = arith.addf %140, %141 : vector<2x64xf32>
    %cst_79 = arith.constant dense<0.000000e+00> : vector<2x64xf32>
    %143 = tpu.matmul %142, %9, %cst_79 {dimension_numbers = #tpu.dot_dimension_numbers<[1], [0], [0], [1], [0, 0, 1, 1], [], []>} : vector<2x64xf32>, vector<64x64xf32>, vector<2x64xf32> -> vector<2x64xf32>
    %144 = vector.broadcast %25 : vector<1x64xf32> to vector<2x64xf32>
    %145 = arith.addf %143, %144 : vector<2x64xf32>
    %cst_80 = arith.constant 0.000000e+00 : f32
    %146 = vector.broadcast %cst_80 : f32 to vector<2x64xf32>
    %147 = arith.maximumf %145, %146 : vector<2x64xf32>
    %cst_81 = arith.constant dense<0.000000e+00> : vector<2x64xf32>
    %148 = tpu.matmul %147, %11, %cst_81 {dimension_numbers = #tpu.dot_dimension_numbers<[1], [0], [0], [1], [0, 0, 1, 1], [], []>} : vector<2x64xf32>, vector<64x64xf32>, vector<2x64xf32> -> vector<2x64xf32>
    %149 = vector.broadcast %27 : vector<1x64xf32> to vector<2x64xf32>
    %150 = arith.addf %148, %149 : vector<2x64xf32>
    %c0_82 = arith.constant 0 : index
    %c1_83 = arith.constant 1 : index
    %c0_84 = arith.constant 0 : index
    %c0_85 = arith.constant 0 : index
    %151 = vector.load %arg5[%c0_82, %c1_83, %c0_84, %c0_85] : memref<1x2x2x64xf32, #tpu.memory_space<vmem>>, vector<1x1x2x64xf32>
    %152 = vector.shape_cast %151 : vector<1x1x2x64xf32> to vector<2x64xf32>
    %153 = vector.shape_cast %150 : vector<2x64xf32> to vector<1x1x2x64xf32>
    tpu.vector_store %arg5[%c0_82, %c1_83, %c0_84, %c0_85], %153 {strides = array<i32>} : memref<1x2x2x64xf32, #tpu.memory_space<vmem>>, vector<1x1x2x64xf32>,
    return
  }
  func.func @transform_0(%arg0: i32) -> (i32, i32, i32, i32) {
    %c0_i32 = arith.constant 0 : i32
    %c0_i32_0 = arith.constant 0 : i32
    %c0_i32_1 = arith.constant 0 : i32
    %c0_i32_2 = arith.constant 0 : i32
    return %arg0, %c0_i32, %c0_i32_0, %c0_i32_1 : i32, i32, i32, i32
  }
  func.func @transform_1(%arg0: i32) -> (i32, i32, i32, i32) {
    %c0_i32 = arith.constant 0 : i32
    %c0_i32_0 = arith.constant 0 : i32
    %c0_i32_1 = arith.constant 0 : i32
    %c0_i32_2 = arith.constant 0 : i32
    return %arg0, %c0_i32, %c0_i32_0, %c0_i32_1 : i32, i32, i32, i32
  }
  func.func @transform_2(%arg0: i32) -> (i32, i32, i32) {
    %c0_i32 = arith.constant 0 : i32
    %c0_i32_0 = arith.constant 0 : i32
    %c0_i32_1 = arith.constant 0 : i32
    return %arg0, %c0_i32, %c0_i32_0 : i32, i32, i32
  }
  func.func @transform_3(%arg0: i32) -> (i32, i32, i32) {
    %c0_i32 = arith.constant 0 : i32
    %c0_i32_0 = arith.constant 0 : i32
    %c0_i32_1 = arith.constant 0 : i32
    return %arg0, %c0_i32, %c0_i32_0 : i32, i32, i32
  }
  func.func @transform_4(%arg0: i32) -> (i32, i32, i32, i32) {
    %c0_i32 = arith.constant 0 : i32
    %c0_i32_0 = arith.constant 0 : i32
    %c0_i32_1 = arith.constant 0 : i32
    %c0_i32_2 = arith.constant 0 : i32
    return %arg0, %c0_i32, %c0_i32_0, %c0_i32_1 : i32, i32, i32, i32
  }
}

module attributes {stable_mosaic.version = 11 : i64} {
  func.func @_lnlstm_kernel(%arg0: i32, %arg1: memref<2x2x256xf32, #tpu.memory_space<vmem>>, %arg2: memref<2x2x1xf32, #tpu.memory_space<vmem>>, %arg3: memref<2x128xf32, #tpu.memory_space<vmem>>, %arg4: memref<64x256xf32, #tpu.memory_space<vmem>>, %arg5: memref<3x256xf32, #tpu.memory_space<vmem>>, %arg6: memref<2x64xf32, #tpu.memory_space<vmem>>, %arg7: memref<2x2x64xf32, #tpu.memory_space<vmem>>, %arg8: memref<2x64xf32, #tpu.memory_space<vmem>>, %arg9: memref<2x64xf32, #tpu.memory_space<vmem>>, %arg10: memref<2x64xf32, #tpu.memory_space<vmem>>, %arg11: memref<2x64xf32, #tpu.memory_space<vmem>>) attributes {dimension_semantics = [#tpu.dimension_semantics<arbitrary>], iteration_bounds = array<i64: 1>, scalar_prefetch = 0 : i64, scratch_operands = 2 : i64, tpu.core_type = #tpu.core_type<tc>, window_params = [{transform_indices = @transform_0, window_bounds = array<i64: 2, 2, 256>}, {transform_indices = @transform_1, window_bounds = array<i64: 2, 2, 1>}, {pipeline_mode = #tpu.pipeline_mode<synchronous>, transform_indices = @transform_2, window_bounds = array<i64: 2, 128>}, {pipeline_mode = #tpu.pipeline_mode<synchronous>, transform_indices = @transform_3, window_bounds = array<i64: 64, 256>}, {pipeline_mode = #tpu.pipeline_mode<synchronous>, transform_indices = @transform_4, window_bounds = array<i64: 3, 256>}, {pipeline_mode = #tpu.pipeline_mode<synchronous>, transform_indices = @transform_5, window_bounds = array<i64: 2, 64>}, {transform_indices = @transform_6, window_bounds = array<i64: 2, 2, 64>}, {pipeline_mode = #tpu.pipeline_mode<synchronous>, transform_indices = @transform_7, window_bounds = array<i64: 2, 64>}, {pipeline_mode = #tpu.pipeline_mode<synchronous>, transform_indices = @transform_8, window_bounds = array<i64: 2, 64>}]} {
    %c0_i32 = arith.constant 0 : i32
    %0 = arith.cmpi eq, %arg0, %c0_i32 : i32
    %1 = arith.extui %0 : i1 to i32
    %c0_i32_0 = arith.constant 0 : i32
    %2 = arith.cmpi ne, %1, %c0_i32_0 : i32
    scf.if %2 {
      %c0_75 = arith.constant 0 : index
      %c0_76 = arith.constant 0 : index
      %189 = vector.load %arg3[%c0_75, %c0_76] : memref<2x128xf32, #tpu.memory_space<vmem>>, vector<2x64xf32>
      %c0_77 = arith.constant 0 : index
      %c0_78 = arith.constant 0 : index
      %190 = vector.load %arg10[%c0_77, %c0_78] : memref<2x64xf32, #tpu.memory_space<vmem>>, vector<2x64xf32>
      tpu.vector_store %arg10[%c0_77, %c0_78], %189 {strides = array<i32>} : memref<2x64xf32, #tpu.memory_space<vmem>>, vector<2x64xf32>,
      %c0_79 = arith.constant 0 : index
      %c64 = arith.constant 64 : index
      %191 = vector.load %arg3[%c0_79, %c64] : memref<2x128xf32, #tpu.memory_space<vmem>>, vector<2x64xf32>
      %c0_80 = arith.constant 0 : index
      %c0_81 = arith.constant 0 : index
      %192 = vector.load %arg11[%c0_80, %c0_81] : memref<2x64xf32, #tpu.memory_space<vmem>>, vector<2x64xf32>
      tpu.vector_store %arg11[%c0_80, %c0_81], %191 {strides = array<i32>} : memref<2x64xf32, #tpu.memory_space<vmem>>, vector<2x64xf32>,
    } else {
    }
    %c0 = arith.constant 0 : index
    %c0_1 = arith.constant 0 : index
    %3 = vector.load %arg5[%c0, %c0_1] : memref<3x256xf32, #tpu.memory_space<vmem>>, vector<1x256xf32>
    %c1 = arith.constant 1 : index
    %c0_2 = arith.constant 0 : index
    %4 = vector.load %arg5[%c1, %c0_2] : memref<3x256xf32, #tpu.memory_space<vmem>>, vector<1x256xf32>
    %c2 = arith.constant 2 : index
    %c0_3 = arith.constant 0 : index
    %5 = vector.load %arg5[%c2, %c0_3] : memref<3x256xf32, #tpu.memory_space<vmem>>, vector<1x256xf32>
    %c0_4 = arith.constant 0 : index
    %c0_5 = arith.constant 0 : index
    %6 = vector.load %arg6[%c0_4, %c0_5] : memref<2x64xf32, #tpu.memory_space<vmem>>, vector<1x64xf32>
    %c1_6 = arith.constant 1 : index
    %c0_7 = arith.constant 0 : index
    %7 = vector.load %arg6[%c1_6, %c0_7] : memref<2x64xf32, #tpu.memory_space<vmem>>, vector<1x64xf32>
    %c0_8 = arith.constant 0 : index
    %c0_9 = arith.constant 0 : index
    %c0_10 = arith.constant 0 : index
    %8 = vector.load %arg2[%c0_8, %c0_9, %c0_10] : memref<2x2x1xf32, #tpu.memory_space<vmem>>, vector<1x2x1xf32>
    %9 = vector.shape_cast %8 : vector<1x2x1xf32> to vector<2x1xf32>
    %c0_11 = arith.constant 0 : index
    %c0_12 = arith.constant 0 : index
    %10 = vector.load %arg10[%c0_11, %c0_12] : memref<2x64xf32, #tpu.memory_space<vmem>>, vector<2x64xf32>
    %11 = vector.broadcast %9 : vector<2x1xf32> to vector<2x64xf32>
    %12 = arith.mulf %10, %11 : vector<2x64xf32>
    %c0_13 = arith.constant 0 : index
    %c0_14 = arith.constant 0 : index
    %13 = vector.load %arg11[%c0_13, %c0_14] : memref<2x64xf32, #tpu.memory_space<vmem>>, vector<2x64xf32>
    %14 = vector.broadcast %9 : vector<2x1xf32> to vector<2x64xf32>
    %15 = arith.mulf %13, %14 : vector<2x64xf32>
    %c0_15 = arith.constant 0 : index
    %c0_16 = arith.constant 0 : index
    %16 = vector.load %arg4[%c0_15, %c0_16] : memref<64x256xf32, #tpu.memory_space<vmem>>, vector<64x256xf32>
    %cst = arith.constant dense<0.000000e+00> : vector<2x256xf32>
    %17 = tpu.matmul %12, %16, %cst {dimension_numbers = #tpu.dot_dimension_numbers<[1], [0], [0], [1], [0, 0, 1, 1], [], []>} : vector<2x64xf32>, vector<64x256xf32>, vector<2x256xf32> -> vector<2x256xf32>
    %cst_17 = arith.constant dense<0.000000e+00> : vector<2xf32>
    %18 = vector.multi_reduction <add>, %17, %cst_17 [1] : vector<2x256xf32> to vector<2xf32>
    %19 = vector.shape_cast %18 : vector<2xf32> to vector<2x1xf32>
    %cst_18 = arith.constant 2.560000e+02 : f32
    %20 = vector.broadcast %cst_18 : f32 to vector<2x1xf32>
    %21 = arith.divf %19, %20 : vector<2x1xf32>
    %22 = vector.broadcast %21 : vector<2x1xf32> to vector<2x256xf32>
    %23 = arith.subf %17, %22 : vector<2x256xf32>
    %24 = arith.mulf %23, %23 : vector<2x256xf32>
    %cst_19 = arith.constant dense<0.000000e+00> : vector<2xf32>
    %25 = vector.multi_reduction <add>, %24, %cst_19 [1] : vector<2x256xf32> to vector<2xf32>
    %26 = vector.shape_cast %25 : vector<2xf32> to vector<2x1xf32>
    %cst_20 = arith.constant 2.560000e+02 : f32
    %27 = vector.broadcast %cst_20 : f32 to vector<2x1xf32>
    %28 = arith.divf %26, %27 : vector<2x1xf32>
    %29 = vector.broadcast %21 : vector<2x1xf32> to vector<2x256xf32>
    %30 = arith.subf %17, %29 : vector<2x256xf32>
    %cst_21 = arith.constant 9.99999974E-6 : f32
    %31 = vector.broadcast %cst_21 : f32 to vector<2x1xf32>
    %32 = arith.addf %28, %31 : vector<2x1xf32>
    %33 = math.rsqrt %32 : vector<2x1xf32>
    %34 = vector.broadcast %33 : vector<2x1xf32> to vector<2x256xf32>
    %35 = arith.mulf %30, %34 : vector<2x256xf32>
    %36 = vector.broadcast %4 : vector<1x256xf32> to vector<2x256xf32>
    %37 = arith.mulf %35, %36 : vector<2x256xf32>
    %38 = vector.broadcast %5 : vector<1x256xf32> to vector<2x256xf32>
    %39 = arith.addf %37, %38 : vector<2x256xf32>
    %c0_22 = arith.constant 0 : index
    %c0_23 = arith.constant 0 : index
    %c0_24 = arith.constant 0 : index
    %40 = vector.load %arg1[%c0_22, %c0_23, %c0_24] : memref<2x2x256xf32, #tpu.memory_space<vmem>>, vector<1x2x256xf32>
    %41 = vector.shape_cast %40 : vector<1x2x256xf32> to vector<2x256xf32>
    %42 = arith.addf %41, %39 : vector<2x256xf32>
    %43 = vector.broadcast %3 : vector<1x256xf32> to vector<2x256xf32>
    %44 = arith.addf %42, %43 : vector<2x256xf32>
    %45 = vector.extract_strided_slice %44 {offsets = [0, 0], sizes = [2, 64], strides = [1, 1]} : vector<2x256xf32> to vector<2x64xf32>
    %46 = arith.negf %45 : vector<2x64xf32>
    %47 = math.exp %46 : vector<2x64xf32>
    %cst_25 = arith.constant 1.000000e+00 : f32
    %48 = vector.broadcast %cst_25 : f32 to vector<2x64xf32>
    %49 = arith.addf %48, %47 : vector<2x64xf32>
    %50 = arith.divf %48, %49 : vector<2x64xf32>
    %51 = vector.extract_strided_slice %44 {offsets = [0, 64], sizes = [2, 64], strides = [1, 1]} : vector<2x256xf32> to vector<2x64xf32>
    %52 = arith.negf %51 : vector<2x64xf32>
    %53 = math.exp %52 : vector<2x64xf32>
    %cst_26 = arith.constant 1.000000e+00 : f32
    %54 = vector.broadcast %cst_26 : f32 to vector<2x64xf32>
    %55 = arith.addf %54, %53 : vector<2x64xf32>
    %56 = arith.divf %54, %55 : vector<2x64xf32>
    %57 = vector.extract_strided_slice %44 {offsets = [0, 128], sizes = [2, 64], strides = [1, 1]} : vector<2x256xf32> to vector<2x64xf32>
    %58 = arith.negf %57 : vector<2x64xf32>
    %59 = math.exp %58 : vector<2x64xf32>
    %cst_27 = arith.constant 1.000000e+00 : f32
    %60 = vector.broadcast %cst_27 : f32 to vector<2x64xf32>
    %61 = arith.addf %60, %59 : vector<2x64xf32>
    %62 = arith.divf %60, %61 : vector<2x64xf32>
    %63 = vector.extract_strided_slice %44 {offsets = [0, 192], sizes = [2, 64], strides = [1, 1]} : vector<2x256xf32> to vector<2x64xf32>
    %64 = math.tanh %63 : vector<2x64xf32>
    %65 = arith.mulf %56, %15 : vector<2x64xf32>
    %66 = arith.mulf %50, %64 : vector<2x64xf32>
    %67 = arith.addf %65, %66 : vector<2x64xf32>
    %cst_28 = arith.constant dense<0.000000e+00> : vector<2xf32>
    %68 = vector.multi_reduction <add>, %67, %cst_28 [1] : vector<2x64xf32> to vector<2xf32>
    %69 = vector.shape_cast %68 : vector<2xf32> to vector<2x1xf32>
    %cst_29 = arith.constant 6.400000e+01 : f32
    %70 = vector.broadcast %cst_29 : f32 to vector<2x1xf32>
    %71 = arith.divf %69, %70 : vector<2x1xf32>
    %72 = vector.broadcast %71 : vector<2x1xf32> to vector<2x64xf32>
    %73 = arith.subf %67, %72 : vector<2x64xf32>
    %74 = arith.mulf %73, %73 : vector<2x64xf32>
    %cst_30 = arith.constant dense<0.000000e+00> : vector<2xf32>
    %75 = vector.multi_reduction <add>, %74, %cst_30 [1] : vector<2x64xf32> to vector<2xf32>
    %76 = vector.shape_cast %75 : vector<2xf32> to vector<2x1xf32>
    %cst_31 = arith.constant 6.400000e+01 : f32
    %77 = vector.broadcast %cst_31 : f32 to vector<2x1xf32>
    %78 = arith.divf %76, %77 : vector<2x1xf32>
    %79 = vector.broadcast %71 : vector<2x1xf32> to vector<2x64xf32>
    %80 = arith.subf %67, %79 : vector<2x64xf32>
    %cst_32 = arith.constant 9.99999974E-6 : f32
    %81 = vector.broadcast %cst_32 : f32 to vector<2x1xf32>
    %82 = arith.addf %78, %81 : vector<2x1xf32>
    %83 = math.rsqrt %82 : vector<2x1xf32>
    %84 = vector.broadcast %83 : vector<2x1xf32> to vector<2x64xf32>
    %85 = arith.mulf %80, %84 : vector<2x64xf32>
    %86 = vector.broadcast %6 : vector<1x64xf32> to vector<2x64xf32>
    %87 = arith.mulf %85, %86 : vector<2x64xf32>
    %88 = vector.broadcast %7 : vector<1x64xf32> to vector<2x64xf32>
    %89 = arith.addf %87, %88 : vector<2x64xf32>
    %90 = math.tanh %89 : vector<2x64xf32>
    %91 = arith.mulf %62, %90 : vector<2x64xf32>
    %c0_33 = arith.constant 0 : index
    %c0_34 = arith.constant 0 : index
    %92 = vector.load %arg10[%c0_33, %c0_34] : memref<2x64xf32, #tpu.memory_space<vmem>>, vector<2x64xf32>
    tpu.vector_store %arg10[%c0_33, %c0_34], %91 {strides = array<i32>} : memref<2x64xf32, #tpu.memory_space<vmem>>, vector<2x64xf32>,
    %c0_35 = arith.constant 0 : index
    %c0_36 = arith.constant 0 : index
    %93 = vector.load %arg11[%c0_35, %c0_36] : memref<2x64xf32, #tpu.memory_space<vmem>>, vector<2x64xf32>
    tpu.vector_store %arg11[%c0_35, %c0_36], %67 {strides = array<i32>} : memref<2x64xf32, #tpu.memory_space<vmem>>, vector<2x64xf32>,
    %c0_37 = arith.constant 0 : index
    %c0_38 = arith.constant 0 : index
    %c0_39 = arith.constant 0 : index
    %94 = vector.load %arg7[%c0_37, %c0_38, %c0_39] : memref<2x2x64xf32, #tpu.memory_space<vmem>>, vector<1x2x64xf32>
    %95 = vector.shape_cast %94 : vector<1x2x64xf32> to vector<2x64xf32>
    %96 = vector.shape_cast %91 : vector<2x64xf32> to vector<1x2x64xf32>
    tpu.vector_store %arg7[%c0_37, %c0_38, %c0_39], %96 {strides = array<i32>} : memref<2x2x64xf32, #tpu.memory_space<vmem>>, vector<1x2x64xf32>,
    %c1_40 = arith.constant 1 : index
    %c0_41 = arith.constant 0 : index
    %c0_42 = arith.constant 0 : index
    %97 = vector.load %arg2[%c1_40, %c0_41, %c0_42] : memref<2x2x1xf32, #tpu.memory_space<vmem>>, vector<1x2x1xf32>
    %98 = vector.shape_cast %97 : vector<1x2x1xf32> to vector<2x1xf32>
    %c0_43 = arith.constant 0 : index
    %c0_44 = arith.constant 0 : index
    %99 = vector.load %arg10[%c0_43, %c0_44] : memref<2x64xf32, #tpu.memory_space<vmem>>, vector<2x64xf32>
    %100 = vector.broadcast %98 : vector<2x1xf32> to vector<2x64xf32>
    %101 = arith.mulf %99, %100 : vector<2x64xf32>
    %c0_45 = arith.constant 0 : index
    %c0_46 = arith.constant 0 : index
    %102 = vector.load %arg11[%c0_45, %c0_46] : memref<2x64xf32, #tpu.memory_space<vmem>>, vector<2x64xf32>
    %103 = vector.broadcast %98 : vector<2x1xf32> to vector<2x64xf32>
    %104 = arith.mulf %102, %103 : vector<2x64xf32>
    %c0_47 = arith.constant 0 : index
    %c0_48 = arith.constant 0 : index
    %105 = vector.load %arg4[%c0_47, %c0_48] : memref<64x256xf32, #tpu.memory_space<vmem>>, vector<64x256xf32>
    %cst_49 = arith.constant dense<0.000000e+00> : vector<2x256xf32>
    %106 = tpu.matmul %101, %105, %cst_49 {dimension_numbers = #tpu.dot_dimension_numbers<[1], [0], [0], [1], [0, 0, 1, 1], [], []>} : vector<2x64xf32>, vector<64x256xf32>, vector<2x256xf32> -> vector<2x256xf32>
    %cst_50 = arith.constant dense<0.000000e+00> : vector<2xf32>
    %107 = vector.multi_reduction <add>, %106, %cst_50 [1] : vector<2x256xf32> to vector<2xf32>
    %108 = vector.shape_cast %107 : vector<2xf32> to vector<2x1xf32>
    %cst_51 = arith.constant 2.560000e+02 : f32
    %109 = vector.broadcast %cst_51 : f32 to vector<2x1xf32>
    %110 = arith.divf %108, %109 : vector<2x1xf32>
    %111 = vector.broadcast %110 : vector<2x1xf32> to vector<2x256xf32>
    %112 = arith.subf %106, %111 : vector<2x256xf32>
    %113 = arith.mulf %112, %112 : vector<2x256xf32>
    %cst_52 = arith.constant dense<0.000000e+00> : vector<2xf32>
    %114 = vector.multi_reduction <add>, %113, %cst_52 [1] : vector<2x256xf32> to vector<2xf32>
    %115 = vector.shape_cast %114 : vector<2xf32> to vector<2x1xf32>
    %cst_53 = arith.constant 2.560000e+02 : f32
    %116 = vector.broadcast %cst_53 : f32 to vector<2x1xf32>
    %117 = arith.divf %115, %116 : vector<2x1xf32>
    %118 = vector.broadcast %110 : vector<2x1xf32> to vector<2x256xf32>
    %119 = arith.subf %106, %118 : vector<2x256xf32>
    %cst_54 = arith.constant 9.99999974E-6 : f32
    %120 = vector.broadcast %cst_54 : f32 to vector<2x1xf32>
    %121 = arith.addf %117, %120 : vector<2x1xf32>
    %122 = math.rsqrt %121 : vector<2x1xf32>
    %123 = vector.broadcast %122 : vector<2x1xf32> to vector<2x256xf32>
    %124 = arith.mulf %119, %123 : vector<2x256xf32>
    %125 = vector.broadcast %4 : vector<1x256xf32> to vector<2x256xf32>
    %126 = arith.mulf %124, %125 : vector<2x256xf32>
    %127 = vector.broadcast %5 : vector<1x256xf32> to vector<2x256xf32>
    %128 = arith.addf %126, %127 : vector<2x256xf32>
    %c1_55 = arith.constant 1 : index
    %c0_56 = arith.constant 0 : index
    %c0_57 = arith.constant 0 : index
    %129 = vector.load %arg1[%c1_55, %c0_56, %c0_57] : memref<2x2x256xf32, #tpu.memory_space<vmem>>, vector<1x2x256xf32>
    %130 = vector.shape_cast %129 : vector<1x2x256xf32> to vector<2x256xf32>
    %131 = arith.addf %130, %128 : vector<2x256xf32>
    %132 = vector.broadcast %3 : vector<1x256xf32> to vector<2x256xf32>
    %133 = arith.addf %131, %132 : vector<2x256xf32>
    %134 = vector.extract_strided_slice %133 {offsets = [0, 0], sizes = [2, 64], strides = [1, 1]} : vector<2x256xf32> to vector<2x64xf32>
    %135 = arith.negf %134 : vector<2x64xf32>
    %136 = math.exp %135 : vector<2x64xf32>
    %cst_58 = arith.constant 1.000000e+00 : f32
    %137 = vector.broadcast %cst_58 : f32 to vector<2x64xf32>
    %138 = arith.addf %137, %136 : vector<2x64xf32>
    %139 = arith.divf %137, %138 : vector<2x64xf32>
    %140 = vector.extract_strided_slice %133 {offsets = [0, 64], sizes = [2, 64], strides = [1, 1]} : vector<2x256xf32> to vector<2x64xf32>
    %141 = arith.negf %140 : vector<2x64xf32>
    %142 = math.exp %141 : vector<2x64xf32>
    %cst_59 = arith.constant 1.000000e+00 : f32
    %143 = vector.broadcast %cst_59 : f32 to vector<2x64xf32>
    %144 = arith.addf %143, %142 : vector<2x64xf32>
    %145 = arith.divf %143, %144 : vector<2x64xf32>
    %146 = vector.extract_strided_slice %133 {offsets = [0, 128], sizes = [2, 64], strides = [1, 1]} : vector<2x256xf32> to vector<2x64xf32>
    %147 = arith.negf %146 : vector<2x64xf32>
    %148 = math.exp %147 : vector<2x64xf32>
    %cst_60 = arith.constant 1.000000e+00 : f32
    %149 = vector.broadcast %cst_60 : f32 to vector<2x64xf32>
    %150 = arith.addf %149, %148 : vector<2x64xf32>
    %151 = arith.divf %149, %150 : vector<2x64xf32>
    %152 = vector.extract_strided_slice %133 {offsets = [0, 192], sizes = [2, 64], strides = [1, 1]} : vector<2x256xf32> to vector<2x64xf32>
    %153 = math.tanh %152 : vector<2x64xf32>
    %154 = arith.mulf %145, %104 : vector<2x64xf32>
    %155 = arith.mulf %139, %153 : vector<2x64xf32>
    %156 = arith.addf %154, %155 : vector<2x64xf32>
    %cst_61 = arith.constant dense<0.000000e+00> : vector<2xf32>
    %157 = vector.multi_reduction <add>, %156, %cst_61 [1] : vector<2x64xf32> to vector<2xf32>
    %158 = vector.shape_cast %157 : vector<2xf32> to vector<2x1xf32>
    %cst_62 = arith.constant 6.400000e+01 : f32
    %159 = vector.broadcast %cst_62 : f32 to vector<2x1xf32>
    %160 = arith.divf %158, %159 : vector<2x1xf32>
    %161 = vector.broadcast %160 : vector<2x1xf32> to vector<2x64xf32>
    %162 = arith.subf %156, %161 : vector<2x64xf32>
    %163 = arith.mulf %162, %162 : vector<2x64xf32>
    %cst_63 = arith.constant dense<0.000000e+00> : vector<2xf32>
    %164 = vector.multi_reduction <add>, %163, %cst_63 [1] : vector<2x64xf32> to vector<2xf32>
    %165 = vector.shape_cast %164 : vector<2xf32> to vector<2x1xf32>
    %cst_64 = arith.constant 6.400000e+01 : f32
    %166 = vector.broadcast %cst_64 : f32 to vector<2x1xf32>
    %167 = arith.divf %165, %166 : vector<2x1xf32>
    %168 = vector.broadcast %160 : vector<2x1xf32> to vector<2x64xf32>
    %169 = arith.subf %156, %168 : vector<2x64xf32>
    %cst_65 = arith.constant 9.99999974E-6 : f32
    %170 = vector.broadcast %cst_65 : f32 to vector<2x1xf32>
    %171 = arith.addf %167, %170 : vector<2x1xf32>
    %172 = math.rsqrt %171 : vector<2x1xf32>
    %173 = vector.broadcast %172 : vector<2x1xf32> to vector<2x64xf32>
    %174 = arith.mulf %169, %173 : vector<2x64xf32>
    %175 = vector.broadcast %6 : vector<1x64xf32> to vector<2x64xf32>
    %176 = arith.mulf %174, %175 : vector<2x64xf32>
    %177 = vector.broadcast %7 : vector<1x64xf32> to vector<2x64xf32>
    %178 = arith.addf %176, %177 : vector<2x64xf32>
    %179 = math.tanh %178 : vector<2x64xf32>
    %180 = arith.mulf %151, %179 : vector<2x64xf32>
    %c0_66 = arith.constant 0 : index
    %c0_67 = arith.constant 0 : index
    %181 = vector.load %arg10[%c0_66, %c0_67] : memref<2x64xf32, #tpu.memory_space<vmem>>, vector<2x64xf32>
    tpu.vector_store %arg10[%c0_66, %c0_67], %180 {strides = array<i32>} : memref<2x64xf32, #tpu.memory_space<vmem>>, vector<2x64xf32>,
    %c0_68 = arith.constant 0 : index
    %c0_69 = arith.constant 0 : index
    %182 = vector.load %arg11[%c0_68, %c0_69] : memref<2x64xf32, #tpu.memory_space<vmem>>, vector<2x64xf32>
    tpu.vector_store %arg11[%c0_68, %c0_69], %156 {strides = array<i32>} : memref<2x64xf32, #tpu.memory_space<vmem>>, vector<2x64xf32>,
    %c1_70 = arith.constant 1 : index
    %c0_71 = arith.constant 0 : index
    %c0_72 = arith.constant 0 : index
    %183 = vector.load %arg7[%c1_70, %c0_71, %c0_72] : memref<2x2x64xf32, #tpu.memory_space<vmem>>, vector<1x2x64xf32>
    %184 = vector.shape_cast %183 : vector<1x2x64xf32> to vector<2x64xf32>
    %185 = vector.shape_cast %180 : vector<2x64xf32> to vector<1x2x64xf32>
    tpu.vector_store %arg7[%c1_70, %c0_71, %c0_72], %185 {strides = array<i32>} : memref<2x2x64xf32, #tpu.memory_space<vmem>>, vector<1x2x64xf32>,
    %c0_i32_73 = arith.constant 0 : i32
    %186 = arith.cmpi eq, %arg0, %c0_i32_73 : i32
    %187 = arith.extui %186 : i1 to i32
    %c0_i32_74 = arith.constant 0 : i32
    %188 = arith.cmpi ne, %187, %c0_i32_74 : i32
    scf.if %188 {
      %c0_75 = arith.constant 0 : index
      %c0_76 = arith.constant 0 : index
      %189 = vector.load %arg10[%c0_75, %c0_76] : memref<2x64xf32, #tpu.memory_space<vmem>>, vector<2x64xf32>
      %c0_77 = arith.constant 0 : index
      %c0_78 = arith.constant 0 : index
      %190 = vector.load %arg8[%c0_77, %c0_78] : memref<2x64xf32, #tpu.memory_space<vmem>>, vector<2x64xf32>
      tpu.vector_store %arg8[%c0_77, %c0_78], %189 {strides = array<i32>} : memref<2x64xf32, #tpu.memory_space<vmem>>, vector<2x64xf32>,
      %c0_79 = arith.constant 0 : index
      %c0_80 = arith.constant 0 : index
      %191 = vector.load %arg11[%c0_79, %c0_80] : memref<2x64xf32, #tpu.memory_space<vmem>>, vector<2x64xf32>
      %c0_81 = arith.constant 0 : index
      %c0_82 = arith.constant 0 : index
      %192 = vector.load %arg9[%c0_81, %c0_82] : memref<2x64xf32, #tpu.memory_space<vmem>>, vector<2x64xf32>
      tpu.vector_store %arg9[%c0_81, %c0_82], %191 {strides = array<i32>} : memref<2x64xf32, #tpu.memory_space<vmem>>, vector<2x64xf32>,
    } else {
    }
    return
  }
  func.func @transform_0(%arg0: i32) -> (i32, i32, i32) {
    %c0_i32 = arith.constant 0 : i32
    %c0_i32_0 = arith.constant 0 : i32
    %c0_i32_1 = arith.constant 0 : i32
    return %arg0, %c0_i32, %c0_i32_0 : i32, i32, i32
  }
  func.func @transform_1(%arg0: i32) -> (i32, i32, i32) {
    %c0_i32 = arith.constant 0 : i32
    %c0_i32_0 = arith.constant 0 : i32
    %c0_i32_1 = arith.constant 0 : i32
    return %arg0, %c0_i32, %c0_i32_0 : i32, i32, i32
  }
  func.func @transform_2(%arg0: i32) -> (i32, i32) {
    %c0_i32 = arith.constant 0 : i32
    %c0_i32_0 = arith.constant 0 : i32
    %c0_i32_1 = arith.constant 0 : i32
    return %c0_i32, %c0_i32_0 : i32, i32
  }
  func.func @transform_3(%arg0: i32) -> (i32, i32) {
    %c0_i32 = arith.constant 0 : i32
    %c0_i32_0 = arith.constant 0 : i32
    %c0_i32_1 = arith.constant 0 : i32
    return %c0_i32, %c0_i32_0 : i32, i32
  }
  func.func @transform_4(%arg0: i32) -> (i32, i32) {
    %c0_i32 = arith.constant 0 : i32
    %c0_i32_0 = arith.constant 0 : i32
    %c0_i32_1 = arith.constant 0 : i32
    return %c0_i32, %c0_i32_0 : i32, i32
  }
  func.func @transform_5(%arg0: i32) -> (i32, i32) {
    %c0_i32 = arith.constant 0 : i32
    %c0_i32_0 = arith.constant 0 : i32
    %c0_i32_1 = arith.constant 0 : i32
    return %c0_i32, %c0_i32_0 : i32, i32
  }
  func.func @transform_6(%arg0: i32) -> (i32, i32, i32) {
    %c0_i32 = arith.constant 0 : i32
    %c0_i32_0 = arith.constant 0 : i32
    %c0_i32_1 = arith.constant 0 : i32
    return %arg0, %c0_i32, %c0_i32_0 : i32, i32, i32
  }
  func.func @transform_7(%arg0: i32) -> (i32, i32) {
    %c0_i32 = arith.constant 0 : i32
    %c0_i32_0 = arith.constant 0 : i32
    %c0_i32_1 = arith.constant 0 : i32
    return %c0_i32, %c0_i32_0 : i32, i32
  }
  func.func @transform_8(%arg0: i32) -> (i32, i32) {
    %c0_i32 = arith.constant 0 : i32
    %c0_i32_0 = arith.constant 0 : i32
    %c0_i32_1 = arith.constant 0 : i32
    return %c0_i32, %c0_i32_0 : i32, i32
  }
}

</mosaic_0001>

<llo_original>
// kernel: _lambda_.8
$region0: #{_lambda_.8}
  #allocation0 [shape = 'u32[]', space=smem, size = 0x4, offset = 0x4, fixed_abs, tag = 'smem constant byte address 0x4 - core index']
  #allocation1 [shape = 'u32[72,128]{1,0:T(1,128)}', space=vmem, size = 0x9000, scoped, tag = 'internal scratch']
  %s0 = inlined_call_operand.vmem [shape: bf16[2,1024,128], index: 0, kind: input, shape index: {}]
  %s1 = inlined_call_operand.vmem [shape: bf16[2,128,32], index: 1, kind: input, shape index: {}]
  %s2 = inlined_call_operand.vmem [shape: f32[2,1,32], index: 2, kind: input, shape index: {}]
  %s3 = inlined_call_operand.vmem [shape: bf16[2,1024,32], index: 3, kind: output, shape index: {}]
  %s4 = sld [smem:[#allocation0]]
  $region45: #{_lambda_.8} parent=0
    _
  %s6 = ssub.s32 1, %s4
  %s7 = scalar_select 0, %s6, %s4
  loop: start=0, step=1, limit=6
  $region2: #{_lambda_.8} parent=0 // loop_pre_header
    _
  $region3: #{_lambda_.8} parent=0 // loop_header
    %s9 = sphi 0, %s13
    %p10 = scmp.ge.s32.totalorder %s9, 6
    %s16 = sphi 0, %s28
    %s17 = sphi 0, %s24
    %s18 = sphi 0, %s16
    %s19 = sphi 0, %s17
    %s20 = sphi 0, %s18
    %s21 = sphi 0, %s19
    %s33 = sphi 0, %s35
    %s36 = sphi 0, %s33
    %s37 = sphi 0, %s36
    %s53 = sphi 0, %s37
    %s59 = sphi 0, %s61
    %s62 = sphi 0, %s59
    %s63 = sphi 0, %s62
    %s79 = sphi 0, %s63
    %s85 = sphi 0, %s87
    %s88 = sphi 0, %s85
    %s89 = sphi 0, %s88
    %s105 = sphi 0, %s89
    %s113 = sphi 0, %s115
    %s116 = sphi 0, %s113
    %s117 = sphi 0, %s116
    %s133 = sphi 0, %s117
  $region4: #{_lambda_.8} parent=0 // loop_header_branch
    %12 = sbr.rel (%p10) target = $region8
  $region5: #{_lambda_.8} parent=0 // loop_body
    %s14 = ssub.s32 %s9, 1
    %s15 = ssub.s32 %s9, 2
    %s22 = sadd.s32 1, %s17
    %p23 = scmp.ge.s32.totalorder %s22, 2
    %s24 = scalar_select %p23, 0, %s22
    %s25 = sadd.s32 1, %s16
    %s26 = scalar_select %p23, %s25, %s16
    %p27 = scmp.ge.s32.totalorder %s26, 2
    %s28 = scalar_select %p27, 0, %s26
    %s29 = ssub.s32 %s16, %s28
    %s30 = ssub.s32 %s17, %s24
    %s31 = sor.u32 %s29, %s30
    %p32 = scmp.eq.s32.totalorder %s31, 0
    %s34 = sadd.s32 %s33, 1
    %s35 = scalar_select %p32, %s33, %s34
    %p38 = pneg %p32
    %p39 = scmp.eq.s32.totalorder %s9, 3
    %p40 = por %p38, %p39
    %p41 = scmp.ne.s32.totalorder %s33, %s36
    %p42 = scmp.eq.s32.totalorder %s9, 0
    %p43 = por %p41, %p42
    %p44 = scmp.ne.s32.totalorder %s33, %s36
    %p45 = scmp.eq.s32.totalorder %s14, 3
    %p46 = por %p44, %p45
    %p47 = scmp.ne.s32.totalorder %s36, %s37
    %p48 = scmp.eq.s32.totalorder %s14, 0
    %p49 = por %p47, %p48
    %p50 = scmp.ne.s32.totalorder %s36, %s37
    %p51 = scmp.eq.s32.totalorder %s15, 3
    %p52 = por %p50, %p51
    %p54 = scmp.ne.s32.totalorder %s37, %s53
    %p55 = scmp.eq.s32.totalorder %s15, 0
    %p56 = por %p54, %p55
    %s57 = ssub.s32 %s16, %s28
    %p58 = scmp.eq.s32.totalorder %s57, 0
    %s60 = sadd.s32 %s59, 1
    %s61 = scalar_select %p58, %s59, %s60
    %p64 = pneg %p58
    %p65 = scmp.eq.s32.totalorder %s9, 3
    %p66 = por %p64, %p65
    %p67 = scmp.ne.s32.totalorder %s59, %s62
    %p68 = scmp.eq.s32.totalorder %s9, 0
    %p69 = por %p67, %p68
    %p70 = scmp.ne.s32.totalorder %s59, %s62
    %p71 = scmp.eq.s32.totalorder %s14, 3
    %p72 = por %p70, %p71
    %p73 = scmp.ne.s32.totalorder %s62, %s63
    %p74 = scmp.eq.s32.totalorder %s14, 0
    %p75 = por %p73, %p74
    %p76 = scmp.ne.s32.totalorder %s62, %s63
    %p77 = scmp.eq.s32.totalorder %s15, 3
    %p78 = por %p76, %p77
    %p80 = scmp.ne.s32.totalorder %s63, %s79
    %p81 = scmp.eq.s32.totalorder %s15, 0
    %p82 = por %p80, %p81
    %s83 = ssub.s32 %s16, %s28
    %p84 = scmp.eq.s32.totalorder %s83, 0
    %s86 = sadd.s32 %s85, 1
    %s87 = scalar_select %p84, %s85, %s86
    %p90 = pneg %p84
    %p91 = scmp.eq.s32.totalorder %s9, 3
    %p92 = por %p90, %p91
    %p93 = scmp.ne.s32.totalorder %s85, %s88
    %p94 = scmp.eq.s32.totalorder %s9, 0
    %p95 = por %p93, %p94
    %p96 = scmp.ne.s32.totalorder %s85, %s88
    %p97 = scmp.eq.s32.totalorder %s14, 3
    %p98 = por %p96, %p97
    %p99 = scmp.ne.s32.totalorder %s88, %s89
    %p100 = scmp.eq.s32.totalorder %s14, 0
    %p101 = por %p99, %p100
    %p102 = scmp.ne.s32.totalorder %s88, %s89
    %p103 = scmp.eq.s32.totalorder %s15, 3
    %p104 = por %p102, %p103
    %p106 = scmp.ne.s32.totalorder %s89, %s105
    %p107 = scmp.eq.s32.totalorder %s15, 0
    %p108 = por %p106, %p107
    %s109 = ssub.s32 %s16, %s28
    %s110 = ssub.s32 %s17, %s24
    %s111 = sor.u32 %s109, %s110
    %p112 = scmp.eq.s32.totalorder %s111, 0
    %s114 = sadd.s32 %s113, 1
    %s115 = scalar_select %p112, %s113, %s114
    %p118 = pneg %p112
    %p119 = scmp.eq.s32.totalorder %s9, 3
    %p120 = por %p118, %p119
    %p121 = scmp.ne.s32.totalorder %s113, %s116
    %p122 = scmp.eq.s32.totalorder %s9, 0
    %p123 = por %p121, %p122
    %p124 = scmp.ne.s32.totalorder %s113, %s116
    %p125 = scmp.eq.s32.totalorder %s14, 3
    %p126 = por %p124, %p125
    %p127 = scmp.ne.s32.totalorder %s116, %s117
    %p128 = scmp.eq.s32.totalorder %s14, 0
    %p129 = por %p127, %p128
    %p130 = scmp.ne.s32.totalorder %s116, %s117
    %p131 = scmp.eq.s32.totalorder %s15, 3
    %p132 = por %p130, %p131
    %p134 = scmp.ne.s32.totalorder %s117, %s133
    %p135 = scmp.eq.s32.totalorder %s15, 0
    %p136 = por %p134, %p135
    %p137 = scmp.le.s32.totalorder 1, %s9
    %p138 = scmp.lt.s32.totalorder %s9, 5
    %p139 = pnand %p137, %p138
    %p140 = pneg %p139
    // Predicated region
    $region9: #{_lambda_.8} parent=5 // pred_check
      _
    $region10: #{_lambda_.8} parent=5 // pred_check_branch
      %142 = sbr.rel (%p139) target = $region12
    $region11: #{_lambda_.8} parent=5 // pred_region
      %s143 = ssub.s32 %s9, 1
    $region12: #{_lambda_.8} parent=5 // pred_fallthru
      _
    %p144 = scmp.lt.s32.totalorder %s9, 4
    // Predicated region
    $region13: #{_lambda_.8} parent=5 // pred_check
      %p145 = pneg %p144
    $region14: #{_lambda_.8} parent=5 // pred_check_branch
      %147 = sbr.rel (%p145) target = $region16
    $region15: #{_lambda_.8} parent=5 // pred_region
      // Predicated region
      $region17: #{_lambda_.8} parent=15 // pred_check
        %p148 = pneg %p43
      $region18: #{_lambda_.8} parent=15 // pred_check_branch
        %150 = sbr.rel (%p148) target = $region20
      $region19: #{_lambda_.8} parent=15 // pred_region
        %s151 = smul.u32 64, %s17
        %p152 = scmp.lt.s32.totalorder %s16, 1
        %s153 = scalar_select %p152, %s16, 1
        %p154 = scmp.lt.s32.totalorder %s151, 127
        %s155 = scalar_select %p154, %s151, 127
        %s156 = smul.addr %s153, 128
        %s157 = sadd.s32 %s155, %s156
        %s158 = smul.addr %s157, 4
        %s159 = scalar_lea.vmem %s0, %s158
        %s160 = smul.u32 64, %s17
      $region20: #{_lambda_.8} parent=15 // pred_fallthru
        _
      // Predicated region
      $region21: #{_lambda_.8} parent=15 // pred_check
        %p161 = pneg %p69
      $region22: #{_lambda_.8} parent=15 // pred_check_branch
        %163 = sbr.rel (%p161) target = $region24
      $region23: #{_lambda_.8} parent=15 // pred_region
        %p164 = scmp.lt.s32.totalorder %s16, 1
        %s165 = scalar_select %p164, %s16, 1
        %s166 = smul.addr %s165, 16
        %s167 = smul.addr %s166, 4
        %s168 = scalar_lea.vmem %s1, %s167
      $region24: #{_lambda_.8} parent=15 // pred_fallthru
        _
      // Predicated region
      $region25: #{_lambda_.8} parent=15 // pred_check
        %p169 = pneg %p95
      $region26: #{_lambda_.8} parent=15 // pred_check_branch
        %171 = sbr.rel (%p169) target = $region28
      $region27: #{_lambda_.8} parent=15 // pred_region
        %p172 = scmp.lt.s32.totalorder %s16, 1
        %s173 = scalar_select %p172, %s16, 1
        %s174 = scalar_lea.vmem %s2, %s173
      $region28: #{_lambda_.8} parent=15 // pred_fallthru
        _
    $region16: #{_lambda_.8} parent=5 // pred_fallthru
      _
    %p175 = scmp.le.s32.totalorder 1, %s9
    %p176 = scmp.lt.s32.totalorder %s9, 5
    %p177 = pnand %p175, %p176
    %p178 = pneg %p177
    // Predicated region
    $region29: #{_lambda_.8} parent=5 // pred_check
      _
    $region30: #{_lambda_.8} parent=5 // pred_check_branch
      %180 = sbr.rel (%p177) target = $region32
    $region31: #{_lambda_.8} parent=5 // pred_region
      %s181 = ssub.s32 %s9, 1
      %s182 = smul.u32 64, %s19
      %p183 = scmp.lt.s32.totalorder %s18, 1
      %s184 = scalar_select %p183, %s18, 1
      %p185 = scmp.lt.s32.totalorder %s182, 127
      %s186 = scalar_select %p185, %s182, 127
      %s187 = smul.addr %s184, 128
      %s188 = sadd.s32 %s186, %s187
      %s189 = smul.addr %s188, 4
      %s190 = scalar_lea.vmem %s0, %s189
      %p191 = pneg %p49
      %p192 = pneg %p46
      %p193 = scmp.lt.s32.totalorder %s18, 1
      %s194 = scalar_select %p193, %s18, 1
      %s195 = smul.addr %s194, 16
      %s196 = smul.addr %s195, 4
      %s197 = scalar_lea.vmem %s1, %s196
      %p198 = pneg %p75
      %p199 = pneg %p72
      %p200 = scmp.lt.s32.totalorder %s18, 1
      %s201 = scalar_select %p200, %s18, 1
      %s202 = scalar_lea.vmem %s2, %s201
      %p203 = pneg %p101
      %p204 = pneg %p98
      %p205 = pneg %p129
      %p206 = pneg %p126
      %s207 = smul.u32 64, %s19
      %p208 = scmp.lt.s32.totalorder %s18, 1
      %s209 = scalar_select %p208, %s18, 1
      %p210 = scmp.lt.s32.totalorder %s207, 127
      %s211 = scalar_select %p210, %s207, 127
      %s212 = smul.addr %s209, 128
      %s213 = sadd.s32 %s211, %s212
      %s214 = smul.addr %s213, 4
      %s215 = scalar_lea.vmem %s3, %s214
      %s216 = smul.u32 64, %s19
      %p217 = scmp.lt.s32.totalorder %s18, 1
      %s218 = scalar_select %p217, %s18, 1
      %p219 = scmp.lt.s32.totalorder %s216, 127
      %s220 = scalar_select %p219, %s216, 127
      %s221 = smul.addr %s218, 128
      %s222 = sadd.s32 %s220, %s221
      %s223 = smul.addr %s222, 4
      %s224 = scalar_lea.vmem %s0, %s223
      %s225 = smul.u32 64, %s19
      %p226 = scmp.lt.s32.totalorder %s18, 1
      %s227 = scalar_select %p226, %s18, 1
      %s228 = smul.addr %s227, 16
      %s229 = smul.addr %s228, 4
      %s230 = scalar_lea.vmem %s1, %s229
      %p231 = scmp.lt.s32.totalorder %s18, 1
      %s232 = scalar_select %p231, %s18, 1
      %s233 = scalar_lea.vmem %s2, %s232
      %s234 = smul.u32 64, %s19
      %p235 = scmp.lt.s32.totalorder %s18, 1
      %s236 = scalar_select %p235, %s18, 1
      %p237 = scmp.lt.s32.totalorder %s234, 127
      %s238 = scalar_select %p237, %s234, 127
      %s239 = smul.addr %s236, 128
      %s240 = sadd.s32 %s238, %s239
      %s241 = smul.addr %s240, 4
      %s242 = scalar_lea.vmem %s3, %s241
      %s243 = smul.u32 64, %s19
      %v244 = vld [vmem:[%s224] sm:$0xf]
      %v245 = vld [vmem:[%s224 + $0x4] sm:$0xf]
      %v246 = vld [vmem:[%s224 + $0x8] sm:$0xf]
      %v247 = vld [vmem:[%s224 + $0xc] sm:$0xf]
      %v248 = vld [vmem:[%s224 + $0x10] sm:$0xf]
      %v249 = vld [vmem:[%s224 + $0x14] sm:$0xf]
      %v250 = vld [vmem:[%s224 + $0x18] sm:$0xf]
      %v251 = vld [vmem:[%s224 + $0x1c] sm:$0xf]
      %v252 = vld [vmem:[%s224 + $0x20] sm:$0xf]
      %v253 = vld [vmem:[%s224 + $0x24] sm:$0xf]
      %v254 = vld [vmem:[%s224 + $0x28] sm:$0xf]
      %v255 = vld [vmem:[%s224 + $0x2c] sm:$0xf]
      %v256 = vld [vmem:[%s224 + $0x30] sm:$0xf]
      %v257 = vld [vmem:[%s224 + $0x34] sm:$0xf]
      %v258 = vld [vmem:[%s224 + $0x38] sm:$0xf]
      %v259 = vld [vmem:[%s224 + $0x3c] sm:$0xf]
      %v260 = vld [vmem:[%s224 + $0x40] sm:$0xf]
      %v261 = vld [vmem:[%s224 + $0x44] sm:$0xf]
      %v262 = vld [vmem:[%s224 + $0x48] sm:$0xf]
      %v263 = vld [vmem:[%s224 + $0x4c] sm:$0xf]
      %v264 = vld [vmem:[%s224 + $0x50] sm:$0xf]
      %v265 = vld [vmem:[%s224 + $0x54] sm:$0xf]
      %v266 = vld [vmem:[%s224 + $0x58] sm:$0xf]
      %v267 = vld [vmem:[%s224 + $0x5c] sm:$0xf]
      %v268 = vld [vmem:[%s224 + $0x60] sm:$0xf]
      %v269 = vld [vmem:[%s224 + $0x64] sm:$0xf]
      %v270 = vld [vmem:[%s224 + $0x68] sm:$0xf]
      %v271 = vld [vmem:[%s224 + $0x6c] sm:$0xf]
      %v272 = vld [vmem:[%s224 + $0x70] sm:$0xf]
      %v273 = vld [vmem:[%s224 + $0x74] sm:$0xf]
      %v274 = vld [vmem:[%s224 + $0x78] sm:$0xf]
      %v275 = vld [vmem:[%s224 + $0x7c] sm:$0xf]
      %v276 = vld [vmem:[%s224 + $0x80] sm:$0xf]
      %v277 = vld [vmem:[%s224 + $0x84] sm:$0xf]
      %v278 = vld [vmem:[%s224 + $0x88] sm:$0xf]
      %v279 = vld [vmem:[%s224 + $0x8c] sm:$0xf]
      %v280 = vld [vmem:[%s224 + $0x90] sm:$0xf]
      %v281 = vld [vmem:[%s224 + $0x94] sm:$0xf]
      %v282 = vld [vmem:[%s224 + $0x98] sm:$0xf]
      %v283 = vld [vmem:[%s224 + $0x9c] sm:$0xf]
      %v284 = vld [vmem:[%s224 + $0xa0] sm:$0xf]
      %v285 = vld [vmem:[%s224 + $0xa4] sm:$0xf]
      %v286 = vld [vmem:[%s224 + $0xa8] sm:$0xf]
      %v287 = vld [vmem:[%s224 + $0xac] sm:$0xf]
      %v288 = vld [vmem:[%s224 + $0xb0] sm:$0xf]
      %v289 = vld [vmem:[%s224 + $0xb4] sm:$0xf]
      %v290 = vld [vmem:[%s224 + $0xb8] sm:$0xf]
      %v291 = vld [vmem:[%s224 + $0xbc] sm:$0xf]
      %v292 = vld [vmem:[%s224 + $0xc0] sm:$0xf]
      %v293 = vld [vmem:[%s224 + $0xc4] sm:$0xf]
      %v294 = vld [vmem:[%s224 + $0xc8] sm:$0xf]
      %v295 = vld [vmem:[%s224 + $0xcc] sm:$0xf]
      %v296 = vld [vmem:[%s224 + $0xd0] sm:$0xf]
      %v297 = vld [vmem:[%s224 + $0xd4] sm:$0xf]
      %v298 = vld [vmem:[%s224 + $0xd8] sm:$0xf]
      %v299 = vld [vmem:[%s224 + $0xdc] sm:$0xf]
      %v300 = vld [vmem:[%s224 + $0xe0] sm:$0xf]
      %v301 = vld [vmem:[%s224 + $0xe4] sm:$0xf]
      %v302 = vld [vmem:[%s224 + $0xe8] sm:$0xf]
      %v303 = vld [vmem:[%s224 + $0xec] sm:$0xf]
      %v304 = vld [vmem:[%s224 + $0xf0] sm:$0xf]
      %v305 = vld [vmem:[%s224 + $0xf4] sm:$0xf]
      %v306 = vld [vmem:[%s224 + $0xf8] sm:$0xf]
      %v307 = vld [vmem:[%s224 + $0xfc] sm:$0xf]
      %v308 = vld [vmem:[%s230] sm:$0xf]
      %v309 = vld [vmem:[%s230 + $0x4] sm:$0xf]
      %v310 = vld [vmem:[%s230 + $0x8] sm:$0xf]
      %v311 = vld [vmem:[%s230 + $0xc] sm:$0xf]
      %v312 = vld [vmem:[%s230 + $0x10] sm:$0xf]
      %v313 = vld [vmem:[%s230 + $0x14] sm:$0xf]
      %v314 = vld [vmem:[%s230 + $0x18] sm:$0xf]
      %v315 = vld [vmem:[%s230 + $0x1c] sm:$0xf]
      %v316 = vld [vmem:[%s230 + $0x20] sm:$0xf]
      %v317 = vld [vmem:[%s230 + $0x24] sm:$0xf]
      %v318 = vld [vmem:[%s230 + $0x28] sm:$0xf]
      %v319 = vld [vmem:[%s230 + $0x2c] sm:$0xf]
      %v320 = vld [vmem:[%s230 + $0x30] sm:$0xf]
      %v321 = vld [vmem:[%s230 + $0x34] sm:$0xf]
      %v322 = vld [vmem:[%s230 + $0x38] sm:$0xf]
      %v323 = vld [vmem:[%s230 + $0x3c] sm:$0xf]
      %v324 = vld [vmem:[%s233] sm:$0x1]
      %v326 = vperm.slane %v324, 0
      %v392 = vunpack.c.l.b16 %v244
      %v393 = vunpack.c.l.b16 %v245
      %v394 = vunpack.c.l.b16 %v246
      %v395 = vunpack.c.l.b16 %v247
      %v396 = vunpack.c.l.b16 %v248
      %v397 = vunpack.c.l.b16 %v249
      %v398 = vunpack.c.l.b16 %v250
      %v399 = vunpack.c.l.b16 %v251
      %v400 = vunpack.c.l.b16 %v252
      %v401 = vunpack.c.l.b16 %v253
      %v402 = vunpack.c.l.b16 %v254
      %v403 = vunpack.c.l.b16 %v255
      %v404 = vunpack.c.l.b16 %v256
      %v405 = vunpack.c.l.b16 %v257
      %v406 = vunpack.c.l.b16 %v258
      %v407 = vunpack.c.l.b16 %v259
      %v408 = vunpack.c.l.b16 %v260
      %v409 = vunpack.c.l.b16 %v261
      %v410 = vunpack.c.l.b16 %v262
      %v411 = vunpack.c.l.b16 %v263
      %v412 = vunpack.c.l.b16 %v264
      %v413 = vunpack.c.l.b16 %v265
      %v414 = vunpack.c.l.b16 %v266
      %v415 = vunpack.c.l.b16 %v267
      %v416 = vunpack.c.l.b16 %v268
      %v417 = vunpack.c.l.b16 %v269
      %v418 = vunpack.c.l.b16 %v270
      %v419 = vunpack.c.l.b16 %v271
      %v420 = vunpack.c.l.b16 %v272
      %v421 = vunpack.c.l.b16 %v273
      %v422 = vunpack.c.l.b16 %v274
      %v423 = vunpack.c.l.b16 %v275
      %v424 = vunpack.c.l.b16 %v276
      %v425 = vunpack.c.l.b16 %v277
      %v426 = vunpack.c.l.b16 %v278
      %v427 = vunpack.c.l.b16 %v279
      %v428 = vunpack.c.l.b16 %v280
      %v429 = vunpack.c.l.b16 %v281
      %v430 = vunpack.c.l.b16 %v282
      %v431 = vunpack.c.l.b16 %v283
      %v432 = vunpack.c.l.b16 %v284
      %v433 = vunpack.c.l.b16 %v285
      %v434 = vunpack.c.l.b16 %v286
      %v435 = vunpack.c.l.b16 %v287
      %v436 = vunpack.c.l.b16 %v288
      %v437 = vunpack.c.l.b16 %v289
      %v438 = vunpack.c.l.b16 %v290
      %v439 = vunpack.c.l.b16 %v291
      %v440 = vunpack.c.l.b16 %v292
      %v441 = vunpack.c.l.b16 %v293
      %v442 = vunpack.c.l.b16 %v294
      %v443 = vunpack.c.l.b16 %v295
      %v444 = vunpack.c.l.b16 %v296
      %v445 = vunpack.c.l.b16 %v297
      %v446 = vunpack.c.l.b16 %v298
      %v447 = vunpack.c.l.b16 %v299
      %v448 = vunpack.c.l.b16 %v300
      %v449 = vunpack.c.l.b16 %v301
      %v450 = vunpack.c.l.b16 %v302
      %v451 = vunpack.c.l.b16 %v303
      %v452 = vunpack.c.l.b16 %v304
      %v453 = vunpack.c.l.b16 %v305
      %v454 = vunpack.c.l.b16 %v306
      %v455 = vunpack.c.l.b16 %v307
      %v456 = vpack.c.b16 %v393, %v392
      %v457 = vpack.c.b16 %v395, %v394
      %v458 = vpack.c.b16 %v397, %v396
      %v459 = vpack.c.b16 %v399, %v398
      %v460 = vpack.c.b16 %v401, %v400
      %v461 = vpack.c.b16 %v403, %v402
      %v462 = vpack.c.b16 %v405, %v404
      %v463 = vpack.c.b16 %v407, %v406
      %v464 = vpack.c.b16 %v409, %v408
      %v465 = vpack.c.b16 %v411, %v410
      %v466 = vpack.c.b16 %v413, %v412
      %v467 = vpack.c.b16 %v415, %v414
      %v468 = vpack.c.b16 %v417, %v416
      %v469 = vpack.c.b16 %v419, %v418
      %v470 = vpack.c.b16 %v421, %v420
      %v471 = vpack.c.b16 %v423, %v422
      %v472 = vpack.c.b16 %v425, %v424
      %v473 = vpack.c.b16 %v427, %v426
      %v474 = vpack.c.b16 %v429, %v428
      %v475 = vpack.c.b16 %v431, %v430
      %v476 = vpack.c.b16 %v433, %v432
      %v477 = vpack.c.b16 %v435, %v434
      %v478 = vpack.c.b16 %v437, %v436
      %v479 = vpack.c.b16 %v439, %v438
      %v480 = vpack.c.b16 %v441, %v440
      %v481 = vpack.c.b16 %v443, %v442
      %v482 = vpack.c.b16 %v445, %v444
      %v483 = vpack.c.b16 %v447, %v446
      %v484 = vpack.c.b16 %v449, %v448
      %v485 = vpack.c.b16 %v451, %v450
      %v486 = vpack.c.b16 %v453, %v452
      %v487 = vpack.c.b16 %v455, %v454
      %v536 = vunpack.c.l.b16 %v308
      %v537 = vunpack.c.l.b16 %v309
      %v538 = vunpack.c.l.b16 %v310
      %v539 = vunpack.c.l.b16 %v311
      %v540 = vunpack.c.l.b16 %v312
      %v541 = vunpack.c.l.b16 %v313
      %v542 = vunpack.c.l.b16 %v314
      %v543 = vunpack.c.l.b16 %v315
      %v544 = vunpack.c.l.b16 %v316
      %v545 = vunpack.c.l.b16 %v317
      %v546 = vunpack.c.l.b16 %v318
      %v547 = vunpack.c.l.b16 %v319
      %v548 = vunpack.c.l.b16 %v320
      %v549 = vunpack.c.l.b16 %v321
      %v550 = vunpack.c.l.b16 %v322
      %v551 = vunpack.c.l.b16 %v323
      %v552 = vpack.c.b16 %v537, %v536
      %v553 = vpack.c.b16 %v539, %v538
      %v554 = vpack.c.b16 %v541, %v540
      %v555 = vpack.c.b16 %v543, %v542
      %v556 = vpack.c.b16 %v545, %v544
      %v557 = vpack.c.b16 %v547, %v546
      %v558 = vpack.c.b16 %v549, %v548
      %v559 = vpack.c.b16 %v551, %v550
      %568 = vmatpush.bf16.msra.mxu0 %v559
      %569 = vmatpush.bf16.msra.mxu0 %v558
      %570 = vmatpush.bf16.msra.mxu0 %v557
      %571 = vmatpush.bf16.msra.mxu0 %v556
      %572 = vmatpush.bf16.msra.mxu0 %v555
      %573 = vmatpush.bf16.msra.mxu0 %v554
      %574 = vmatpush.bf16.msra.mxu0 %v553
      %575 = vmatpush.bf16.msra.mxu0 %v552
      %576 = vmatmul.bf16.gmra.mxu0 %v456
      %v577 = vpop.f32.mrf.mxu0
      %v578 = vadd.f32 %v326, %v577
      %v579 = vpop.f32.mrf.mxu0
      %v580 = vadd.f32 %v326, %v579
      %581 = vmatmul.bf16.gmra.mxu0 %v457
      %v582 = vpop.f32.mrf.mxu0
      %v583 = vadd.f32 %v326, %v582
      %v584 = vpop.f32.mrf.mxu0
      %v585 = vadd.f32 %v326, %v584
      %586 = vmatmul.bf16.gmra.mxu0 %v458
      %v587 = vpop.f32.mrf.mxu0
      %v588 = vadd.f32 %v326, %v587
      %v589 = vpop.f32.mrf.mxu0
      %v590 = vadd.f32 %v326, %v589
      %591 = vmatmul.bf16.gmra.mxu0 %v459
      %v592 = vpop.f32.mrf.mxu0
      %v593 = vadd.f32 %v326, %v592
      %v594 = vpop.f32.mrf.mxu0
      %v595 = vadd.f32 %v326, %v594
      %596 = vmatmul.bf16.gmra.mxu0 %v460
      %v597 = vpop.f32.mrf.mxu0
      %v598 = vadd.f32 %v326, %v597
      %v599 = vpop.f32.mrf.mxu0
      %v600 = vadd.f32 %v326, %v599
      %601 = vmatmul.bf16.gmra.mxu0 %v461
      %v602 = vpop.f32.mrf.mxu0
      %v603 = vadd.f32 %v326, %v602
      %v604 = vpop.f32.mrf.mxu0
      %v605 = vadd.f32 %v326, %v604
      %606 = vmatmul.bf16.gmra.mxu0 %v462
      %v607 = vpop.f32.mrf.mxu0
      %v608 = vadd.f32 %v326, %v607
      %v609 = vpop.f32.mrf.mxu0
      %v610 = vadd.f32 %v326, %v609
      %611 = vmatmul.bf16.gmra.mxu0 %v463
      %v612 = vpop.f32.mrf.mxu0
      %v613 = vadd.f32 %v326, %v612
      %v614 = vpop.f32.mrf.mxu0
      %v615 = vadd.f32 %v326, %v614
      %616 = vmatmul.bf16.gmra.mxu0 %v464
      %v617 = vpop.f32.mrf.mxu0
      %v618 = vadd.f32 %v326, %v617
      %v619 = vpop.f32.mrf.mxu0
      %v620 = vadd.f32 %v326, %v619
      %621 = vmatmul.bf16.gmra.mxu0 %v465
      %v622 = vpop.f32.mrf.mxu0
      %v623 = vadd.f32 %v326, %v622
      %v624 = vpop.f32.mrf.mxu0
      %v625 = vadd.f32 %v326, %v624
      %626 = vmatmul.bf16.gmra.mxu0 %v466
      %v627 = vpop.f32.mrf.mxu0
      %v628 = vadd.f32 %v326, %v627
      %v629 = vpop.f32.mrf.mxu0
      %v630 = vadd.f32 %v326, %v629
      %631 = vmatmul.bf16.gmra.mxu0 %v467
      %v632 = vpop.f32.mrf.mxu0
      %v633 = vadd.f32 %v326, %v632
      %v634 = vpop.f32.mrf.mxu0
      %v635 = vadd.f32 %v326, %v634
      %636 = vmatmul.bf16.gmra.mxu0 %v468
      %v637 = vpop.f32.mrf.mxu0
      %v638 = vadd.f32 %v326, %v637
      %v639 = vpop.f32.mrf.mxu0
      %v640 = vadd.f32 %v326, %v639
      %641 = vmatmul.bf16.gmra.mxu0 %v469
      %v642 = vpop.f32.mrf.mxu0
      %v643 = vadd.f32 %v326, %v642
      %v644 = vpop.f32.mrf.mxu0
      %v645 = vadd.f32 %v326, %v644
      %646 = vmatmul.bf16.gmra.mxu0 %v470
      %v647 = vpop.f32.mrf.mxu0
      %v648 = vadd.f32 %v326, %v647
      %v649 = vpop.f32.mrf.mxu0
      %v650 = vadd.f32 %v326, %v649
      %651 = vmatmul.bf16.gmra.mxu0 %v471
      %v652 = vpop.f32.mrf.mxu0
      %v653 = vadd.f32 %v326, %v652
      %v654 = vpop.f32.mrf.mxu0
      %v655 = vadd.f32 %v326, %v654
      %656 = vmatmul.bf16.gmra.mxu0 %v472
      %v657 = vpop.f32.mrf.mxu0
      %v658 = vadd.f32 %v326, %v657
      %v659 = vpop.f32.mrf.mxu0
      %v660 = vadd.f32 %v326, %v659
      %661 = vmatmul.bf16.gmra.mxu0 %v473
      %v662 = vpop.f32.mrf.mxu0
      %v663 = vadd.f32 %v326, %v662
      %v664 = vpop.f32.mrf.mxu0
      %v665 = vadd.f32 %v326, %v664
      %666 = vmatmul.bf16.gmra.mxu0 %v474
      %v667 = vpop.f32.mrf.mxu0
      %v668 = vadd.f32 %v326, %v667
      %v669 = vpop.f32.mrf.mxu0
      %v670 = vadd.f32 %v326, %v669
      %671 = vmatmul.bf16.gmra.mxu0 %v475
      %v672 = vpop.f32.mrf.mxu0
      %v673 = vadd.f32 %v326, %v672
      %v674 = vpop.f32.mrf.mxu0
      %v675 = vadd.f32 %v326, %v674
      %676 = vmatmul.bf16.gmra.mxu0 %v476
      %v677 = vpop.f32.mrf.mxu0
      %v678 = vadd.f32 %v326, %v677
      %v679 = vpop.f32.mrf.mxu0
      %v680 = vadd.f32 %v326, %v679
      %681 = vmatmul.bf16.gmra.mxu0 %v477
      %v682 = vpop.f32.mrf.mxu0
      %v683 = vadd.f32 %v326, %v682
      %v684 = vpop.f32.mrf.mxu0
      %v685 = vadd.f32 %v326, %v684
      %686 = vmatmul.bf16.gmra.mxu0 %v478
      %v687 = vpop.f32.mrf.mxu0
      %v688 = vadd.f32 %v326, %v687
      %v689 = vpop.f32.mrf.mxu0
      %v690 = vadd.f32 %v326, %v689
      %691 = vmatmul.bf16.gmra.mxu0 %v479
      %v692 = vpop.f32.mrf.mxu0
      %v693 = vadd.f32 %v326, %v692
      %v694 = vpop.f32.mrf.mxu0
      %v695 = vadd.f32 %v326, %v694
      %696 = vmatmul.bf16.gmra.mxu0 %v480
      %v697 = vpop.f32.mrf.mxu0
      %v698 = vadd.f32 %v326, %v697
      %v699 = vpop.f32.mrf.mxu0
      %v700 = vadd.f32 %v326, %v699
      %701 = vmatmul.bf16.gmra.mxu0 %v481
      %v702 = vpop.f32.mrf.mxu0
      %v703 = vadd.f32 %v326, %v702
      %v704 = vpop.f32.mrf.mxu0
      %v705 = vadd.f32 %v326, %v704
      %706 = vmatmul.bf16.gmra.mxu0 %v482
      %v707 = vpop.f32.mrf.mxu0
      %v708 = vadd.f32 %v326, %v707
      %v709 = vpop.f32.mrf.mxu0
      %v710 = vadd.f32 %v326, %v709
      %711 = vmatmul.bf16.gmra.mxu0 %v483
      %v712 = vpop.f32.mrf.mxu0
      %v713 = vadd.f32 %v326, %v712
      %v714 = vpop.f32.mrf.mxu0
      %v715 = vadd.f32 %v326, %v714
      %716 = vmatmul.bf16.gmra.mxu0 %v484
      %v717 = vpop.f32.mrf.mxu0
      %v718 = vadd.f32 %v326, %v717
      %v719 = vpop.f32.mrf.mxu0
      %v720 = vadd.f32 %v326, %v719
      %721 = vmatmul.bf16.gmra.mxu0 %v485
      %v722 = vpop.f32.mrf.mxu0
      %v723 = vadd.f32 %v326, %v722
      %v724 = vpop.f32.mrf.mxu0
      %v725 = vadd.f32 %v326, %v724
      %726 = vmatmul.bf16.gmra.mxu0 %v486
      %v727 = vpop.f32.mrf.mxu0
      %v728 = vadd.f32 %v326, %v727
      %v729 = vpop.f32.mrf.mxu0
      %v730 = vadd.f32 %v326, %v729
      %731 = vmatmul.bf16.gmra.mxu0 %v487
      %v732 = vpop.f32.mrf.mxu0
      %v733 = vadd.f32 %v326, %v732
      %v734 = vpop.f32.mrf.mxu0
      %v735 = vadd.f32 %v326, %v734
      %736 = vdwg.mxu0
      %v737 = vmax.f32 %v578, 0.0
      %v738 = vmax.f32 %v580, 0.0
      %v739 = vmax.f32 %v583, 0.0
      %v740 = vmax.f32 %v585, 0.0
      %v741 = vmax.f32 %v588, 0.0
      %v742 = vmax.f32 %v590, 0.0
      %v743 = vmax.f32 %v593, 0.0
      %v744 = vmax.f32 %v595, 0.0
      %v745 = vmax.f32 %v598, 0.0
      %v746 = vmax.f32 %v600, 0.0
      %v747 = vmax.f32 %v603, 0.0
      %v748 = vmax.f32 %v605, 0.0
      %v749 = vmax.f32 %v608, 0.0
      %v750 = vmax.f32 %v610, 0.0
      %v751 = vmax.f32 %v613, 0.0
      %v752 = vmax.f32 %v615, 0.0
      %v753 = vmax.f32 %v618, 0.0
      %v754 = vmax.f32 %v620, 0.0
      %v755 = vmax.f32 %v623, 0.0
      %v756 = vmax.f32 %v625, 0.0
      %v757 = vmax.f32 %v628, 0.0
      %v758 = vmax.f32 %v630, 0.0
      %v759 = vmax.f32 %v633, 0.0
      %v760 = vmax.f32 %v635, 0.0
      %v761 = vmax.f32 %v638, 0.0
      %v762 = vmax.f32 %v640, 0.0
      %v763 = vmax.f32 %v643, 0.0
      %v764 = vmax.f32 %v645, 0.0
      %v765 = vmax.f32 %v648, 0.0
      %v766 = vmax.f32 %v650, 0.0
      %v767 = vmax.f32 %v653, 0.0
      %v768 = vmax.f32 %v655, 0.0
      %v769 = vmax.f32 %v658, 0.0
      %v770 = vmax.f32 %v660, 0.0
      %v771 = vmax.f32 %v663, 0.0
      %v772 = vmax.f32 %v665, 0.0
      %v773 = vmax.f32 %v668, 0.0
      %v774 = vmax.f32 %v670, 0.0
      %v775 = vmax.f32 %v673, 0.0
      %v776 = vmax.f32 %v675, 0.0
      %v777 = vmax.f32 %v678, 0.0
      %v778 = vmax.f32 %v680, 0.0
      %v779 = vmax.f32 %v683, 0.0
      %v780 = vmax.f32 %v685, 0.0
      %v781 = vmax.f32 %v688, 0.0
      %v782 = vmax.f32 %v690, 0.0
      %v783 = vmax.f32 %v693, 0.0
      %v784 = vmax.f32 %v695, 0.0
      %v785 = vmax.f32 %v698, 0.0
      %v786 = vmax.f32 %v700, 0.0
      %v787 = vmax.f32 %v703, 0.0
      %v788 = vmax.f32 %v705, 0.0
      %v789 = vmax.f32 %v708, 0.0
      %v790 = vmax.f32 %v710, 0.0
      %v791 = vmax.f32 %v713, 0.0
      %v792 = vmax.f32 %v715, 0.0
      %v793 = vmax.f32 %v718, 0.0
      %v794 = vmax.f32 %v720, 0.0
      %v795 = vmax.f32 %v723, 0.0
      %v796 = vmax.f32 %v725, 0.0
      %v797 = vmax.f32 %v728, 0.0
      %v798 = vmax.f32 %v730, 0.0
      %v799 = vmax.f32 %v733, 0.0
      %v800 = vmax.f32 %v735, 0.0
      %v801 = vpack.c.bf16 %v737, %v737
      %v802 = vpack.c.bf16 %v738, %v738
      %v803 = vpack.c.bf16 %v739, %v739
      %v804 = vpack.c.bf16 %v740, %v740
      %v805 = vpack.c.bf16 %v741, %v741
      %v806 = vpack.c.bf16 %v742, %v742
      %v807 = vpack.c.bf16 %v743, %v743
      %v808 = vpack.c.bf16 %v744, %v744
      %v809 = vpack.c.bf16 %v745, %v745
      %v810 = vpack.c.bf16 %v746, %v746
      %v811 = vpack.c.bf16 %v747, %v747
      %v812 = vpack.c.bf16 %v748, %v748
      %v813 = vpack.c.bf16 %v749, %v749
      %v814 = vpack.c.bf16 %v750, %v750
      %v815 = vpack.c.bf16 %v751, %v751
      %v816 = vpack.c.bf16 %v752, %v752
      %v817 = vpack.c.bf16 %v753, %v753
      %v818 = vpack.c.bf16 %v754, %v754
      %v819 = vpack.c.bf16 %v755, %v755
      %v820 = vpack.c.bf16 %v756, %v756
      %v821 = vpack.c.bf16 %v757, %v757
      %v822 = vpack.c.bf16 %v758, %v758
      %v823 = vpack.c.bf16 %v759, %v759
      %v824 = vpack.c.bf16 %v760, %v760
      %v825 = vpack.c.bf16 %v761, %v761
      %v826 = vpack.c.bf16 %v762, %v762
      %v827 = vpack.c.bf16 %v763, %v763
      %v828 = vpack.c.bf16 %v764, %v764
      %v829 = vpack.c.bf16 %v765, %v765
      %v830 = vpack.c.bf16 %v766, %v766
      %v831 = vpack.c.bf16 %v767, %v767
      %v832 = vpack.c.bf16 %v768, %v768
      %v833 = vpack.c.bf16 %v769, %v769
      %v834 = vpack.c.bf16 %v770, %v770
      %v835 = vpack.c.bf16 %v771, %v771
      %v836 = vpack.c.bf16 %v772, %v772
      %v837 = vpack.c.bf16 %v773, %v773
      %v838 = vpack.c.bf16 %v774, %v774
      %v839 = vpack.c.bf16 %v775, %v775
      %v840 = vpack.c.bf16 %v776, %v776
      %v841 = vpack.c.bf16 %v777, %v777
      %v842 = vpack.c.bf16 %v778, %v778
      %v843 = vpack.c.bf16 %v779, %v779
      %v844 = vpack.c.bf16 %v780, %v780
      %v845 = vpack.c.bf16 %v781, %v781
      %v846 = vpack.c.bf16 %v782, %v782
      %v847 = vpack.c.bf16 %v783, %v783
      %v848 = vpack.c.bf16 %v784, %v784
      %v849 = vpack.c.bf16 %v785, %v785
      %v850 = vpack.c.bf16 %v786, %v786
      %v851 = vpack.c.bf16 %v787, %v787
      %v852 = vpack.c.bf16 %v788, %v788
      %v853 = vpack.c.bf16 %v789, %v789
      %v854 = vpack.c.bf16 %v790, %v790
      %v855 = vpack.c.bf16 %v791, %v791
      %v856 = vpack.c.bf16 %v792, %v792
      %v857 = vpack.c.bf16 %v793, %v793
      %v858 = vpack.c.bf16 %v794, %v794
      %v859 = vpack.c.bf16 %v795, %v795
      %v860 = vpack.c.bf16 %v796, %v796
      %v861 = vpack.c.bf16 %v797, %v797
      %v862 = vpack.c.bf16 %v798, %v798
      %v863 = vpack.c.bf16 %v799, %v799
      %v864 = vpack.c.bf16 %v800, %v800
      %vm865 = vcmask 257024
      %866 = vst.msk [vmem:[%s242] sm:$0xf] %vm865, %v801
      %867 = vst.msk [vmem:[%s242 + $0x4] sm:$0xf] %vm865, %v802
      %868 = vst.msk [vmem:[%s242 + $0x8] sm:$0xf] %vm865, %v803
      %869 = vst.msk [vmem:[%s242 + $0xc] sm:$0xf] %vm865, %v804
      %870 = vst.msk [vmem:[%s242 + $0x10] sm:$0xf] %vm865, %v805
      %871 = vst.msk [vmem:[%s242 + $0x14] sm:$0xf] %vm865, %v806
      %872 = vst.msk [vmem:[%s242 + $0x18] sm:$0xf] %vm865, %v807
      %873 = vst.msk [vmem:[%s242 + $0x1c] sm:$0xf] %vm865, %v808
      %874 = vst.msk [vmem:[%s242 + $0x20] sm:$0xf] %vm865, %v809
      %875 = vst.msk [vmem:[%s242 + $0x24] sm:$0xf] %vm865, %v810
      %876 = vst.msk [vmem:[%s242 + $0x28] sm:$0xf] %vm865, %v811
      %877 = vst.msk [vmem:[%s242 + $0x2c] sm:$0xf] %vm865, %v812
      %878 = vst.msk [vmem:[%s242 + $0x30] sm:$0xf] %vm865, %v813
      %879 = vst.msk [vmem:[%s242 + $0x34] sm:$0xf] %vm865, %v814
      %880 = vst.msk [vmem:[%s242 + $0x38] sm:$0xf] %vm865, %v815
      %881 = vst.msk [vmem:[%s242 + $0x3c] sm:$0xf] %vm865, %v816
      %882 = vst.msk [vmem:[%s242 + $0x40] sm:$0xf] %vm865, %v817
      %883 = vst.msk [vmem:[%s242 + $0x44] sm:$0xf] %vm865, %v818
      %884 = vst.msk [vmem:[%s242 + $0x48] sm:$0xf] %vm865, %v819
      %885 = vst.msk [vmem:[%s242 + $0x4c] sm:$0xf] %vm865, %v820
      %886 = vst.msk [vmem:[%s242 + $0x50] sm:$0xf] %vm865, %v821
      %887 = vst.msk [vmem:[%s242 + $0x54] sm:$0xf] %vm865, %v822
      %888 = vst.msk [vmem:[%s242 + $0x58] sm:$0xf] %vm865, %v823
      %889 = vst.msk [vmem:[%s242 + $0x5c] sm:$0xf] %vm865, %v824
      %890 = vst.msk [vmem:[%s242 + $0x60] sm:$0xf] %vm865, %v825
      %891 = vst.msk [vmem:[%s242 + $0x64] sm:$0xf] %vm865, %v826
      %892 = vst.msk [vmem:[%s242 + $0x68] sm:$0xf] %vm865, %v827
      %893 = vst.msk [vmem:[%s242 + $0x6c] sm:$0xf] %vm865, %v828
      %894 = vst.msk [vmem:[%s242 + $0x70] sm:$0xf] %vm865, %v829
      %895 = vst.msk [vmem:[%s242 + $0x74] sm:$0xf] %vm865, %v830
      %896 = vst.msk [vmem:[%s242 + $0x78] sm:$0xf] %vm865, %v831
      %897 = vst.msk [vmem:[%s242 + $0x7c] sm:$0xf] %vm865, %v832
      %898 = vst.msk [vmem:[%s242 + $0x80] sm:$0xf] %vm865, %v833
      %899 = vst.msk [vmem:[%s242 + $0x84] sm:$0xf] %vm865, %v834
      %900 = vst.msk [vmem:[%s242 + $0x88] sm:$0xf] %vm865, %v835
      %901 = vst.msk [vmem:[%s242 + $0x8c] sm:$0xf] %vm865, %v836
      %902 = vst.msk [vmem:[%s242 + $0x90] sm:$0xf] %vm865, %v837
      %903 = vst.msk [vmem:[%s242 + $0x94] sm:$0xf] %vm865, %v838
      %904 = vst.msk [vmem:[%s242 + $0x98] sm:$0xf] %vm865, %v839
      %905 = vst.msk [vmem:[%s242 + $0x9c] sm:$0xf] %vm865, %v840
      %906 = vst.msk [vmem:[%s242 + $0xa0] sm:$0xf] %vm865, %v841
      %907 = vst.msk [vmem:[%s242 + $0xa4] sm:$0xf] %vm865, %v842
      %908 = vst.msk [vmem:[%s242 + $0xa8] sm:$0xf] %vm865, %v843
      %909 = vst.msk [vmem:[%s242 + $0xac] sm:$0xf] %vm865, %v844
      %910 = vst.msk [vmem:[%s242 + $0xb0] sm:$0xf] %vm865, %v845
      %911 = vst.msk [vmem:[%s242 + $0xb4] sm:$0xf] %vm865, %v846
      %912 = vst.msk [vmem:[%s242 + $0xb8] sm:$0xf] %vm865, %v847
      %913 = vst.msk [vmem:[%s242 + $0xbc] sm:$0xf] %vm865, %v848
      %914 = vst.msk [vmem:[%s242 + $0xc0] sm:$0xf] %vm865, %v849
      %915 = vst.msk [vmem:[%s242 + $0xc4] sm:$0xf] %vm865, %v850
      %916 = vst.msk [vmem:[%s242 + $0xc8] sm:$0xf] %vm865, %v851
      %917 = vst.msk [vmem:[%s242 + $0xcc] sm:$0xf] %vm865, %v852
      %918 = vst.msk [vmem:[%s242 + $0xd0] sm:$0xf] %vm865, %v853
      %919 = vst.msk [vmem:[%s242 + $0xd4] sm:$0xf] %vm865, %v854
      %920 = vst.msk [vmem:[%s242 + $0xd8] sm:$0xf] %vm865, %v855
      %921 = vst.msk [vmem:[%s242 + $0xdc] sm:$0xf] %vm865, %v856
      %922 = vst.msk [vmem:[%s242 + $0xe0] sm:$0xf] %vm865, %v857
      %923 = vst.msk [vmem:[%s242 + $0xe4] sm:$0xf] %vm865, %v858
      %924 = vst.msk [vmem:[%s242 + $0xe8] sm:$0xf] %vm865, %v859
      %925 = vst.msk [vmem:[%s242 + $0xec] sm:$0xf] %vm865, %v860
      %926 = vst.msk [vmem:[%s242 + $0xf0] sm:$0xf] %vm865, %v861
      %927 = vst.msk [vmem:[%s242 + $0xf4] sm:$0xf] %vm865, %v862
      %928 = vst.msk [vmem:[%s242 + $0xf8] sm:$0xf] %vm865, %v863
      %929 = vst.msk [vmem:[%s242 + $0xfc] sm:$0xf] %vm865, %v864
      %s930 = smul.u32 64, %s19
      %p931 = scmp.lt.s32.totalorder %s18, 1
      %s932 = scalar_select %p931, %s18, 1
      %p933 = scmp.lt.s32.totalorder %s930, 127
      %s934 = scalar_select %p933, %s930, 127
      %s935 = smul.addr %s932, 128
      %s936 = sadd.s32 %s934, %s935
      %s937 = smul.addr %s936, 4
      %s938 = scalar_lea.vmem %s3, %s937
      // Predicated region
      $region33: #{_lambda_.8} parent=31 // pred_check
        %p939 = pneg %p126
      $region34: #{_lambda_.8} parent=31 // pred_check_branch
        %941 = sbr.rel (%p939) target = $region36
      $region35: #{_lambda_.8} parent=31 // pred_region
        %s942 = smul.u32 64, %s19
      $region36: #{_lambda_.8} parent=31 // pred_fallthru
        _
    $region32: #{_lambda_.8} parent=5 // pred_fallthru
      _
    %p943 = scmp.le.s32.totalorder 2, %s9
    // Predicated region
    $region37: #{_lambda_.8} parent=5 // pred_check
      %p944 = pneg %p943
    $region38: #{_lambda_.8} parent=5 // pred_check_branch
      %946 = sbr.rel (%p944) target = $region40
    $region39: #{_lambda_.8} parent=5 // pred_region
      %s947 = ssub.s32 %s9, 2
      // Predicated region
      $region41: #{_lambda_.8} parent=39 // pred_check
        %p948 = pneg %p132
      $region42: #{_lambda_.8} parent=39 // pred_check_branch
        %950 = sbr.rel (%p948) target = $region44
      $region43: #{_lambda_.8} parent=39 // pred_region
        %s951 = smul.u32 64, %s21
        %p952 = scmp.lt.s32.totalorder %s20, 1
        %s953 = scalar_select %p952, %s20, 1
        %p954 = scmp.lt.s32.totalorder %s951, 127
        %s955 = scalar_select %p954, %s951, 127
        %s956 = smul.addr %s953, 128
        %s957 = sadd.s32 %s955, %s956
        %s958 = smul.addr %s957, 4
        %s959 = scalar_lea.vmem %s3, %s958
      $region44: #{_lambda_.8} parent=39 // pred_fallthru
        _
    $region40: #{_lambda_.8} parent=5 // pred_fallthru
      _
  $region6: #{_lambda_.8} parent=0 // loop_footer
    %s13 = sadd.s32 1, %s9
  $region7: #{_lambda_.8} parent=0 // loop_footer_branch
    %8 = sbr.rel target = $region3
  $region8: #{_lambda_.8} parent=0 // loop_exit
    _

// kernel: _lambda_.9
$region0: #{_lambda_.9}
  #allocation0 [shape = 'u32[]', space=smem, size = 0x4, offset = 0x4, fixed_abs, tag = 'smem constant byte address 0x4 - core index']
  #allocation1 [shape = 'u32[72,128]{1,0:T(1,128)}', space=vmem, size = 0x9000, scoped, tag = 'internal scratch']
  %s0 = inlined_call_operand.vmem [shape: bf16[2,144,512], index: 0, kind: input, shape index: {}]
  %s1 = inlined_call_operand.vmem [shape: bf16[2,512,64], index: 1, kind: input, shape index: {}]
  %s2 = inlined_call_operand.vmem [shape: f32[2,1,64], index: 2, kind: input, shape index: {}]
  %s3 = inlined_call_operand.vmem [shape: bf16[2,144,64], index: 3, kind: output, shape index: {}]
  %s4 = sld [smem:[#allocation0]]
  $region45: #{_lambda_.9} parent=0
    _
  %s6 = ssub.s32 1, %s4
  %s7 = scalar_select 0, %s6, %s4
  loop: start=0, step=1, limit=4
  $region2: #{_lambda_.9} parent=0 // loop_pre_header
    _
  $region3: #{_lambda_.9} parent=0 // loop_header
    %s9 = sphi 0, %s13
    %p10 = scmp.ge.s32.totalorder %s9, 4
    %s16 = sphi 0, %s28
    %s17 = sphi 0, %s24
    %s18 = sphi 0, %s16
    %s19 = sphi 0, %s17
    %s20 = sphi 0, %s18
    %s21 = sphi 0, %s19
    %s33 = sphi 0, %s35
    %s36 = sphi 0, %s33
    %s37 = sphi 0, %s36
    %s53 = sphi 0, %s37
    %s59 = sphi 0, %s61
    %s62 = sphi 0, %s59
    %s63 = sphi 0, %s62
    %s79 = sphi 0, %s63
    %s85 = sphi 0, %s87
    %s88 = sphi 0, %s85
    %s89 = sphi 0, %s88
    %s105 = sphi 0, %s89
    %s113 = sphi 0, %s115
    %s116 = sphi 0, %s113
    %s117 = sphi 0, %s116
    %s133 = sphi 0, %s117
  $region4: #{_lambda_.9} parent=0 // loop_header_branch
    %12 = sbr.rel (%p10) target = $region8
  $region5: #{_lambda_.9} parent=0 // loop_body
    %s14 = ssub.s32 %s9, 1
    %s15 = ssub.s32 %s9, 2
    %s22 = sadd.s32 1, %s17
    %p23 = scmp.ge.s32.totalorder %s22, 1
    %s24 = scalar_select %p23, 0, %s22
    %s25 = sadd.s32 1, %s16
    %s26 = scalar_select %p23, %s25, %s16
    %p27 = scmp.ge.s32.totalorder %s26, 2
    %s28 = scalar_select %p27, 0, %s26
    %s29 = ssub.s32 %s16, %s28
    %s30 = ssub.s32 %s17, %s24
    %s31 = sor.u32 %s29, %s30
    %p32 = scmp.eq.s32.totalorder %s31, 0
    %s34 = sadd.s32 %s33, 1
    %s35 = scalar_select %p32, %s33, %s34
    %p38 = pneg %p32
    %p39 = scmp.eq.s32.totalorder %s9, 1
    %p40 = por %p38, %p39
    %p41 = scmp.ne.s32.totalorder %s33, %s36
    %p42 = scmp.eq.s32.totalorder %s9, 0
    %p43 = por %p41, %p42
    %p44 = scmp.ne.s32.totalorder %s33, %s36
    %p45 = scmp.eq.s32.totalorder %s14, 1
    %p46 = por %p44, %p45
    %p47 = scmp.ne.s32.totalorder %s36, %s37
    %p48 = scmp.eq.s32.totalorder %s14, 0
    %p49 = por %p47, %p48
    %p50 = scmp.ne.s32.totalorder %s36, %s37
    %p51 = scmp.eq.s32.totalorder %s15, 1
    %p52 = por %p50, %p51
    %p54 = scmp.ne.s32.totalorder %s37, %s53
    %p55 = scmp.eq.s32.totalorder %s15, 0
    %p56 = por %p54, %p55
    %s57 = ssub.s32 %s16, %s28
    %p58 = scmp.eq.s32.totalorder %s57, 0
    %s60 = sadd.s32 %s59, 1
    %s61 = scalar_select %p58, %s59, %s60
    %p64 = pneg %p58
    %p65 = scmp.eq.s32.totalorder %s9, 1
    %p66 = por %p64, %p65
    %p67 = scmp.ne.s32.totalorder %s59, %s62
    %p68 = scmp.eq.s32.totalorder %s9, 0
    %p69 = por %p67, %p68
    %p70 = scmp.ne.s32.totalorder %s59, %s62
    %p71 = scmp.eq.s32.totalorder %s14, 1
    %p72 = por %p70, %p71
    %p73 = scmp.ne.s32.totalorder %s62, %s63
    %p74 = scmp.eq.s32.totalorder %s14, 0
    %p75 = por %p73, %p74
    %p76 = scmp.ne.s32.totalorder %s62, %s63
    %p77 = scmp.eq.s32.totalorder %s15, 1
    %p78 = por %p76, %p77
    %p80 = scmp.ne.s32.totalorder %s63, %s79
    %p81 = scmp.eq.s32.totalorder %s15, 0
    %p82 = por %p80, %p81
    %s83 = ssub.s32 %s16, %s28
    %p84 = scmp.eq.s32.totalorder %s83, 0
    %s86 = sadd.s32 %s85, 1
    %s87 = scalar_select %p84, %s85, %s86
    %p90 = pneg %p84
    %p91 = scmp.eq.s32.totalorder %s9, 1
    %p92 = por %p90, %p91
    %p93 = scmp.ne.s32.totalorder %s85, %s88
    %p94 = scmp.eq.s32.totalorder %s9, 0
    %p95 = por %p93, %p94
    %p96 = scmp.ne.s32.totalorder %s85, %s88
    %p97 = scmp.eq.s32.totalorder %s14, 1
    %p98 = por %p96, %p97
    %p99 = scmp.ne.s32.totalorder %s88, %s89
    %p100 = scmp.eq.s32.totalorder %s14, 0
    %p101 = por %p99, %p100
    %p102 = scmp.ne.s32.totalorder %s88, %s89
    %p103 = scmp.eq.s32.totalorder %s15, 1
    %p104 = por %p102, %p103
    %p106 = scmp.ne.s32.totalorder %s89, %s105
    %p107 = scmp.eq.s32.totalorder %s15, 0
    %p108 = por %p106, %p107
    %s109 = ssub.s32 %s16, %s28
    %s110 = ssub.s32 %s17, %s24
    %s111 = sor.u32 %s109, %s110
    %p112 = scmp.eq.s32.totalorder %s111, 0
    %s114 = sadd.s32 %s113, 1
    %s115 = scalar_select %p112, %s113, %s114
    %p118 = pneg %p112
    %p119 = scmp.eq.s32.totalorder %s9, 1
    %p120 = por %p118, %p119
    %p121 = scmp.ne.s32.totalorder %s113, %s116
    %p122 = scmp.eq.s32.totalorder %s9, 0
    %p123 = por %p121, %p122
    %p124 = scmp.ne.s32.totalorder %s113, %s116
    %p125 = scmp.eq.s32.totalorder %s14, 1
    %p126 = por %p124, %p125
    %p127 = scmp.ne.s32.totalorder %s116, %s117
    %p128 = scmp.eq.s32.totalorder %s14, 0
    %p129 = por %p127, %p128
    %p130 = scmp.ne.s32.totalorder %s116, %s117
    %p131 = scmp.eq.s32.totalorder %s15, 1
    %p132 = por %p130, %p131
    %p134 = scmp.ne.s32.totalorder %s117, %s133
    %p135 = scmp.eq.s32.totalorder %s15, 0
    %p136 = por %p134, %p135
    %p137 = scmp.le.s32.totalorder 1, %s9
    %p138 = scmp.lt.s32.totalorder %s9, 3
    %p139 = pnand %p137, %p138
    %p140 = pneg %p139
    // Predicated region
    $region9: #{_lambda_.9} parent=5 // pred_check
      _
    $region10: #{_lambda_.9} parent=5 // pred_check_branch
      %142 = sbr.rel (%p139) target = $region12
    $region11: #{_lambda_.9} parent=5 // pred_region
      %s143 = ssub.s32 %s9, 1
    $region12: #{_lambda_.9} parent=5 // pred_fallthru
      _
    %p144 = scmp.lt.s32.totalorder %s9, 2
    // Predicated region
    $region13: #{_lambda_.9} parent=5 // pred_check
      %p145 = pneg %p144
    $region14: #{_lambda_.9} parent=5 // pred_check_branch
      %147 = sbr.rel (%p145) target = $region16
    $region15: #{_lambda_.9} parent=5 // pred_region
      // Predicated region
      $region17: #{_lambda_.9} parent=15 // pred_check
        %p148 = pneg %p43
      $region18: #{_lambda_.9} parent=15 // pred_check_branch
        %150 = sbr.rel (%p148) target = $region20
      $region19: #{_lambda_.9} parent=15 // pred_region
        %s151 = smul.u32 18, %s17
        %p152 = scmp.lt.s32.totalorder %s16, 1
        %s153 = scalar_select %p152, %s16, 1
        %p154 = scmp.lt.s32.totalorder %s151, 17
        %s155 = scalar_select %p154, %s151, 17
        %s156 = smul.addr %s155, 4
        %s157 = smul.addr %s153, 72
        %s158 = sadd.s32 %s156, %s157
        %s159 = smul.addr %s158, 4
        %s160 = scalar_lea.vmem %s0, %s159
        %s161 = smul.u32 18, %s17
      $region20: #{_lambda_.9} parent=15 // pred_fallthru
        _
      // Predicated region
      $region21: #{_lambda_.9} parent=15 // pred_check
        %p162 = pneg %p69
      $region22: #{_lambda_.9} parent=15 // pred_check_branch
        %164 = sbr.rel (%p162) target = $region24
      $region23: #{_lambda_.9} parent=15 // pred_region
        %p165 = scmp.lt.s32.totalorder %s16, 1
        %s166 = scalar_select %p165, %s16, 1
        %s167 = smul.addr %s166, 64
        %s168 = smul.addr %s167, 4
        %s169 = scalar_lea.vmem %s1, %s168
      $region24: #{_lambda_.9} parent=15 // pred_fallthru
        _
      // Predicated region
      $region25: #{_lambda_.9} parent=15 // pred_check
        %p170 = pneg %p95
      $region26: #{_lambda_.9} parent=15 // pred_check_branch
        %172 = sbr.rel (%p170) target = $region28
      $region27: #{_lambda_.9} parent=15 // pred_region
        %p173 = scmp.lt.s32.totalorder %s16, 1
        %s174 = scalar_select %p173, %s16, 1
        %s175 = scalar_lea.vmem %s2, %s174
      $region28: #{_lambda_.9} parent=15 // pred_fallthru
        _
    $region16: #{_lambda_.9} parent=5 // pred_fallthru
      _
    %p176 = scmp.le.s32.totalorder 1, %s9
    %p177 = scmp.lt.s32.totalorder %s9, 3
    %p178 = pnand %p176, %p177
    %p179 = pneg %p178
    // Predicated region
    $region29: #{_lambda_.9} parent=5 // pred_check
      _
    $region30: #{_lambda_.9} parent=5 // pred_check_branch
      %181 = sbr.rel (%p178) target = $region32
    $region31: #{_lambda_.9} parent=5 // pred_region
      %s182 = ssub.s32 %s9, 1
      %s183 = smul.u32 18, %s19
      %p184 = scmp.lt.s32.totalorder %s18, 1
      %s185 = scalar_select %p184, %s18, 1
      %p186 = scmp.lt.s32.totalorder %s183, 17
      %s187 = scalar_select %p186, %s183, 17
      %s188 = smul.addr %s187, 4
      %s189 = smul.addr %s185, 72
      %s190 = sadd.s32 %s188, %s189
      %s191 = smul.addr %s190, 4
      %s192 = scalar_lea.vmem %s0, %s191
      %p193 = pneg %p49
      %p194 = pneg %p46
      %p195 = scmp.lt.s32.totalorder %s18, 1
      %s196 = scalar_select %p195, %s18, 1
      %s197 = smul.addr %s196, 64
      %s198 = smul.addr %s197, 4
      %s199 = scalar_lea.vmem %s1, %s198
      %p200 = pneg %p75
      %p201 = pneg %p72
      %p202 = scmp.lt.s32.totalorder %s18, 1
      %s203 = scalar_select %p202, %s18, 1
      %s204 = scalar_lea.vmem %s2, %s203
      %p205 = pneg %p101
      %p206 = pneg %p98
      %p207 = pneg %p129
      %p208 = pneg %p126
      %s209 = smul.u32 18, %s19
      %p210 = scmp.lt.s32.totalorder %s18, 1
      %s211 = scalar_select %p210, %s18, 1
      %p212 = scmp.lt.s32.totalorder %s209, 17
      %s213 = scalar_select %p212, %s209, 17
      %s214 = smul.addr %s211, 18
      %s215 = sadd.s32 %s213, %s214
      %s216 = smul.addr %s215, 4
      %s217 = scalar_lea.vmem %s3, %s216
      %s218 = smul.u32 18, %s19
      %p219 = scmp.lt.s32.totalorder %s18, 1
      %s220 = scalar_select %p219, %s18, 1
      %p221 = scmp.lt.s32.totalorder %s218, 17
      %s222 = scalar_select %p221, %s218, 17
      %s223 = smul.addr %s222, 4
      %s224 = smul.addr %s220, 72
      %s225 = sadd.s32 %s223, %s224
      %s226 = smul.addr %s225, 4
      %s227 = scalar_lea.vmem %s0, %s226
      %s228 = smul.u32 18, %s19
      %p229 = scmp.lt.s32.totalorder %s18, 1
      %s230 = scalar_select %p229, %s18, 1
      %s231 = smul.addr %s230, 64
      %s232 = smul.addr %s231, 4
      %s233 = scalar_lea.vmem %s1, %s232
      %p234 = scmp.lt.s32.totalorder %s18, 1
      %s235 = scalar_select %p234, %s18, 1
      %s236 = scalar_lea.vmem %s2, %s235
      %s237 = smul.u32 18, %s19
      %p238 = scmp.lt.s32.totalorder %s18, 1
      %s239 = scalar_select %p238, %s18, 1
      %p240 = scmp.lt.s32.totalorder %s237, 17
      %s241 = scalar_select %p240, %s237, 17
      %s242 = smul.addr %s239, 18
      %s243 = sadd.s32 %s241, %s242
      %s244 = smul.addr %s243, 4
      %s245 = scalar_lea.vmem %s3, %s244
      %s246 = smul.u32 18, %s19
      %v247 = vld [vmem:[%s227] sm:$0xff]
      %v248 = vld [vmem:[%s227 + $0x8] sm:$0xff]
      %v249 = vld [vmem:[%s227 + $0x10] sm:$0xff]
      %v250 = vld [vmem:[%s227 + $0x18] sm:$0xff]
      %v251 = vld [vmem:[%s227 + $0x20] sm:$0xff]
      %v252 = vld [vmem:[%s227 + $0x28] sm:$0xff]
      %v253 = vld [vmem:[%s227 + $0x30] sm:$0xff]
      %v254 = vld [vmem:[%s227 + $0x38] sm:$0xff]
      %v255 = vld [vmem:[%s227 + $0x40] sm:$0xff]
      %v256 = vld [vmem:[%s227 + $0x48] sm:$0xff]
      %v257 = vld [vmem:[%s227 + $0x50] sm:$0xff]
      %v258 = vld [vmem:[%s227 + $0x58] sm:$0xff]
      %v259 = vld [vmem:[%s227 + $0x60] sm:$0xff]
      %v260 = vld [vmem:[%s227 + $0x68] sm:$0xff]
      %v261 = vld [vmem:[%s227 + $0x70] sm:$0xff]
      %v262 = vld [vmem:[%s227 + $0x78] sm:$0xff]
      %v263 = vld [vmem:[%s227 + $0x80] sm:$0xff]
      %v264 = vld [vmem:[%s227 + $0x88] sm:$0xff]
      %v265 = vld [vmem:[%s227 + $0x90] sm:$0xff]
      %v266 = vld [vmem:[%s227 + $0x98] sm:$0xff]
      %v267 = vld [vmem:[%s227 + $0xa0] sm:$0xff]
      %v268 = vld [vmem:[%s227 + $0xa8] sm:$0xff]
      %v269 = vld [vmem:[%s227 + $0xb0] sm:$0xff]
      %v270 = vld [vmem:[%s227 + $0xb8] sm:$0xff]
      %v271 = vld [vmem:[%s227 + $0xc0] sm:$0xff]
      %v272 = vld [vmem:[%s227 + $0xc8] sm:$0xff]
      %v273 = vld [vmem:[%s227 + $0xd0] sm:$0xff]
      %v274 = vld [vmem:[%s227 + $0xd8] sm:$0xff]
      %v275 = vld [vmem:[%s227 + $0xe0] sm:$0xff]
      %v276 = vld [vmem:[%s227 + $0xe8] sm:$0xff]
      %v277 = vld [vmem:[%s227 + $0xf0] sm:$0xff]
      %v278 = vld [vmem:[%s227 + $0xf8] sm:$0xff]
      %v279 = vld [vmem:[%s227 + $0x100] sm:$0xff]
      %v280 = vld [vmem:[%s227 + $0x108] sm:$0xff]
      %v281 = vld [vmem:[%s227 + $0x110] sm:$0xff]
      %v282 = vld [vmem:[%s227 + $0x118] sm:$0xff]
      %v283 = vld [vmem:[%s233] sm:$0xf]
      %v284 = vld [vmem:[%s233 + $0x4] sm:$0xf]
      %v285 = vld [vmem:[%s233 + $0x8] sm:$0xf]
      %v286 = vld [vmem:[%s233 + $0xc] sm:$0xf]
      %v287 = vld [vmem:[%s233 + $0x10] sm:$0xf]
      %v288 = vld [vmem:[%s233 + $0x14] sm:$0xf]
      %v289 = vld [vmem:[%s233 + $0x18] sm:$0xf]
      %v290 = vld [vmem:[%s233 + $0x1c] sm:$0xf]
      %v291 = vld [vmem:[%s233 + $0x20] sm:$0xf]
      %v292 = vld [vmem:[%s233 + $0x24] sm:$0xf]
      %v293 = vld [vmem:[%s233 + $0x28] sm:$0xf]
      %v294 = vld [vmem:[%s233 + $0x2c] sm:$0xf]
      %v295 = vld [vmem:[%s233 + $0x30] sm:$0xf]
      %v296 = vld [vmem:[%s233 + $0x34] sm:$0xf]
      %v297 = vld [vmem:[%s233 + $0x38] sm:$0xf]
      %v298 = vld [vmem:[%s233 + $0x3c] sm:$0xf]
      %v299 = vld [vmem:[%s233 + $0x40] sm:$0xf]
      %v300 = vld [vmem:[%s233 + $0x44] sm:$0xf]
      %v301 = vld [vmem:[%s233 + $0x48] sm:$0xf]
      %v302 = vld [vmem:[%s233 + $0x4c] sm:$0xf]
      %v303 = vld [vmem:[%s233 + $0x50] sm:$0xf]
      %v304 = vld [vmem:[%s233 + $0x54] sm:$0xf]
      %v305 = vld [vmem:[%s233 + $0x58] sm:$0xf]
      %v306 = vld [vmem:[%s233 + $0x5c] sm:$0xf]
      %v307 = vld [vmem:[%s233 + $0x60] sm:$0xf]
      %v308 = vld [vmem:[%s233 + $0x64] sm:$0xf]
      %v309 = vld [vmem:[%s233 + $0x68] sm:$0xf]
      %v310 = vld [vmem:[%s233 + $0x6c] sm:$0xf]
      %v311 = vld [vmem:[%s233 + $0x70] sm:$0xf]
      %v312 = vld [vmem:[%s233 + $0x74] sm:$0xf]
      %v313 = vld [vmem:[%s233 + $0x78] sm:$0xf]
      %v314 = vld [vmem:[%s233 + $0x7c] sm:$0xf]
      %v315 = vld [vmem:[%s233 + $0x80] sm:$0xf]
      %v316 = vld [vmem:[%s233 + $0x84] sm:$0xf]
      %v317 = vld [vmem:[%s233 + $0x88] sm:$0xf]
      %v318 = vld [vmem:[%s233 + $0x8c] sm:$0xf]
      %v319 = vld [vmem:[%s233 + $0x90] sm:$0xf]
      %v320 = vld [vmem:[%s233 + $0x94] sm:$0xf]
      %v321 = vld [vmem:[%s233 + $0x98] sm:$0xf]
      %v322 = vld [vmem:[%s233 + $0x9c] sm:$0xf]
      %v323 = vld [vmem:[%s233 + $0xa0] sm:$0xf]
      %v324 = vld [vmem:[%s233 + $0xa4] sm:$0xf]
      %v325 = vld [vmem:[%s233 + $0xa8] sm:$0xf]
      %v326 = vld [vmem:[%s233 + $0xac] sm:$0xf]
      %v327 = vld [vmem:[%s233 + $0xb0] sm:$0xf]
      %v328 = vld [vmem:[%s233 + $0xb4] sm:$0xf]
      %v329 = vld [vmem:[%s233 + $0xb8] sm:$0xf]
      %v330 = vld [vmem:[%s233 + $0xbc] sm:$0xf]
      %v331 = vld [vmem:[%s233 + $0xc0] sm:$0xf]
      %v332 = vld [vmem:[%s233 + $0xc4] sm:$0xf]
      %v333 = vld [vmem:[%s233 + $0xc8] sm:$0xf]
      %v334 = vld [vmem:[%s233 + $0xcc] sm:$0xf]
      %v335 = vld [vmem:[%s233 + $0xd0] sm:$0xf]
      %v336 = vld [vmem:[%s233 + $0xd4] sm:$0xf]
      %v337 = vld [vmem:[%s233 + $0xd8] sm:$0xf]
      %v338 = vld [vmem:[%s233 + $0xdc] sm:$0xf]
      %v339 = vld [vmem:[%s233 + $0xe0] sm:$0xf]
      %v340 = vld [vmem:[%s233 + $0xe4] sm:$0xf]
      %v341 = vld [vmem:[%s233 + $0xe8] sm:$0xf]
      %v342 = vld [vmem:[%s233 + $0xec] sm:$0xf]
      %v343 = vld [vmem:[%s233 + $0xf0] sm:$0xf]
      %v344 = vld [vmem:[%s233 + $0xf4] sm:$0xf]
      %v345 = vld [vmem:[%s233 + $0xf8] sm:$0xf]
      %v346 = vld [vmem:[%s233 + $0xfc] sm:$0xf]
      %v347 = vld [vmem:[%s236] sm:$0x1]
      %v349 = vperm.slane %v347, 0
      %v387 = vunpack.c.l.b16 %v247
      %v388 = vunpack.c.h.b16 %v247
      %v389 = vunpack.c.l.b16 %v248
      %v390 = vunpack.c.h.b16 %v248
      %v391 = vunpack.c.l.b16 %v249
      %v392 = vunpack.c.h.b16 %v249
      %v393 = vunpack.c.l.b16 %v250
      %v394 = vunpack.c.h.b16 %v250
      %v395 = vunpack.c.l.b16 %v251
      %v396 = vunpack.c.h.b16 %v251
      %v397 = vunpack.c.l.b16 %v252
      %v398 = vunpack.c.h.b16 %v252
      %v399 = vunpack.c.l.b16 %v253
      %v400 = vunpack.c.h.b16 %v253
      %v401 = vunpack.c.l.b16 %v254
      %v402 = vunpack.c.h.b16 %v254
      %v403 = vunpack.c.l.b16 %v255
      %v404 = vunpack.c.h.b16 %v255
      %v405 = vunpack.c.l.b16 %v256
      %v406 = vunpack.c.h.b16 %v256
      %v407 = vunpack.c.l.b16 %v257
      %v408 = vunpack.c.h.b16 %v257
      %v409 = vunpack.c.l.b16 %v258
      %v410 = vunpack.c.h.b16 %v258
      %v411 = vunpack.c.l.b16 %v259
      %v412 = vunpack.c.h.b16 %v259
      %v413 = vunpack.c.l.b16 %v260
      %v414 = vunpack.c.h.b16 %v260
      %v415 = vunpack.c.l.b16 %v261
      %v416 = vunpack.c.h.b16 %v261
      %v417 = vunpack.c.l.b16 %v262
      %v418 = vunpack.c.h.b16 %v262
      %v419 = vunpack.c.l.b16 %v263
      %v420 = vunpack.c.h.b16 %v263
      %v421 = vunpack.c.l.b16 %v264
      %v422 = vunpack.c.h.b16 %v264
      %v423 = vunpack.c.l.b16 %v265
      %v424 = vunpack.c.h.b16 %v265
      %v425 = vunpack.c.l.b16 %v266
      %v426 = vunpack.c.h.b16 %v266
      %v427 = vunpack.c.l.b16 %v267
      %v428 = vunpack.c.h.b16 %v267
      %v429 = vunpack.c.l.b16 %v268
      %v430 = vunpack.c.h.b16 %v268
      %v431 = vunpack.c.l.b16 %v269
      %v432 = vunpack.c.h.b16 %v269
      %v433 = vunpack.c.l.b16 %v270
      %v434 = vunpack.c.h.b16 %v270
      %v435 = vunpack.c.l.b16 %v271
      %v436 = vunpack.c.h.b16 %v271
      %v437 = vunpack.c.l.b16 %v272
      %v438 = vunpack.c.h.b16 %v272
      %v439 = vunpack.c.l.b16 %v273
      %v440 = vunpack.c.h.b16 %v273
      %v441 = vunpack.c.l.b16 %v274
      %v442 = vunpack.c.h.b16 %v274
      %v443 = vunpack.c.l.b16 %v275
      %v444 = vunpack.c.h.b16 %v275
      %v445 = vunpack.c.l.b16 %v276
      %v446 = vunpack.c.h.b16 %v276
      %v447 = vunpack.c.l.b16 %v277
      %v448 = vunpack.c.h.b16 %v277
      %v449 = vunpack.c.l.b16 %v278
      %v450 = vunpack.c.h.b16 %v278
      %v451 = vunpack.c.l.b16 %v279
      %v452 = vunpack.c.h.b16 %v279
      %v453 = vunpack.c.l.b16 %v280
      %v454 = vunpack.c.h.b16 %v280
      %v455 = vunpack.c.l.b16 %v281
      %v456 = vunpack.c.h.b16 %v281
      %v457 = vunpack.c.l.b16 %v282
      %v458 = vunpack.c.h.b16 %v282
      %v459 = vpack.c.b16 %v391, %v387
      %v460 = vpack.c.b16 %v392, %v388
      %v461 = vpack.c.b16 %v393, %v389
      %v462 = vpack.c.b16 %v394, %v390
      %v463 = vpack.c.b16 %v399, %v395
      %v464 = vpack.c.b16 %v400, %v396
      %v465 = vpack.c.b16 %v401, %v397
      %v466 = vpack.c.b16 %v402, %v398
      %v467 = vpack.c.b16 %v407, %v403
      %v468 = vpack.c.b16 %v408, %v404
      %v469 = vpack.c.b16 %v409, %v405
      %v470 = vpack.c.b16 %v410, %v406
      %v471 = vpack.c.b16 %v415, %v411
      %v472 = vpack.c.b16 %v416, %v412
      %v473 = vpack.c.b16 %v417, %v413
      %v474 = vpack.c.b16 %v418, %v414
      %v475 = vpack.c.b16 %v423, %v419
      %v476 = vpack.c.b16 %v424, %v420
      %v477 = vpack.c.b16 %v425, %v421
      %v478 = vpack.c.b16 %v426, %v422
      %v479 = vpack.c.b16 %v431, %v427
      %v480 = vpack.c.b16 %v432, %v428
      %v481 = vpack.c.b16 %v433, %v429
      %v482 = vpack.c.b16 %v434, %v430
      %v483 = vpack.c.b16 %v439, %v435
      %v484 = vpack.c.b16 %v440, %v436
      %v485 = vpack.c.b16 %v441, %v437
      %v486 = vpack.c.b16 %v442, %v438
      %v487 = vpack.c.b16 %v447, %v443
      %v488 = vpack.c.b16 %v448, %v444
      %v489 = vpack.c.b16 %v449, %v445
      %v490 = vpack.c.b16 %v450, %v446
      %v491 = vpack.c.b16 %v455, %v451
      %v492 = vpack.c.b16 %v456, %v452
      %v493 = vpack.c.b16 %v457, %v453
      %v494 = vpack.c.b16 %v458, %v454
      %v595 = vunpack.c.l.b16 %v283
      %v596 = vunpack.c.l.b16 %v284
      %v597 = vunpack.c.l.b16 %v285
      %v598 = vunpack.c.l.b16 %v286
      %v599 = vunpack.c.l.b16 %v287
      %v600 = vunpack.c.l.b16 %v288
      %v601 = vunpack.c.l.b16 %v289
      %v602 = vunpack.c.l.b16 %v290
      %v603 = vunpack.c.l.b16 %v291
      %v604 = vunpack.c.l.b16 %v292
      %v605 = vunpack.c.l.b16 %v293
      %v606 = vunpack.c.l.b16 %v294
      %v607 = vunpack.c.l.b16 %v295
      %v608 = vunpack.c.l.b16 %v296
      %v609 = vunpack.c.l.b16 %v297
      %v610 = vunpack.c.l.b16 %v298
      %v611 = vunpack.c.l.b16 %v299
      %v612 = vunpack.c.l.b16 %v300
      %v613 = vunpack.c.l.b16 %v301
      %v614 = vunpack.c.l.b16 %v302
      %v615 = vunpack.c.l.b16 %v303
      %v616 = vunpack.c.l.b16 %v304
      %v617 = vunpack.c.l.b16 %v305
      %v618 = vunpack.c.l.b16 %v306
      %v619 = vunpack.c.l.b16 %v307
      %v620 = vunpack.c.l.b16 %v308
      %v621 = vunpack.c.l.b16 %v309
      %v622 = vunpack.c.l.b16 %v310
      %v623 = vunpack.c.l.b16 %v311
      %v624 = vunpack.c.l.b16 %v312
      %v625 = vunpack.c.l.b16 %v313
      %v626 = vunpack.c.l.b16 %v314
      %v627 = vunpack.c.l.b16 %v315
      %v628 = vunpack.c.l.b16 %v316
      %v629 = vunpack.c.l.b16 %v317
      %v630 = vunpack.c.l.b16 %v318
      %v631 = vunpack.c.l.b16 %v319
      %v632 = vunpack.c.l.b16 %v320
      %v633 = vunpack.c.l.b16 %v321
      %v634 = vunpack.c.l.b16 %v322
      %v635 = vunpack.c.l.b16 %v323
      %v636 = vunpack.c.l.b16 %v324
      %v637 = vunpack.c.l.b16 %v325
      %v638 = vunpack.c.l.b16 %v326
      %v639 = vunpack.c.l.b16 %v327
      %v640 = vunpack.c.l.b16 %v328
      %v641 = vunpack.c.l.b16 %v329
      %v642 = vunpack.c.l.b16 %v330
      %v643 = vunpack.c.l.b16 %v331
      %v644 = vunpack.c.l.b16 %v332
      %v645 = vunpack.c.l.b16 %v333
      %v646 = vunpack.c.l.b16 %v334
      %v647 = vunpack.c.l.b16 %v335
      %v648 = vunpack.c.l.b16 %v336
      %v649 = vunpack.c.l.b16 %v337
      %v650 = vunpack.c.l.b16 %v338
      %v651 = vunpack.c.l.b16 %v339
      %v652 = vunpack.c.l.b16 %v340
      %v653 = vunpack.c.l.b16 %v341
      %v654 = vunpack.c.l.b16 %v342
      %v655 = vunpack.c.l.b16 %v343
      %v656 = vunpack.c.l.b16 %v344
      %v657 = vunpack.c.l.b16 %v345
      %v658 = vunpack.c.l.b16 %v346
      %v659 = vpack.c.b16 %v596, %v595
      %v660 = vpack.c.b16 %v598, %v597
      %v661 = vpack.c.b16 %v600, %v599
      %v662 = vpack.c.b16 %v602, %v601
      %v663 = vpack.c.b16 %v604, %v603
      %v664 = vpack.c.b16 %v606, %v605
      %v665 = vpack.c.b16 %v608, %v607
      %v666 = vpack.c.b16 %v610, %v609
      %v667 = vpack.c.b16 %v612, %v611
      %v668 = vpack.c.b16 %v614, %v613
      %v669 = vpack.c.b16 %v616, %v615
      %v670 = vpack.c.b16 %v618, %v617
      %v671 = vpack.c.b16 %v620, %v619
      %v672 = vpack.c.b16 %v622, %v621
      %v673 = vpack.c.b16 %v624, %v623
      %v674 = vpack.c.b16 %v626, %v625
      %v675 = vpack.c.b16 %v628, %v627
      %v676 = vpack.c.b16 %v630, %v629
      %v677 = vpack.c.b16 %v632, %v631
      %v678 = vpack.c.b16 %v634, %v633
      %v679 = vpack.c.b16 %v636, %v635
      %v680 = vpack.c.b16 %v638, %v637
      %v681 = vpack.c.b16 %v640, %v639
      %v682 = vpack.c.b16 %v642, %v641
      %v683 = vpack.c.b16 %v644, %v643
      %v684 = vpack.c.b16 %v646, %v645
      %v685 = vpack.c.b16 %v648, %v647
      %v686 = vpack.c.b16 %v650, %v649
      %v687 = vpack.c.b16 %v652, %v651
      %v688 = vpack.c.b16 %v654, %v653
      %v689 = vpack.c.b16 %v656, %v655
      %v690 = vpack.c.b16 %v658, %v657
      %723 = vmatpush.bf16.msra.mxu0 %v666
      %724 = vmatpush.bf16.msra.mxu0 %v665
      %725 = vmatpush.bf16.msra.mxu0 %v664
      %726 = vmatpush.bf16.msra.mxu0 %v663
      %727 = vmatpush.bf16.msra.mxu0 %v662
      %728 = vmatpush.bf16.msra.mxu0 %v661
      %729 = vmatpush.bf16.msra.mxu0 %v660
      %730 = vmatpush.bf16.msra.mxu0 %v659
      %731 = vmatmul.bf16.gmra.mxu0 %v459
      %v732 = vpop.f32.mrf.mxu0
      %v733 = vadd.f32 %v349, %v732
      %v734 = vpop.f32.mrf.mxu0
      %v735 = vadd.f32 %v349, %v734
      %736 = vmatmul.bf16.gmra.mxu0 %v463
      %v737 = vpop.f32.mrf.mxu0
      %v738 = vadd.f32 %v349, %v737
      %v739 = vpop.f32.mrf.mxu0
      %v740 = vadd.f32 %v349, %v739
      %741 = vmatmul.bf16.gmra.mxu0 %v467
      %v742 = vpop.f32.mrf.mxu0
      %v743 = vadd.f32 %v349, %v742
      %v744 = vpop.f32.mrf.mxu0
      %v745 = vadd.f32 %v349, %v744
      %746 = vmatmul.bf16.gmra.mxu0 %v471
      %v747 = vpop.f32.mrf.mxu0
      %v748 = vadd.f32 %v349, %v747
      %v749 = vpop.f32.mrf.mxu0
      %v750 = vadd.f32 %v349, %v749
      %751 = vmatmul.bf16.gmra.mxu0 %v475
      %v752 = vpop.f32.mrf.mxu0
      %v753 = vadd.f32 %v349, %v752
      %v754 = vpop.f32.mrf.mxu0
      %v755 = vadd.f32 %v349, %v754
      %756 = vmatmul.bf16.gmra.mxu0 %v479
      %v757 = vpop.f32.mrf.mxu0
      %v758 = vadd.f32 %v349, %v757
      %v759 = vpop.f32.mrf.mxu0
      %v760 = vadd.f32 %v349, %v759
      %761 = vmatmul.bf16.gmra.mxu0 %v483
      %v762 = vpop.f32.mrf.mxu0
      %v763 = vadd.f32 %v349, %v762
      %v764 = vpop.f32.mrf.mxu0
      %v765 = vadd.f32 %v349, %v764
      %766 = vmatmul.bf16.gmra.mxu0 %v487
      %v767 = vpop.f32.mrf.mxu0
      %v768 = vadd.f32 %v349, %v767
      %v769 = vpop.f32.mrf.mxu0
      %v770 = vadd.f32 %v349, %v769
      %771 = vmatmul.bf16.gmra.mxu0 %v491
      %v772 = vpop.f32.mrf.mxu0
      %v773 = vadd.f32 %v349, %v772
      %v774 = vpop.f32.mrf.mxu0
      %v775 = vadd.f32 %v349, %v774
      %776 = vdwg.mxu0
      %777 = vmatpush.bf16.msra.mxu0 %v674
      %778 = vmatpush.bf16.msra.mxu0 %v673
      %779 = vmatpush.bf16.msra.mxu0 %v672
      %780 = vmatpush.bf16.msra.mxu0 %v671
      %781 = vmatpush.bf16.msra.mxu0 %v670
      %782 = vmatpush.bf16.msra.mxu0 %v669
      %783 = vmatpush.bf16.msra.mxu0 %v668
      %784 = vmatpush.bf16.msra.mxu0 %v667
      %785 = vmatmul.bf16.gmra.mxu0 %v460
      %v786 = vpop.f32.mrf.mxu0
      %v787 = vadd.f32 %v733, %v786
      %v788 = vpop.f32.mrf.mxu0
      %v789 = vadd.f32 %v735, %v788
      %790 = vmatmul.bf16.gmra.mxu0 %v464
      %v791 = vpop.f32.mrf.mxu0
      %v792 = vadd.f32 %v738, %v791
      %v793 = vpop.f32.mrf.mxu0
      %v794 = vadd.f32 %v740, %v793
      %795 = vmatmul.bf16.gmra.mxu0 %v468
      %v796 = vpop.f32.mrf.mxu0
      %v797 = vadd.f32 %v743, %v796
      %v798 = vpop.f32.mrf.mxu0
      %v799 = vadd.f32 %v745, %v798
      %800 = vmatmul.bf16.gmra.mxu0 %v472
      %v801 = vpop.f32.mrf.mxu0
      %v802 = vadd.f32 %v748, %v801
      %v803 = vpop.f32.mrf.mxu0
      %v804 = vadd.f32 %v750, %v803
      %805 = vmatmul.bf16.gmra.mxu0 %v476
      %v806 = vpop.f32.mrf.mxu0
      %v807 = vadd.f32 %v753, %v806
      %v808 = vpop.f32.mrf.mxu0
      %v809 = vadd.f32 %v755, %v808
      %810 = vmatmul.bf16.gmra.mxu0 %v480
      %v811 = vpop.f32.mrf.mxu0
      %v812 = vadd.f32 %v758, %v811
      %v813 = vpop.f32.mrf.mxu0
      %v814 = vadd.f32 %v760, %v813
      %815 = vmatmul.bf16.gmra.mxu0 %v484
      %v816 = vpop.f32.mrf.mxu0
      %v817 = vadd.f32 %v763, %v816
      %v818 = vpop.f32.mrf.mxu0
      %v819 = vadd.f32 %v765, %v818
      %820 = vmatmul.bf16.gmra.mxu0 %v488
      %v821 = vpop.f32.mrf.mxu0
      %v822 = vadd.f32 %v768, %v821
      %v823 = vpop.f32.mrf.mxu0
      %v824 = vadd.f32 %v770, %v823
      %825 = vmatmul.bf16.gmra.mxu0 %v492
      %v826 = vpop.f32.mrf.mxu0
      %v827 = vadd.f32 %v773, %v826
      %v828 = vpop.f32.mrf.mxu0
      %v829 = vadd.f32 %v775, %v828
      %830 = vdwg.mxu0
      %831 = vmatpush.bf16.msra.mxu0 %v682
      %832 = vmatpush.bf16.msra.mxu0 %v681
      %833 = vmatpush.bf16.msra.mxu0 %v680
      %834 = vmatpush.bf16.msra.mxu0 %v679
      %835 = vmatpush.bf16.msra.mxu0 %v678
      %836 = vmatpush.bf16.msra.mxu0 %v677
      %837 = vmatpush.bf16.msra.mxu0 %v676
      %838 = vmatpush.bf16.msra.mxu0 %v675
      %839 = vmatmul.bf16.gmra.mxu0 %v461
      %v840 = vpop.f32.mrf.mxu0
      %v841 = vadd.f32 %v787, %v840
      %v842 = vpop.f32.mrf.mxu0
      %v843 = vadd.f32 %v789, %v842
      %844 = vmatmul.bf16.gmra.mxu0 %v465
      %v845 = vpop.f32.mrf.mxu0
      %v846 = vadd.f32 %v792, %v845
      %v847 = vpop.f32.mrf.mxu0
      %v848 = vadd.f32 %v794, %v847
      %849 = vmatmul.bf16.gmra.mxu0 %v469
      %v850 = vpop.f32.mrf.mxu0
      %v851 = vadd.f32 %v797, %v850
      %v852 = vpop.f32.mrf.mxu0
      %v853 = vadd.f32 %v799, %v852
      %854 = vmatmul.bf16.gmra.mxu0 %v473
      %v855 = vpop.f32.mrf.mxu0
      %v856 = vadd.f32 %v802, %v855
      %v857 = vpop.f32.mrf.mxu0
      %v858 = vadd.f32 %v804, %v857
      %859 = vmatmul.bf16.gmra.mxu0 %v477
      %v860 = vpop.f32.mrf.mxu0
      %v861 = vadd.f32 %v807, %v860
      %v862 = vpop.f32.mrf.mxu0
      %v863 = vadd.f32 %v809, %v862
      %864 = vmatmul.bf16.gmra.mxu0 %v481
      %v865 = vpop.f32.mrf.mxu0
      %v866 = vadd.f32 %v812, %v865
      %v867 = vpop.f32.mrf.mxu0
      %v868 = vadd.f32 %v814, %v867
      %869 = vmatmul.bf16.gmra.mxu0 %v485
      %v870 = vpop.f32.mrf.mxu0
      %v871 = vadd.f32 %v817, %v870
      %v872 = vpop.f32.mrf.mxu0
      %v873 = vadd.f32 %v819, %v872
      %874 = vmatmul.bf16.gmra.mxu0 %v489
      %v875 = vpop.f32.mrf.mxu0
      %v876 = vadd.f32 %v822, %v875
      %v877 = vpop.f32.mrf.mxu0
      %v878 = vadd.f32 %v824, %v877
      %879 = vmatmul.bf16.gmra.mxu0 %v493
      %v880 = vpop.f32.mrf.mxu0
      %v881 = vadd.f32 %v827, %v880
      %v882 = vpop.f32.mrf.mxu0
      %v883 = vadd.f32 %v829, %v882
      %884 = vdwg.mxu0
      %885 = vmatpush.bf16.msra.mxu0 %v690
      %886 = vmatpush.bf16.msra.mxu0 %v689
      %887 = vmatpush.bf16.msra.mxu0 %v688
      %888 = vmatpush.bf16.msra.mxu0 %v687
      %889 = vmatpush.bf16.msra.mxu0 %v686
      %890 = vmatpush.bf16.msra.mxu0 %v685
      %891 = vmatpush.bf16.msra.mxu0 %v684
      %892 = vmatpush.bf16.msra.mxu0 %v683
      %893 = vmatmul.bf16.gmra.mxu0 %v462
      %v894 = vpop.f32.mrf.mxu0
      %v895 = vadd.f32 %v841, %v894
      %v896 = vpop.f32.mrf.mxu0
      %v897 = vadd.f32 %v843, %v896
      %898 = vmatmul.bf16.gmra.mxu0 %v466
      %v899 = vpop.f32.mrf.mxu0
      %v900 = vadd.f32 %v846, %v899
      %v901 = vpop.f32.mrf.mxu0
      %v902 = vadd.f32 %v848, %v901
      %903 = vmatmul.bf16.gmra.mxu0 %v470
      %v904 = vpop.f32.mrf.mxu0
      %v905 = vadd.f32 %v851, %v904
      %v906 = vpop.f32.mrf.mxu0
      %v907 = vadd.f32 %v853, %v906
      %908 = vmatmul.bf16.gmra.mxu0 %v474
      %v909 = vpop.f32.mrf.mxu0
      %v910 = vadd.f32 %v856, %v909
      %v911 = vpop.f32.mrf.mxu0
      %v912 = vadd.f32 %v858, %v911
      %913 = vmatmul.bf16.gmra.mxu0 %v478
      %v914 = vpop.f32.mrf.mxu0
      %v915 = vadd.f32 %v861, %v914
      %v916 = vpop.f32.mrf.mxu0
      %v917 = vadd.f32 %v863, %v916
      %918 = vmatmul.bf16.gmra.mxu0 %v482
      %v919 = vpop.f32.mrf.mxu0
      %v920 = vadd.f32 %v866, %v919
      %v921 = vpop.f32.mrf.mxu0
      %v922 = vadd.f32 %v868, %v921
      %923 = vmatmul.bf16.gmra.mxu0 %v486
      %v924 = vpop.f32.mrf.mxu0
      %v925 = vadd.f32 %v871, %v924
      %v926 = vpop.f32.mrf.mxu0
      %v927 = vadd.f32 %v873, %v926
      %928 = vmatmul.bf16.gmra.mxu0 %v490
      %v929 = vpop.f32.mrf.mxu0
      %v930 = vadd.f32 %v876, %v929
      %v931 = vpop.f32.mrf.mxu0
      %v932 = vadd.f32 %v878, %v931
      %933 = vmatmul.bf16.gmra.mxu0 %v494
      %v934 = vpop.f32.mrf.mxu0
      %v935 = vadd.f32 %v881, %v934
      %v936 = vpop.f32.mrf.mxu0
      %v937 = vadd.f32 %v883, %v936
      %938 = vdwg.mxu0
      %v939 = vmax.f32 %v895, 0.0
      %v940 = vmax.f32 %v897, 0.0
      %v941 = vmax.f32 %v900, 0.0
      %v942 = vmax.f32 %v902, 0.0
      %v943 = vmax.f32 %v905, 0.0
      %v944 = vmax.f32 %v907, 0.0
      %v945 = vmax.f32 %v910, 0.0
      %v946 = vmax.f32 %v912, 0.0
      %v947 = vmax.f32 %v915, 0.0
      %v948 = vmax.f32 %v917, 0.0
      %v949 = vmax.f32 %v920, 0.0
      %v950 = vmax.f32 %v922, 0.0
      %v951 = vmax.f32 %v925, 0.0
      %v952 = vmax.f32 %v927, 0.0
      %v953 = vmax.f32 %v930, 0.0
      %v954 = vmax.f32 %v932, 0.0
      %v955 = vmax.f32 %v935, 0.0
      %v956 = vmax.f32 %v937, 0.0
      %v957 = vpack.c.bf16 %v939, %v939
      %v958 = vpack.c.bf16 %v940, %v940
      %v959 = vpack.c.bf16 %v941, %v941
      %v960 = vpack.c.bf16 %v942, %v942
      %v961 = vpack.c.bf16 %v943, %v943
      %v962 = vpack.c.bf16 %v944, %v944
      %v963 = vpack.c.bf16 %v945, %v945
      %v964 = vpack.c.bf16 %v946, %v946
      %v965 = vpack.c.bf16 %v947, %v947
      %v966 = vpack.c.bf16 %v948, %v948
      %v967 = vpack.c.bf16 %v949, %v949
      %v968 = vpack.c.bf16 %v950, %v950
      %v969 = vpack.c.bf16 %v951, %v951
      %v970 = vpack.c.bf16 %v952, %v952
      %v971 = vpack.c.bf16 %v953, %v953
      %v972 = vpack.c.bf16 %v954, %v954
      %v973 = vpack.c.bf16 %v955, %v955
      %v974 = vpack.c.bf16 %v956, %v956
      %vm975 = vcmask 519168
      %976 = vst.msk [vmem:[%s245] sm:$0xf] %vm975, %v957
      %977 = vst.msk [vmem:[%s245 + $0x4] sm:$0xf] %vm975, %v958
      %978 = vst.msk [vmem:[%s245 + $0x8] sm:$0xf] %vm975, %v959
      %979 = vst.msk [vmem:[%s245 + $0xc] sm:$0xf] %vm975, %v960
      %980 = vst.msk [vmem:[%s245 + $0x10] sm:$0xf] %vm975, %v961
      %981 = vst.msk [vmem:[%s245 + $0x14] sm:$0xf] %vm975, %v962
      %982 = vst.msk [vmem:[%s245 + $0x18] sm:$0xf] %vm975, %v963
      %983 = vst.msk [vmem:[%s245 + $0x1c] sm:$0xf] %vm975, %v964
      %984 = vst.msk [vmem:[%s245 + $0x20] sm:$0xf] %vm975, %v965
      %985 = vst.msk [vmem:[%s245 + $0x24] sm:$0xf] %vm975, %v966
      %986 = vst.msk [vmem:[%s245 + $0x28] sm:$0xf] %vm975, %v967
      %987 = vst.msk [vmem:[%s245 + $0x2c] sm:$0xf] %vm975, %v968
      %988 = vst.msk [vmem:[%s245 + $0x30] sm:$0xf] %vm975, %v969
      %989 = vst.msk [vmem:[%s245 + $0x34] sm:$0xf] %vm975, %v970
      %990 = vst.msk [vmem:[%s245 + $0x38] sm:$0xf] %vm975, %v971
      %991 = vst.msk [vmem:[%s245 + $0x3c] sm:$0xf] %vm975, %v972
      %992 = vst.msk [vmem:[%s245 + $0x40] sm:$0xf] %vm975, %v973
      %993 = vst.msk [vmem:[%s245 + $0x44] sm:$0xf] %vm975, %v974
      %s994 = smul.u32 18, %s19
      %p995 = scmp.lt.s32.totalorder %s18, 1
      %s996 = scalar_select %p995, %s18, 1
      %p997 = scmp.lt.s32.totalorder %s994, 17
      %s998 = scalar_select %p997, %s994, 17
      %s999 = smul.addr %s996, 18
      %s1000 = sadd.s32 %s998, %s999
      %s1001 = smul.addr %s1000, 4
      %s1002 = scalar_lea.vmem %s3, %s1001
      // Predicated region
      $region33: #{_lambda_.9} parent=31 // pred_check
        %p1003 = pneg %p126
      $region34: #{_lambda_.9} parent=31 // pred_check_branch
        %1005 = sbr.rel (%p1003) target = $region36
      $region35: #{_lambda_.9} parent=31 // pred_region
        %s1006 = smul.u32 18, %s19
      $region36: #{_lambda_.9} parent=31 // pred_fallthru
        _
    $region32: #{_lambda_.9} parent=5 // pred_fallthru
      _
    %p1007 = scmp.le.s32.totalorder 2, %s9
    // Predicated region
    $region37: #{_lambda_.9} parent=5 // pred_check
      %p1008 = pneg %p1007
    $region38: #{_lambda_.9} parent=5 // pred_check_branch
      %1010 = sbr.rel (%p1008) target = $region40
    $region39: #{_lambda_.9} parent=5 // pred_region
      %s1011 = ssub.s32 %s9, 2
      // Predicated region
      $region41: #{_lambda_.9} parent=39 // pred_check
        %p1012 = pneg %p132
      $region42: #{_lambda_.9} parent=39 // pred_check_branch
        %1014 = sbr.rel (%p1012) target = $region44
      $region43: #{_lambda_.9} parent=39 // pred_region
        %s1015 = smul.u32 18, %s21
        %p1016 = scmp.lt.s32.totalorder %s20, 1
        %s1017 = scalar_select %p1016, %s20, 1
        %p1018 = scmp.lt.s32.totalorder %s1015, 17
        %s1019 = scalar_select %p1018, %s1015, 17
        %s1020 = smul.addr %s1017, 18
        %s1021 = sadd.s32 %s1019, %s1020
        %s1022 = smul.addr %s1021, 4
        %s1023 = scalar_lea.vmem %s3, %s1022
      $region44: #{_lambda_.9} parent=39 // pred_fallthru
        _
    $region40: #{_lambda_.9} parent=5 // pred_fallthru
      _
  $region6: #{_lambda_.9} parent=0 // loop_footer
    %s13 = sadd.s32 1, %s9
  $region7: #{_lambda_.9} parent=0 // loop_footer_branch
    %8 = sbr.rel target = $region3
  $region8: #{_lambda_.9} parent=0 // loop_exit
    _

// kernel: _lambda_.10
$region0: #{_lambda_.10}
  #allocation0 [shape = 'u32[]', space=smem, size = 0x4, offset = 0x4, fixed_abs, tag = 'smem constant byte address 0x4 - core index']
  #allocation1 [shape = 'u32[72,128]{1,0:T(1,128)}', space=vmem, size = 0x9000, scoped, tag = 'internal scratch']
  %s0 = inlined_call_operand.vmem [shape: bf16[2,64,576], index: 0, kind: input, shape index: {}]
  %s1 = inlined_call_operand.vmem [shape: bf16[2,576,64], index: 1, kind: input, shape index: {}]
  %s2 = inlined_call_operand.vmem [shape: f32[2,1,64], index: 2, kind: input, shape index: {}]
  %s3 = inlined_call_operand.vmem [shape: bf16[2,64,64], index: 3, kind: output, shape index: {}]
  %s4 = sld [smem:[#allocation0]]
  $region45: #{_lambda_.10} parent=0
    _
  %s6 = ssub.s32 1, %s4
  %s7 = scalar_select 0, %s6, %s4
  loop: start=0, step=1, limit=4
  $region2: #{_lambda_.10} parent=0 // loop_pre_header
    _
  $region3: #{_lambda_.10} parent=0 // loop_header
    %s9 = sphi 0, %s13
    %p10 = scmp.ge.s32.totalorder %s9, 4
    %s16 = sphi 0, %s28
    %s17 = sphi 0, %s24
    %s18 = sphi 0, %s16
    %s19 = sphi 0, %s17
    %s20 = sphi 0, %s18
    %s21 = sphi 0, %s19
    %s33 = sphi 0, %s35
    %s36 = sphi 0, %s33
    %s37 = sphi 0, %s36
    %s53 = sphi 0, %s37
    %s59 = sphi 0, %s61
    %s62 = sphi 0, %s59
    %s63 = sphi 0, %s62
    %s79 = sphi 0, %s63
    %s85 = sphi 0, %s87
    %s88 = sphi 0, %s85
    %s89 = sphi 0, %s88
    %s105 = sphi 0, %s89
    %s113 = sphi 0, %s115
    %s116 = sphi 0, %s113
    %s117 = sphi 0, %s116
    %s133 = sphi 0, %s117
  $region4: #{_lambda_.10} parent=0 // loop_header_branch
    %12 = sbr.rel (%p10) target = $region8
  $region5: #{_lambda_.10} parent=0 // loop_body
    %s14 = ssub.s32 %s9, 1
    %s15 = ssub.s32 %s9, 2
    %s22 = sadd.s32 1, %s17
    %p23 = scmp.ge.s32.totalorder %s22, 1
    %s24 = scalar_select %p23, 0, %s22
    %s25 = sadd.s32 1, %s16
    %s26 = scalar_select %p23, %s25, %s16
    %p27 = scmp.ge.s32.totalorder %s26, 2
    %s28 = scalar_select %p27, 0, %s26
    %s29 = ssub.s32 %s16, %s28
    %s30 = ssub.s32 %s17, %s24
    %s31 = sor.u32 %s29, %s30
    %p32 = scmp.eq.s32.totalorder %s31, 0
    %s34 = sadd.s32 %s33, 1
    %s35 = scalar_select %p32, %s33, %s34
    %p38 = pneg %p32
    %p39 = scmp.eq.s32.totalorder %s9, 1
    %p40 = por %p38, %p39
    %p41 = scmp.ne.s32.totalorder %s33, %s36
    %p42 = scmp.eq.s32.totalorder %s9, 0
    %p43 = por %p41, %p42
    %p44 = scmp.ne.s32.totalorder %s33, %s36
    %p45 = scmp.eq.s32.totalorder %s14, 1
    %p46 = por %p44, %p45
    %p47 = scmp.ne.s32.totalorder %s36, %s37
    %p48 = scmp.eq.s32.totalorder %s14, 0
    %p49 = por %p47, %p48
    %p50 = scmp.ne.s32.totalorder %s36, %s37
    %p51 = scmp.eq.s32.totalorder %s15, 1
    %p52 = por %p50, %p51
    %p54 = scmp.ne.s32.totalorder %s37, %s53
    %p55 = scmp.eq.s32.totalorder %s15, 0
    %p56 = por %p54, %p55
    %s57 = ssub.s32 %s16, %s28
    %p58 = scmp.eq.s32.totalorder %s57, 0
    %s60 = sadd.s32 %s59, 1
    %s61 = scalar_select %p58, %s59, %s60
    %p64 = pneg %p58
    %p65 = scmp.eq.s32.totalorder %s9, 1
    %p66 = por %p64, %p65
    %p67 = scmp.ne.s32.totalorder %s59, %s62
    %p68 = scmp.eq.s32.totalorder %s9, 0
    %p69 = por %p67, %p68
    %p70 = scmp.ne.s32.totalorder %s59, %s62
    %p71 = scmp.eq.s32.totalorder %s14, 1
    %p72 = por %p70, %p71
    %p73 = scmp.ne.s32.totalorder %s62, %s63
    %p74 = scmp.eq.s32.totalorder %s14, 0
    %p75 = por %p73, %p74
    %p76 = scmp.ne.s32.totalorder %s62, %s63
    %p77 = scmp.eq.s32.totalorder %s15, 1
    %p78 = por %p76, %p77
    %p80 = scmp.ne.s32.totalorder %s63, %s79
    %p81 = scmp.eq.s32.totalorder %s15, 0
    %p82 = por %p80, %p81
    %s83 = ssub.s32 %s16, %s28
    %p84 = scmp.eq.s32.totalorder %s83, 0
    %s86 = sadd.s32 %s85, 1
    %s87 = scalar_select %p84, %s85, %s86
    %p90 = pneg %p84
    %p91 = scmp.eq.s32.totalorder %s9, 1
    %p92 = por %p90, %p91
    %p93 = scmp.ne.s32.totalorder %s85, %s88
    %p94 = scmp.eq.s32.totalorder %s9, 0
    %p95 = por %p93, %p94
    %p96 = scmp.ne.s32.totalorder %s85, %s88
    %p97 = scmp.eq.s32.totalorder %s14, 1
    %p98 = por %p96, %p97
    %p99 = scmp.ne.s32.totalorder %s88, %s89
    %p100 = scmp.eq.s32.totalorder %s14, 0
    %p101 = por %p99, %p100
    %p102 = scmp.ne.s32.totalorder %s88, %s89
    %p103 = scmp.eq.s32.totalorder %s15, 1
    %p104 = por %p102, %p103
    %p106 = scmp.ne.s32.totalorder %s89, %s105
    %p107 = scmp.eq.s32.totalorder %s15, 0
    %p108 = por %p106, %p107
    %s109 = ssub.s32 %s16, %s28
    %s110 = ssub.s32 %s17, %s24
    %s111 = sor.u32 %s109, %s110
    %p112 = scmp.eq.s32.totalorder %s111, 0
    %s114 = sadd.s32 %s113, 1
    %s115 = scalar_select %p112, %s113, %s114
    %p118 = pneg %p112
    %p119 = scmp.eq.s32.totalorder %s9, 1
    %p120 = por %p118, %p119
    %p121 = scmp.ne.s32.totalorder %s113, %s116
    %p122 = scmp.eq.s32.totalorder %s9, 0
    %p123 = por %p121, %p122
    %p124 = scmp.ne.s32.totalorder %s113, %s116
    %p125 = scmp.eq.s32.totalorder %s14, 1
    %p126 = por %p124, %p125
    %p127 = scmp.ne.s32.totalorder %s116, %s117
    %p128 = scmp.eq.s32.totalorder %s14, 0
    %p129 = por %p127, %p128
    %p130 = scmp.ne.s32.totalorder %s116, %s117
    %p131 = scmp.eq.s32.totalorder %s15, 1
    %p132 = por %p130, %p131
    %p134 = scmp.ne.s32.totalorder %s117, %s133
    %p135 = scmp.eq.s32.totalorder %s15, 0
    %p136 = por %p134, %p135
    %p137 = scmp.le.s32.totalorder 1, %s9
    %p138 = scmp.lt.s32.totalorder %s9, 3
    %p139 = pnand %p137, %p138
    %p140 = pneg %p139
    // Predicated region
    $region9: #{_lambda_.10} parent=5 // pred_check
      _
    $region10: #{_lambda_.10} parent=5 // pred_check_branch
      %142 = sbr.rel (%p139) target = $region12
    $region11: #{_lambda_.10} parent=5 // pred_region
      %s143 = ssub.s32 %s9, 1
    $region12: #{_lambda_.10} parent=5 // pred_fallthru
      _
    %p144 = scmp.lt.s32.totalorder %s9, 2
    // Predicated region
    $region13: #{_lambda_.10} parent=5 // pred_check
      %p145 = pneg %p144
    $region14: #{_lambda_.10} parent=5 // pred_check_branch
      %147 = sbr.rel (%p145) target = $region16
    $region15: #{_lambda_.10} parent=5 // pred_region
      // Predicated region
      $region17: #{_lambda_.10} parent=15 // pred_check
        %p148 = pneg %p43
      $region18: #{_lambda_.10} parent=15 // pred_check_branch
        %150 = sbr.rel (%p148) target = $region20
      $region19: #{_lambda_.10} parent=15 // pred_region
        %s151 = smul.u32 8, %s17
        %p152 = scmp.lt.s32.totalorder %s16, 1
        %s153 = scalar_select %p152, %s16, 1
        %p154 = scmp.lt.s32.totalorder %s151, 7
        %s155 = scalar_select %p154, %s151, 7
        %s156 = smul.addr %s155, 5
        %s157 = smul.addr %s153, 40
        %s158 = sadd.s32 %s156, %s157
        %s159 = smul.addr %s158, 4
        %s160 = scalar_lea.vmem %s0, %s159
        %s161 = smul.u32 8, %s17
      $region20: #{_lambda_.10} parent=15 // pred_fallthru
        _
      // Predicated region
      $region21: #{_lambda_.10} parent=15 // pred_check
        %p162 = pneg %p69
      $region22: #{_lambda_.10} parent=15 // pred_check_branch
        %164 = sbr.rel (%p162) target = $region24
      $region23: #{_lambda_.10} parent=15 // pred_region
        %p165 = scmp.lt.s32.totalorder %s16, 1
        %s166 = scalar_select %p165, %s16, 1
        %s167 = smul.addr %s166, 72
        %s168 = smul.addr %s167, 4
        %s169 = scalar_lea.vmem %s1, %s168
      $region24: #{_lambda_.10} parent=15 // pred_fallthru
        _
      // Predicated region
      $region25: #{_lambda_.10} parent=15 // pred_check
        %p170 = pneg %p95
      $region26: #{_lambda_.10} parent=15 // pred_check_branch
        %172 = sbr.rel (%p170) target = $region28
      $region27: #{_lambda_.10} parent=15 // pred_region
        %p173 = scmp.lt.s32.totalorder %s16, 1
        %s174 = scalar_select %p173, %s16, 1
        %s175 = scalar_lea.vmem %s2, %s174
      $region28: #{_lambda_.10} parent=15 // pred_fallthru
        _
    $region16: #{_lambda_.10} parent=5 // pred_fallthru
      _
    %p176 = scmp.le.s32.totalorder 1, %s9
    %p177 = scmp.lt.s32.totalorder %s9, 3
    %p178 = pnand %p176, %p177
    %p179 = pneg %p178
    // Predicated region
    $region29: #{_lambda_.10} parent=5 // pred_check
      _
    $region30: #{_lambda_.10} parent=5 // pred_check_branch
      %181 = sbr.rel (%p178) target = $region32
    $region31: #{_lambda_.10} parent=5 // pred_region
      %s182 = ssub.s32 %s9, 1
      %s183 = smul.u32 8, %s19
      %p184 = scmp.lt.s32.totalorder %s18, 1
      %s185 = scalar_select %p184, %s18, 1
      %p186 = scmp.lt.s32.totalorder %s183, 7
      %s187 = scalar_select %p186, %s183, 7
      %s188 = smul.addr %s187, 5
      %s189 = smul.addr %s185, 40
      %s190 = sadd.s32 %s188, %s189
      %s191 = smul.addr %s190, 4
      %s192 = scalar_lea.vmem %s0, %s191
      %p193 = pneg %p49
      %p194 = pneg %p46
      %p195 = scmp.lt.s32.totalorder %s18, 1
      %s196 = scalar_select %p195, %s18, 1
      %s197 = smul.addr %s196, 72
      %s198 = smul.addr %s197, 4
      %s199 = scalar_lea.vmem %s1, %s198
      %p200 = pneg %p75
      %p201 = pneg %p72
      %p202 = scmp.lt.s32.totalorder %s18, 1
      %s203 = scalar_select %p202, %s18, 1
      %s204 = scalar_lea.vmem %s2, %s203
      %p205 = pneg %p101
      %p206 = pneg %p98
      %p207 = pneg %p129
      %p208 = pneg %p126
      %s209 = smul.u32 8, %s19
      %p210 = scmp.lt.s32.totalorder %s18, 1
      %s211 = scalar_select %p210, %s18, 1
      %p212 = scmp.lt.s32.totalorder %s209, 7
      %s213 = scalar_select %p212, %s209, 7
      %s214 = smul.addr %s211, 8
      %s215 = sadd.s32 %s213, %s214
      %s216 = smul.addr %s215, 4
      %s217 = scalar_lea.vmem %s3, %s216
      %s218 = smul.u32 8, %s19
      %p219 = scmp.lt.s32.totalorder %s18, 1
      %s220 = scalar_select %p219, %s18, 1
      %p221 = scmp.lt.s32.totalorder %s218, 7
      %s222 = scalar_select %p221, %s218, 7
      %s223 = smul.addr %s222, 5
      %s224 = smul.addr %s220, 40
      %s225 = sadd.s32 %s223, %s224
      %s226 = smul.addr %s225, 4
      %s227 = scalar_lea.vmem %s0, %s226
      %s228 = smul.u32 8, %s19
      %p229 = scmp.lt.s32.totalorder %s18, 1
      %s230 = scalar_select %p229, %s18, 1
      %s231 = smul.addr %s230, 72
      %s232 = smul.addr %s231, 4
      %s233 = scalar_lea.vmem %s1, %s232
      %p234 = scmp.lt.s32.totalorder %s18, 1
      %s235 = scalar_select %p234, %s18, 1
      %s236 = scalar_lea.vmem %s2, %s235
      %s237 = smul.u32 8, %s19
      %p238 = scmp.lt.s32.totalorder %s18, 1
      %s239 = scalar_select %p238, %s18, 1
      %p240 = scmp.lt.s32.totalorder %s237, 7
      %s241 = scalar_select %p240, %s237, 7
      %s242 = smul.addr %s239, 8
      %s243 = sadd.s32 %s241, %s242
      %s244 = smul.addr %s243, 4
      %s245 = scalar_lea.vmem %s3, %s244
      %s246 = smul.u32 8, %s19
      %v248 = vld [vmem:[%s227] sm:$0xff]
      %v249 = vld [vmem:[%s227 + $0x8] sm:$0xff]
      %v250 = vld [vmem:[%s227 + $0x10] sm:$0xf]
      %v251 = vld [vmem:[%s227 + $0x14] sm:$0xff]
      %v252 = vld [vmem:[%s227 + $0x1c] sm:$0xff]
      %v253 = vld [vmem:[%s227 + $0x24] sm:$0xf]
      %v254 = vld [vmem:[%s227 + $0x28] sm:$0xff]
      %v255 = vld [vmem:[%s227 + $0x30] sm:$0xff]
      %v256 = vld [vmem:[%s227 + $0x38] sm:$0xf]
      %v257 = vld [vmem:[%s227 + $0x3c] sm:$0xff]
      %v258 = vld [vmem:[%s227 + $0x44] sm:$0xff]
      %v259 = vld [vmem:[%s227 + $0x4c] sm:$0xf]
      %v260 = vld [vmem:[%s227 + $0x50] sm:$0xff]
      %v261 = vld [vmem:[%s227 + $0x58] sm:$0xff]
      %v262 = vld [vmem:[%s227 + $0x60] sm:$0xf]
      %v263 = vld [vmem:[%s227 + $0x64] sm:$0xff]
      %v264 = vld [vmem:[%s227 + $0x6c] sm:$0xff]
      %v265 = vld [vmem:[%s227 + $0x74] sm:$0xf]
      %v266 = vld [vmem:[%s227 + $0x78] sm:$0xff]
      %v267 = vld [vmem:[%s227 + $0x80] sm:$0xff]
      %v268 = vld [vmem:[%s227 + $0x88] sm:$0xf]
      %v269 = vld [vmem:[%s227 + $0x8c] sm:$0xff]
      %v270 = vld [vmem:[%s227 + $0x94] sm:$0xff]
      %v271 = vld [vmem:[%s227 + $0x9c] sm:$0xf]
      %v272 = vld [vmem:[%s233] sm:$0xf]
      %v273 = vld [vmem:[%s233 + $0x4] sm:$0xf]
      %v274 = vld [vmem:[%s233 + $0x8] sm:$0xf]
      %v275 = vld [vmem:[%s233 + $0xc] sm:$0xf]
      %v276 = vld [vmem:[%s233 + $0x10] sm:$0xf]
      %v277 = vld [vmem:[%s233 + $0x14] sm:$0xf]
      %v278 = vld [vmem:[%s233 + $0x18] sm:$0xf]
      %v279 = vld [vmem:[%s233 + $0x1c] sm:$0xf]
      %v280 = vld [vmem:[%s233 + $0x20] sm:$0xf]
      %v281 = vld [vmem:[%s233 + $0x24] sm:$0xf]
      %v282 = vld [vmem:[%s233 + $0x28] sm:$0xf]
      %v283 = vld [vmem:[%s233 + $0x2c] sm:$0xf]
      %v284 = vld [vmem:[%s233 + $0x30] sm:$0xf]
      %v285 = vld [vmem:[%s233 + $0x34] sm:$0xf]
      %v286 = vld [vmem:[%s233 + $0x38] sm:$0xf]
      %v287 = vld [vmem:[%s233 + $0x3c] sm:$0xf]
      %v288 = vld [vmem:[%s233 + $0x40] sm:$0xf]
      %v289 = vld [vmem:[%s233 + $0x44] sm:$0xf]
      %v290 = vld [vmem:[%s233 + $0x48] sm:$0xf]
      %v291 = vld [vmem:[%s233 + $0x4c] sm:$0xf]
      %v292 = vld [vmem:[%s233 + $0x50] sm:$0xf]
      %v293 = vld [vmem:[%s233 + $0x54] sm:$0xf]
      %v294 = vld [vmem:[%s233 + $0x58] sm:$0xf]
      %v295 = vld [vmem:[%s233 + $0x5c] sm:$0xf]
      %v296 = vld [vmem:[%s233 + $0x60] sm:$0xf]
      %v297 = vld [vmem:[%s233 + $0x64] sm:$0xf]
      %v298 = vld [vmem:[%s233 + $0x68] sm:$0xf]
      %v299 = vld [vmem:[%s233 + $0x6c] sm:$0xf]
      %v300 = vld [vmem:[%s233 + $0x70] sm:$0xf]
      %v301 = vld [vmem:[%s233 + $0x74] sm:$0xf]
      %v302 = vld [vmem:[%s233 + $0x78] sm:$0xf]
      %v303 = vld [vmem:[%s233 + $0x7c] sm:$0xf]
      %v304 = vld [vmem:[%s233 + $0x80] sm:$0xf]
      %v305 = vld [vmem:[%s233 + $0x84] sm:$0xf]
      %v306 = vld [vmem:[%s233 + $0x88] sm:$0xf]
      %v307 = vld [vmem:[%s233 + $0x8c] sm:$0xf]
      %v308 = vld [vmem:[%s233 + $0x90] sm:$0xf]
      %v309 = vld [vmem:[%s233 + $0x94] sm:$0xf]
      %v310 = vld [vmem:[%s233 + $0x98] sm:$0xf]
      %v311 = vld [vmem:[%s233 + $0x9c] sm:$0xf]
      %v312 = vld [vmem:[%s233 + $0xa0] sm:$0xf]
      %v313 = vld [vmem:[%s233 + $0xa4] sm:$0xf]
      %v314 = vld [vmem:[%s233 + $0xa8] sm:$0xf]
      %v315 = vld [vmem:[%s233 + $0xac] sm:$0xf]
      %v316 = vld [vmem:[%s233 + $0xb0] sm:$0xf]
      %v317 = vld [vmem:[%s233 + $0xb4] sm:$0xf]
      %v318 = vld [vmem:[%s233 + $0xb8] sm:$0xf]
      %v319 = vld [vmem:[%s233 + $0xbc] sm:$0xf]
      %v320 = vld [vmem:[%s233 + $0xc0] sm:$0xf]
      %v321 = vld [vmem:[%s233 + $0xc4] sm:$0xf]
      %v322 = vld [vmem:[%s233 + $0xc8] sm:$0xf]
      %v323 = vld [vmem:[%s233 + $0xcc] sm:$0xf]
      %v324 = vld [vmem:[%s233 + $0xd0] sm:$0xf]
      %v325 = vld [vmem:[%s233 + $0xd4] sm:$0xf]
      %v326 = vld [vmem:[%s233 + $0xd8] sm:$0xf]
      %v327 = vld [vmem:[%s233 + $0xdc] sm:$0xf]
      %v328 = vld [vmem:[%s233 + $0xe0] sm:$0xf]
      %v329 = vld [vmem:[%s233 + $0xe4] sm:$0xf]
      %v330 = vld [vmem:[%s233 + $0xe8] sm:$0xf]
      %v331 = vld [vmem:[%s233 + $0xec] sm:$0xf]
      %v332 = vld [vmem:[%s233 + $0xf0] sm:$0xf]
      %v333 = vld [vmem:[%s233 + $0xf4] sm:$0xf]
      %v334 = vld [vmem:[%s233 + $0xf8] sm:$0xf]
      %v335 = vld [vmem:[%s233 + $0xfc] sm:$0xf]
      %v336 = vld [vmem:[%s233 + $0x100] sm:$0xf]
      %v337 = vld [vmem:[%s233 + $0x104] sm:$0xf]
      %v338 = vld [vmem:[%s233 + $0x108] sm:$0xf]
      %v339 = vld [vmem:[%s233 + $0x10c] sm:$0xf]
      %v340 = vld [vmem:[%s233 + $0x110] sm:$0xf]
      %v341 = vld [vmem:[%s233 + $0x114] sm:$0xf]
      %v342 = vld [vmem:[%s233 + $0x118] sm:$0xf]
      %v343 = vld [vmem:[%s233 + $0x11c] sm:$0xf]
      %v344 = vld [vmem:[%s236] sm:$0x1]
      %v346 = vperm.slane %v344, 0
      %v372 = vunpack.c.l.b16 %v248
      %v373 = vunpack.c.h.b16 %v248
      %v374 = vunpack.c.l.b16 %v249
      %v375 = vunpack.c.h.b16 %v249
      %v376 = vunpack.c.l.b16 %v250
      %v377 = vunpack.c.l.b16 %v251
      %v378 = vunpack.c.h.b16 %v251
      %v379 = vunpack.c.l.b16 %v252
      %v380 = vunpack.c.h.b16 %v252
      %v381 = vunpack.c.l.b16 %v253
      %v382 = vunpack.c.l.b16 %v254
      %v383 = vunpack.c.h.b16 %v254
      %v384 = vunpack.c.l.b16 %v255
      %v385 = vunpack.c.h.b16 %v255
      %v386 = vunpack.c.l.b16 %v256
      %v387 = vunpack.c.l.b16 %v257
      %v388 = vunpack.c.h.b16 %v257
      %v389 = vunpack.c.l.b16 %v258
      %v390 = vunpack.c.h.b16 %v258
      %v391 = vunpack.c.l.b16 %v259
      %v392 = vunpack.c.l.b16 %v260
      %v393 = vunpack.c.h.b16 %v260
      %v394 = vunpack.c.l.b16 %v261
      %v395 = vunpack.c.h.b16 %v261
      %v396 = vunpack.c.l.b16 %v262
      %v397 = vunpack.c.l.b16 %v263
      %v398 = vunpack.c.h.b16 %v263
      %v399 = vunpack.c.l.b16 %v264
      %v400 = vunpack.c.h.b16 %v264
      %v401 = vunpack.c.l.b16 %v265
      %v402 = vunpack.c.l.b16 %v266
      %v403 = vunpack.c.h.b16 %v266
      %v404 = vunpack.c.l.b16 %v267
      %v405 = vunpack.c.h.b16 %v267
      %v406 = vunpack.c.l.b16 %v268
      %v407 = vunpack.c.l.b16 %v269
      %v408 = vunpack.c.h.b16 %v269
      %v409 = vunpack.c.l.b16 %v270
      %v410 = vunpack.c.h.b16 %v270
      %v411 = vunpack.c.l.b16 %v271
      %v412 = vpack.c.b16 %v377, %v372
      %v413 = vpack.c.b16 %v378, %v373
      %v414 = vpack.c.b16 %v379, %v374
      %v415 = vpack.c.b16 %v380, %v375
      %v416 = vpack.c.b16 %v381, %v376
      %v417 = vpack.c.b16 %v387, %v382
      %v418 = vpack.c.b16 %v388, %v383
      %v419 = vpack.c.b16 %v389, %v384
      %v420 = vpack.c.b16 %v390, %v385
      %v421 = vpack.c.b16 %v391, %v386
      %v422 = vpack.c.b16 %v397, %v392
      %v423 = vpack.c.b16 %v398, %v393
      %v424 = vpack.c.b16 %v399, %v394
      %v425 = vpack.c.b16 %v400, %v395
      %v426 = vpack.c.b16 %v401, %v396
      %v427 = vpack.c.b16 %v407, %v402
      %v428 = vpack.c.b16 %v408, %v403
      %v429 = vpack.c.b16 %v409, %v404
      %v430 = vpack.c.b16 %v410, %v405
      %v431 = vpack.c.b16 %v411, %v406
      %v520 = vunpack.c.l.b16 %v272
      %v521 = vunpack.c.l.b16 %v273
      %v522 = vunpack.c.l.b16 %v274
      %v523 = vunpack.c.l.b16 %v275
      %v524 = vunpack.c.l.b16 %v276
      %v525 = vunpack.c.l.b16 %v277
      %v526 = vunpack.c.l.b16 %v278
      %v527 = vunpack.c.l.b16 %v279
      %v528 = vunpack.c.l.b16 %v280
      %v529 = vunpack.c.l.b16 %v281
      %v530 = vunpack.c.l.b16 %v282
      %v531 = vunpack.c.l.b16 %v283
      %v532 = vunpack.c.l.b16 %v284
      %v533 = vunpack.c.l.b16 %v285
      %v534 = vunpack.c.l.b16 %v286
      %v535 = vunpack.c.l.b16 %v287
      %v536 = vunpack.c.l.b16 %v288
      %v537 = vunpack.c.l.b16 %v289
      %v538 = vunpack.c.l.b16 %v290
      %v539 = vunpack.c.l.b16 %v291
      %v540 = vunpack.c.l.b16 %v292
      %v541 = vunpack.c.l.b16 %v293
      %v542 = vunpack.c.l.b16 %v294
      %v543 = vunpack.c.l.b16 %v295
      %v544 = vunpack.c.l.b16 %v296
      %v545 = vunpack.c.l.b16 %v297
      %v546 = vunpack.c.l.b16 %v298
      %v547 = vunpack.c.l.b16 %v299
      %v548 = vunpack.c.l.b16 %v300
      %v549 = vunpack.c.l.b16 %v301
      %v550 = vunpack.c.l.b16 %v302
      %v551 = vunpack.c.l.b16 %v303
      %v552 = vunpack.c.l.b16 %v304
      %v553 = vunpack.c.l.b16 %v305
      %v554 = vunpack.c.l.b16 %v306
      %v555 = vunpack.c.l.b16 %v307
      %v556 = vunpack.c.l.b16 %v308
      %v557 = vunpack.c.l.b16 %v309
      %v558 = vunpack.c.l.b16 %v310
      %v559 = vunpack.c.l.b16 %v311
      %v560 = vunpack.c.l.b16 %v312
      %v561 = vunpack.c.l.b16 %v313
      %v562 = vunpack.c.l.b16 %v314
      %v563 = vunpack.c.l.b16 %v315
      %v564 = vunpack.c.l.b16 %v316
      %v565 = vunpack.c.l.b16 %v317
      %v566 = vunpack.c.l.b16 %v318
      %v567 = vunpack.c.l.b16 %v319
      %v568 = vunpack.c.l.b16 %v320
      %v569 = vunpack.c.l.b16 %v321
      %v570 = vunpack.c.l.b16 %v322
      %v571 = vunpack.c.l.b16 %v323
      %v572 = vunpack.c.l.b16 %v324
      %v573 = vunpack.c.l.b16 %v325
      %v574 = vunpack.c.l.b16 %v326
      %v575 = vunpack.c.l.b16 %v327
      %v576 = vunpack.c.l.b16 %v328
      %v577 = vunpack.c.l.b16 %v329
      %v578 = vunpack.c.l.b16 %v330
      %v579 = vunpack.c.l.b16 %v331
      %v580 = vunpack.c.l.b16 %v332
      %v581 = vunpack.c.l.b16 %v333
      %v582 = vunpack.c.l.b16 %v334
      %v583 = vunpack.c.l.b16 %v335
      %v584 = vunpack.c.l.b16 %v336
      %v585 = vunpack.c.l.b16 %v337
      %v586 = vunpack.c.l.b16 %v338
      %v587 = vunpack.c.l.b16 %v339
      %v588 = vunpack.c.l.b16 %v340
      %v589 = vunpack.c.l.b16 %v341
      %v590 = vunpack.c.l.b16 %v342
      %v591 = vunpack.c.l.b16 %v343
      %v592 = vpack.c.b16 %v521, %v520
      %v593 = vpack.c.b16 %v523, %v522
      %v594 = vpack.c.b16 %v525, %v524
      %v595 = vpack.c.b16 %v527, %v526
      %v596 = vpack.c.b16 %v529, %v528
      %v597 = vpack.c.b16 %v531, %v530
      %v598 = vpack.c.b16 %v533, %v532
      %v599 = vpack.c.b16 %v535, %v534
      %v600 = vpack.c.b16 %v537, %v536
      %v601 = vpack.c.b16 %v539, %v538
      %v602 = vpack.c.b16 %v541, %v540
      %v603 = vpack.c.b16 %v543, %v542
      %v604 = vpack.c.b16 %v545, %v544
      %v605 = vpack.c.b16 %v547, %v546
      %v606 = vpack.c.b16 %v549, %v548
      %v607 = vpack.c.b16 %v551, %v550
      %v608 = vpack.c.b16 %v553, %v552
      %v609 = vpack.c.b16 %v555, %v554
      %v610 = vpack.c.b16 %v557, %v556
      %v611 = vpack.c.b16 %v559, %v558
      %v612 = vpack.c.b16 %v561, %v560
      %v613 = vpack.c.b16 %v563, %v562
      %v614 = vpack.c.b16 %v565, %v564
      %v615 = vpack.c.b16 %v567, %v566
      %v616 = vpack.c.b16 %v569, %v568
      %v617 = vpack.c.b16 %v571, %v570
      %v618 = vpack.c.b16 %v573, %v572
      %v619 = vpack.c.b16 %v575, %v574
      %v620 = vpack.c.b16 %v577, %v576
      %v621 = vpack.c.b16 %v579, %v578
      %v622 = vpack.c.b16 %v581, %v580
      %v623 = vpack.c.b16 %v583, %v582
      %v624 = vpack.c.b16 %v585, %v584
      %v625 = vpack.c.b16 %v587, %v586
      %v626 = vpack.c.b16 %v589, %v588
      %v627 = vpack.c.b16 %v591, %v590
      %vm664 = vcmask 523264
      %v666 = vsel %vm664, %v416, 0
      %v669 = vsel %vm664, %v421, 0
      %v672 = vsel %vm664, %v426, 0
      %v675 = vsel %vm664, %v431, 0
      %677 = vmatpush.bf16.msra.mxu0 %v599
      %678 = vmatpush.bf16.msra.mxu0 %v598
      %679 = vmatpush.bf16.msra.mxu0 %v597
      %680 = vmatpush.bf16.msra.mxu0 %v596
      %681 = vmatpush.bf16.msra.mxu0 %v595
      %682 = vmatpush.bf16.msra.mxu0 %v594
      %683 = vmatpush.bf16.msra.mxu0 %v593
      %684 = vmatpush.bf16.msra.mxu0 %v592
      %685 = vmatmul.bf16.gmra.mxu0 %v412
      %v686 = vpop.f32.mrf.mxu0
      %v687 = vadd.f32 %v346, %v686
      %v688 = vpop.f32.mrf.mxu0
      %v689 = vadd.f32 %v346, %v688
      %690 = vmatmul.bf16.gmra.mxu0 %v417
      %v691 = vpop.f32.mrf.mxu0
      %v692 = vadd.f32 %v346, %v691
      %v693 = vpop.f32.mrf.mxu0
      %v694 = vadd.f32 %v346, %v693
      %695 = vmatmul.bf16.gmra.mxu0 %v422
      %v696 = vpop.f32.mrf.mxu0
      %v697 = vadd.f32 %v346, %v696
      %v698 = vpop.f32.mrf.mxu0
      %v699 = vadd.f32 %v346, %v698
      %700 = vmatmul.bf16.gmra.mxu0 %v427
      %v701 = vpop.f32.mrf.mxu0
      %v702 = vadd.f32 %v346, %v701
      %v703 = vpop.f32.mrf.mxu0
      %v704 = vadd.f32 %v346, %v703
      %705 = vdwg.mxu0
      %706 = vmatpush.bf16.msra.mxu0 %v607
      %707 = vmatpush.bf16.msra.mxu0 %v606
      %708 = vmatpush.bf16.msra.mxu0 %v605
      %709 = vmatpush.bf16.msra.mxu0 %v604
      %710 = vmatpush.bf16.msra.mxu0 %v603
      %711 = vmatpush.bf16.msra.mxu0 %v602
      %712 = vmatpush.bf16.msra.mxu0 %v601
      %713 = vmatpush.bf16.msra.mxu0 %v600
      %714 = vmatmul.bf16.gmra.mxu0 %v413
      %v715 = vpop.f32.mrf.mxu0
      %v716 = vadd.f32 %v687, %v715
      %v717 = vpop.f32.mrf.mxu0
      %v718 = vadd.f32 %v689, %v717
      %719 = vmatmul.bf16.gmra.mxu0 %v418
      %v720 = vpop.f32.mrf.mxu0
      %v721 = vadd.f32 %v692, %v720
      %v722 = vpop.f32.mrf.mxu0
      %v723 = vadd.f32 %v694, %v722
      %724 = vmatmul.bf16.gmra.mxu0 %v423
      %v725 = vpop.f32.mrf.mxu0
      %v726 = vadd.f32 %v697, %v725
      %v727 = vpop.f32.mrf.mxu0
      %v728 = vadd.f32 %v699, %v727
      %729 = vmatmul.bf16.gmra.mxu0 %v428
      %v730 = vpop.f32.mrf.mxu0
      %v731 = vadd.f32 %v702, %v730
      %v732 = vpop.f32.mrf.mxu0
      %v733 = vadd.f32 %v704, %v732
      %734 = vdwg.mxu0
      %735 = vmatpush.bf16.msra.mxu0 %v615
      %736 = vmatpush.bf16.msra.mxu0 %v614
      %737 = vmatpush.bf16.msra.mxu0 %v613
      %738 = vmatpush.bf16.msra.mxu0 %v612
      %739 = vmatpush.bf16.msra.mxu0 %v611
      %740 = vmatpush.bf16.msra.mxu0 %v610
      %741 = vmatpush.bf16.msra.mxu0 %v609
      %742 = vmatpush.bf16.msra.mxu0 %v608
      %743 = vmatmul.bf16.gmra.mxu0 %v414
      %v744 = vpop.f32.mrf.mxu0
      %v745 = vadd.f32 %v716, %v744
      %v746 = vpop.f32.mrf.mxu0
      %v747 = vadd.f32 %v718, %v746
      %748 = vmatmul.bf16.gmra.mxu0 %v419
      %v749 = vpop.f32.mrf.mxu0
      %v750 = vadd.f32 %v721, %v749
      %v751 = vpop.f32.mrf.mxu0
      %v752 = vadd.f32 %v723, %v751
      %753 = vmatmul.bf16.gmra.mxu0 %v424
      %v754 = vpop.f32.mrf.mxu0
      %v755 = vadd.f32 %v726, %v754
      %v756 = vpop.f32.mrf.mxu0
      %v757 = vadd.f32 %v728, %v756
      %758 = vmatmul.bf16.gmra.mxu0 %v429
      %v759 = vpop.f32.mrf.mxu0
      %v760 = vadd.f32 %v731, %v759
      %v761 = vpop.f32.mrf.mxu0
      %v762 = vadd.f32 %v733, %v761
      %763 = vdwg.mxu0
      %764 = vmatpush.bf16.msra.mxu0 %v623
      %765 = vmatpush.bf16.msra.mxu0 %v622
      %766 = vmatpush.bf16.msra.mxu0 %v621
      %767 = vmatpush.bf16.msra.mxu0 %v620
      %768 = vmatpush.bf16.msra.mxu0 %v619
      %769 = vmatpush.bf16.msra.mxu0 %v618
      %770 = vmatpush.bf16.msra.mxu0 %v617
      %771 = vmatpush.bf16.msra.mxu0 %v616
      %772 = vmatmul.bf16.gmra.mxu0 %v415
      %v773 = vpop.f32.mrf.mxu0
      %v774 = vadd.f32 %v745, %v773
      %v775 = vpop.f32.mrf.mxu0
      %v776 = vadd.f32 %v747, %v775
      %777 = vmatmul.bf16.gmra.mxu0 %v420
      %v778 = vpop.f32.mrf.mxu0
      %v779 = vadd.f32 %v750, %v778
      %v780 = vpop.f32.mrf.mxu0
      %v781 = vadd.f32 %v752, %v780
      %782 = vmatmul.bf16.gmra.mxu0 %v425
      %v783 = vpop.f32.mrf.mxu0
      %v784 = vadd.f32 %v755, %v783
      %v785 = vpop.f32.mrf.mxu0
      %v786 = vadd.f32 %v757, %v785
      %787 = vmatmul.bf16.gmra.mxu0 %v430
      %v788 = vpop.f32.mrf.mxu0
      %v789 = vadd.f32 %v760, %v788
      %v790 = vpop.f32.mrf.mxu0
      %v791 = vadd.f32 %v762, %v790
      %792 = vdwg.mxu0
      %793 = vmatpush.bf16.msra.mxu0 0
      %794 = vmatpush.bf16.msra.mxu0 0
      %795 = vmatpush.bf16.msra.mxu0 0
      %796 = vmatpush.bf16.msra.mxu0 0
      %797 = vmatpush.bf16.msra.mxu0 %v627
      %798 = vmatpush.bf16.msra.mxu0 %v626
      %799 = vmatpush.bf16.msra.mxu0 %v625
      %800 = vmatpush.bf16.msra.mxu0 %v624
      %801 = vmatmul.bf16.gmra.mxu0 %v666
      %v802 = vpop.f32.mrf.mxu0
      %v803 = vadd.f32 %v774, %v802
      %v804 = vpop.f32.mrf.mxu0
      %v805 = vadd.f32 %v776, %v804
      %806 = vmatmul.bf16.gmra.mxu0 %v669
      %v807 = vpop.f32.mrf.mxu0
      %v808 = vadd.f32 %v779, %v807
      %v809 = vpop.f32.mrf.mxu0
      %v810 = vadd.f32 %v781, %v809
      %811 = vmatmul.bf16.gmra.mxu0 %v672
      %v812 = vpop.f32.mrf.mxu0
      %v813 = vadd.f32 %v784, %v812
      %v814 = vpop.f32.mrf.mxu0
      %v815 = vadd.f32 %v786, %v814
      %816 = vmatmul.bf16.gmra.mxu0 %v675
      %v817 = vpop.f32.mrf.mxu0
      %v818 = vadd.f32 %v789, %v817
      %v819 = vpop.f32.mrf.mxu0
      %v820 = vadd.f32 %v791, %v819
      %821 = vdwg.mxu0
      %v822 = vmax.f32 %v803, 0.0
      %v823 = vmax.f32 %v805, 0.0
      %v824 = vmax.f32 %v808, 0.0
      %v825 = vmax.f32 %v810, 0.0
      %v826 = vmax.f32 %v813, 0.0
      %v827 = vmax.f32 %v815, 0.0
      %v828 = vmax.f32 %v818, 0.0
      %v829 = vmax.f32 %v820, 0.0
      %v830 = vpack.c.bf16 %v822, %v822
      %v831 = vpack.c.bf16 %v823, %v823
      %v832 = vpack.c.bf16 %v824, %v824
      %v833 = vpack.c.bf16 %v825, %v825
      %v834 = vpack.c.bf16 %v826, %v826
      %v835 = vpack.c.bf16 %v827, %v827
      %v836 = vpack.c.bf16 %v828, %v828
      %v837 = vpack.c.bf16 %v829, %v829
      %vm838 = vcmask 519168
      %839 = vst.msk [vmem:[%s245] sm:$0xf] %vm838, %v830
      %840 = vst.msk [vmem:[%s245 + $0x4] sm:$0xf] %vm838, %v831
      %841 = vst.msk [vmem:[%s245 + $0x8] sm:$0xf] %vm838, %v832
      %842 = vst.msk [vmem:[%s245 + $0xc] sm:$0xf] %vm838, %v833
      %843 = vst.msk [vmem:[%s245 + $0x10] sm:$0xf] %vm838, %v834
      %844 = vst.msk [vmem:[%s245 + $0x14] sm:$0xf] %vm838, %v835
      %845 = vst.msk [vmem:[%s245 + $0x18] sm:$0xf] %vm838, %v836
      %846 = vst.msk [vmem:[%s245 + $0x1c] sm:$0xf] %vm838, %v837
      %s847 = smul.u32 8, %s19
      %p848 = scmp.lt.s32.totalorder %s18, 1
      %s849 = scalar_select %p848, %s18, 1
      %p850 = scmp.lt.s32.totalorder %s847, 7
      %s851 = scalar_select %p850, %s847, 7
      %s852 = smul.addr %s849, 8
      %s853 = sadd.s32 %s851, %s852
      %s854 = smul.addr %s853, 4
      %s855 = scalar_lea.vmem %s3, %s854
      // Predicated region
      $region33: #{_lambda_.10} parent=31 // pred_check
        %p856 = pneg %p126
      $region34: #{_lambda_.10} parent=31 // pred_check_branch
        %858 = sbr.rel (%p856) target = $region36
      $region35: #{_lambda_.10} parent=31 // pred_region
        %s859 = smul.u32 8, %s19
      $region36: #{_lambda_.10} parent=31 // pred_fallthru
        _
    $region32: #{_lambda_.10} parent=5 // pred_fallthru
      _
    %p860 = scmp.le.s32.totalorder 2, %s9
    // Predicated region
    $region37: #{_lambda_.10} parent=5 // pred_check
      %p861 = pneg %p860
    $region38: #{_lambda_.10} parent=5 // pred_check_branch
      %863 = sbr.rel (%p861) target = $region40
    $region39: #{_lambda_.10} parent=5 // pred_region
      %s864 = ssub.s32 %s9, 2
      // Predicated region
      $region41: #{_lambda_.10} parent=39 // pred_check
        %p865 = pneg %p132
      $region42: #{_lambda_.10} parent=39 // pred_check_branch
        %867 = sbr.rel (%p865) target = $region44
      $region43: #{_lambda_.10} parent=39 // pred_region
        %s868 = smul.u32 8, %s21
        %p869 = scmp.lt.s32.totalorder %s20, 1
        %s870 = scalar_select %p869, %s20, 1
        %p871 = scmp.lt.s32.totalorder %s868, 7
        %s872 = scalar_select %p871, %s868, 7
        %s873 = smul.addr %s870, 8
        %s874 = sadd.s32 %s872, %s873
        %s875 = smul.addr %s874, 4
        %s876 = scalar_lea.vmem %s3, %s875
      $region44: #{_lambda_.10} parent=39 // pred_fallthru
        _
    $region40: #{_lambda_.10} parent=5 // pred_fallthru
      _
  $region6: #{_lambda_.10} parent=0 // loop_footer
    %s13 = sadd.s32 1, %s9
  $region7: #{_lambda_.10} parent=0 // loop_footer_branch
    %8 = sbr.rel target = $region3
  $region8: #{_lambda_.10} parent=0 // loop_exit
    _

// kernel: _lambda_.12
$region0: #{_lambda_.12}
  #allocation0 [shape = 'u32[]', space=smem, size = 0x4, offset = 0x4, fixed_abs, tag = 'smem constant byte address 0x4 - core index']
  #allocation1 [shape = 'u32[72,128]{1,0:T(1,128)}', space=vmem, size = 0x9000, scoped, tag = 'internal scratch']
  %s0 = inlined_call_operand.vmem [shape: f32[4,16], index: 0, kind: input, shape index: {}]
  %s1 = inlined_call_operand.vmem [shape: f32[16,64], index: 1, kind: input, shape index: {}]
  %s2 = inlined_call_operand.vmem [shape: f32[1,64], index: 2, kind: input, shape index: {}, may-alias: {2,4}]
  %s3 = inlined_call_operand.vmem [shape: f32[64,64], index: 3, kind: input, shape index: {}]
  %s4 = inlined_call_operand.vmem [shape: f32[1,64], index: 4, kind: input, shape index: {}, may-alias: {2,4}]
  %s5 = inlined_call_operand.vmem [shape: f32[4,64], index: 5, kind: output, shape index: {}]
  %s6 = sld [smem:[#allocation0]]
  $region30: #{_lambda_.12} parent=0
    _
  %s8 = ssub.s32 1, %s6
  %s9 = scalar_select 0, %s8, %s6
  // Predicated region
  $region2: #{_lambda_.12} parent=0 // pred_check
    _
  $region3: #{_lambda_.12} parent=0 // pred_check_branch
    %11 = sbr.rel (0) target = $region5
  $region4: #{_lambda_.12} parent=0 // pred_region
    _
  $region5: #{_lambda_.12} parent=0 // pred_fallthru
    _
  // Predicated region
  $region6: #{_lambda_.12} parent=0 // pred_check
    _
  $region7: #{_lambda_.12} parent=0 // pred_check_branch
    %13 = sbr.rel (0) target = $region9
  $region8: #{_lambda_.12} parent=0 // pred_region
    _
  $region9: #{_lambda_.12} parent=0 // pred_fallthru
    _
  // Predicated region
  $region10: #{_lambda_.12} parent=0 // pred_check
    _
  $region11: #{_lambda_.12} parent=0 // pred_check_branch
    %15 = sbr.rel (0) target = $region13
  $region12: #{_lambda_.12} parent=0 // pred_region
    _
  $region13: #{_lambda_.12} parent=0 // pred_fallthru
    _
  // Predicated region
  $region14: #{_lambda_.12} parent=0 // pred_check
    _
  $region15: #{_lambda_.12} parent=0 // pred_check_branch
    %17 = sbr.rel (0) target = $region17
  $region16: #{_lambda_.12} parent=0 // pred_region
    _
  $region17: #{_lambda_.12} parent=0 // pred_fallthru
    _
  // Predicated region
  $region18: #{_lambda_.12} parent=0 // pred_check
    _
  $region19: #{_lambda_.12} parent=0 // pred_check_branch
    %19 = sbr.rel (0) target = $region21
  $region20: #{_lambda_.12} parent=0 // pred_region
    _
  $region21: #{_lambda_.12} parent=0 // pred_fallthru
    _
  %v20 = vld [vmem:[%s0] sm:$0xf]
  %v21 = vld [vmem:[%s1] sm:$0xff]
  %v22 = vld [vmem:[%s1 + $0x8] sm:$0xff]
  %v23 = vld [vmem:[%s2] sm:$0x1]
  %v25 = vperm.slane %v23, 0
  %vm27 = vcmask 130048
  %v29 = vsel %vm27, %v20, 0
  %31 = vmatpush.msra.mxu0 0.0
  %32 = vmatpush.msra.mxu0 0.0
  %33 = vmatpush.msra.mxu0 0.0
  %34 = vmatpush.msra.mxu0 0.0
  %35 = vmatpush.msra.mxu0 0.0
  %36 = vmatpush.msra.mxu0 0.0
  %37 = vmatpush.msra.mxu0 0.0
  %38 = vmatpush.msra.mxu0 0.0
  %39 = vmatpush.msra.mxu0 0.0
  %40 = vmatpush.msra.mxu0 0.0
  %41 = vmatpush.msra.mxu0 0.0
  %42 = vmatpush.msra.mxu0 0.0
  %43 = vmatpush.msra.mxu0 0.0
  %44 = vmatpush.msra.mxu0 0.0
  %45 = vmatpush.msra.mxu0 %v22
  %46 = vmatpush.msra.mxu0 %v21
  %47 = vmatmul.f32.gmra.mxu0 %v29
  %v48 = vpop.f32.mrf.mxu0
  %v49 = vadd.f32 %v25, %v48
  %50 = vdwg.mxu0
  %v51 = vmax.f32 %v49, 0.0
  %v52 = vld [vmem:[%s3] sm:$0xff]
  %v53 = vld [vmem:[%s3 + $0x8] sm:$0xff]
  %v54 = vld [vmem:[%s3 + $0x10] sm:$0xff]
  %v55 = vld [vmem:[%s3 + $0x18] sm:$0xff]
  %v56 = vld [vmem:[%s3 + $0x20] sm:$0xff]
  %v57 = vld [vmem:[%s3 + $0x28] sm:$0xff]
  %v58 = vld [vmem:[%s3 + $0x30] sm:$0xff]
  %v59 = vld [vmem:[%s3 + $0x38] sm:$0xff]
  %v60 = vld [vmem:[%s4] sm:$0x1]
  %v62 = vperm.slane %v60, 0
  %vm64 = vcmask 523264
  %v66 = vsel %vm64, %v51, 0
  %68 = vmatpush.msra.mxu0 0.0
  %69 = vmatpush.msra.mxu0 0.0
  %70 = vmatpush.msra.mxu0 0.0
  %71 = vmatpush.msra.mxu0 0.0
  %72 = vmatpush.msra.mxu0 0.0
  %73 = vmatpush.msra.mxu0 0.0
  %74 = vmatpush.msra.mxu0 0.0
  %75 = vmatpush.msra.mxu0 0.0
  %76 = vmatpush.msra.mxu0 %v59
  %77 = vmatpush.msra.mxu0 %v58
  %78 = vmatpush.msra.mxu0 %v57
  %79 = vmatpush.msra.mxu0 %v56
  %80 = vmatpush.msra.mxu0 %v55
  %81 = vmatpush.msra.mxu0 %v54
  %82 = vmatpush.msra.mxu0 %v53
  %83 = vmatpush.msra.mxu0 %v52
  %84 = vmatmul.f32.gmra.mxu0 %v66
  %v85 = vpop.f32.mrf.mxu0
  %v86 = vadd.f32 %v62, %v85
  %87 = vdwg.mxu0
  %v88 = vmax.f32 %v86, 0.0
  %vm89 = vcmask 519168
  %90 = vst.msk [vmem:[%s5] sm:$0xf] %vm89, %v88
  // Predicated region
  $region22: #{_lambda_.12} parent=0 // pred_check
    _
  $region23: #{_lambda_.12} parent=0 // pred_check_branch
    %92 = sbr.rel (0) target = $region25
  $region24: #{_lambda_.12} parent=0 // pred_region
    _
  $region25: #{_lambda_.12} parent=0 // pred_fallthru
    _
  // Predicated region
  $region26: #{_lambda_.12} parent=0 // pred_check
    _
  $region27: #{_lambda_.12} parent=0 // pred_check_branch
    %94 = sbr.rel (0) target = $region29
  $region28: #{_lambda_.12} parent=0 // pred_region
    _
  $region29: #{_lambda_.12} parent=0 // pred_fallthru
    _

// kernel: _lambda_.11
$region0: #{_lambda_.11}
  #allocation0 [shape = 'u32[]', space=smem, size = 0x4, offset = 0x4, fixed_abs, tag = 'smem constant byte address 0x4 - core index']
  #allocation1 [shape = 'u32[72,128]{1,0:T(1,128)}', space=vmem, size = 0x9000, scoped, tag = 'internal scratch']
  %s0 = inlined_call_operand.vmem [shape: bf16[2,8,1024], index: 0, kind: input, shape index: {}]
  %s1 = inlined_call_operand.vmem [shape: bf16[2,1024,64], index: 1, kind: input, shape index: {}]
  %s2 = inlined_call_operand.vmem [shape: f32[2,1,64], index: 2, kind: input, shape index: {}]
  %s3 = inlined_call_operand.vmem [shape: f32[2,8,64], index: 3, kind: output, shape index: {}]
  %s4 = sld [smem:[#allocation0]]
  $region45: #{_lambda_.11} parent=0
    _
  %s6 = ssub.s32 1, %s4
  %s7 = scalar_select 0, %s6, %s4
  loop: start=0, step=1, limit=4
  $region2: #{_lambda_.11} parent=0 // loop_pre_header
    _
  $region3: #{_lambda_.11} parent=0 // loop_header
    %s9 = sphi 0, %s13
    %p10 = scmp.ge.s32.totalorder %s9, 4
    %s16 = sphi 0, %s28
    %s17 = sphi 0, %s24
    %s18 = sphi 0, %s16
    %s19 = sphi 0, %s17
    %s20 = sphi 0, %s18
    %s21 = sphi 0, %s19
    %s33 = sphi 0, %s35
    %s36 = sphi 0, %s33
    %s37 = sphi 0, %s36
    %s53 = sphi 0, %s37
    %s59 = sphi 0, %s61
    %s62 = sphi 0, %s59
    %s63 = sphi 0, %s62
    %s79 = sphi 0, %s63
    %s85 = sphi 0, %s87
    %s88 = sphi 0, %s85
    %s89 = sphi 0, %s88
    %s105 = sphi 0, %s89
    %s113 = sphi 0, %s115
    %s116 = sphi 0, %s113
    %s117 = sphi 0, %s116
    %s133 = sphi 0, %s117
  $region4: #{_lambda_.11} parent=0 // loop_header_branch
    %12 = sbr.rel (%p10) target = $region8
  $region5: #{_lambda_.11} parent=0 // loop_body
    %s14 = ssub.s32 %s9, 1
    %s15 = ssub.s32 %s9, 2
    %s22 = sadd.s32 1, %s17
    %p23 = scmp.ge.s32.totalorder %s22, 1
    %s24 = scalar_select %p23, 0, %s22
    %s25 = sadd.s32 1, %s16
    %s26 = scalar_select %p23, %s25, %s16
    %p27 = scmp.ge.s32.totalorder %s26, 2
    %s28 = scalar_select %p27, 0, %s26
    %s29 = ssub.s32 %s16, %s28
    %s30 = ssub.s32 %s17, %s24
    %s31 = sor.u32 %s29, %s30
    %p32 = scmp.eq.s32.totalorder %s31, 0
    %s34 = sadd.s32 %s33, 1
    %s35 = scalar_select %p32, %s33, %s34
    %p38 = pneg %p32
    %p39 = scmp.eq.s32.totalorder %s9, 1
    %p40 = por %p38, %p39
    %p41 = scmp.ne.s32.totalorder %s33, %s36
    %p42 = scmp.eq.s32.totalorder %s9, 0
    %p43 = por %p41, %p42
    %p44 = scmp.ne.s32.totalorder %s33, %s36
    %p45 = scmp.eq.s32.totalorder %s14, 1
    %p46 = por %p44, %p45
    %p47 = scmp.ne.s32.totalorder %s36, %s37
    %p48 = scmp.eq.s32.totalorder %s14, 0
    %p49 = por %p47, %p48
    %p50 = scmp.ne.s32.totalorder %s36, %s37
    %p51 = scmp.eq.s32.totalorder %s15, 1
    %p52 = por %p50, %p51
    %p54 = scmp.ne.s32.totalorder %s37, %s53
    %p55 = scmp.eq.s32.totalorder %s15, 0
    %p56 = por %p54, %p55
    %s57 = ssub.s32 %s16, %s28
    %p58 = scmp.eq.s32.totalorder %s57, 0
    %s60 = sadd.s32 %s59, 1
    %s61 = scalar_select %p58, %s59, %s60
    %p64 = pneg %p58
    %p65 = scmp.eq.s32.totalorder %s9, 1
    %p66 = por %p64, %p65
    %p67 = scmp.ne.s32.totalorder %s59, %s62
    %p68 = scmp.eq.s32.totalorder %s9, 0
    %p69 = por %p67, %p68
    %p70 = scmp.ne.s32.totalorder %s59, %s62
    %p71 = scmp.eq.s32.totalorder %s14, 1
    %p72 = por %p70, %p71
    %p73 = scmp.ne.s32.totalorder %s62, %s63
    %p74 = scmp.eq.s32.totalorder %s14, 0
    %p75 = por %p73, %p74
    %p76 = scmp.ne.s32.totalorder %s62, %s63
    %p77 = scmp.eq.s32.totalorder %s15, 1
    %p78 = por %p76, %p77
    %p80 = scmp.ne.s32.totalorder %s63, %s79
    %p81 = scmp.eq.s32.totalorder %s15, 0
    %p82 = por %p80, %p81
    %s83 = ssub.s32 %s16, %s28
    %p84 = scmp.eq.s32.totalorder %s83, 0
    %s86 = sadd.s32 %s85, 1
    %s87 = scalar_select %p84, %s85, %s86
    %p90 = pneg %p84
    %p91 = scmp.eq.s32.totalorder %s9, 1
    %p92 = por %p90, %p91
    %p93 = scmp.ne.s32.totalorder %s85, %s88
    %p94 = scmp.eq.s32.totalorder %s9, 0
    %p95 = por %p93, %p94
    %p96 = scmp.ne.s32.totalorder %s85, %s88
    %p97 = scmp.eq.s32.totalorder %s14, 1
    %p98 = por %p96, %p97
    %p99 = scmp.ne.s32.totalorder %s88, %s89
    %p100 = scmp.eq.s32.totalorder %s14, 0
    %p101 = por %p99, %p100
    %p102 = scmp.ne.s32.totalorder %s88, %s89
    %p103 = scmp.eq.s32.totalorder %s15, 1
    %p104 = por %p102, %p103
    %p106 = scmp.ne.s32.totalorder %s89, %s105
    %p107 = scmp.eq.s32.totalorder %s15, 0
    %p108 = por %p106, %p107
    %s109 = ssub.s32 %s16, %s28
    %s110 = ssub.s32 %s17, %s24
    %s111 = sor.u32 %s109, %s110
    %p112 = scmp.eq.s32.totalorder %s111, 0
    %s114 = sadd.s32 %s113, 1
    %s115 = scalar_select %p112, %s113, %s114
    %p118 = pneg %p112
    %p119 = scmp.eq.s32.totalorder %s9, 1
    %p120 = por %p118, %p119
    %p121 = scmp.ne.s32.totalorder %s113, %s116
    %p122 = scmp.eq.s32.totalorder %s9, 0
    %p123 = por %p121, %p122
    %p124 = scmp.ne.s32.totalorder %s113, %s116
    %p125 = scmp.eq.s32.totalorder %s14, 1
    %p126 = por %p124, %p125
    %p127 = scmp.ne.s32.totalorder %s116, %s117
    %p128 = scmp.eq.s32.totalorder %s14, 0
    %p129 = por %p127, %p128
    %p130 = scmp.ne.s32.totalorder %s116, %s117
    %p131 = scmp.eq.s32.totalorder %s15, 1
    %p132 = por %p130, %p131
    %p134 = scmp.ne.s32.totalorder %s117, %s133
    %p135 = scmp.eq.s32.totalorder %s15, 0
    %p136 = por %p134, %p135
    %p137 = scmp.le.s32.totalorder 1, %s9
    %p138 = scmp.lt.s32.totalorder %s9, 3
    %p139 = pnand %p137, %p138
    %p140 = pneg %p139
    // Predicated region
    $region9: #{_lambda_.11} parent=5 // pred_check
      _
    $region10: #{_lambda_.11} parent=5 // pred_check_branch
      %142 = sbr.rel (%p139) target = $region12
    $region11: #{_lambda_.11} parent=5 // pred_region
      %s143 = ssub.s32 %s9, 1
    $region12: #{_lambda_.11} parent=5 // pred_fallthru
      _
    %p144 = scmp.lt.s32.totalorder %s9, 2
    // Predicated region
    $region13: #{_lambda_.11} parent=5 // pred_check
      %p145 = pneg %p144
    $region14: #{_lambda_.11} parent=5 // pred_check_branch
      %147 = sbr.rel (%p145) target = $region16
    $region15: #{_lambda_.11} parent=5 // pred_region
      // Predicated region
      $region17: #{_lambda_.11} parent=15 // pred_check
        %p148 = pneg %p43
      $region18: #{_lambda_.11} parent=15 // pred_check_branch
        %150 = sbr.rel (%p148) target = $region20
      $region19: #{_lambda_.11} parent=15 // pred_region
        %p151 = scmp.lt.s32.totalorder %s16, 1
        %s152 = scalar_select %p151, %s16, 1
        %p153 = scmp.lt.s32.totalorder %s17, 0
        %s154 = scalar_select %p153, %s17, 0
        %s155 = smul.addr %s154, 8
        %s156 = smul.addr %s152, 8
        %s157 = sadd.s32 %s155, %s156
        %s158 = smul.addr %s157, 4
        %s159 = scalar_lea.vmem %s0, %s158
      $region20: #{_lambda_.11} parent=15 // pred_fallthru
        _
      // Predicated region
      $region21: #{_lambda_.11} parent=15 // pred_check
        %p160 = pneg %p69
      $region22: #{_lambda_.11} parent=15 // pred_check_branch
        %162 = sbr.rel (%p160) target = $region24
      $region23: #{_lambda_.11} parent=15 // pred_region
        %p163 = scmp.lt.s32.totalorder %s16, 1
        %s164 = scalar_select %p163, %s16, 1
        %s165 = smul.addr %s164, 128
        %s166 = smul.addr %s165, 4
        %s167 = scalar_lea.vmem %s1, %s166
      $region24: #{_lambda_.11} parent=15 // pred_fallthru
        _
      // Predicated region
      $region25: #{_lambda_.11} parent=15 // pred_check
        %p168 = pneg %p95
      $region26: #{_lambda_.11} parent=15 // pred_check_branch
        %170 = sbr.rel (%p168) target = $region28
      $region27: #{_lambda_.11} parent=15 // pred_region
        %p171 = scmp.lt.s32.totalorder %s16, 1
        %s172 = scalar_select %p171, %s16, 1
        %s173 = scalar_lea.vmem %s2, %s172
      $region28: #{_lambda_.11} parent=15 // pred_fallthru
        _
    $region16: #{_lambda_.11} parent=5 // pred_fallthru
      _
    %p174 = scmp.le.s32.totalorder 1, %s9
    %p175 = scmp.lt.s32.totalorder %s9, 3
    %p176 = pnand %p174, %p175
    %p177 = pneg %p176
    // Predicated region
    $region29: #{_lambda_.11} parent=5 // pred_check
      _
    $region30: #{_lambda_.11} parent=5 // pred_check_branch
      %179 = sbr.rel (%p176) target = $region32
    $region31: #{_lambda_.11} parent=5 // pred_region
      %s180 = ssub.s32 %s9, 1
      %p181 = scmp.lt.s32.totalorder %s18, 1
      %s182 = scalar_select %p181, %s18, 1
      %p183 = scmp.lt.s32.totalorder %s19, 0
      %s184 = scalar_select %p183, %s19, 0
      %s185 = smul.addr %s184, 8
      %s186 = smul.addr %s182, 8
      %s187 = sadd.s32 %s185, %s186
      %s188 = smul.addr %s187, 4
      %s189 = scalar_lea.vmem %s0, %s188
      %p190 = pneg %p49
      %p191 = pneg %p46
      %p192 = scmp.lt.s32.totalorder %s18, 1
      %s193 = scalar_select %p192, %s18, 1
      %s194 = smul.addr %s193, 128
      %s195 = smul.addr %s194, 4
      %s196 = scalar_lea.vmem %s1, %s195
      %p197 = pneg %p75
      %p198 = pneg %p72
      %p199 = scmp.lt.s32.totalorder %s18, 1
      %s200 = scalar_select %p199, %s18, 1
      %s201 = scalar_lea.vmem %s2, %s200
      %p202 = pneg %p101
      %p203 = pneg %p98
      %p204 = pneg %p129
      %p205 = pneg %p126
      %p206 = scmp.lt.s32.totalorder %s18, 1
      %s207 = scalar_select %p206, %s18, 1
      %p208 = scmp.lt.s32.totalorder %s19, 0
      %s209 = scalar_select %p208, %s19, 0
      %s210 = sadd.s32 %s209, %s207
      %s211 = smul.addr %s210, 8
      %s212 = scalar_lea.vmem %s3, %s211
      %p213 = scmp.lt.s32.totalorder %s18, 1
      %s214 = scalar_select %p213, %s18, 1
      %p215 = scmp.lt.s32.totalorder %s19, 0
      %s216 = scalar_select %p215, %s19, 0
      %s217 = smul.addr %s216, 8
      %s218 = smul.addr %s214, 8
      %s219 = sadd.s32 %s217, %s218
      %s220 = smul.addr %s219, 4
      %s221 = scalar_lea.vmem %s0, %s220
      %p222 = scmp.lt.s32.totalorder %s18, 1
      %s223 = scalar_select %p222, %s18, 1
      %s224 = smul.addr %s223, 128
      %s225 = smul.addr %s224, 4
      %s226 = scalar_lea.vmem %s1, %s225
      %p227 = scmp.lt.s32.totalorder %s18, 1
      %s228 = scalar_select %p227, %s18, 1
      %s229 = scalar_lea.vmem %s2, %s228
      %p230 = scmp.lt.s32.totalorder %s18, 1
      %s231 = scalar_select %p230, %s18, 1
      %p232 = scmp.lt.s32.totalorder %s19, 0
      %s233 = scalar_select %p232, %s19, 0
      %s234 = sadd.s32 %s233, %s231
      %s235 = smul.addr %s234, 8
      %s236 = scalar_lea.vmem %s3, %s235
      %v237 = vld [vmem:[%s221] sm:$0xff]
      %v238 = vld [vmem:[%s221 + $0x8] sm:$0xff]
      %v239 = vld [vmem:[%s221 + $0x10] sm:$0xff]
      %v240 = vld [vmem:[%s221 + $0x18] sm:$0xff]
      %v241 = vld [vmem:[%s226] sm:$0xf]
      %v242 = vld [vmem:[%s226 + $0x4] sm:$0xf]
      %v243 = vld [vmem:[%s226 + $0x8] sm:$0xf]
      %v244 = vld [vmem:[%s226 + $0xc] sm:$0xf]
      %v245 = vld [vmem:[%s226 + $0x10] sm:$0xf]
      %v246 = vld [vmem:[%s226 + $0x14] sm:$0xf]
      %v247 = vld [vmem:[%s226 + $0x18] sm:$0xf]
      %v248 = vld [vmem:[%s226 + $0x1c] sm:$0xf]
      %v249 = vld [vmem:[%s226 + $0x20] sm:$0xf]
      %v250 = vld [vmem:[%s226 + $0x24] sm:$0xf]
      %v251 = vld [vmem:[%s226 + $0x28] sm:$0xf]
      %v252 = vld [vmem:[%s226 + $0x2c] sm:$0xf]
      %v253 = vld [vmem:[%s226 + $0x30] sm:$0xf]
      %v254 = vld [vmem:[%s226 + $0x34] sm:$0xf]
      %v255 = vld [vmem:[%s226 + $0x38] sm:$0xf]
      %v256 = vld [vmem:[%s226 + $0x3c] sm:$0xf]
      %v257 = vld [vmem:[%s226 + $0x40] sm:$0xf]
      %v258 = vld [vmem:[%s226 + $0x44] sm:$0xf]
      %v259 = vld [vmem:[%s226 + $0x48] sm:$0xf]
      %v260 = vld [vmem:[%s226 + $0x4c] sm:$0xf]
      %v261 = vld [vmem:[%s226 + $0x50] sm:$0xf]
      %v262 = vld [vmem:[%s226 + $0x54] sm:$0xf]
      %v263 = vld [vmem:[%s226 + $0x58] sm:$0xf]
      %v264 = vld [vmem:[%s226 + $0x5c] sm:$0xf]
      %v265 = vld [vmem:[%s226 + $0x60] sm:$0xf]
      %v266 = vld [vmem:[%s226 + $0x64] sm:$0xf]
      %v267 = vld [vmem:[%s226 + $0x68] sm:$0xf]
      %v268 = vld [vmem:[%s226 + $0x6c] sm:$0xf]
      %v269 = vld [vmem:[%s226 + $0x70] sm:$0xf]
      %v270 = vld [vmem:[%s226 + $0x74] sm:$0xf]
      %v271 = vld [vmem:[%s226 + $0x78] sm:$0xf]
      %v272 = vld [vmem:[%s226 + $0x7c] sm:$0xf]
      %v273 = vld [vmem:[%s226 + $0x80] sm:$0xf]
      %v274 = vld [vmem:[%s226 + $0x84] sm:$0xf]
      %v275 = vld [vmem:[%s226 + $0x88] sm:$0xf]
      %v276 = vld [vmem:[%s226 + $0x8c] sm:$0xf]
      %v277 = vld [vmem:[%s226 + $0x90] sm:$0xf]
      %v278 = vld [vmem:[%s226 + $0x94] sm:$0xf]
      %v279 = vld [vmem:[%s226 + $0x98] sm:$0xf]
      %v280 = vld [vmem:[%s226 + $0x9c] sm:$0xf]
      %v281 = vld [vmem:[%s226 + $0xa0] sm:$0xf]
      %v282 = vld [vmem:[%s226 + $0xa4] sm:$0xf]
      %v283 = vld [vmem:[%s226 + $0xa8] sm:$0xf]
      %v284 = vld [vmem:[%s226 + $0xac] sm:$0xf]
      %v285 = vld [vmem:[%s226 + $0xb0] sm:$0xf]
      %v286 = vld [vmem:[%s226 + $0xb4] sm:$0xf]
      %v287 = vld [vmem:[%s226 + $0xb8] sm:$0xf]
      %v288 = vld [vmem:[%s226 + $0xbc] sm:$0xf]
      %v289 = vld [vmem:[%s226 + $0xc0] sm:$0xf]
      %v290 = vld [vmem:[%s226 + $0xc4] sm:$0xf]
      %v291 = vld [vmem:[%s226 + $0xc8] sm:$0xf]
      %v292 = vld [vmem:[%s226 + $0xcc] sm:$0xf]
      %v293 = vld [vmem:[%s226 + $0xd0] sm:$0xf]
      %v294 = vld [vmem:[%s226 + $0xd4] sm:$0xf]
      %v295 = vld [vmem:[%s226 + $0xd8] sm:$0xf]
      %v296 = vld [vmem:[%s226 + $0xdc] sm:$0xf]
      %v297 = vld [vmem:[%s226 + $0xe0] sm:$0xf]
      %v298 = vld [vmem:[%s226 + $0xe4] sm:$0xf]
      %v299 = vld [vmem:[%s226 + $0xe8] sm:$0xf]
      %v300 = vld [vmem:[%s226 + $0xec] sm:$0xf]
      %v301 = vld [vmem:[%s226 + $0xf0] sm:$0xf]
      %v302 = vld [vmem:[%s226 + $0xf4] sm:$0xf]
      %v303 = vld [vmem:[%s226 + $0xf8] sm:$0xf]
      %v304 = vld [vmem:[%s226 + $0xfc] sm:$0xf]
      %v305 = vld [vmem:[%s226 + $0x100] sm:$0xf]
      %v306 = vld [vmem:[%s226 + $0x104] sm:$0xf]
      %v307 = vld [vmem:[%s226 + $0x108] sm:$0xf]
      %v308 = vld [vmem:[%s226 + $0x10c] sm:$0xf]
      %v309 = vld [vmem:[%s226 + $0x110] sm:$0xf]
      %v310 = vld [vmem:[%s226 + $0x114] sm:$0xf]
      %v311 = vld [vmem:[%s226 + $0x118] sm:$0xf]
      %v312 = vld [vmem:[%s226 + $0x11c] sm:$0xf]
      %v313 = vld [vmem:[%s226 + $0x120] sm:$0xf]
      %v314 = vld [vmem:[%s226 + $0x124] sm:$0xf]
      %v315 = vld [vmem:[%s226 + $0x128] sm:$0xf]
      %v316 = vld [vmem:[%s226 + $0x12c] sm:$0xf]
      %v317 = vld [vmem:[%s226 + $0x130] sm:$0xf]
      %v318 = vld [vmem:[%s226 + $0x134] sm:$0xf]
      %v319 = vld [vmem:[%s226 + $0x138] sm:$0xf]
      %v320 = vld [vmem:[%s226 + $0x13c] sm:$0xf]
      %v321 = vld [vmem:[%s226 + $0x140] sm:$0xf]
      %v322 = vld [vmem:[%s226 + $0x144] sm:$0xf]
      %v323 = vld [vmem:[%s226 + $0x148] sm:$0xf]
      %v324 = vld [vmem:[%s226 + $0x14c] sm:$0xf]
      %v325 = vld [vmem:[%s226 + $0x150] sm:$0xf]
      %v326 = vld [vmem:[%s226 + $0x154] sm:$0xf]
      %v327 = vld [vmem:[%s226 + $0x158] sm:$0xf]
      %v328 = vld [vmem:[%s226 + $0x15c] sm:$0xf]
      %v329 = vld [vmem:[%s226 + $0x160] sm:$0xf]
      %v330 = vld [vmem:[%s226 + $0x164] sm:$0xf]
      %v331 = vld [vmem:[%s226 + $0x168] sm:$0xf]
      %v332 = vld [vmem:[%s226 + $0x16c] sm:$0xf]
      %v333 = vld [vmem:[%s226 + $0x170] sm:$0xf]
      %v334 = vld [vmem:[%s226 + $0x174] sm:$0xf]
      %v335 = vld [vmem:[%s226 + $0x178] sm:$0xf]
      %v336 = vld [vmem:[%s226 + $0x17c] sm:$0xf]
      %v337 = vld [vmem:[%s226 + $0x180] sm:$0xf]
      %v338 = vld [vmem:[%s226 + $0x184] sm:$0xf]
      %v339 = vld [vmem:[%s226 + $0x188] sm:$0xf]
      %v340 = vld [vmem:[%s226 + $0x18c] sm:$0xf]
      %v341 = vld [vmem:[%s226 + $0x190] sm:$0xf]
      %v342 = vld [vmem:[%s226 + $0x194] sm:$0xf]
      %v343 = vld [vmem:[%s226 + $0x198] sm:$0xf]
      %v344 = vld [vmem:[%s226 + $0x19c] sm:$0xf]
      %v345 = vld [vmem:[%s226 + $0x1a0] sm:$0xf]
      %v346 = vld [vmem:[%s226 + $0x1a4] sm:$0xf]
      %v347 = vld [vmem:[%s226 + $0x1a8] sm:$0xf]
      %v348 = vld [vmem:[%s226 + $0x1ac] sm:$0xf]
      %v349 = vld [vmem:[%s226 + $0x1b0] sm:$0xf]
      %v350 = vld [vmem:[%s226 + $0x1b4] sm:$0xf]
      %v351 = vld [vmem:[%s226 + $0x1b8] sm:$0xf]
      %v352 = vld [vmem:[%s226 + $0x1bc] sm:$0xf]
      %v353 = vld [vmem:[%s226 + $0x1c0] sm:$0xf]
      %v354 = vld [vmem:[%s226 + $0x1c4] sm:$0xf]
      %v355 = vld [vmem:[%s226 + $0x1c8] sm:$0xf]
      %v356 = vld [vmem:[%s226 + $0x1cc] sm:$0xf]
      %v357 = vld [vmem:[%s226 + $0x1d0] sm:$0xf]
      %v358 = vld [vmem:[%s226 + $0x1d4] sm:$0xf]
      %v359 = vld [vmem:[%s226 + $0x1d8] sm:$0xf]
      %v360 = vld [vmem:[%s226 + $0x1dc] sm:$0xf]
      %v361 = vld [vmem:[%s226 + $0x1e0] sm:$0xf]
      %v362 = vld [vmem:[%s226 + $0x1e4] sm:$0xf]
      %v363 = vld [vmem:[%s226 + $0x1e8] sm:$0xf]
      %v364 = vld [vmem:[%s226 + $0x1ec] sm:$0xf]
      %v365 = vld [vmem:[%s226 + $0x1f0] sm:$0xf]
      %v366 = vld [vmem:[%s226 + $0x1f4] sm:$0xf]
      %v367 = vld [vmem:[%s226 + $0x1f8] sm:$0xf]
      %v368 = vld [vmem:[%s226 + $0x1fc] sm:$0xf]
      %v369 = vld [vmem:[%s229] sm:$0x1]
      %v371 = vperm.slane %v369, 0
      %v377 = vunpack.c.l.b16 %v237
      %v378 = vunpack.c.h.b16 %v237
      %v379 = vunpack.c.l.b16 %v238
      %v380 = vunpack.c.h.b16 %v238
      %v381 = vunpack.c.l.b16 %v239
      %v382 = vunpack.c.h.b16 %v239
      %v383 = vunpack.c.l.b16 %v240
      %v384 = vunpack.c.h.b16 %v240
      %v385 = vpack.c.b16 %v377, %v377
      %v386 = vpack.c.b16 %v378, %v378
      %v387 = vpack.c.b16 %v379, %v379
      %v388 = vpack.c.b16 %v380, %v380
      %v389 = vpack.c.b16 %v381, %v381
      %v390 = vpack.c.b16 %v382, %v382
      %v391 = vpack.c.b16 %v383, %v383
      %v392 = vpack.c.b16 %v384, %v384
      %v529 = vunpack.c.l.b16 %v241
      %v530 = vunpack.c.l.b16 %v242
      %v531 = vunpack.c.l.b16 %v243
      %v532 = vunpack.c.l.b16 %v244
      %v533 = vunpack.c.l.b16 %v245
      %v534 = vunpack.c.l.b16 %v246
      %v535 = vunpack.c.l.b16 %v247
      %v536 = vunpack.c.l.b16 %v248
      %v537 = vunpack.c.l.b16 %v249
      %v538 = vunpack.c.l.b16 %v250
      %v539 = vunpack.c.l.b16 %v251
      %v540 = vunpack.c.l.b16 %v252
      %v541 = vunpack.c.l.b16 %v253
      %v542 = vunpack.c.l.b16 %v254
      %v543 = vunpack.c.l.b16 %v255
      %v544 = vunpack.c.l.b16 %v256
      %v545 = vunpack.c.l.b16 %v257
      %v546 = vunpack.c.l.b16 %v258
      %v547 = vunpack.c.l.b16 %v259
      %v548 = vunpack.c.l.b16 %v260
      %v549 = vunpack.c.l.b16 %v261
      %v550 = vunpack.c.l.b16 %v262
      %v551 = vunpack.c.l.b16 %v263
      %v552 = vunpack.c.l.b16 %v264
      %v553 = vunpack.c.l.b16 %v265
      %v554 = vunpack.c.l.b16 %v266
      %v555 = vunpack.c.l.b16 %v267
      %v556 = vunpack.c.l.b16 %v268
      %v557 = vunpack.c.l.b16 %v269
      %v558 = vunpack.c.l.b16 %v270
      %v559 = vunpack.c.l.b16 %v271
      %v560 = vunpack.c.l.b16 %v272
      %v561 = vunpack.c.l.b16 %v273
      %v562 = vunpack.c.l.b16 %v274
      %v563 = vunpack.c.l.b16 %v275
      %v564 = vunpack.c.l.b16 %v276
      %v565 = vunpack.c.l.b16 %v277
      %v566 = vunpack.c.l.b16 %v278
      %v567 = vunpack.c.l.b16 %v279
      %v568 = vunpack.c.l.b16 %v280
      %v569 = vunpack.c.l.b16 %v281
      %v570 = vunpack.c.l.b16 %v282
      %v571 = vunpack.c.l.b16 %v283
      %v572 = vunpack.c.l.b16 %v284
      %v573 = vunpack.c.l.b16 %v285
      %v574 = vunpack.c.l.b16 %v286
      %v575 = vunpack.c.l.b16 %v287
      %v576 = vunpack.c.l.b16 %v288
      %v577 = vunpack.c.l.b16 %v289
      %v578 = vunpack.c.l.b16 %v290
      %v579 = vunpack.c.l.b16 %v291
      %v580 = vunpack.c.l.b16 %v292
      %v581 = vunpack.c.l.b16 %v293
      %v582 = vunpack.c.l.b16 %v294
      %v583 = vunpack.c.l.b16 %v295
      %v584 = vunpack.c.l.b16 %v296
      %v585 = vunpack.c.l.b16 %v297
      %v586 = vunpack.c.l.b16 %v298
      %v587 = vunpack.c.l.b16 %v299
      %v588 = vunpack.c.l.b16 %v300
      %v589 = vunpack.c.l.b16 %v301
      %v590 = vunpack.c.l.b16 %v302
      %v591 = vunpack.c.l.b16 %v303
      %v592 = vunpack.c.l.b16 %v304
      %v593 = vunpack.c.l.b16 %v305
      %v594 = vunpack.c.l.b16 %v306
      %v595 = vunpack.c.l.b16 %v307
      %v596 = vunpack.c.l.b16 %v308
      %v597 = vunpack.c.l.b16 %v309
      %v598 = vunpack.c.l.b16 %v310
      %v599 = vunpack.c.l.b16 %v311
      %v600 = vunpack.c.l.b16 %v312
      %v601 = vunpack.c.l.b16 %v313
      %v602 = vunpack.c.l.b16 %v314
      %v603 = vunpack.c.l.b16 %v315
      %v604 = vunpack.c.l.b16 %v316
      %v605 = vunpack.c.l.b16 %v317
      %v606 = vunpack.c.l.b16 %v318
      %v607 = vunpack.c.l.b16 %v319
      %v608 = vunpack.c.l.b16 %v320
      %v609 = vunpack.c.l.b16 %v321
      %v610 = vunpack.c.l.b16 %v322
      %v611 = vunpack.c.l.b16 %v323
      %v612 = vunpack.c.l.b16 %v324
      %v613 = vunpack.c.l.b16 %v325
      %v614 = vunpack.c.l.b16 %v326
      %v615 = vunpack.c.l.b16 %v327
      %v616 = vunpack.c.l.b16 %v328
      %v617 = vunpack.c.l.b16 %v329
      %v618 = vunpack.c.l.b16 %v330
      %v619 = vunpack.c.l.b16 %v331
      %v620 = vunpack.c.l.b16 %v332
      %v621 = vunpack.c.l.b16 %v333
      %v622 = vunpack.c.l.b16 %v334
      %v623 = vunpack.c.l.b16 %v335
      %v624 = vunpack.c.l.b16 %v336
      %v625 = vunpack.c.l.b16 %v337
      %v626 = vunpack.c.l.b16 %v338
      %v627 = vunpack.c.l.b16 %v339
      %v628 = vunpack.c.l.b16 %v340
      %v629 = vunpack.c.l.b16 %v341
      %v630 = vunpack.c.l.b16 %v342
      %v631 = vunpack.c.l.b16 %v343
      %v632 = vunpack.c.l.b16 %v344
      %v633 = vunpack.c.l.b16 %v345
      %v634 = vunpack.c.l.b16 %v346
      %v635 = vunpack.c.l.b16 %v347
      %v636 = vunpack.c.l.b16 %v348
      %v637 = vunpack.c.l.b16 %v349
      %v638 = vunpack.c.l.b16 %v350
      %v639 = vunpack.c.l.b16 %v351
      %v640 = vunpack.c.l.b16 %v352
      %v641 = vunpack.c.l.b16 %v353
      %v642 = vunpack.c.l.b16 %v354
      %v643 = vunpack.c.l.b16 %v355
      %v644 = vunpack.c.l.b16 %v356
      %v645 = vunpack.c.l.b16 %v357
      %v646 = vunpack.c.l.b16 %v358
      %v647 = vunpack.c.l.b16 %v359
      %v648 = vunpack.c.l.b16 %v360
      %v649 = vunpack.c.l.b16 %v361
      %v650 = vunpack.c.l.b16 %v362
      %v651 = vunpack.c.l.b16 %v363
      %v652 = vunpack.c.l.b16 %v364
      %v653 = vunpack.c.l.b16 %v365
      %v654 = vunpack.c.l.b16 %v366
      %v655 = vunpack.c.l.b16 %v367
      %v656 = vunpack.c.l.b16 %v368
      %v657 = vpack.c.b16 %v530, %v529
      %v658 = vpack.c.b16 %v532, %v531
      %v659 = vpack.c.b16 %v534, %v533
      %v660 = vpack.c.b16 %v536, %v535
      %v661 = vpack.c.b16 %v538, %v537
      %v662 = vpack.c.b16 %v540, %v539
      %v663 = vpack.c.b16 %v542, %v541
      %v664 = vpack.c.b16 %v544, %v543
      %v665 = vpack.c.b16 %v546, %v545
      %v666 = vpack.c.b16 %v548, %v547
      %v667 = vpack.c.b16 %v550, %v549
      %v668 = vpack.c.b16 %v552, %v551
      %v669 = vpack.c.b16 %v554, %v553
      %v670 = vpack.c.b16 %v556, %v555
      %v671 = vpack.c.b16 %v558, %v557
      %v672 = vpack.c.b16 %v560, %v559
      %v673 = vpack.c.b16 %v562, %v561
      %v674 = vpack.c.b16 %v564, %v563
      %v675 = vpack.c.b16 %v566, %v565
      %v676 = vpack.c.b16 %v568, %v567
      %v677 = vpack.c.b16 %v570, %v569
      %v678 = vpack.c.b16 %v572, %v571
      %v679 = vpack.c.b16 %v574, %v573
      %v680 = vpack.c.b16 %v576, %v575
      %v681 = vpack.c.b16 %v578, %v577
      %v682 = vpack.c.b16 %v580, %v579
      %v683 = vpack.c.b16 %v582, %v581
      %v684 = vpack.c.b16 %v584, %v583
      %v685 = vpack.c.b16 %v586, %v585
      %v686 = vpack.c.b16 %v588, %v587
      %v687 = vpack.c.b16 %v590, %v589
      %v688 = vpack.c.b16 %v592, %v591
      %v689 = vpack.c.b16 %v594, %v593
      %v690 = vpack.c.b16 %v596, %v595
      %v691 = vpack.c.b16 %v598, %v597
      %v692 = vpack.c.b16 %v600, %v599
      %v693 = vpack.c.b16 %v602, %v601
      %v694 = vpack.c.b16 %v604, %v603
      %v695 = vpack.c.b16 %v606, %v605
      %v696 = vpack.c.b16 %v608, %v607
      %v697 = vpack.c.b16 %v610, %v609
      %v698 = vpack.c.b16 %v612, %v611
      %v699 = vpack.c.b16 %v614, %v613
      %v700 = vpack.c.b16 %v616, %v615
      %v701 = vpack.c.b16 %v618, %v617
      %v702 = vpack.c.b16 %v620, %v619
      %v703 = vpack.c.b16 %v622, %v621
      %v704 = vpack.c.b16 %v624, %v623
      %v705 = vpack.c.b16 %v626, %v625
      %v706 = vpack.c.b16 %v628, %v627
      %v707 = vpack.c.b16 %v630, %v629
      %v708 = vpack.c.b16 %v632, %v631
      %v709 = vpack.c.b16 %v634, %v633
      %v710 = vpack.c.b16 %v636, %v635
      %v711 = vpack.c.b16 %v638, %v637
      %v712 = vpack.c.b16 %v640, %v639
      %v713 = vpack.c.b16 %v642, %v641
      %v714 = vpack.c.b16 %v644, %v643
      %v715 = vpack.c.b16 %v646, %v645
      %v716 = vpack.c.b16 %v648, %v647
      %v717 = vpack.c.b16 %v650, %v649
      %v718 = vpack.c.b16 %v652, %v651
      %v719 = vpack.c.b16 %v654, %v653
      %v720 = vpack.c.b16 %v656, %v655
      %785 = vmatpush.bf16.msra.mxu0 %v664
      %786 = vmatpush.bf16.msra.mxu0 %v663
      %787 = vmatpush.bf16.msra.mxu0 %v662
      %788 = vmatpush.bf16.msra.mxu0 %v661
      %789 = vmatpush.bf16.msra.mxu0 %v660
      %790 = vmatpush.bf16.msra.mxu0 %v659
      %791 = vmatpush.bf16.msra.mxu0 %v658
      %792 = vmatpush.bf16.msra.mxu0 %v657
      %793 = vmatmul.bf16.gmra.mxu0 %v385
      %v794 = vpop.f32.mrf.mxu0
      %v795 = vadd.f32 %v371, %v794
      %v796 = vpop.f32.mrf.mxu0
      %797 = vdwg.mxu0
      %798 = vmatpush.bf16.msra.mxu0 %v672
      %799 = vmatpush.bf16.msra.mxu0 %v671
      %800 = vmatpush.bf16.msra.mxu0 %v670
      %801 = vmatpush.bf16.msra.mxu0 %v669
      %802 = vmatpush.bf16.msra.mxu0 %v668
      %803 = vmatpush.bf16.msra.mxu0 %v667
      %804 = vmatpush.bf16.msra.mxu0 %v666
      %805 = vmatpush.bf16.msra.mxu0 %v665
      %806 = vmatmul.bf16.gmra.mxu0 %v386
      %v807 = vpop.f32.mrf.mxu0
      %v808 = vadd.f32 %v795, %v807
      %v809 = vpop.f32.mrf.mxu0
      %810 = vdwg.mxu0
      %811 = vmatpush.bf16.msra.mxu0 %v680
      %812 = vmatpush.bf16.msra.mxu0 %v679
      %813 = vmatpush.bf16.msra.mxu0 %v678
      %814 = vmatpush.bf16.msra.mxu0 %v677
      %815 = vmatpush.bf16.msra.mxu0 %v676
      %816 = vmatpush.bf16.msra.mxu0 %v675
      %817 = vmatpush.bf16.msra.mxu0 %v674
      %818 = vmatpush.bf16.msra.mxu0 %v673
      %819 = vmatmul.bf16.gmra.mxu0 %v387
      %v820 = vpop.f32.mrf.mxu0
      %v821 = vadd.f32 %v808, %v820
      %v822 = vpop.f32.mrf.mxu0
      %823 = vdwg.mxu0
      %824 = vmatpush.bf16.msra.mxu0 %v688
      %825 = vmatpush.bf16.msra.mxu0 %v687
      %826 = vmatpush.bf16.msra.mxu0 %v686
      %827 = vmatpush.bf16.msra.mxu0 %v685
      %828 = vmatpush.bf16.msra.mxu0 %v684
      %829 = vmatpush.bf16.msra.mxu0 %v683
      %830 = vmatpush.bf16.msra.mxu0 %v682
      %831 = vmatpush.bf16.msra.mxu0 %v681
      %832 = vmatmul.bf16.gmra.mxu0 %v388
      %v833 = vpop.f32.mrf.mxu0
      %v834 = vadd.f32 %v821, %v833
      %v835 = vpop.f32.mrf.mxu0
      %836 = vdwg.mxu0
      %837 = vmatpush.bf16.msra.mxu0 %v696
      %838 = vmatpush.bf16.msra.mxu0 %v695
      %839 = vmatpush.bf16.msra.mxu0 %v694
      %840 = vmatpush.bf16.msra.mxu0 %v693
      %841 = vmatpush.bf16.msra.mxu0 %v692
      %842 = vmatpush.bf16.msra.mxu0 %v691
      %843 = vmatpush.bf16.msra.mxu0 %v690
      %844 = vmatpush.bf16.msra.mxu0 %v689
      %845 = vmatmul.bf16.gmra.mxu0 %v389
      %v846 = vpop.f32.mrf.mxu0
      %v847 = vadd.f32 %v834, %v846
      %v848 = vpop.f32.mrf.mxu0
      %849 = vdwg.mxu0
      %850 = vmatpush.bf16.msra.mxu0 %v704
      %851 = vmatpush.bf16.msra.mxu0 %v703
      %852 = vmatpush.bf16.msra.mxu0 %v702
      %853 = vmatpush.bf16.msra.mxu0 %v701
      %854 = vmatpush.bf16.msra.mxu0 %v700
      %855 = vmatpush.bf16.msra.mxu0 %v699
      %856 = vmatpush.bf16.msra.mxu0 %v698
      %857 = vmatpush.bf16.msra.mxu0 %v697
      %858 = vmatmul.bf16.gmra.mxu0 %v390
      %v859 = vpop.f32.mrf.mxu0
      %v860 = vadd.f32 %v847, %v859
      %v861 = vpop.f32.mrf.mxu0
      %862 = vdwg.mxu0
      %863 = vmatpush.bf16.msra.mxu0 %v712
      %864 = vmatpush.bf16.msra.mxu0 %v711
      %865 = vmatpush.bf16.msra.mxu0 %v710
      %866 = vmatpush.bf16.msra.mxu0 %v709
      %867 = vmatpush.bf16.msra.mxu0 %v708
      %868 = vmatpush.bf16.msra.mxu0 %v707
      %869 = vmatpush.bf16.msra.mxu0 %v706
      %870 = vmatpush.bf16.msra.mxu0 %v705
      %871 = vmatmul.bf16.gmra.mxu0 %v391
      %v872 = vpop.f32.mrf.mxu0
      %v873 = vadd.f32 %v860, %v872
      %v874 = vpop.f32.mrf.mxu0
      %875 = vdwg.mxu0
      %876 = vmatpush.bf16.msra.mxu0 %v720
      %877 = vmatpush.bf16.msra.mxu0 %v719
      %878 = vmatpush.bf16.msra.mxu0 %v718
      %879 = vmatpush.bf16.msra.mxu0 %v717
      %880 = vmatpush.bf16.msra.mxu0 %v716
      %881 = vmatpush.bf16.msra.mxu0 %v715
      %882 = vmatpush.bf16.msra.mxu0 %v714
      %883 = vmatpush.bf16.msra.mxu0 %v713
      %884 = vmatmul.bf16.gmra.mxu0 %v392
      %v885 = vpop.f32.mrf.mxu0
      %v886 = vadd.f32 %v873, %v885
      %v887 = vpop.f32.mrf.mxu0
      %888 = vdwg.mxu0
      %v889 = vmax.f32 %v886, 0.0
      %vm890 = vcmask 523264
      %891 = vst.msk [vmem:[%s236] sm:$0xff] %vm890, %v889
      %p892 = scmp.lt.s32.totalorder %s18, 1
      %s893 = scalar_select %p892, %s18, 1
      %p894 = scmp.lt.s32.totalorder %s19, 0
      %s895 = scalar_select %p894, %s19, 0
      %s896 = sadd.s32 %s895, %s893
      %s897 = smul.addr %s896, 8
      %s898 = scalar_lea.vmem %s3, %s897
      // Predicated region
      $region33: #{_lambda_.11} parent=31 // pred_check
        %p899 = pneg %p126
      $region34: #{_lambda_.11} parent=31 // pred_check_branch
        %901 = sbr.rel (%p899) target = $region36
      $region35: #{_lambda_.11} parent=31 // pred_region
        _
      $region36: #{_lambda_.11} parent=31 // pred_fallthru
        _
    $region32: #{_lambda_.11} parent=5 // pred_fallthru
      _
    %p902 = scmp.le.s32.totalorder 2, %s9
    // Predicated region
    $region37: #{_lambda_.11} parent=5 // pred_check
      %p903 = pneg %p902
    $region38: #{_lambda_.11} parent=5 // pred_check_branch
      %905 = sbr.rel (%p903) target = $region40
    $region39: #{_lambda_.11} parent=5 // pred_region
      %s906 = ssub.s32 %s9, 2
      // Predicated region
      $region41: #{_lambda_.11} parent=39 // pred_check
        %p907 = pneg %p132
      $region42: #{_lambda_.11} parent=39 // pred_check_branch
        %909 = sbr.rel (%p907) target = $region44
      $region43: #{_lambda_.11} parent=39 // pred_region
        %p910 = scmp.lt.s32.totalorder %s20, 1
        %s911 = scalar_select %p910, %s20, 1
        %p912 = scmp.lt.s32.totalorder %s21, 0
        %s913 = scalar_select %p912, %s21, 0
        %s914 = sadd.s32 %s913, %s911
        %s915 = smul.addr %s914, 8
        %s916 = scalar_lea.vmem %s3, %s915
      $region44: #{_lambda_.11} parent=39 // pred_fallthru
        _
    $region40: #{_lambda_.11} parent=5 // pred_fallthru
      _
  $region6: #{_lambda_.11} parent=0 // loop_footer
    %s13 = sadd.s32 1, %s9
  $region7: #{_lambda_.11} parent=0 // loop_footer_branch
    %8 = sbr.rel target = $region3
  $region8: #{_lambda_.11} parent=0 // loop_exit
    _

// kernel: _lambda_.14
$region0: #{_lambda_.14}
  #allocation0 [shape = 'u32[]', space=smem, size = 0x4, offset = 0x4, fixed_abs, tag = 'smem constant byte address 0x4 - core index']
  #allocation1 [shape = 'u32[72,128]{1,0:T(1,128)}', space=vmem, size = 0x9000, scoped, tag = 'internal scratch']
  %s0 = inlined_call_operand.vmem [shape: f32[3,2,2,64], index: 0, kind: input, shape index: {}]
  %s1 = inlined_call_operand.vmem [shape: bf16[64,256], index: 1, kind: input, shape index: {}]
  %s2 = inlined_call_operand.vmem [shape: f32[2,256], index: 2, kind: input, shape index: {}]
  %s3 = inlined_call_operand.vmem [shape: f32[2,2,256], index: 3, kind: output, shape index: {}]
  %s4 = sld [smem:[#allocation0]]
  $region22: #{_lambda_.14} parent=0
    _
  %s6 = ssub.s32 1, %s4
  %s7 = scalar_select 0, %s6, %s4
  // Predicated region
  $region2: #{_lambda_.14} parent=0 // pred_check
    _
  $region3: #{_lambda_.14} parent=0 // pred_check_branch
    %9 = sbr.rel (0) target = $region5
  $region4: #{_lambda_.14} parent=0 // pred_region
    _
  $region5: #{_lambda_.14} parent=0 // pred_fallthru
    _
  // Predicated region
  $region6: #{_lambda_.14} parent=0 // pred_check
    _
  $region7: #{_lambda_.14} parent=0 // pred_check_branch
    %11 = sbr.rel (0) target = $region9
  $region8: #{_lambda_.14} parent=0 // pred_region
    _
  $region9: #{_lambda_.14} parent=0 // pred_fallthru
    _
  // Predicated region
  $region10: #{_lambda_.14} parent=0 // pred_check
    _
  $region11: #{_lambda_.14} parent=0 // pred_check_branch
    %13 = sbr.rel (0) target = $region13
  $region12: #{_lambda_.14} parent=0 // pred_region
    _
  $region13: #{_lambda_.14} parent=0 // pred_fallthru
    _
  %v15 = vld [vmem:[%s2] ss:$2 sm:$0x3]
  %s16 = scalar_lea.vmem %s2, 1
  %v17 = vld [vmem:[%s16] ss:$2 sm:$0x3]
  %v18 = vld [vmem:[%s0] sm:$0x3]
  %v19 = vld [vmem:[%s0 + $0x2] sm:$0x3]
  %v20 = vld [vmem:[%s0 + $0x4] sm:$0x3]
  %v21 = vld [vmem:[%s0 + $0x6] sm:$0x3]
  %v22 = vld [vmem:[%s0 + $0x8] sm:$0x3]
  %v23 = vld [vmem:[%s0 + $0xa] sm:$0x3]
  %v24 = vld [vmem:[%s1] sm:$0xff]
  %v25 = vld [vmem:[%s1 + $0x8] sm:$0xff]
  %v26 = vld [vmem:[%s1 + $0x10] sm:$0xff]
  %v27 = vld [vmem:[%s1 + $0x18] sm:$0xff]
  %v28 = vld [vmem:[%s1 + $0x20] sm:$0xff]
  %v29 = vld [vmem:[%s1 + $0x28] sm:$0xff]
  %v30 = vld [vmem:[%s1 + $0x30] sm:$0xff]
  %v31 = vld [vmem:[%s1 + $0x38] sm:$0xff]
  %v32 = vmul.f32 %v18, %v20
  %v33 = vmul.f32 %v32, %v22
  %v34 = vpack.c.bf16 %v33, %v33
  %v43 = vunpack.c.l.b16 %v24
  %v44 = vunpack.c.h.b16 %v24
  %v45 = vunpack.c.l.b16 %v25
  %v46 = vunpack.c.h.b16 %v25
  %v47 = vunpack.c.l.b16 %v26
  %v48 = vunpack.c.h.b16 %v26
  %v49 = vunpack.c.l.b16 %v27
  %v50 = vunpack.c.h.b16 %v27
  %v51 = vunpack.c.l.b16 %v28
  %v52 = vunpack.c.h.b16 %v28
  %v53 = vunpack.c.l.b16 %v29
  %v54 = vunpack.c.h.b16 %v29
  %v55 = vunpack.c.l.b16 %v30
  %v56 = vunpack.c.h.b16 %v30
  %v57 = vunpack.c.l.b16 %v31
  %v58 = vunpack.c.h.b16 %v31
  %v59 = vpack.c.b16 %v45, %v43
  %v60 = vpack.c.b16 %v46, %v44
  %v61 = vpack.c.b16 %v49, %v47
  %v62 = vpack.c.b16 %v50, %v48
  %v63 = vpack.c.b16 %v53, %v51
  %v64 = vpack.c.b16 %v54, %v52
  %v65 = vpack.c.b16 %v57, %v55
  %v66 = vpack.c.b16 %v58, %v56
  %vm75 = vcmask 523264
  %v77 = vsel %vm75, %v34, 0
  %79 = vmatpush.bf16.msra.mxu0 0
  %80 = vmatpush.bf16.msra.mxu0 0
  %81 = vmatpush.bf16.msra.mxu0 0
  %82 = vmatpush.bf16.msra.mxu0 0
  %83 = vmatpush.bf16.msra.mxu0 %v65
  %84 = vmatpush.bf16.msra.mxu0 %v63
  %85 = vmatpush.bf16.msra.mxu0 %v61
  %86 = vmatpush.bf16.msra.mxu0 %v59
  %87 = vmatmul.bf16.gmra.mxu0 %v77
  %v88 = vpop.f32.mrf.mxu0
  %v89 = vadd.f32 0.0, %v88
  %v90 = vpop.f32.mrf.mxu0
  %91 = vdwg.mxu0
  %92 = vmatpush.bf16.msra.mxu0 0
  %93 = vmatpush.bf16.msra.mxu0 0
  %94 = vmatpush.bf16.msra.mxu0 0
  %95 = vmatpush.bf16.msra.mxu0 0
  %96 = vmatpush.bf16.msra.mxu0 %v66
  %97 = vmatpush.bf16.msra.mxu0 %v64
  %98 = vmatpush.bf16.msra.mxu0 %v62
  %99 = vmatpush.bf16.msra.mxu0 %v60
  %100 = vmatmul.bf16.gmra.mxu0 %v77
  %v101 = vpop.f32.mrf.mxu0
  %v102 = vadd.f32 0.0, %v101
  %v103 = vpop.f32.mrf.mxu0
  %104 = vdwg.mxu0
  %vm105 = vcmask 1041408
  %v106 = vsel %vm105, %v89, 0.0
  %v107 = vsel %vm105, %v102, 0.0
  %v108 = vadd.f32 %v106, %v107
  %109 = vadd.xlane.f32.xlu0 %v108
  %v110 = vpop.xlane.xlu0 %109
  %v111 = vrcp.pop 256.0
  %v112 = vmul.f32 256.0, %v111
  %v113 = vsub.f32 1.0, %v112
  %v114 = vmul.f32 %v111, %v113
  %v115 = vadd.f32 %v111, %v114
  %vm116 = vweird.f32 %v111
  %v117 = vsel %vm116, %v111, %v115
  %v118 = vmul.f32 %v110, %v117
  %v119 = vsub.f32 %v89, %v118
  %v120 = vsub.f32 %v102, %v118
  %v121 = vmul.f32 %v119, %v119
  %v122 = vmul.f32 %v120, %v120
  %v123 = vsel %vm105, %v121, 0.0
  %v124 = vsel %vm105, %v122, 0.0
  %v125 = vadd.f32 %v123, %v124
  %126 = vadd.xlane.f32.xlu0 %v125
  %v127 = vpop.xlane.xlu0 %126
  %v128 = vmul.f32 %v127, %v117
  %v129 = vadd.f32 %v128, 1e-05
  %v130 = vrsqrt.pop %v129
  %v131 = vmul.f32 %v130, %v129
  %v132 = vmul.f32 %v131, %v130
  %v133 = vmul.f32 0.5, %v132
  %v134 = vsub.f32 1.5, %v133
  %v135 = vmul.f32 %v130, %v134
  %vm136 = vweird.f32 %v129
  %vm137 = vweird.f32 %v130
  %vm138 = vmor %vm136, %vm137
  %v139 = vsel %vm138, %v130, %v135
  %v140 = vmul.f32 %v119, %v139
  %v141 = vmul.f32 %v120, %v139
  %v143 = vperm.slane %v15, 0
  %v144 = vperm.slane %v15, 1
  %v147 = vmul.f32 %v140, %v143
  %v148 = vmul.f32 %v141, %v144
  %v150 = vperm.slane %v17, 0
  %v151 = vperm.slane %v17, 1
  %v154 = vadd.f32 %v147, %v150
  %v155 = vadd.f32 %v148, %v151
  %v158 = vrot.slane %v155, 6
  %v159 = vsel %vm105, %v154, %v158
  %161 = vst [vmem:[%s3] sm:$0xf] %v159
  %v162 = vmul.f32 %v19, %v21
  %v163 = vmul.f32 %v162, %v23
  %v164 = vpack.c.bf16 %v163, %v163
  %v166 = vsel %vm75, %v164, 0
  %168 = vmatpush.bf16.msra.mxu0 0
  %169 = vmatpush.bf16.msra.mxu0 0
  %170 = vmatpush.bf16.msra.mxu0 0
  %171 = vmatpush.bf16.msra.mxu0 0
  %172 = vmatpush.bf16.msra.mxu0 %v65
  %173 = vmatpush.bf16.msra.mxu0 %v63
  %174 = vmatpush.bf16.msra.mxu0 %v61
  %175 = vmatpush.bf16.msra.mxu0 %v59
  %176 = vmatmul.bf16.gmra.mxu0 %v166
  %v177 = vpop.f32.mrf.mxu0
  %v178 = vadd.f32 0.0, %v177
  %v179 = vpop.f32.mrf.mxu0
  %180 = vdwg.mxu0
  %181 = vmatpush.bf16.msra.mxu0 0
  %182 = vmatpush.bf16.msra.mxu0 0
  %183 = vmatpush.bf16.msra.mxu0 0
  %184 = vmatpush.bf16.msra.mxu0 0
  %185 = vmatpush.bf16.msra.mxu0 %v66
  %186 = vmatpush.bf16.msra.mxu0 %v64
  %187 = vmatpush.bf16.msra.mxu0 %v62
  %188 = vmatpush.bf16.msra.mxu0 %v60
  %189 = vmatmul.bf16.gmra.mxu0 %v166
  %v190 = vpop.f32.mrf.mxu0
  %v191 = vadd.f32 0.0, %v190
  %v192 = vpop.f32.mrf.mxu0
  %193 = vdwg.mxu0
  %v194 = vsel %vm105, %v178, 0.0
  %v195 = vsel %vm105, %v191, 0.0
  %v196 = vadd.f32 %v194, %v195
  %197 = vadd.xlane.f32.xlu0 %v196
  %v198 = vpop.xlane.xlu0 %197
  %v199 = vmul.f32 %v198, %v117
  %v200 = vsub.f32 %v178, %v199
  %v201 = vsub.f32 %v191, %v199
  %v202 = vmul.f32 %v200, %v200
  %v203 = vmul.f32 %v201, %v201
  %v204 = vsel %vm105, %v202, 0.0
  %v205 = vsel %vm105, %v203, 0.0
  %v206 = vadd.f32 %v204, %v205
  %207 = vadd.xlane.f32.xlu0 %v206
  %v208 = vpop.xlane.xlu0 %207
  %v209 = vmul.f32 %v208, %v117
  %v210 = vadd.f32 %v209, 1e-05
  %v211 = vrsqrt.pop %v210
  %v212 = vmul.f32 %v211, %v210
  %v213 = vmul.f32 %v212, %v211
  %v214 = vmul.f32 0.5, %v213
  %v215 = vsub.f32 1.5, %v214
  %v216 = vmul.f32 %v211, %v215
  %vm217 = vweird.f32 %v210
  %vm218 = vweird.f32 %v211
  %vm219 = vmor %vm217, %vm218
  %v220 = vsel %vm219, %v211, %v216
  %v221 = vmul.f32 %v200, %v220
  %v222 = vmul.f32 %v201, %v220
  %v223 = vmul.f32 %v221, %v143
  %v224 = vmul.f32 %v222, %v144
  %v225 = vadd.f32 %v223, %v150
  %v226 = vadd.f32 %v224, %v151
  %v229 = vrot.slane %v226, 6
  %v230 = vsel %vm105, %v225, %v229
  %s232 = scalar_lea.vmem %s3, 4
  %233 = vst [vmem:[%s232] sm:$0xf] %v230
  // Predicated region
  $region14: #{_lambda_.14} parent=0 // pred_check
    _
  $region15: #{_lambda_.14} parent=0 // pred_check_branch
    %235 = sbr.rel (0) target = $region17
  $region16: #{_lambda_.14} parent=0 // pred_region
    _
  $region17: #{_lambda_.14} parent=0 // pred_fallthru
    _
  // Predicated region
  $region18: #{_lambda_.14} parent=0 // pred_check
    _
  $region19: #{_lambda_.14} parent=0 // pred_check_branch
    %237 = sbr.rel (0) target = $region21
  $region20: #{_lambda_.14} parent=0 // pred_region
    _
  $region21: #{_lambda_.14} parent=0 // pred_fallthru
    _

// kernel: _lambda_.13
$region0: #{_lambda_.13}
  #allocation0 [shape = 'u32[]', space=smem, size = 0x4, offset = 0x4, fixed_abs, tag = 'smem constant byte address 0x4 - core index']
  #allocation1 [shape = 'u32[72,128]{1,0:T(1,128)}', space=vmem, size = 0x9000, scoped, tag = 'internal scratch']
  %s0 = inlined_call_operand.vmem [shape: f32[3,2,2,64], index: 0, kind: input, shape index: {}]
  %s1 = inlined_call_operand.vmem [shape: f32[3,2,4,64], index: 1, kind: input, shape index: {}]
  %s2 = inlined_call_operand.vmem [shape: f32[3,384,64], index: 2, kind: input, shape index: {}]
  %s3 = inlined_call_operand.vmem [shape: f32[3,8,64], index: 3, kind: input, shape index: {}]
  %s4 = inlined_call_operand.vmem [shape: f32[3,2,2,64], index: 4, kind: output, shape index: {}]
  %s5 = sld [smem:[#allocation0]]
  $region49: #{_lambda_.13} parent=0
    _
  %s7 = ssub.s32 1, %s5
  %s8 = scalar_select 0, %s7, %s5
  loop: start=0, step=1, limit=5
  $region2: #{_lambda_.13} parent=0 // loop_pre_header
    _
  $region3: #{_lambda_.13} parent=0 // loop_header
    %s10 = sphi 0, %s14
    %p11 = scmp.ge.s32.totalorder %s10, 5
    %s20 = sphi 0, %s22
    %s23 = sphi 0, %s20
    %s24 = sphi 0, %s23
    %s40 = sphi 0, %s24
    %s46 = sphi 0, %s48
    %s49 = sphi 0, %s46
    %s50 = sphi 0, %s49
    %s66 = sphi 0, %s50
    %s72 = sphi 0, %s74
    %s75 = sphi 0, %s72
    %s76 = sphi 0, %s75
    %s92 = sphi 0, %s76
    %s98 = sphi 0, %s100
    %s101 = sphi 0, %s98
    %s102 = sphi 0, %s101
    %s118 = sphi 0, %s102
    %s124 = sphi 0, %s126
    %s127 = sphi 0, %s124
    %s128 = sphi 0, %s127
    %s144 = sphi 0, %s128
  $region4: #{_lambda_.13} parent=0 // loop_header_branch
    %13 = sbr.rel (%p11) target = $region8
  $region5: #{_lambda_.13} parent=0 // loop_body
    %s15 = ssub.s32 %s10, 1
    %s16 = ssub.s32 %s10, 2
    %s17 = sadd.s32 %s10, 1
    %s18 = ssub.s32 %s10, %s17
    %p19 = scmp.eq.s32.totalorder %s18, 0
    %s21 = sadd.s32 %s20, 1
    %s22 = scalar_select %p19, %s20, %s21
    %p25 = pneg %p19
    %p26 = scmp.eq.s32.totalorder %s10, 2
    %p27 = por %p25, %p26
    %p28 = scmp.ne.s32.totalorder %s20, %s23
    %p29 = scmp.eq.s32.totalorder %s10, 0
    %p30 = por %p28, %p29
    %p31 = scmp.ne.s32.totalorder %s20, %s23
    %p32 = scmp.eq.s32.totalorder %s15, 2
    %p33 = por %p31, %p32
    %p34 = scmp.ne.s32.totalorder %s23, %s24
    %p35 = scmp.eq.s32.totalorder %s15, 0
    %p36 = por %p34, %p35
    %p37 = scmp.ne.s32.totalorder %s23, %s24
    %p38 = scmp.eq.s32.totalorder %s16, 2
    %p39 = por %p37, %p38
    %p41 = scmp.ne.s32.totalorder %s24, %s40
    %p42 = scmp.eq.s32.totalorder %s16, 0
    %p43 = por %p41, %p42
    %s44 = ssub.s32 %s10, %s17
    %p45 = scmp.eq.s32.totalorder %s44, 0
    %s47 = sadd.s32 %s46, 1
    %s48 = scalar_select %p45, %s46, %s47
    %p51 = pneg %p45
    %p52 = scmp.eq.s32.totalorder %s10, 2
    %p53 = por %p51, %p52
    %p54 = scmp.ne.s32.totalorder %s46, %s49
    %p55 = scmp.eq.s32.totalorder %s10, 0
    %p56 = por %p54, %p55
    %p57 = scmp.ne.s32.totalorder %s46, %s49
    %p58 = scmp.eq.s32.totalorder %s15, 2
    %p59 = por %p57, %p58
    %p60 = scmp.ne.s32.totalorder %s49, %s50
    %p61 = scmp.eq.s32.totalorder %s15, 0
    %p62 = por %p60, %p61
    %p63 = scmp.ne.s32.totalorder %s49, %s50
    %p64 = scmp.eq.s32.totalorder %s16, 2
    %p65 = por %p63, %p64
    %p67 = scmp.ne.s32.totalorder %s50, %s66
    %p68 = scmp.eq.s32.totalorder %s16, 0
    %p69 = por %p67, %p68
    %s70 = ssub.s32 %s10, %s17
    %p71 = scmp.eq.s32.totalorder %s70, 0
    %s73 = sadd.s32 %s72, 1
    %s74 = scalar_select %p71, %s72, %s73
    %p77 = pneg %p71
    %p78 = scmp.eq.s32.totalorder %s10, 2
    %p79 = por %p77, %p78
    %p80 = scmp.ne.s32.totalorder %s72, %s75
    %p81 = scmp.eq.s32.totalorder %s10, 0
    %p82 = por %p80, %p81
    %p83 = scmp.ne.s32.totalorder %s72, %s75
    %p84 = scmp.eq.s32.totalorder %s15, 2
    %p85 = por %p83, %p84
    %p86 = scmp.ne.s32.totalorder %s75, %s76
    %p87 = scmp.eq.s32.totalorder %s15, 0
    %p88 = por %p86, %p87
    %p89 = scmp.ne.s32.totalorder %s75, %s76
    %p90 = scmp.eq.s32.totalorder %s16, 2
    %p91 = por %p89, %p90
    %p93 = scmp.ne.s32.totalorder %s76, %s92
    %p94 = scmp.eq.s32.totalorder %s16, 0
    %p95 = por %p93, %p94
    %s96 = ssub.s32 %s10, %s17
    %p97 = scmp.eq.s32.totalorder %s96, 0
    %s99 = sadd.s32 %s98, 1
    %s100 = scalar_select %p97, %s98, %s99
    %p103 = pneg %p97
    %p104 = scmp.eq.s32.totalorder %s10, 2
    %p105 = por %p103, %p104
    %p106 = scmp.ne.s32.totalorder %s98, %s101
    %p107 = scmp.eq.s32.totalorder %s10, 0
    %p108 = por %p106, %p107
    %p109 = scmp.ne.s32.totalorder %s98, %s101
    %p110 = scmp.eq.s32.totalorder %s15, 2
    %p111 = por %p109, %p110
    %p112 = scmp.ne.s32.totalorder %s101, %s102
    %p113 = scmp.eq.s32.totalorder %s15, 0
    %p114 = por %p112, %p113
    %p115 = scmp.ne.s32.totalorder %s101, %s102
    %p116 = scmp.eq.s32.totalorder %s16, 2
    %p117 = por %p115, %p116
    %p119 = scmp.ne.s32.totalorder %s102, %s118
    %p120 = scmp.eq.s32.totalorder %s16, 0
    %p121 = por %p119, %p120
    %s122 = ssub.s32 %s10, %s17
    %p123 = scmp.eq.s32.totalorder %s122, 0
    %s125 = sadd.s32 %s124, 1
    %s126 = scalar_select %p123, %s124, %s125
    %p129 = pneg %p123
    %p130 = scmp.eq.s32.totalorder %s10, 2
    %p131 = por %p129, %p130
    %p132 = scmp.ne.s32.totalorder %s124, %s127
    %p133 = scmp.eq.s32.totalorder %s10, 0
    %p134 = por %p132, %p133
    %p135 = scmp.ne.s32.totalorder %s124, %s127
    %p136 = scmp.eq.s32.totalorder %s15, 2
    %p137 = por %p135, %p136
    %p138 = scmp.ne.s32.totalorder %s127, %s128
    %p139 = scmp.eq.s32.totalorder %s15, 0
    %p140 = por %p138, %p139
    %p141 = scmp.ne.s32.totalorder %s127, %s128
    %p142 = scmp.eq.s32.totalorder %s16, 2
    %p143 = por %p141, %p142
    %p145 = scmp.ne.s32.totalorder %s128, %s144
    %p146 = scmp.eq.s32.totalorder %s16, 0
    %p147 = por %p145, %p146
    %p148 = scmp.le.s32.totalorder 1, %s10
    %p149 = scmp.lt.s32.totalorder %s10, 4
    %p150 = pnand %p148, %p149
    %p151 = pneg %p150
    // Predicated region
    $region9: #{_lambda_.13} parent=5 // pred_check
      _
    $region10: #{_lambda_.13} parent=5 // pred_check_branch
      %153 = sbr.rel (%p150) target = $region12
    $region11: #{_lambda_.13} parent=5 // pred_region
      %s154 = ssub.s32 %s10, 1
    $region12: #{_lambda_.13} parent=5 // pred_fallthru
      _
    %p155 = scmp.lt.s32.totalorder %s10, 3
    // Predicated region
    $region13: #{_lambda_.13} parent=5 // pred_check
      %p156 = pneg %p155
    $region14: #{_lambda_.13} parent=5 // pred_check_branch
      %158 = sbr.rel (%p156) target = $region16
    $region15: #{_lambda_.13} parent=5 // pred_region
      // Predicated region
      $region17: #{_lambda_.13} parent=15 // pred_check
        %p159 = pneg %p30
      $region18: #{_lambda_.13} parent=15 // pred_check_branch
        %161 = sbr.rel (%p159) target = $region20
      $region19: #{_lambda_.13} parent=15 // pred_region
        %p162 = scmp.lt.s32.totalorder %s10, 2
        %s163 = scalar_select %p162, %s10, 2
        %s164 = smul.addr %s163, 2
        %s165 = smul.addr %s164, 2
        %s166 = scalar_lea.vmem %s0, %s165
      $region20: #{_lambda_.13} parent=15 // pred_fallthru
        _
      // Predicated region
      $region21: #{_lambda_.13} parent=15 // pred_check
        %p167 = pneg %p56
      $region22: #{_lambda_.13} parent=15 // pred_check_branch
        %169 = sbr.rel (%p167) target = $region24
      $region23: #{_lambda_.13} parent=15 // pred_region
        %p170 = scmp.lt.s32.totalorder %s10, 2
        %s171 = scalar_select %p170, %s10, 2
        %s172 = smul.addr %s171, 2
        %s173 = smul.addr %s172, 4
        %s174 = scalar_lea.vmem %s1, %s173
      $region24: #{_lambda_.13} parent=15 // pred_fallthru
        _
      // Predicated region
      $region25: #{_lambda_.13} parent=15 // pred_check
        %p175 = pneg %p82
      $region26: #{_lambda_.13} parent=15 // pred_check_branch
        %177 = sbr.rel (%p175) target = $region28
      $region27: #{_lambda_.13} parent=15 // pred_region
        %p178 = scmp.lt.s32.totalorder %s10, 2
        %s179 = scalar_select %p178, %s10, 2
        %s180 = smul.addr %s179, 48
        %s181 = smul.addr %s180, 8
        %s182 = scalar_lea.vmem %s2, %s181
      $region28: #{_lambda_.13} parent=15 // pred_fallthru
        _
      // Predicated region
      $region29: #{_lambda_.13} parent=15 // pred_check
        %p183 = pneg %p108
      $region30: #{_lambda_.13} parent=15 // pred_check_branch
        %185 = sbr.rel (%p183) target = $region32
      $region31: #{_lambda_.13} parent=15 // pred_region
        %p186 = scmp.lt.s32.totalorder %s10, 2
        %s187 = scalar_select %p186, %s10, 2
        %s188 = smul.addr %s187, 8
        %s189 = scalar_lea.vmem %s3, %s188
      $region32: #{_lambda_.13} parent=15 // pred_fallthru
        _
    $region16: #{_lambda_.13} parent=5 // pred_fallthru
      _
    %p190 = scmp.le.s32.totalorder 1, %s10
    %p191 = scmp.lt.s32.totalorder %s10, 4
    %p192 = pnand %p190, %p191
    %p193 = pneg %p192
    // Predicated region
    $region33: #{_lambda_.13} parent=5 // pred_check
      _
    $region34: #{_lambda_.13} parent=5 // pred_check_branch
      %195 = sbr.rel (%p192) target = $region36
    $region35: #{_lambda_.13} parent=5 // pred_region
      %s196 = ssub.s32 %s10, 1
      %p197 = scmp.lt.s32.totalorder %s15, 2
      %s198 = scalar_select %p197, %s15, 2
      %s199 = smul.addr %s198, 2
      %s200 = smul.addr %s199, 2
      %s201 = scalar_lea.vmem %s0, %s200
      %p202 = pneg %p36
      %p203 = pneg %p33
      %p204 = scmp.lt.s32.totalorder %s15, 2
      %s205 = scalar_select %p204, %s15, 2
      %s206 = smul.addr %s205, 2
      %s207 = smul.addr %s206, 4
      %s208 = scalar_lea.vmem %s1, %s207
      %p209 = pneg %p62
      %p210 = pneg %p59
      %p211 = scmp.lt.s32.totalorder %s15, 2
      %s212 = scalar_select %p211, %s15, 2
      %s213 = smul.addr %s212, 48
      %s214 = smul.addr %s213, 8
      %s215 = scalar_lea.vmem %s2, %s214
      %p216 = pneg %p88
      %p217 = pneg %p85
      %p218 = scmp.lt.s32.totalorder %s15, 2
      %s219 = scalar_select %p218, %s15, 2
      %s220 = smul.addr %s219, 8
      %s221 = scalar_lea.vmem %s3, %s220
      %p222 = pneg %p114
      %p223 = pneg %p111
      %p224 = pneg %p140
      %p225 = pneg %p137
      %p226 = scmp.lt.s32.totalorder %s15, 2
      %s227 = scalar_select %p226, %s15, 2
      %s228 = smul.addr %s227, 2
      %s229 = smul.addr %s228, 2
      %s230 = scalar_lea.vmem %s4, %s229
      %p231 = scmp.lt.s32.totalorder %s15, 2
      %s232 = scalar_select %p231, %s15, 2
      %s233 = smul.addr %s232, 2
      %s234 = smul.addr %s233, 2
      %s235 = scalar_lea.vmem %s0, %s234
      %p236 = scmp.lt.s32.totalorder %s15, 2
      %s237 = scalar_select %p236, %s15, 2
      %s238 = smul.addr %s237, 2
      %s239 = smul.addr %s238, 4
      %s240 = scalar_lea.vmem %s1, %s239
      %p241 = scmp.lt.s32.totalorder %s15, 2
      %s242 = scalar_select %p241, %s15, 2
      %s243 = smul.addr %s242, 48
      %s244 = smul.addr %s243, 8
      %s245 = scalar_lea.vmem %s2, %s244
      %p246 = scmp.lt.s32.totalorder %s15, 2
      %s247 = scalar_select %p246, %s15, 2
      %s248 = smul.addr %s247, 8
      %s249 = scalar_lea.vmem %s3, %s248
      %p250 = scmp.lt.s32.totalorder %s15, 2
      %s251 = scalar_select %p250, %s15, 2
      %s252 = smul.addr %s251, 2
      %s253 = smul.addr %s252, 2
      %s254 = scalar_lea.vmem %s4, %s253
      %v255 = vld [vmem:[%s245] sm:$0xff]
      %v256 = vld [vmem:[%s245 + $0x8] sm:$0xff]
      %v257 = vld [vmem:[%s245 + $0x10] sm:$0xff]
      %v258 = vld [vmem:[%s245 + $0x18] sm:$0xff]
      %v259 = vld [vmem:[%s245 + $0x20] sm:$0xff]
      %v260 = vld [vmem:[%s245 + $0x28] sm:$0xff]
      %v261 = vld [vmem:[%s245 + $0x30] sm:$0xff]
      %v262 = vld [vmem:[%s245 + $0x38] sm:$0xff]
      %v263 = vld [vmem:[%s245 + $0x40] sm:$0xff]
      %v264 = vld [vmem:[%s245 + $0x48] sm:$0xff]
      %v265 = vld [vmem:[%s245 + $0x50] sm:$0xff]
      %v266 = vld [vmem:[%s245 + $0x58] sm:$0xff]
      %v267 = vld [vmem:[%s245 + $0x60] sm:$0xff]
      %v268 = vld [vmem:[%s245 + $0x68] sm:$0xff]
      %v269 = vld [vmem:[%s245 + $0x70] sm:$0xff]
      %v270 = vld [vmem:[%s245 + $0x78] sm:$0xff]
      %v271 = vld [vmem:[%s245 + $0x80] sm:$0xff]
      %v272 = vld [vmem:[%s245 + $0x88] sm:$0xff]
      %v273 = vld [vmem:[%s245 + $0x90] sm:$0xff]
      %v274 = vld [vmem:[%s245 + $0x98] sm:$0xff]
      %v275 = vld [vmem:[%s245 + $0xa0] sm:$0xff]
      %v276 = vld [vmem:[%s245 + $0xa8] sm:$0xff]
      %v277 = vld [vmem:[%s245 + $0xb0] sm:$0xff]
      %v278 = vld [vmem:[%s245 + $0xb8] sm:$0xff]
      %v279 = vld [vmem:[%s245 + $0xc0] sm:$0xff]
      %v280 = vld [vmem:[%s245 + $0xc8] sm:$0xff]
      %v281 = vld [vmem:[%s245 + $0xd0] sm:$0xff]
      %v282 = vld [vmem:[%s245 + $0xd8] sm:$0xff]
      %v283 = vld [vmem:[%s245 + $0xe0] sm:$0xff]
      %v284 = vld [vmem:[%s245 + $0xe8] sm:$0xff]
      %v285 = vld [vmem:[%s245 + $0xf0] sm:$0xff]
      %v286 = vld [vmem:[%s245 + $0xf8] sm:$0xff]
      %v287 = vld [vmem:[%s245 + $0x100] sm:$0xff]
      %v288 = vld [vmem:[%s245 + $0x108] sm:$0xff]
      %v289 = vld [vmem:[%s245 + $0x110] sm:$0xff]
      %v290 = vld [vmem:[%s245 + $0x118] sm:$0xff]
      %v291 = vld [vmem:[%s245 + $0x120] sm:$0xff]
      %v292 = vld [vmem:[%s245 + $0x128] sm:$0xff]
      %v293 = vld [vmem:[%s245 + $0x130] sm:$0xff]
      %v294 = vld [vmem:[%s245 + $0x138] sm:$0xff]
      %v295 = vld [vmem:[%s245 + $0x140] sm:$0xff]
      %v296 = vld [vmem:[%s245 + $0x148] sm:$0xff]
      %v297 = vld [vmem:[%s245 + $0x150] sm:$0xff]
      %v298 = vld [vmem:[%s245 + $0x158] sm:$0xff]
      %v299 = vld [vmem:[%s245 + $0x160] sm:$0xff]
      %v300 = vld [vmem:[%s245 + $0x168] sm:$0xff]
      %v301 = vld [vmem:[%s245 + $0x170] sm:$0xff]
      %v302 = vld [vmem:[%s245 + $0x178] sm:$0xff]
      %v303 = vld [vmem:[%s249] sm:$0x1]
      %v304 = vld [vmem:[%s249 + $0x1] sm:$0x1]
      %v305 = vld [vmem:[%s249 + $0x2] sm:$0x1]
      %v306 = vld [vmem:[%s249 + $0x3] sm:$0x1]
      %v307 = vld [vmem:[%s249 + $0x4] sm:$0x1]
      %v308 = vld [vmem:[%s249 + $0x5] sm:$0x1]
      %v309 = vld [vmem:[%s249 + $0x6] sm:$0x1]
      %v310 = vld [vmem:[%s249 + $0x7] sm:$0x1]
      %v311 = vld [vmem:[%s235] sm:$0x3]
      %v312 = vld [vmem:[%s240] sm:$0xf]
      %v313 = vperm.slane %v303, 0
      %vm314 = vcmask 523264
      %v316 = vsel %vm314, %v311, 0
      %318 = vmatpush.msra.mxu0 0.0
      %319 = vmatpush.msra.mxu0 0.0
      %320 = vmatpush.msra.mxu0 0.0
      %321 = vmatpush.msra.mxu0 0.0
      %322 = vmatpush.msra.mxu0 0.0
      %323 = vmatpush.msra.mxu0 0.0
      %324 = vmatpush.msra.mxu0 0.0
      %325 = vmatpush.msra.mxu0 0.0
      %326 = vmatpush.msra.mxu0 %v262
      %327 = vmatpush.msra.mxu0 %v261
      %328 = vmatpush.msra.mxu0 %v260
      %329 = vmatpush.msra.mxu0 %v259
      %330 = vmatpush.msra.mxu0 %v258
      %331 = vmatpush.msra.mxu0 %v257
      %332 = vmatpush.msra.mxu0 %v256
      %333 = vmatpush.msra.mxu0 %v255
      %334 = vmatmul.f32.gmra.mxu0 %v316
      %v335 = vpop.f32.mrf.mxu0
      %v336 = vadd.f32 %v313, %v335
      %337 = vdwg.mxu0
      %v338 = vperm.slane %v304, 0
      %v340 = vsel %vm314, %v312, 0
      %342 = vmatpush.msra.mxu0 0.0
      %343 = vmatpush.msra.mxu0 0.0
      %344 = vmatpush.msra.mxu0 0.0
      %345 = vmatpush.msra.mxu0 0.0
      %346 = vmatpush.msra.mxu0 0.0
      %347 = vmatpush.msra.mxu0 0.0
      %348 = vmatpush.msra.mxu0 0.0
      %349 = vmatpush.msra.mxu0 0.0
      %350 = vmatpush.msra.mxu0 %v270
      %351 = vmatpush.msra.mxu0 %v269
      %352 = vmatpush.msra.mxu0 %v268
      %353 = vmatpush.msra.mxu0 %v267
      %354 = vmatpush.msra.mxu0 %v266
      %355 = vmatpush.msra.mxu0 %v265
      %356 = vmatpush.msra.mxu0 %v264
      %357 = vmatpush.msra.mxu0 %v263
      %358 = vmatmul.f32.gmra.mxu0 %v340
      %v359 = vpop.f32.mrf.mxu0
      %v360 = vadd.f32 %v338, %v359
      %361 = vdwg.mxu0
      %v362 = vperm.slane %v305, 0
      %363 = vmatpush.msra.mxu0 0.0
      %364 = vmatpush.msra.mxu0 0.0
      %365 = vmatpush.msra.mxu0 0.0
      %366 = vmatpush.msra.mxu0 0.0
      %367 = vmatpush.msra.mxu0 0.0
      %368 = vmatpush.msra.mxu0 0.0
      %369 = vmatpush.msra.mxu0 0.0
      %370 = vmatpush.msra.mxu0 0.0
      %371 = vmatpush.msra.mxu0 %v278
      %372 = vmatpush.msra.mxu0 %v277
      %373 = vmatpush.msra.mxu0 %v276
      %374 = vmatpush.msra.mxu0 %v275
      %375 = vmatpush.msra.mxu0 %v274
      %376 = vmatpush.msra.mxu0 %v273
      %377 = vmatpush.msra.mxu0 %v272
      %378 = vmatpush.msra.mxu0 %v271
      %379 = vmatmul.f32.gmra.mxu0 %v340
      %v380 = vpop.f32.mrf.mxu0
      %v381 = vadd.f32 %v362, %v380
      %382 = vdwg.mxu0
      %v384 = vsel %vm314, %v336, 0
      %v387 = vsel %vm314, %v360, 0
      %389 = vmatpush.xpose.msra.mxu0 0.0
      %390 = vmatpush.xpose.msra.mxu0 0.0
      %391 = vmatpush.xpose.msra.mxu0 0.0
      %392 = vmatpush.xpose.msra.mxu0 0.0
      %393 = vmatpush.xpose.msra.mxu0 0.0
      %394 = vmatpush.xpose.msra.mxu0 0.0
      %395 = vmatpush.xpose.msra.mxu0 0.0
      %396 = vmatpush.xpose.msra.mxu0 0.0
      %397 = vmatpush.xpose.msra.mxu0 0.0
      %398 = vmatpush.xpose.msra.mxu0 0.0
      %399 = vmatpush.xpose.msra.mxu0 0.0
      %400 = vmatpush.xpose.msra.mxu0 0.0
      %401 = vmatpush.xpose.msra.mxu0 0.0
      %402 = vmatpush.xpose.msra.mxu0 0.0
      %403 = vmatpush.xpose.msra.mxu0 0.0
      %404 = vmatpush.xpose.msra.mxu0 %v387
      %405 = vmatmul.f32.gmra.mxu0 %v384
      %v406 = vpop.f32.mrf.mxu0
      %v407 = vadd.f32 0.0, %v406
      %408 = vdwg.mxu0
      %v409 = vmul.f32 %v407, 0.125
      %vm410 = vcmask 25600
      %v411 = vsel %vm410, %v409, -inf
      %412 = vmax.xlane.f32.xlu0 %v411
      %v413 = vpop.xlane.xlu0 %412
      %v414 = vsub.f32 %v409, %v413
      %v415 = vmul.f32 %v414, 1.442695
      %v416 = vpow.pop %v415
      %v417 = vsel %vm410, %v416, 0.0
      %418 = vadd.xlane.f32.xlu0 %v417
      %v419 = vpop.xlane.xlu0 %418
      %v420 = vrcp.pop %v419
      %v421 = vmul.f32 %v419, %v420
      %v422 = vsub.f32 1.0, %v421
      %v423 = vmul.f32 %v420, %v422
      %v424 = vadd.f32 %v420, %v423
      %vm425 = vweird.f32 %v419
      %vm426 = vweird.f32 %v420
      %vm427 = vmor %vm425, %vm426
      %v428 = vsel %vm427, %v420, %v424
      %v429 = vand.u32 2147483647, %v419
      %vm430 = vcmp.eq.f32.partialorder %v429, 8.507059e+37
      %v431 = vand.u32 %v419, 2147483648
      %v432 = vor.u32 1.1754944e-38, %v431
      %v433 = vsel %vm430, %v432, %v428
      %v434 = vmul.f32 %v416, %v433
      %vm435 = vcmask 31744
      %v437 = vsel %vm435, %v434, 0
      %vm439 = vcmask 1043456
      %v441 = vsel %vm439, %v381, 0
      %443 = vmatpush.msra.mxu0 0.0
      %444 = vmatpush.msra.mxu0 0.0
      %445 = vmatpush.msra.mxu0 0.0
      %446 = vmatpush.msra.mxu0 0.0
      %447 = vmatpush.msra.mxu0 0.0
      %448 = vmatpush.msra.mxu0 0.0
      %449 = vmatpush.msra.mxu0 0.0
      %450 = vmatpush.msra.mxu0 0.0
      %451 = vmatpush.msra.mxu0 0.0
      %452 = vmatpush.msra.mxu0 0.0
      %453 = vmatpush.msra.mxu0 0.0
      %454 = vmatpush.msra.mxu0 0.0
      %455 = vmatpush.msra.mxu0 0.0
      %456 = vmatpush.msra.mxu0 0.0
      %457 = vmatpush.msra.mxu0 0.0
      %458 = vmatpush.msra.mxu0 %v441
      %459 = vmatmul.f32.gmra.mxu0 %v437
      %v460 = vpop.f32.mrf.mxu0
      %v461 = vadd.f32 0.0, %v460
      %462 = vdwg.mxu0
      %v463 = vperm.slane %v306, 0
      %v465 = vsel %vm314, %v461, 0
      %467 = vmatpush.msra.mxu0 0.0
      %468 = vmatpush.msra.mxu0 0.0
      %469 = vmatpush.msra.mxu0 0.0
      %470 = vmatpush.msra.mxu0 0.0
      %471 = vmatpush.msra.mxu0 0.0
      %472 = vmatpush.msra.mxu0 0.0
      %473 = vmatpush.msra.mxu0 0.0
      %474 = vmatpush.msra.mxu0 0.0
      %475 = vmatpush.msra.mxu0 %v286
      %476 = vmatpush.msra.mxu0 %v285
      %477 = vmatpush.msra.mxu0 %v284
      %478 = vmatpush.msra.mxu0 %v283
      %479 = vmatpush.msra.mxu0 %v282
      %480 = vmatpush.msra.mxu0 %v281
      %481 = vmatpush.msra.mxu0 %v280
      %482 = vmatpush.msra.mxu0 %v279
      %483 = vmatmul.f32.gmra.mxu0 %v465
      %v484 = vpop.f32.mrf.mxu0
      %v485 = vadd.f32 %v463, %v484
      %486 = vdwg.mxu0
      %v487 = vadd.f32 %v485, %v311
      %vm488 = vcmask 517120
      %v489 = vsel %vm488, %v487, 0.0
      %490 = vadd.xlane.f32.xlu0 %v489
      %v491 = vpop.xlane.xlu0 %490
      %v492 = vrcp.pop 64.0
      %v493 = vmul.f32 64.0, %v492
      %v494 = vsub.f32 1.0, %v493
      %v495 = vmul.f32 %v492, %v494
      %v496 = vadd.f32 %v492, %v495
      %vm497 = vweird.f32 %v492
      %v498 = vsel %vm497, %v492, %v496
      %v499 = vmul.f32 %v491, %v498
      %v500 = vsub.f32 %v487, %v499
      %v501 = vmul.f32 %v500, %v500
      %v502 = vsel %vm488, %v501, 0.0
      %503 = vadd.xlane.f32.xlu0 %v502
      %v504 = vpop.xlane.xlu0 %503
      %v505 = vmul.f32 %v504, %v498
      %v506 = vadd.f32 %v505, 1e-05
      %v507 = vrsqrt.pop %v506
      %v508 = vmul.f32 %v507, %v506
      %v509 = vmul.f32 %v508, %v507
      %v510 = vmul.f32 0.5, %v509
      %v511 = vsub.f32 1.5, %v510
      %v512 = vmul.f32 %v507, %v511
      %vm513 = vweird.f32 %v506
      %vm514 = vweird.f32 %v507
      %vm515 = vmor %vm513, %vm514
      %v516 = vsel %vm515, %v507, %v512
      %v517 = vmul.f32 %v500, %v516
      %v518 = vperm.slane %v307, 0
      %v519 = vmul.f32 %v517, %v518
      %v520 = vperm.slane %v308, 0
      %v521 = vadd.f32 %v519, %v520
      %v522 = vperm.slane %v309, 0
      %v524 = vsel %vm314, %v521, 0
      %526 = vmatpush.msra.mxu0 0.0
      %527 = vmatpush.msra.mxu0 0.0
      %528 = vmatpush.msra.mxu0 0.0
      %529 = vmatpush.msra.mxu0 0.0
      %530 = vmatpush.msra.mxu0 0.0
      %531 = vmatpush.msra.mxu0 0.0
      %532 = vmatpush.msra.mxu0 0.0
      %533 = vmatpush.msra.mxu0 0.0
      %534 = vmatpush.msra.mxu0 %v294
      %535 = vmatpush.msra.mxu0 %v293
      %536 = vmatpush.msra.mxu0 %v292
      %537 = vmatpush.msra.mxu0 %v291
      %538 = vmatpush.msra.mxu0 %v290
      %539 = vmatpush.msra.mxu0 %v289
      %540 = vmatpush.msra.mxu0 %v288
      %541 = vmatpush.msra.mxu0 %v287
      %542 = vmatmul.f32.gmra.mxu0 %v524
      %v543 = vpop.f32.mrf.mxu0
      %v544 = vadd.f32 %v522, %v543
      %545 = vdwg.mxu0
      %v546 = vmax.f32 %v544, 0.0
      %v547 = vperm.slane %v310, 0
      %v549 = vsel %vm314, %v546, 0
      %551 = vmatpush.msra.mxu0 0.0
      %552 = vmatpush.msra.mxu0 0.0
      %553 = vmatpush.msra.mxu0 0.0
      %554 = vmatpush.msra.mxu0 0.0
      %555 = vmatpush.msra.mxu0 0.0
      %556 = vmatpush.msra.mxu0 0.0
      %557 = vmatpush.msra.mxu0 0.0
      %558 = vmatpush.msra.mxu0 0.0
      %559 = vmatpush.msra.mxu0 %v302
      %560 = vmatpush.msra.mxu0 %v301
      %561 = vmatpush.msra.mxu0 %v300
      %562 = vmatpush.msra.mxu0 %v299
      %563 = vmatpush.msra.mxu0 %v298
      %564 = vmatpush.msra.mxu0 %v297
      %565 = vmatpush.msra.mxu0 %v296
      %566 = vmatpush.msra.mxu0 %v295
      %567 = vmatmul.f32.gmra.mxu0 %v549
      %v568 = vpop.f32.mrf.mxu0
      %v569 = vadd.f32 %v547, %v568
      %570 = vdwg.mxu0
      %571 = vst.msk [vmem:[%s254] sm:$0x3] %vm488, %v569
      %s572 = scalar_lea.vmem %s235, 2
      %v573 = vld [vmem:[%s572] sm:$0x3]
      %s574 = scalar_lea.vmem %s240, 4
      %v575 = vld [vmem:[%s574] sm:$0xf]
      %v577 = vsel %vm314, %v573, 0
      %579 = vmatpush.msra.mxu0 0.0
      %580 = vmatpush.msra.mxu0 0.0
      %581 = vmatpush.msra.mxu0 0.0
      %582 = vmatpush.msra.mxu0 0.0
      %583 = vmatpush.msra.mxu0 0.0
      %584 = vmatpush.msra.mxu0 0.0
      %585 = vmatpush.msra.mxu0 0.0
      %586 = vmatpush.msra.mxu0 0.0
      %587 = vmatpush.msra.mxu0 %v262
      %588 = vmatpush.msra.mxu0 %v261
      %589 = vmatpush.msra.mxu0 %v260
      %590 = vmatpush.msra.mxu0 %v259
      %591 = vmatpush.msra.mxu0 %v258
      %592 = vmatpush.msra.mxu0 %v257
      %593 = vmatpush.msra.mxu0 %v256
      %594 = vmatpush.msra.mxu0 %v255
      %595 = vmatmul.f32.gmra.mxu0 %v577
      %v596 = vpop.f32.mrf.mxu0
      %v597 = vadd.f32 %v313, %v596
      %598 = vdwg.mxu0
      %v600 = vsel %vm314, %v575, 0
      %602 = vmatpush.msra.mxu0 0.0
      %603 = vmatpush.msra.mxu0 0.0
      %604 = vmatpush.msra.mxu0 0.0
      %605 = vmatpush.msra.mxu0 0.0
      %606 = vmatpush.msra.mxu0 0.0
      %607 = vmatpush.msra.mxu0 0.0
      %608 = vmatpush.msra.mxu0 0.0
      %609 = vmatpush.msra.mxu0 0.0
      %610 = vmatpush.msra.mxu0 %v270
      %611 = vmatpush.msra.mxu0 %v269
      %612 = vmatpush.msra.mxu0 %v268
      %613 = vmatpush.msra.mxu0 %v267
      %614 = vmatpush.msra.mxu0 %v266
      %615 = vmatpush.msra.mxu0 %v265
      %616 = vmatpush.msra.mxu0 %v264
      %617 = vmatpush.msra.mxu0 %v263
      %618 = vmatmul.f32.gmra.mxu0 %v600
      %v619 = vpop.f32.mrf.mxu0
      %v620 = vadd.f32 %v338, %v619
      %621 = vdwg.mxu0
      %622 = vmatpush.msra.mxu0 0.0
      %623 = vmatpush.msra.mxu0 0.0
      %624 = vmatpush.msra.mxu0 0.0
      %625 = vmatpush.msra.mxu0 0.0
      %626 = vmatpush.msra.mxu0 0.0
      %627 = vmatpush.msra.mxu0 0.0
      %628 = vmatpush.msra.mxu0 0.0
      %629 = vmatpush.msra.mxu0 0.0
      %630 = vmatpush.msra.mxu0 %v278
      %631 = vmatpush.msra.mxu0 %v277
      %632 = vmatpush.msra.mxu0 %v276
      %633 = vmatpush.msra.mxu0 %v275
      %634 = vmatpush.msra.mxu0 %v274
      %635 = vmatpush.msra.mxu0 %v273
      %636 = vmatpush.msra.mxu0 %v272
      %637 = vmatpush.msra.mxu0 %v271
      %638 = vmatmul.f32.gmra.mxu0 %v600
      %v639 = vpop.f32.mrf.mxu0
      %v640 = vadd.f32 %v362, %v639
      %641 = vdwg.mxu0
      %v643 = vsel %vm314, %v597, 0
      %v646 = vsel %vm314, %v620, 0
      %648 = vmatpush.xpose.msra.mxu0 0.0
      %649 = vmatpush.xpose.msra.mxu0 0.0
      %650 = vmatpush.xpose.msra.mxu0 0.0
      %651 = vmatpush.xpose.msra.mxu0 0.0
      %652 = vmatpush.xpose.msra.mxu0 0.0
      %653 = vmatpush.xpose.msra.mxu0 0.0
      %654 = vmatpush.xpose.msra.mxu0 0.0
      %655 = vmatpush.xpose.msra.mxu0 0.0
      %656 = vmatpush.xpose.msra.mxu0 0.0
      %657 = vmatpush.xpose.msra.mxu0 0.0
      %658 = vmatpush.xpose.msra.mxu0 0.0
      %659 = vmatpush.xpose.msra.mxu0 0.0
      %660 = vmatpush.xpose.msra.mxu0 0.0
      %661 = vmatpush.xpose.msra.mxu0 0.0
      %662 = vmatpush.xpose.msra.mxu0 0.0
      %663 = vmatpush.xpose.msra.mxu0 %v646
      %664 = vmatmul.f32.gmra.mxu0 %v643
      %v665 = vpop.f32.mrf.mxu0
      %v666 = vadd.f32 0.0, %v665
      %667 = vdwg.mxu0
      %v668 = vmul.f32 %v666, 0.125
      %v669 = vsel %vm410, %v668, -inf
      %670 = vmax.xlane.f32.xlu0 %v669
      %v671 = vpop.xlane.xlu0 %670
      %v672 = vsub.f32 %v668, %v671
      %v673 = vmul.f32 %v672, 1.442695
      %v674 = vpow.pop %v673
      %v675 = vsel %vm410, %v674, 0.0
      %676 = vadd.xlane.f32.xlu0 %v675
      %v677 = vpop.xlane.xlu0 %676
      %v678 = vrcp.pop %v677
      %v679 = vmul.f32 %v677, %v678
      %v680 = vsub.f32 1.0, %v679
      %v681 = vmul.f32 %v678, %v680
      %v682 = vadd.f32 %v678, %v681
      %vm683 = vweird.f32 %v677
      %vm684 = vweird.f32 %v678
      %vm685 = vmor %vm683, %vm684
      %v686 = vsel %vm685, %v678, %v682
      %v687 = vand.u32 2147483647, %v677
      %vm688 = vcmp.eq.f32.partialorder %v687, 8.507059e+37
      %v689 = vand.u32 %v677, 2147483648
      %v690 = vor.u32 1.1754944e-38, %v689
      %v691 = vsel %vm688, %v690, %v686
      %v692 = vmul.f32 %v674, %v691
      %v694 = vsel %vm435, %v692, 0
      %v697 = vsel %vm439, %v640, 0
      %699 = vmatpush.msra.mxu0 0.0
      %700 = vmatpush.msra.mxu0 0.0
      %701 = vmatpush.msra.mxu0 0.0
      %702 = vmatpush.msra.mxu0 0.0
      %703 = vmatpush.msra.mxu0 0.0
      %704 = vmatpush.msra.mxu0 0.0
      %705 = vmatpush.msra.mxu0 0.0
      %706 = vmatpush.msra.mxu0 0.0
      %707 = vmatpush.msra.mxu0 0.0
      %708 = vmatpush.msra.mxu0 0.0
      %709 = vmatpush.msra.mxu0 0.0
      %710 = vmatpush.msra.mxu0 0.0
      %711 = vmatpush.msra.mxu0 0.0
      %712 = vmatpush.msra.mxu0 0.0
      %713 = vmatpush.msra.mxu0 0.0
      %714 = vmatpush.msra.mxu0 %v697
      %715 = vmatmul.f32.gmra.mxu0 %v694
      %v716 = vpop.f32.mrf.mxu0
      %v717 = vadd.f32 0.0, %v716
      %718 = vdwg.mxu0
      %v720 = vsel %vm314, %v717, 0
      %722 = vmatpush.msra.mxu0 0.0
      %723 = vmatpush.msra.mxu0 0.0
      %724 = vmatpush.msra.mxu0 0.0
      %725 = vmatpush.msra.mxu0 0.0
      %726 = vmatpush.msra.mxu0 0.0
      %727 = vmatpush.msra.mxu0 0.0
      %728 = vmatpush.msra.mxu0 0.0
      %729 = vmatpush.msra.mxu0 0.0
      %730 = vmatpush.msra.mxu0 %v286
      %731 = vmatpush.msra.mxu0 %v285
      %732 = vmatpush.msra.mxu0 %v284
      %733 = vmatpush.msra.mxu0 %v283
      %734 = vmatpush.msra.mxu0 %v282
      %735 = vmatpush.msra.mxu0 %v281
      %736 = vmatpush.msra.mxu0 %v280
      %737 = vmatpush.msra.mxu0 %v279
      %738 = vmatmul.f32.gmra.mxu0 %v720
      %v739 = vpop.f32.mrf.mxu0
      %v740 = vadd.f32 %v463, %v739
      %741 = vdwg.mxu0
      %v742 = vadd.f32 %v740, %v573
      %v743 = vsel %vm488, %v742, 0.0
      %744 = vadd.xlane.f32.xlu0 %v743
      %v745 = vpop.xlane.xlu0 %744
      %v746 = vmul.f32 %v745, %v498
      %v747 = vsub.f32 %v742, %v746
      %v748 = vmul.f32 %v747, %v747
      %v749 = vsel %vm488, %v748, 0.0
      %750 = vadd.xlane.f32.xlu0 %v749
      %v751 = vpop.xlane.xlu0 %750
      %v752 = vmul.f32 %v751, %v498
      %v753 = vadd.f32 %v752, 1e-05
      %v754 = vrsqrt.pop %v753
      %v755 = vmul.f32 %v754, %v753
      %v756 = vmul.f32 %v755, %v754
      %v757 = vmul.f32 0.5, %v756
      %v758 = vsub.f32 1.5, %v757
      %v759 = vmul.f32 %v754, %v758
      %vm760 = vweird.f32 %v753
      %vm761 = vweird.f32 %v754
      %vm762 = vmor %vm760, %vm761
      %v763 = vsel %vm762, %v754, %v759
      %v764 = vmul.f32 %v747, %v763
      %v765 = vmul.f32 %v764, %v518
      %v766 = vadd.f32 %v765, %v520
      %v768 = vsel %vm314, %v766, 0
      %770 = vmatpush.msra.mxu0 0.0
      %771 = vmatpush.msra.mxu0 0.0
      %772 = vmatpush.msra.mxu0 0.0
      %773 = vmatpush.msra.mxu0 0.0
      %774 = vmatpush.msra.mxu0 0.0
      %775 = vmatpush.msra.mxu0 0.0
      %776 = vmatpush.msra.mxu0 0.0
      %777 = vmatpush.msra.mxu0 0.0
      %778 = vmatpush.msra.mxu0 %v294
      %779 = vmatpush.msra.mxu0 %v293
      %780 = vmatpush.msra.mxu0 %v292
      %781 = vmatpush.msra.mxu0 %v291
      %782 = vmatpush.msra.mxu0 %v290
      %783 = vmatpush.msra.mxu0 %v289
      %784 = vmatpush.msra.mxu0 %v288
      %785 = vmatpush.msra.mxu0 %v287
      %786 = vmatmul.f32.gmra.mxu0 %v768
      %v787 = vpop.f32.mrf.mxu0
      %v788 = vadd.f32 %v522, %v787
      %789 = vdwg.mxu0
      %v790 = vmax.f32 %v788, 0.0
      %v792 = vsel %vm314, %v790, 0
      %794 = vmatpush.msra.mxu0 0.0
      %795 = vmatpush.msra.mxu0 0.0
      %796 = vmatpush.msra.mxu0 0.0
      %797 = vmatpush.msra.mxu0 0.0
      %798 = vmatpush.msra.mxu0 0.0
      %799 = vmatpush.msra.mxu0 0.0
      %800 = vmatpush.msra.mxu0 0.0
      %801 = vmatpush.msra.mxu0 0.0
      %802 = vmatpush.msra.mxu0 %v302
      %803 = vmatpush.msra.mxu0 %v301
      %804 = vmatpush.msra.mxu0 %v300
      %805 = vmatpush.msra.mxu0 %v299
      %806 = vmatpush.msra.mxu0 %v298
      %807 = vmatpush.msra.mxu0 %v297
      %808 = vmatpush.msra.mxu0 %v296
      %809 = vmatpush.msra.mxu0 %v295
      %810 = vmatmul.f32.gmra.mxu0 %v792
      %v811 = vpop.f32.mrf.mxu0
      %v812 = vadd.f32 %v547, %v811
      %813 = vdwg.mxu0
      %s814 = scalar_lea.vmem %s254, 2
      %815 = vst.msk [vmem:[%s814] sm:$0x3] %vm488, %v812
      %p816 = scmp.lt.s32.totalorder %s15, 2
      %s817 = scalar_select %p816, %s15, 2
      %s818 = smul.addr %s817, 2
      %s819 = smul.addr %s818, 2
      %s820 = scalar_lea.vmem %s4, %s819
      // Predicated region
      $region37: #{_lambda_.13} parent=35 // pred_check
        %p821 = pneg %p137
      $region38: #{_lambda_.13} parent=35 // pred_check_branch
        %823 = sbr.rel (%p821) target = $region40
      $region39: #{_lambda_.13} parent=35 // pred_region
        _
      $region40: #{_lambda_.13} parent=35 // pred_fallthru
        _
    $region36: #{_lambda_.13} parent=5 // pred_fallthru
      _
    %p824 = scmp.le.s32.totalorder 2, %s10
    // Predicated region
    $region41: #{_lambda_.13} parent=5 // pred_check
      %p825 = pneg %p824
    $region42: #{_lambda_.13} parent=5 // pred_check_branch
      %827 = sbr.rel (%p825) target = $region44
    $region43: #{_lambda_.13} parent=5 // pred_region
      %s828 = ssub.s32 %s10, 2
      // Predicated region
      $region45: #{_lambda_.13} parent=43 // pred_check
        %p829 = pneg %p143
      $region46: #{_lambda_.13} parent=43 // pred_check_branch
        %831 = sbr.rel (%p829) target = $region48
      $region47: #{_lambda_.13} parent=43 // pred_region
        %p832 = scmp.lt.s32.totalorder %s16, 2
        %s833 = scalar_select %p832, %s16, 2
        %s834 = smul.addr %s833, 2
        %s835 = smul.addr %s834, 2
        %s836 = scalar_lea.vmem %s4, %s835
      $region48: #{_lambda_.13} parent=43 // pred_fallthru
        _
    $region44: #{_lambda_.13} parent=5 // pred_fallthru
      _
  $region6: #{_lambda_.13} parent=0 // loop_footer
    %s14 = sadd.s32 1, %s10
  $region7: #{_lambda_.13} parent=0 // loop_footer_branch
    %9 = sbr.rel target = $region3
  $region8: #{_lambda_.13} parent=0 // loop_exit
    _

// kernel: _lambda_.15
$region0: #{_lambda_.15}
  #allocation0 [shape = 'u32[]', space=smem, size = 0x4, offset = 0x4, fixed_abs, tag = 'smem constant byte address 0x4 - core index']
  #allocation1 [shape = 'u32[72,128]{1,0:T(1,128)}', space=vmem, size = 0x9000, scoped, tag = 'internal scratch']
  #allocation2 [shape = 'f32[2,64]{1,0:T(2,128)}', space=vmem, size = 0x400, scoped, tag = 'scratch operand']
  #allocation3 [shape = 'f32[2,64]{1,0:T(2,128)}', space=vmem, size = 0x400, scoped, tag = 'scratch operand']
  %s0 = inlined_call_operand.vmem [shape: f32[2,2,256], index: 0, kind: input, shape index: {}]
  %s1 = inlined_call_operand.vmem [shape: f32[2,2,1], index: 1, kind: input, shape index: {}]
  %s2 = inlined_call_operand.vmem [shape: f32[2,128], index: 2, kind: input, shape index: {}]
  %s3 = inlined_call_operand.vmem [shape: f32[64,256], index: 3, kind: input, shape index: {}]
  %s4 = inlined_call_operand.vmem [shape: f32[3,256], index: 4, kind: input, shape index: {}]
  %s5 = inlined_call_operand.vmem [shape: f32[2,64], index: 5, kind: input, shape index: {}]
  %s6 = inlined_call_operand.hbm [shape: f32[2,2,64], index: 6, kind: output, shape index: {0}]
  %s7 = inlined_call_operand.vmem [shape: f32[2,64], index: 7, kind: output, shape index: {1}]
  %s8 = inlined_call_operand.vmem [shape: f32[2,64], index: 8, kind: output, shape index: {2}]
  %9 = xla_tuple %s6, %s7, %s8
  %s10 = sld [smem:[#allocation0]]
  $region58: #{_lambda_.15} parent=0
    _
  %s12 = ssub.s32 1, %s10
  %s13 = scalar_select 0, %s12, %s10
  $region1: #{_lambda_.15} parent=0
    #allocation4 [shape = 'u8[2048]{0}', space=vmem, size = 0x800, scoped, tag = 'output window, operand 0, single buffered']
    #allocation5 [shape = 's32[1]{0}', space=sflag, size = 0x4, scoped, tag = 'scoped memory for _lambda_.15']
    %14 = vsyncpa [#allocation5], 0
    // Predicated region
    $region2: #{_lambda_.15} parent=1 // pred_check
      _
    $region3: #{_lambda_.15} parent=1 // pred_check_branch
      %16 = sbr.rel (0) target = $region5
    $region4: #{_lambda_.15} parent=1 // pred_region
      _
    $region5: #{_lambda_.15} parent=1 // pred_fallthru
      _
    // Predicated region
    $region6: #{_lambda_.15} parent=1 // pred_check
      _
    $region7: #{_lambda_.15} parent=1 // pred_check_branch
      %18 = sbr.rel (0) target = $region9
    $region8: #{_lambda_.15} parent=1 // pred_region
      _
    $region9: #{_lambda_.15} parent=1 // pred_fallthru
      _
    // Predicated region
    $region10: #{_lambda_.15} parent=1 // pred_check
      _
    $region11: #{_lambda_.15} parent=1 // pred_check_branch
      %20 = sbr.rel (0) target = $region13
    $region12: #{_lambda_.15} parent=1 // pred_region
      _
    $region13: #{_lambda_.15} parent=1 // pred_fallthru
      _
    // Predicated region
    $region14: #{_lambda_.15} parent=1 // pred_check
      _
    $region15: #{_lambda_.15} parent=1 // pred_check_branch
      %22 = sbr.rel (0) target = $region17
    $region16: #{_lambda_.15} parent=1 // pred_region
      _
    $region17: #{_lambda_.15} parent=1 // pred_fallthru
      _
    // Predicated region
    $region18: #{_lambda_.15} parent=1 // pred_check
      _
    $region19: #{_lambda_.15} parent=1 // pred_check_branch
      %24 = sbr.rel (0) target = $region21
    $region20: #{_lambda_.15} parent=1 // pred_region
      _
    $region21: #{_lambda_.15} parent=1 // pred_fallthru
      _
    // Predicated region
    $region22: #{_lambda_.15} parent=1 // pred_check
      _
    $region23: #{_lambda_.15} parent=1 // pred_check_branch
      %26 = sbr.rel (0) target = $region25
    $region24: #{_lambda_.15} parent=1 // pred_region
      _
    $region25: #{_lambda_.15} parent=1 // pred_fallthru
      _
    %p27 = scmp.eq.s32.totalorder 0, 0
    // Predicated region
    $region26: #{_lambda_.15} parent=1 // pred_check
      %p28 = pneg %p27
    $region27: #{_lambda_.15} parent=1 // pred_check_branch
      %30 = sbr.rel (%p28) target = $region29
    $region28: #{_lambda_.15} parent=1 // pred_region
      %v31 = vld [vmem:[%s2] sm:$0x3]
      %vm32 = vcmask 517120
      %33 = vst.msk [vmem:[#allocation2] sm:$0x3] %vm32, %v31
      %v34 = vld [vmem:[%s2] sm:$0x3]
      %36 = vrot.lane.b32.xlu0 %v34, 64
      %v37 = vpop.permute.xlu0 %36
      %39 = vst.msk [vmem:[#allocation3] sm:$0x3] %vm32, %v37
    $region29: #{_lambda_.15} parent=1 // pred_fallthru
      _
    %v40 = vld [vmem:[%s4] ss:$4 sm:$0x3]
    %s41 = scalar_lea.vmem %s4, 1
    %v42 = vld [vmem:[%s41] ss:$4 sm:$0x3]
    %s43 = scalar_lea.vmem %s4, 2
    %v44 = vld [vmem:[%s43] ss:$4 sm:$0x3]
    %v45 = vld [vmem:[%s5] sm:$0x1]
    %v46 = vld [vmem:[%s5 + $0x1] sm:$0x1]
    %v47 = vld [vmem:[%s1] sm:$0x3]
    %v48 = vld [vmem:[#allocation2] sm:$0x3]
    %50 = vset.pattern.permute.xlu0 0
    %51 = vperm.xlu0 %50, %v47
    %v52 = vpop.permute.xlu0 %51
    %v54 = vmul.f32 %v48, %v52
    %v55 = vld [vmem:[#allocation3] sm:$0x3]
    %v56 = vmul.f32 %v55, %v52
    %v57 = vld [vmem:[%s3] sm:$0xff]
    %v58 = vld [vmem:[%s3 + $0x8] sm:$0xff]
    %v59 = vld [vmem:[%s3 + $0x10] sm:$0xff]
    %v60 = vld [vmem:[%s3 + $0x18] sm:$0xff]
    %v61 = vld [vmem:[%s3 + $0x20] sm:$0xff]
    %v62 = vld [vmem:[%s3 + $0x28] sm:$0xff]
    %v63 = vld [vmem:[%s3 + $0x30] sm:$0xff]
    %v64 = vld [vmem:[%s3 + $0x38] sm:$0xff]
    %v65 = vld [vmem:[%s3 + $0x40] sm:$0xff]
    %v66 = vld [vmem:[%s3 + $0x48] sm:$0xff]
    %v67 = vld [vmem:[%s3 + $0x50] sm:$0xff]
    %v68 = vld [vmem:[%s3 + $0x58] sm:$0xff]
    %v69 = vld [vmem:[%s3 + $0x60] sm:$0xff]
    %v70 = vld [vmem:[%s3 + $0x68] sm:$0xff]
    %v71 = vld [vmem:[%s3 + $0x70] sm:$0xff]
    %v72 = vld [vmem:[%s3 + $0x78] sm:$0xff]
    %vm73 = vcmask 523264
    %v75 = vsel %vm73, %v54, 0
    %77 = vmatpush.msra.mxu0 0.0
    %78 = vmatpush.msra.mxu0 0.0
    %79 = vmatpush.msra.mxu0 0.0
    %80 = vmatpush.msra.mxu0 0.0
    %81 = vmatpush.msra.mxu0 0.0
    %82 = vmatpush.msra.mxu0 0.0
    %83 = vmatpush.msra.mxu0 0.0
    %84 = vmatpush.msra.mxu0 0.0
    %85 = vmatpush.msra.mxu0 %v71
    %86 = vmatpush.msra.mxu0 %v69
    %87 = vmatpush.msra.mxu0 %v67
    %88 = vmatpush.msra.mxu0 %v65
    %89 = vmatpush.msra.mxu0 %v63
    %90 = vmatpush.msra.mxu0 %v61
    %91 = vmatpush.msra.mxu0 %v59
    %92 = vmatpush.msra.mxu0 %v57
    %93 = vmatmul.f32.gmra.mxu0 %v75
    %v94 = vpop.f32.mrf.mxu0
    %v95 = vadd.f32 0.0, %v94
    %96 = vdwg.mxu0
    %97 = vmatpush.msra.mxu0 0.0
    %98 = vmatpush.msra.mxu0 0.0
    %99 = vmatpush.msra.mxu0 0.0
    %100 = vmatpush.msra.mxu0 0.0
    %101 = vmatpush.msra.mxu0 0.0
    %102 = vmatpush.msra.mxu0 0.0
    %103 = vmatpush.msra.mxu0 0.0
    %104 = vmatpush.msra.mxu0 0.0
    %105 = vmatpush.msra.mxu0 %v72
    %106 = vmatpush.msra.mxu0 %v70
    %107 = vmatpush.msra.mxu0 %v68
    %108 = vmatpush.msra.mxu0 %v66
    %109 = vmatpush.msra.mxu0 %v64
    %110 = vmatpush.msra.mxu0 %v62
    %111 = vmatpush.msra.mxu0 %v60
    %112 = vmatpush.msra.mxu0 %v58
    %113 = vmatmul.f32.gmra.mxu0 %v75
    %v114 = vpop.f32.mrf.mxu0
    %v115 = vadd.f32 0.0, %v114
    %116 = vdwg.mxu0
    %vm117 = vcmask 1041408
    %v118 = vsel %vm117, %v95, 0.0
    %v119 = vsel %vm117, %v115, 0.0
    %v120 = vadd.f32 %v118, %v119
    %121 = vadd.xlane.f32.xlu0 %v120
    %v122 = vpop.xlane.xlu0 %121
    %v123 = vrcp.pop 256.0
    %v124 = vmul.f32 256.0, %v123
    %v125 = vsub.f32 1.0, %v124
    %v126 = vmul.f32 %v123, %v125
    %v127 = vadd.f32 %v123, %v126
    %vm128 = vweird.f32 %v123
    %v129 = vsel %vm128, %v123, %v127
    %v130 = vmul.f32 %v122, %v129
    %v131 = vsub.f32 %v95, %v130
    %v132 = vsub.f32 %v115, %v130
    %v133 = vmul.f32 %v131, %v131
    %v134 = vmul.f32 %v132, %v132
    %v135 = vsel %vm117, %v133, 0.0
    %v136 = vsel %vm117, %v134, 0.0
    %v137 = vadd.f32 %v135, %v136
    %138 = vadd.xlane.f32.xlu0 %v137
    %v139 = vpop.xlane.xlu0 %138
    %v140 = vmul.f32 %v139, %v129
    %v141 = vadd.f32 %v140, 1e-05
    %v142 = vrsqrt.pop %v141
    %v143 = vmul.f32 %v142, %v141
    %v144 = vmul.f32 %v143, %v142
    %v145 = vmul.f32 0.5, %v144
    %v146 = vsub.f32 1.5, %v145
    %v147 = vmul.f32 %v142, %v146
    %vm148 = vweird.f32 %v141
    %vm149 = vweird.f32 %v142
    %vm150 = vmor %vm148, %vm149
    %v151 = vsel %vm150, %v142, %v147
    %v152 = vmul.f32 %v131, %v151
    %v153 = vmul.f32 %v132, %v151
    %v155 = vperm.slane %v42, 0
    %v156 = vperm.slane %v42, 1
    %v159 = vmul.f32 %v152, %v155
    %v160 = vmul.f32 %v153, %v156
    %v162 = vperm.slane %v44, 0
    %v163 = vperm.slane %v44, 1
    %v166 = vadd.f32 %v159, %v162
    %v167 = vadd.f32 %v160, %v163
    %v168 = vld [vmem:[%s0] sm:$0xf]
    %v171 = vrot.slane %v167, 6
    %v172 = vsel %vm117, %v166, %v171
    %v174 = vadd.f32 %v168, %v172
    %v176 = vperm.slane %v40, 0
    %v177 = vperm.slane %v40, 1
    %v178 = vrot.slane %v177, 6
    %v179 = vsel %vm117, %v176, %v178
    %v181 = vadd.f32 %v174, %v179
    %v182 = vxor.u32 %v181, 2147483648
    %v183 = vmul.f32 %v182, 1.442695
    %v184 = vpow.pop %v183
    %v185 = vadd.f32 %v184, 1.0
    %v186 = vrcp.pop %v185
    %v187 = vmul.f32 %v185, %v186
    %v188 = vsub.f32 1.0, %v187
    %v189 = vmul.f32 %v186, %v188
    %v190 = vadd.f32 %v186, %v189
    %vm191 = vweird.f32 %v185
    %vm192 = vweird.f32 %v186
    %vm193 = vmor %vm191, %vm192
    %v194 = vsel %vm193, %v186, %v190
    %v195 = vand.u32 2147483647, %v185
    %vm196 = vcmp.eq.f32.partialorder %v195, 8.507059e+37
    %v197 = vand.u32 %v185, 2147483648
    %v198 = vor.u32 1.1754944e-38, %v197
    %v199 = vsel %vm196, %v198, %v194
    %v200 = vmul.f32 1.0, %v199
    %v202 = vrot.slane %v181, 2
    %v204 = vxor.u32 %v202, 2147483648
    %v205 = vmul.f32 %v204, 1.442695
    %v206 = vpow.pop %v205
    %v207 = vadd.f32 %v206, 1.0
    %v208 = vrcp.pop %v207
    %v209 = vmul.f32 %v207, %v208
    %v210 = vsub.f32 1.0, %v209
    %v211 = vmul.f32 %v208, %v210
    %v212 = vadd.f32 %v208, %v211
    %vm213 = vweird.f32 %v207
    %vm214 = vweird.f32 %v208
    %vm215 = vmor %vm213, %vm214
    %v216 = vsel %vm215, %v208, %v212
    %v217 = vand.u32 2147483647, %v207
    %vm218 = vcmp.eq.f32.partialorder %v217, 8.507059e+37
    %v219 = vand.u32 %v207, 2147483648
    %v220 = vor.u32 1.1754944e-38, %v219
    %v221 = vsel %vm218, %v220, %v216
    %v222 = vmul.f32 1.0, %v221
    %223 = vrot.lane.b32.xlu0 %v181, 64
    %v224 = vpop.permute.xlu0 %223
    %v225 = vrot.slane %v224, 2
    %v227 = vtanh.pop %v225
    %229 = vrot.lane.b32.xlu0 %v56, 64
    %v230 = vpop.permute.xlu0 %229
    %v232 = vmul.f32 %v200, %v230
    %v233 = vmul.f32 %v200, %v227
    %235 = vrot.lane.b32.xlu0 %v233, 64
    %v236 = vpop.permute.xlu0 %235
    %v238 = vadd.f32 %v232, %v236
    %240 = vst [vmem:[#allocation1] ss:$4 sm:$0xff] %v238
    %v241 = vld.sshfl [vmem:[#allocation1] sm:$0xff pattern:$0x73625140]
    %242 = vrot.lane.b32.xlu0 %v241, 64
    %v243 = vpop.permute.xlu0 %242
    %vm245 = vcmask 517120
    %v246 = vsel %vm245, %v243, 0.0
    %247 = vadd.xlane.f32.xlu0 %v246
    %v248 = vpop.xlane.xlu0 %247
    %v249 = vrcp.pop 64.0
    %v250 = vmul.f32 64.0, %v249
    %v251 = vsub.f32 1.0, %v250
    %v252 = vmul.f32 %v249, %v251
    %v253 = vadd.f32 %v249, %v252
    %vm254 = vweird.f32 %v249
    %v255 = vsel %vm254, %v249, %v253
    %v256 = vmul.f32 %v248, %v255
    %v257 = vsub.f32 %v238, %v256
    %v258 = vmul.f32 %v257, %v257
    %260 = vst [vmem:[#allocation1] ss:$4 sm:$0xff] %v258
    %v261 = vld.sshfl [vmem:[#allocation1] sm:$0xff pattern:$0x73625140]
    %262 = vrot.lane.b32.xlu0 %v261, 64
    %v263 = vpop.permute.xlu0 %262
    %v265 = vsel %vm245, %v263, 0.0
    %266 = vadd.xlane.f32.xlu0 %v265
    %v267 = vpop.xlane.xlu0 %266
    %v268 = vmul.f32 %v267, %v255
    %v269 = vadd.f32 %v268, 1e-05
    %v270 = vrsqrt.pop %v269
    %v271 = vmul.f32 %v270, %v269
    %v272 = vmul.f32 %v271, %v270
    %v273 = vmul.f32 0.5, %v272
    %v274 = vsub.f32 1.5, %v273
    %v275 = vmul.f32 %v270, %v274
    %vm276 = vweird.f32 %v269
    %vm277 = vweird.f32 %v270
    %vm278 = vmor %vm276, %vm277
    %v279 = vsel %vm278, %v270, %v275
    %v280 = vmul.f32 %v257, %v279
    %v281 = vperm.slane %v45, 0
    %283 = vrot.lane.b32.xlu0 %v281, 64
    %v284 = vpop.permute.xlu0 %283
    %v286 = vmul.f32 %v280, %v284
    %v287 = vperm.slane %v46, 0
    %289 = vrot.lane.b32.xlu0 %v287, 64
    %v290 = vpop.permute.xlu0 %289
    %v292 = vadd.f32 %v286, %v290
    %v293 = vtanh.pop %v292
    %295 = vrot.lane.b32.xlu0 %v293, 64
    %v296 = vpop.permute.xlu0 %295
    %v298 = vmul.f32 %v222, %v296
    %299 = vst.msk [vmem:[#allocation2] sm:$0x3] %vm245, %v298
    %300 = vst [vmem:[#allocation1] ss:$4 sm:$0xff] %v238
    %v301 = vld.sshfl [vmem:[#allocation1] sm:$0xff pattern:$0x73625140]
    %302 = vrot.lane.b32.xlu0 %v301, 64
    %v303 = vpop.permute.xlu0 %302
    %305 = vst.msk [vmem:[#allocation3] sm:$0x3] %vm245, %v303
    %306 = vst.msk [vmem:[#allocation4] sm:$0x3] %vm245, %v298
    %s307 = scalar_lea.vmem %s1, 2
    %v308 = vld [vmem:[%s307] sm:$0x3]
    %v309 = vld [vmem:[#allocation2] sm:$0x3]
    %311 = vset.pattern.permute.xlu0 0
    %312 = vperm.xlu0 %311, %v308
    %v313 = vpop.permute.xlu0 %312
    %v315 = vmul.f32 %v309, %v313
    %v316 = vld [vmem:[#allocation3] sm:$0x3]
    %v317 = vmul.f32 %v316, %v313
    %v318 = vld [vmem:[%s3] sm:$0xff]
    %v319 = vld [vmem:[%s3 + $0x8] sm:$0xff]
    %v320 = vld [vmem:[%s3 + $0x10] sm:$0xff]
    %v321 = vld [vmem:[%s3 + $0x18] sm:$0xff]
    %v322 = vld [vmem:[%s3 + $0x20] sm:$0xff]
    %v323 = vld [vmem:[%s3 + $0x28] sm:$0xff]
    %v324 = vld [vmem:[%s3 + $0x30] sm:$0xff]
    %v325 = vld [vmem:[%s3 + $0x38] sm:$0xff]
    %v326 = vld [vmem:[%s3 + $0x40] sm:$0xff]
    %v327 = vld [vmem:[%s3 + $0x48] sm:$0xff]
    %v328 = vld [vmem:[%s3 + $0x50] sm:$0xff]
    %v329 = vld [vmem:[%s3 + $0x58] sm:$0xff]
    %v330 = vld [vmem:[%s3 + $0x60] sm:$0xff]
    %v331 = vld [vmem:[%s3 + $0x68] sm:$0xff]
    %v332 = vld [vmem:[%s3 + $0x70] sm:$0xff]
    %v333 = vld [vmem:[%s3 + $0x78] sm:$0xff]
    %v335 = vsel %vm73, %v315, 0
    %337 = vmatpush.msra.mxu0 0.0
    %338 = vmatpush.msra.mxu0 0.0
    %339 = vmatpush.msra.mxu0 0.0
    %340 = vmatpush.msra.mxu0 0.0
    %341 = vmatpush.msra.mxu0 0.0
    %342 = vmatpush.msra.mxu0 0.0
    %343 = vmatpush.msra.mxu0 0.0
    %344 = vmatpush.msra.mxu0 0.0
    %345 = vmatpush.msra.mxu0 %v332
    %346 = vmatpush.msra.mxu0 %v330
    %347 = vmatpush.msra.mxu0 %v328
    %348 = vmatpush.msra.mxu0 %v326
    %349 = vmatpush.msra.mxu0 %v324
    %350 = vmatpush.msra.mxu0 %v322
    %351 = vmatpush.msra.mxu0 %v320
    %352 = vmatpush.msra.mxu0 %v318
    %353 = vmatmul.f32.gmra.mxu0 %v335
    %v354 = vpop.f32.mrf.mxu0
    %v355 = vadd.f32 0.0, %v354
    %356 = vdwg.mxu0
    %357 = vmatpush.msra.mxu0 0.0
    %358 = vmatpush.msra.mxu0 0.0
    %359 = vmatpush.msra.mxu0 0.0
    %360 = vmatpush.msra.mxu0 0.0
    %361 = vmatpush.msra.mxu0 0.0
    %362 = vmatpush.msra.mxu0 0.0
    %363 = vmatpush.msra.mxu0 0.0
    %364 = vmatpush.msra.mxu0 0.0
    %365 = vmatpush.msra.mxu0 %v333
    %366 = vmatpush.msra.mxu0 %v331
    %367 = vmatpush.msra.mxu0 %v329
    %368 = vmatpush.msra.mxu0 %v327
    %369 = vmatpush.msra.mxu0 %v325
    %370 = vmatpush.msra.mxu0 %v323
    %371 = vmatpush.msra.mxu0 %v321
    %372 = vmatpush.msra.mxu0 %v319
    %373 = vmatmul.f32.gmra.mxu0 %v335
    %v374 = vpop.f32.mrf.mxu0
    %v375 = vadd.f32 0.0, %v374
    %376 = vdwg.mxu0
    %v377 = vsel %vm117, %v355, 0.0
    %v378 = vsel %vm117, %v375, 0.0
    %v379 = vadd.f32 %v377, %v378
    %380 = vadd.xlane.f32.xlu0 %v379
    %v381 = vpop.xlane.xlu0 %380
    %v382 = vmul.f32 %v381, %v129
    %v383 = vsub.f32 %v355, %v382
    %v384 = vsub.f32 %v375, %v382
    %v385 = vmul.f32 %v383, %v383
    %v386 = vmul.f32 %v384, %v384
    %v387 = vsel %vm117, %v385, 0.0
    %v388 = vsel %vm117, %v386, 0.0
    %v389 = vadd.f32 %v387, %v388
    %390 = vadd.xlane.f32.xlu0 %v389
    %v391 = vpop.xlane.xlu0 %390
    %v392 = vmul.f32 %v391, %v129
    %v393 = vadd.f32 %v392, 1e-05
    %v394 = vrsqrt.pop %v393
    %v395 = vmul.f32 %v394, %v393
    %v396 = vmul.f32 %v395, %v394
    %v397 = vmul.f32 0.5, %v396
    %v398 = vsub.f32 1.5, %v397
    %v399 = vmul.f32 %v394, %v398
    %vm400 = vweird.f32 %v393
    %vm401 = vweird.f32 %v394
    %vm402 = vmor %vm400, %vm401
    %v403 = vsel %vm402, %v394, %v399
    %v404 = vmul.f32 %v383, %v403
    %v405 = vmul.f32 %v384, %v403
    %v406 = vmul.f32 %v404, %v155
    %v407 = vmul.f32 %v405, %v156
    %v408 = vadd.f32 %v406, %v162
    %v409 = vadd.f32 %v407, %v163
    %s410 = scalar_lea.vmem %s0, 4
    %v411 = vld [vmem:[%s410] sm:$0xf]
    %v414 = vrot.slane %v409, 6
    %v415 = vsel %vm117, %v408, %v414
    %v417 = vadd.f32 %v411, %v415
    %v418 = vadd.f32 %v417, %v179
    %v419 = vxor.u32 %v418, 2147483648
    %v420 = vmul.f32 %v419, 1.442695
    %v421 = vpow.pop %v420
    %v422 = vadd.f32 %v421, 1.0
    %v423 = vrcp.pop %v422
    %v424 = vmul.f32 %v422, %v423
    %v425 = vsub.f32 1.0, %v424
    %v426 = vmul.f32 %v423, %v425
    %v427 = vadd.f32 %v423, %v426
    %vm428 = vweird.f32 %v422
    %vm429 = vweird.f32 %v423
    %vm430 = vmor %vm428, %vm429
    %v431 = vsel %vm430, %v423, %v427
    %v432 = vand.u32 2147483647, %v422
    %vm433 = vcmp.eq.f32.partialorder %v432, 8.507059e+37
    %v434 = vand.u32 %v422, 2147483648
    %v435 = vor.u32 1.1754944e-38, %v434
    %v436 = vsel %vm433, %v435, %v431
    %v437 = vmul.f32 1.0, %v436
    %v439 = vrot.slane %v418, 2
    %v441 = vxor.u32 %v439, 2147483648
    %v442 = vmul.f32 %v441, 1.442695
    %v443 = vpow.pop %v442
    %v444 = vadd.f32 %v443, 1.0
    %v445 = vrcp.pop %v444
    %v446 = vmul.f32 %v444, %v445
    %v447 = vsub.f32 1.0, %v446
    %v448 = vmul.f32 %v445, %v447
    %v449 = vadd.f32 %v445, %v448
    %vm450 = vweird.f32 %v444
    %vm451 = vweird.f32 %v445
    %vm452 = vmor %vm450, %vm451
    %v453 = vsel %vm452, %v445, %v449
    %v454 = vand.u32 2147483647, %v444
    %vm455 = vcmp.eq.f32.partialorder %v454, 8.507059e+37
    %v456 = vand.u32 %v444, 2147483648
    %v457 = vor.u32 1.1754944e-38, %v456
    %v458 = vsel %vm455, %v457, %v453
    %v459 = vmul.f32 1.0, %v458
    %460 = vrot.lane.b32.xlu0 %v418, 64
    %v461 = vpop.permute.xlu0 %460
    %v462 = vrot.slane %v461, 2
    %v464 = vtanh.pop %v462
    %466 = vrot.lane.b32.xlu0 %v317, 64
    %v467 = vpop.permute.xlu0 %466
    %v469 = vmul.f32 %v437, %v467
    %v470 = vmul.f32 %v437, %v464
    %472 = vrot.lane.b32.xlu0 %v470, 64
    %v473 = vpop.permute.xlu0 %472
    %v475 = vadd.f32 %v469, %v473
    %477 = vst [vmem:[#allocation1] ss:$4 sm:$0xff] %v475
    %v478 = vld.sshfl [vmem:[#allocation1] sm:$0xff pattern:$0x73625140]
    %479 = vrot.lane.b32.xlu0 %v478, 64
    %v480 = vpop.permute.xlu0 %479
    %v482 = vsel %vm245, %v480, 0.0
    %483 = vadd.xlane.f32.xlu0 %v482
    %v484 = vpop.xlane.xlu0 %483
    %v485 = vmul.f32 %v484, %v255
    %v486 = vsub.f32 %v475, %v485
    %v487 = vmul.f32 %v486, %v486
    %489 = vst [vmem:[#allocation1] ss:$4 sm:$0xff] %v487
    %v490 = vld.sshfl [vmem:[#allocation1] sm:$0xff pattern:$0x73625140]
    %491 = vrot.lane.b32.xlu0 %v490, 64
    %v492 = vpop.permute.xlu0 %491
    %v494 = vsel %vm245, %v492, 0.0
    %495 = vadd.xlane.f32.xlu0 %v494
    %v496 = vpop.xlane.xlu0 %495
    %v497 = vmul.f32 %v496, %v255
    %v498 = vadd.f32 %v497, 1e-05
    %v499 = vrsqrt.pop %v498
    %v500 = vmul.f32 %v499, %v498
    %v501 = vmul.f32 %v500, %v499
    %v502 = vmul.f32 0.5, %v501
    %v503 = vsub.f32 1.5, %v502
    %v504 = vmul.f32 %v499, %v503
    %vm505 = vweird.f32 %v498
    %vm506 = vweird.f32 %v499
    %vm507 = vmor %vm505, %vm506
    %v508 = vsel %vm507, %v499, %v504
    %v509 = vmul.f32 %v486, %v508
    %v510 = vmul.f32 %v509, %v284
    %v511 = vadd.f32 %v510, %v290
    %v512 = vtanh.pop %v511
    %514 = vrot.lane.b32.xlu0 %v512, 64
    %v515 = vpop.permute.xlu0 %514
    %v517 = vmul.f32 %v459, %v515
    %518 = vst.msk [vmem:[#allocation2] sm:$0x3] %vm245, %v517
    %519 = vst [vmem:[#allocation1] ss:$4 sm:$0xff] %v475
    %v520 = vld.sshfl [vmem:[#allocation1] sm:$0xff pattern:$0x73625140]
    %521 = vrot.lane.b32.xlu0 %v520, 64
    %v522 = vpop.permute.xlu0 %521
    %524 = vst.msk [vmem:[#allocation3] sm:$0x3] %vm245, %v522
    %s525 = scalar_lea.vmem [#allocation4], 2
    %526 = vst.msk [vmem:[%s525] sm:$0x3] %vm245, %v517
    // Predicated region
    $region30: #{_lambda_.15} parent=1 // pred_check
      %p527 = pneg %p27
    $region31: #{_lambda_.15} parent=1 // pred_check_branch
      %529 = sbr.rel (%p527) target = $region33
    $region32: #{_lambda_.15} parent=1 // pred_region
      %v530 = vld [vmem:[#allocation2] sm:$0x3]
      %531 = vst.msk [vmem:[%s7] sm:$0x3] %vm245, %v530
      %v532 = vld [vmem:[#allocation3] sm:$0x3]
      %533 = vst.msk [vmem:[%s8] sm:$0x3] %vm245, %v532
    $region33: #{_lambda_.15} parent=1 // pred_fallthru
      _
    // Predicated region
    $region34: #{_lambda_.15} parent=1 // pred_check
      _
    $region35: #{_lambda_.15} parent=1 // pred_check_branch
      %535 = sbr.rel (0) target = $region37
    $region36: #{_lambda_.15} parent=1 // pred_region
      %537 = vsyncadd [#allocation5], 0
      %s538 = sshll.u32 [#allocation4], 4
      %s539 = int_to_ptr.vmem [resolvable:$true] %s538
      %s540 = sshll.u32 %s6, 4
      %s541 = int_to_ptr.hbm [resolvable:$true] %s540
      %546 = dma.vmem_to_hbm [thread:$0]  %s539, 64, %s541, [#allocation5], 32, 32, 2
    $region37: #{_lambda_.15} parent=1 // pred_fallthru
      _
    // Predicated region
    $region38: #{_lambda_.15} parent=1 // pred_check
      _
    $region39: #{_lambda_.15} parent=1 // pred_check_branch
      %548 = sbr.rel (0) target = $region41
    $region40: #{_lambda_.15} parent=1 // pred_region
      _
    $region41: #{_lambda_.15} parent=1 // pred_fallthru
      _
    // Predicated region
    $region42: #{_lambda_.15} parent=1 // pred_check
      _
    $region43: #{_lambda_.15} parent=1 // pred_check_branch
      %550 = sbr.rel (0) target = $region45
    $region44: #{_lambda_.15} parent=1 // pred_region
      _
    $region45: #{_lambda_.15} parent=1 // pred_fallthru
      _
    // Predicated region
    $region46: #{_lambda_.15} parent=1 // pred_check
      _
    $region47: #{_lambda_.15} parent=1 // pred_check_branch
      %552 = sbr.rel (0) target = $region49
    $region48: #{_lambda_.15} parent=1 // pred_region
      %554 = dma.done [#allocation5], 64
    $region49: #{_lambda_.15} parent=1 // pred_fallthru
      _
    // Predicated region
    $region50: #{_lambda_.15} parent=1 // pred_check
      _
    $region51: #{_lambda_.15} parent=1 // pred_check_branch
      %556 = sbr.rel (0) target = $region53
    $region52: #{_lambda_.15} parent=1 // pred_region
      _
    $region53: #{_lambda_.15} parent=1 // pred_fallthru
      _
    // Predicated region
    $region54: #{_lambda_.15} parent=1 // pred_check
      _
    $region55: #{_lambda_.15} parent=1 // pred_check_branch
      %558 = sbr.rel (0) target = $region57
    $region56: #{_lambda_.15} parent=1 // pred_region
      _
    $region57: #{_lambda_.15} parent=1 // pred_fallthru
      _
    %559 = vsyncpa [#allocation5], 1

</llo_original>
